<compile_context>
chip_gen: v5e
topology: v5e:2x2
jax: 0.10.0
libtpu: 0.0.40
codegen_flags: <defaults>
</compile_context>

<pallas_src>
import functools

import jax
import jax.numpy as jnp
from jax import lax
from jax.experimental import pallas as pl
from jax.experimental.pallas import tpu as pltpu

NUM_HEADS = 8

# bf16 is the native MXU input dtype on v5e/v6e/v7x; accumulation stays f32.
# Set to jnp.float32 for bit-tighter parity with the f32 PyTorch reference.
_MXU_DTYPE = jnp.bfloat16


def _vmem_limit_bytes():
    """Scoped-VMEM limit derived from the chip (64 MiB v7x vs 128 MiB v5e/v6e)."""
    try:
        cap = getattr(pltpu.get_tpu_info(), "vmem_capacity_bytes", 64 * 1024 * 1024)
    except Exception:                      # not on TPU / API unavailable
        cap = 64 * 1024 * 1024
    return int(min(cap * 3 // 4, 100 * 1024 * 1024))


# --------------------------- in-kernel helpers ------------------------------

def _shift(x, t, mask, *, W, HW):
    """shifted[c, i] = x[c, i + oy*W + ox] inside the HxW image, 0 outside.

    t = ky*3 + kx, (oy, ox) = (ky-1, kx-1).  The shift is a lane roll on the
    flattened spatial axis; mask (9, HW) zeroes positions whose neighbour
    falls outside the image (row wrap on the W border and the H border).
    """
    oy, ox = t // 3 - 1, t % 3 - 1
    off = oy * W + ox
    if off == 0:
        return x                                   # centre tap: mask is all ones
    return pltpu.roll(x, (-off) % HW, axis=1) * mask[t:t + 1, :]


def _conv3x3(x, w_ref, mask, *, W, HW):
    """Dense 3x3 conv (padding=1) on a flattened (Cin, HW) f32 tile, no bias.

    w_ref: (3, Cout, 3*Cin) with w_ref[ky][co, kx*Cin + ci] = torch_w[co, ci, ky, kx]
           (== torch_w.permute(2, 0, 3, 1).reshape(3, Cout, 3*Cin)).
    Accumulates 3 row-group MXU matmuls (K = 3*Cin each) instead of one
    (9*Cin, HW) im2col -> 3x smaller peak temporary, bf16 operands, f32 acc.
    """
    Cin = x.shape[0]
    acc = None
    for ky in range(3):
        grp = jnp.concatenate(
            [_shift(x, ky * 3 + kx, mask, W=W, HW=HW) for kx in range(3)],
            axis=0).astype(_MXU_DTYPE)                              # (3*Cin, HW)
        part = jnp.dot(w_ref[ky].astype(_MXU_DTYPE), grp,
                       preferred_element_type=jnp.float32)          # (Cout, HW)
        acc = part if acc is None else acc + part
    return acc


def _dwconv3x3(x, dw_ref, mask, *, W, HW):
    """Depthwise 3x3 conv (padding=1) on a flattened (C, HW) f32 tile (VPU + rolls).

    dw_ref: (C, 9), column t = ky*3 + kx  (== torch_w.reshape(C, 9)).
    """
    dw = dw_ref[...].astype(jnp.float32)
    acc = x * dw[:, 4:5]                                             # centre tap
    for t in range(9):
        if t == 4:
            continue
        acc = acc + _shift(x, t, mask, W=W, HW=HW) * dw[:, t:t + 1]
    return acc


def _attention(x, y, q_w_ref, k_w_ref, v_w_ref, q_dw_ref, k_dw_ref, v_dw_ref,
               proj_w_ref, tvec_ref, bias_ref, mask, *, W, HW):
    """Attention.forward(x, y) on flattened (C, HW) f32 tiles (no residual).

    All heads at once: one (C,HW)x(HW,C) score matmul + block-diagonal -1e30
    additive bias for the per-head softmax, then a single (C,C)@(C,HW) matmul
    instead of 8 tiny per-head GEMMs.
    """
    xb = x.astype(_MXU_DTYPE)
    yb = y.astype(_MXU_DTYPE)

    # 1x1 projections (bf16 MXU, f32 acc) followed by f32 depthwise 3x3.
    q = jnp.dot(q_w_ref[...].astype(_MXU_DTYPE), xb, preferred_element_type=jnp.float32)
    k = jnp.dot(k_w_ref[...].astype(_MXU_DTYPE), yb, preferred_element_type=jnp.float32)
    v = jnp.dot(v_w_ref[...].astype(_MXU_DTYPE), yb, preferred_element_type=jnp.float32)
    q = _dwconv3x3(q, q_dw_ref, mask, W=W, HW=HW)
    k = _dwconv3x3(k, k_dw_ref, mask, W=W, HW=HW)
    v = _dwconv3x3(v, v_dw_ref, mask, W=W, HW=HW)

    # F.normalize(dim=-1): x * rsqrt(max(sum x^2, eps^2)), eps = 1e-12 (f32, EUP rsqrt).
    q = q * lax.rsqrt(jnp.maximum(jnp.sum(q * q, axis=-1, keepdims=True), 1e-24))
    k = k * lax.rsqrt(jnp.maximum(jnp.sum(k * k, axis=-1, keepdims=True), 1e-24))
    q = q * tvec_ref[...].astype(jnp.float32)      # per-head temperature (row-wise)

    attn = lax.dot_general(q.astype(_MXU_DTYPE), k.astype(_MXU_DTYPE),
                           (((1,), (1,)), ((), ())),
                           preferred_element_type=jnp.float32)       # (C, C)
    attn = attn + bias_ref[...].astype(jnp.float32)                  # block-diag mask
    attn = attn - jnp.max(attn, axis=-1, keepdims=True)
    attn = jnp.exp(attn)
    attn = attn / jnp.sum(attn, axis=-1, keepdims=True)              # exact division

    out = jnp.dot(attn.astype(_MXU_DTYPE), v.astype(_MXU_DTYPE),
                  preferred_element_type=jnp.float32)                # (C, HW)
    out = jnp.dot(proj_w_ref[...].astype(_MXU_DTYPE), out.astype(_MXU_DTYPE),
                  preferred_element_type=jnp.float32)                # project_out
    return out


# ------------------------------ fused kernel --------------------------------

def _fuse_block7_kernel(
        spa_ref, fre_ref,
        fre_w_ref, fre_b_ref, spa_w_ref, spa_b_ref,
        q_w_ref, k_w_ref, v_w_ref, q_dw_ref, k_dw_ref, v_dw_ref,
        proj_w_ref, tvec_ref, bias_ref,
        f1a_w_ref, f1b_w_ref, f1_b_ref,
        f2a_w_ref, f2a_b_ref, f2b_w_ref, f2b_b_ref,
        mask_ref, o_ref, *, W, HW):
    """Whole FuseBlock7.forward for one batch element, everything kept in VMEM."""
    mask = mask_ref[...].astype(jnp.float32)                         # (9, HW)

    spa0 = spa_ref[0].astype(jnp.float32)                            # (C, HW)
    fre0 = fre_ref[0].astype(jnp.float32)

    # ---- stage 1: dense 3x3 convs ------------------------------------------
    fre = _conv3x3(fre0, fre_w_ref, mask, W=W, HW=HW) + fre_b_ref[...].astype(jnp.float32)
    spa = _conv3x3(spa0, spa_w_ref, mask, W=W, HW=HW) + spa_b_ref[...].astype(jnp.float32)

    # ---- stage 2: cross attention (fre_att used for BOTH calls, as in torch)
    att_args = (q_w_ref, k_w_ref, v_w_ref, q_dw_ref, k_dw_ref, v_dw_ref,
                proj_w_ref, tvec_ref, bias_ref)
    fre = fre + _attention(fre, spa, *att_args, mask, W=W, HW=HW)    # fre_att(fre, spa) + fre
    spa = spa + _attention(spa, fre, *att_args, mask, W=W, HW=HW)    # fre_att(spa, fre) + spa

    # ---- stage 3: fuse epilogue --------------------------------------------
    # fuse[0] Conv2d(2C->C): split over the concat axis -> no (2C, HW) copy.
    g = (_conv3x3(fre, f1a_w_ref, mask, W=W, HW=HW)
         + _conv3x3(spa, f1b_w_ref, mask, W=W, HW=HW)
         + f1_b_ref[...].astype(jnp.float32))
    # fuse[1] Conv2d(C->2C): split over output channels (fre gate / spa gate).
    gate_f = jax.nn.sigmoid(_conv3x3(g, f2a_w_ref, mask, W=W, HW=HW)
                            + f2a_b_ref[...].astype(jnp.float32))
    gate_s = jax.nn.sigmoid(_conv3x3(g, f2b_w_ref, mask, W=W, HW=HW)
                            + f2b_b_ref[...].astype(jnp.float32))

    res = fre * gate_f + spa * gate_s
    # torch.nan_to_num(nan=1e-5, posinf=1e-5, neginf=1e-5)
    res = jnp.where(jnp.isnan(res) | jnp.isinf(res), jnp.float32(1e-5), res)
    o_ref[0] = res.astype(o_ref.dtype)


# ------------------------------ wrapper --------------------------------------

def _make_tap_mask(H, W):
    """(9, H*W) validity mask for each 3x3 tap on the flattened image (lane-dense)."""
    ys = jnp.arange(H, dtype=jnp.int32)[:, None]
    xs = jnp.arange(W, dtype=jnp.int32)[None, :]
    rows = []
    for t in range(9):
        oy, ox = t // 3 - 1, t % 3 - 1
        valid = ((ys + oy >= 0) & (ys + oy < H) &
                 (xs + ox >= 0) & (xs + ox < W))
        rows.append(valid.reshape(H * W))
    return jnp.stack(rows).astype(jnp.float32)


def _make_head_bias(C, num_heads):
    """(C, C) additive mask: 0 inside a head's block, -1e30 across heads."""
    head_id = jnp.arange(C, dtype=jnp.int32) // (C // num_heads)
    same = head_id[:, None] == head_id[None, :]
    return jnp.where(same, 0.0, -1e30).astype(jnp.float32)


def fuse_block7(params, spa_nchw, fre_nchw):
    B, C, H, W = spa_nchw.shape
    HW = H * W
    # Flatten space; stays channel-major (contiguous view, no transpose).
    spa = spa_nchw.reshape(B, C, HW)
    fre = fre_nchw.reshape(B, C, HW)

    tap_mask = _make_tap_mask(H, W)
    head_bias = _make_head_bias(C, NUM_HEADS)
    att = params['fre_att']            # PyTorch forward uses fre_att for BOTH calls
    ch = C // NUM_HEADS
    tvec = jnp.repeat(att['temperature'].reshape(NUM_HEADS), ch).reshape(C, 1)

    def batch_spec():
        return pl.BlockSpec((1, C, HW), lambda i: (i, 0, 0))

    def whole(shape):
        nd = len(shape)
        return pl.BlockSpec(shape, lambda i, nd=nd: (0,) * nd)

    kernel = functools.partial(_fuse_block7_kernel, W=W, HW=HW)
    out = pl.pallas_call(
        kernel,
        out_shape=jax.ShapeDtypeStruct((B, C, HW), spa.dtype),
        grid=(B,),
        in_specs=[
            batch_spec(),                      # spa
            batch_spec(),                      # fre
            whole((3, C, 3 * C)),              # fre conv weight (row-grouped)
            whole((C, 1)),                     # fre conv bias
            whole((3, C, 3 * C)),              # spa conv weight
            whole((C, 1)),                     # spa conv bias
            whole((C, C)),                     # q 1x1 weight
            whole((C, C)),                     # k 1x1 weight (kv split)
            whole((C, C)),                     # v 1x1 weight (kv split)
            whole((C, 9)),                     # q depthwise weight
            whole((C, 9)),                     # k depthwise weight
            whole((C, 9)),                     # v depthwise weight
            whole((C, C)),                     # project_out weight
            whole((C, 1)),                     # per-row temperature
            whole((C, C)),                     # block-diag softmax bias
            whole((3, C, 3 * C)),              # fuse[0] weight, fre input half
            whole((3, C, 3 * C)),              # fuse[0] weight, spa input half
            whole((C, 1)),                     # fuse[0] bias
            whole((3, C, 3 * C)),              # fuse[1] weight, fre-gate rows
            whole((C, 1)),                     # fuse[1] bias, fre-gate rows
            whole((3, C, 3 * C)),              # fuse[1] weight, spa-gate rows
            whole((C, 1)),                     # fuse[1] bias, spa-gate rows
            whole((9, HW)),                    # 3x3 tap border masks
        ],
        out_specs=pl.BlockSpec((1, C, HW), lambda i: (i, 0, 0)),
        compiler_params=pltpu.CompilerParams(
            dimension_semantics=("parallel",),
            vmem_limit_bytes=_vmem_limit_bytes()),
    )(spa, fre,
      params['fre_w'], params['fre_b'], params['spa_w'], params['spa_b'],
      att['q_w'], att['k_w'], att['v_w'], att['q_dw'], att['k_dw'], att['v_dw'],
      att['proj_w'], tvec, head_bias,
      params['fuse1a_w'], params['fuse1b_w'], params['fuse1_b'],
      params['fuse2a_w'], params['fuse2a_b'], params['fuse2b_w'], params['fuse2b_b'],
      tap_mask)
    return out.reshape(B, C, H, W)


# ------------------------------ params ---------------------------------------

def init_params(key, C):
    """Parameters in kernel layout.

    Mapping from the PyTorch module's weights:
      dense 3x3 (Cout, Cin, 3, 3) -> w.permute(2, 0, 3, 1).reshape(3, Cout, 3*Cin)
      depthwise 3x3 (C, 1, 3, 3)  -> w.reshape(C, 9)
      1x1 conv (Cout, Cin, 1, 1)  -> w.reshape(Cout, Cin)
      bias (Cout,)                -> b.reshape(Cout, 1)
      fre_att.kv / kv_dwconv      -> split into k_* (first C out rows) / v_* (last C)
      fuse[0] (C, 2C, 3, 3)       -> fuse1a_w from input channels [0, C)  (fre half)
                                     fuse1b_w from input channels [C, 2C) (spa half)
      fuse[1] (2C, C, 3, 3)       -> fuse2a_* from output rows [0, C)     (fre gate)
                                     fuse2b_* from output rows [C, 2C)    (spa gate)
    """
    ks = jax.random.split(key, 18)

    def n(k, shape, scale=0.1):
        return scale * jax.random.normal(k, shape, jnp.float32)

    att = {
        'temperature': jnp.ones((NUM_HEADS, 1, 1), jnp.float32),
        'q_w': n(ks[4], (C, C)),
        'k_w': n(ks[5], (C, C)),
        'v_w': n(ks[6], (C, C)),
        'q_dw': n(ks[7], (C, 9)),
        'k_dw': n(ks[8], (C, 9)),
        'v_dw': n(ks[9], (C, 9)),
        'proj_w': n(ks[10], (C, C)),
    }
    return {
        'fre_w': n(ks[0], (3, C, 3 * C)), 'fre_b': n(ks[1], (C, 1)),
        'spa_w': n(ks[2], (3, C, 3 * C)), 'spa_b': n(ks[3], (C, 1)),
        'fre_att': att,
        # spa_att exists in the PyTorch module but is never used in forward.
        'fuse1a_w': n(ks[11], (3, C, 3 * C)),
        'fuse1b_w': n(ks[12], (3, C, 3 * C)),
        'fuse1_b': n(ks[13], (C, 1)),
        'fuse2a_w': n(ks[14], (3, C, 3 * C)), 'fuse2a_b': n(ks[15], (C, 1)),
        'fuse2b_w': n(ks[16], (3, C, 3 * C)), 'fuse2b_b': n(ks[17], (C, 1)),
    }


if __name__ == "__main__":
    key = jax.random.PRNGKey(0)
    kp, kx, kyy = jax.random.split(key, 3)

    # C must be divisible by num_heads=8; H*W = 256 keeps the lane axis dense.
    B, C, H, W = 2, 16, 16, 16
    params = init_params(kp, C)
    spa_in = jax.random.normal(kx, (B, C, H, W), jnp.float32)   # NCHW like PyTorch
    fre_in = jax.random.normal(kyy, (B, C, H, W), jnp.float32)

    out = jax.jit(fuse_block7)(params, spa_in, fre_in)
    out = jax.block_until_ready(out)
    assert out.shape == (B, C, H, W)
    assert bool(jnp.all(jnp.isfinite(out)))
    print("KERNEL_OK")
</pallas_src>

<mosaic_0001>
module attributes {stable_mosaic.version = 11 : i64} {
  func.func @_fuse_block7_kernel(%arg0: i32, %arg1: memref<1x16x256xf32, #tpu.memory_space<vmem>>, %arg2: memref<1x16x256xf32, #tpu.memory_space<vmem>>, %arg3: memref<3x16x48xf32, #tpu.memory_space<vmem>>, %arg4: memref<16x1xf32, #tpu.memory_space<vmem>>, %arg5: memref<3x16x48xf32, #tpu.memory_space<vmem>>, %arg6: memref<16x1xf32, #tpu.memory_space<vmem>>, %arg7: memref<16x16xf32, #tpu.memory_space<vmem>>, %arg8: memref<16x16xf32, #tpu.memory_space<vmem>>, %arg9: memref<16x16xf32, #tpu.memory_space<vmem>>, %arg10: memref<16x9xf32, #tpu.memory_space<vmem>>, %arg11: memref<16x9xf32, #tpu.memory_space<vmem>>, %arg12: memref<16x9xf32, #tpu.memory_space<vmem>>, %arg13: memref<16x16xf32, #tpu.memory_space<vmem>>, %arg14: memref<16x1xf32, #tpu.memory_space<vmem>>, %arg15: memref<16x16xf32, #tpu.memory_space<vmem>>, %arg16: memref<3x16x48xf32, #tpu.memory_space<vmem>>, %arg17: memref<3x16x48xf32, #tpu.memory_space<vmem>>, %arg18: memref<16x1xf32, #tpu.memory_space<vmem>>, %arg19: memref<3x16x48xf32, #tpu.memory_space<vmem>>, %arg20: memref<16x1xf32, #tpu.memory_space<vmem>>, %arg21: memref<3x16x48xf32, #tpu.memory_space<vmem>>, %arg22: memref<16x1xf32, #tpu.memory_space<vmem>>, %arg23: memref<9x256xf32, #tpu.memory_space<vmem>>, %arg24: memref<1x16x256xf32, #tpu.memory_space<vmem>>) attributes {dimension_semantics = [#tpu.dimension_semantics<parallel>], iteration_bounds = array<i64: 2>, scalar_prefetch = 0 : i64, scratch_operands = 0 : i64, tpu.core_type = #tpu.core_type<tc>, window_params = [{transform_indices = @transform_0, window_bounds = array<i64: 1, 16, 256>}, {transform_indices = @transform_1, window_bounds = array<i64: 1, 16, 256>}, {pipeline_mode = #tpu.pipeline_mode<synchronous>, transform_indices = @transform_2, window_bounds = array<i64: 3, 16, 48>}, {pipeline_mode = #tpu.pipeline_mode<synchronous>, transform_indices = @transform_3, window_bounds = array<i64: 16, 1>}, {pipeline_mode = #tpu.pipeline_mode<synchronous>, transform_indices = @transform_4, window_bounds = array<i64: 3, 16, 48>}, {pipeline_mode = #tpu.pipeline_mode<synchronous>, transform_indices = @transform_5, window_bounds = array<i64: 16, 1>}, {pipeline_mode = #tpu.pipeline_mode<synchronous>, transform_indices = @transform_6, window_bounds = array<i64: 16, 16>}, {pipeline_mode = #tpu.pipeline_mode<synchronous>, transform_indices = @transform_7, window_bounds = array<i64: 16, 16>}, {pipeline_mode = #tpu.pipeline_mode<synchronous>, transform_indices = @transform_8, window_bounds = array<i64: 16, 16>}, {pipeline_mode = #tpu.pipeline_mode<synchronous>, transform_indices = @transform_9, window_bounds = array<i64: 16, 9>}, {pipeline_mode = #tpu.pipeline_mode<synchronous>, transform_indices = @transform_10, window_bounds = array<i64: 16, 9>}, {pipeline_mode = #tpu.pipeline_mode<synchronous>, transform_indices = @transform_11, window_bounds = array<i64: 16, 9>}, {pipeline_mode = #tpu.pipeline_mode<synchronous>, transform_indices = @transform_12, window_bounds = array<i64: 16, 16>}, {pipeline_mode = #tpu.pipeline_mode<synchronous>, transform_indices = @transform_13, window_bounds = array<i64: 16, 1>}, {pipeline_mode = #tpu.pipeline_mode<synchronous>, transform_indices = @transform_14, window_bounds = array<i64: 16, 16>}, {pipeline_mode = #tpu.pipeline_mode<synchronous>, transform_indices = @transform_15, window_bounds = array<i64: 3, 16, 48>}, {pipeline_mode = #tpu.pipeline_mode<synchronous>, transform_indices = @transform_16, window_bounds = array<i64: 3, 16, 48>}, {pipeline_mode = #tpu.pipeline_mode<synchronous>, transform_indices = @transform_17, window_bounds = array<i64: 16, 1>}, {pipeline_mode = #tpu.pipeline_mode<synchronous>, transform_indices = @transform_18, window_bounds = array<i64: 3, 16, 48>}, {pipeline_mode = #tpu.pipeline_mode<synchronous>, transform_indices = @transform_19, window_bounds = array<i64: 16, 1>}, {pipeline_mode = #tpu.pipeline_mode<synchronous>, transform_indices = @transform_20, window_bounds = array<i64: 3, 16, 48>}, {pipeline_mode = #tpu.pipeline_mode<synchronous>, transform_indices = @transform_21, window_bounds = array<i64: 16, 1>}, {pipeline_mode = #tpu.pipeline_mode<synchronous>, transform_indices = @transform_22, window_bounds = array<i64: 9, 256>}, {transform_indices = @transform_23, window_bounds = array<i64: 1, 16, 256>}]} {
    %c0 = arith.constant 0 : index
    %c0_0 = arith.constant 0 : index
    %0 = vector.load %arg23[%c0, %c0_0] : memref<9x256xf32, #tpu.memory_space<vmem>>, vector<9x256xf32>
    %c0_1 = arith.constant 0 : index
    %c0_2 = arith.constant 0 : index
    %c0_3 = arith.constant 0 : index
    %1 = vector.load %arg1[%c0_1, %c0_2, %c0_3] : memref<1x16x256xf32, #tpu.memory_space<vmem>>, vector<1x16x256xf32>
    %2 = vector.shape_cast %1 : vector<1x16x256xf32> to vector<16x256xf32>
    %c0_4 = arith.constant 0 : index
    %c0_5 = arith.constant 0 : index
    %c0_6 = arith.constant 0 : index
    %3 = vector.load %arg2[%c0_4, %c0_5, %c0_6] : memref<1x16x256xf32, #tpu.memory_space<vmem>>, vector<1x16x256xf32>
    %4 = vector.shape_cast %3 : vector<1x16x256xf32> to vector<16x256xf32>
    %c17_i32 = arith.constant 17 : i32
    %5 = tpu.dynamic_rotate %4 by %c17_i32 dim 1 : vector<16x256xf32>, i32 -> vector<16x256xf32>
    %6 = vector.extract_strided_slice %0 {offsets = [0, 0], sizes = [1, 256], strides = [1, 1]} : vector<9x256xf32> to vector<1x256xf32>
    %7 = vector.broadcast %6 : vector<1x256xf32> to vector<16x256xf32>
    %8 = arith.mulf %5, %7 : vector<16x256xf32>
    %c16_i32 = arith.constant 16 : i32
    %9 = tpu.dynamic_rotate %4 by %c16_i32 dim 1 : vector<16x256xf32>, i32 -> vector<16x256xf32>
    %10 = vector.extract_strided_slice %0 {offsets = [1, 0], sizes = [1, 256], strides = [1, 1]} : vector<9x256xf32> to vector<1x256xf32>
    %11 = vector.broadcast %10 : vector<1x256xf32> to vector<16x256xf32>
    %12 = arith.mulf %9, %11 : vector<16x256xf32>
    %c15_i32 = arith.constant 15 : i32
    %13 = tpu.dynamic_rotate %4 by %c15_i32 dim 1 : vector<16x256xf32>, i32 -> vector<16x256xf32>
    %14 = vector.extract_strided_slice %0 {offsets = [2, 0], sizes = [1, 256], strides = [1, 1]} : vector<9x256xf32> to vector<1x256xf32>
    %15 = vector.broadcast %14 : vector<1x256xf32> to vector<16x256xf32>
    %16 = arith.mulf %13, %15 : vector<16x256xf32>
    %17 = tpu.concatenate %8, %12, %16 in 0 : vector<16x256xf32>, vector<16x256xf32>, vector<16x256xf32> -> vector<48x256xf32>
    %18 = arith.truncf %17 : vector<48x256xf32> to vector<48x256xbf16>
    %c0_7 = arith.constant 0 : index
    %c0_8 = arith.constant 0 : index
    %c0_9 = arith.constant 0 : index
    %19 = vector.load %arg3[%c0_7, %c0_8, %c0_9] : memref<3x16x48xf32, #tpu.memory_space<vmem>>, vector<1x16x48xf32>
    %20 = vector.shape_cast %19 : vector<1x16x48xf32> to vector<16x48xf32>
    %21 = arith.truncf %20 : vector<16x48xf32> to vector<16x48xbf16>
    %cst = arith.constant dense<0.000000e+00> : vector<16x256xf32>
    %22 = tpu.matmul %21, %18, %cst {dimension_numbers = #tpu.dot_dimension_numbers<[1], [0], [0], [1], [0, 0, 1, 1], [], []>} : vector<16x48xbf16>, vector<48x256xbf16>, vector<16x256xf32> -> vector<16x256xf32>
    %c1_i32 = arith.constant 1 : i32
    %23 = tpu.dynamic_rotate %4 by %c1_i32 dim 1 : vector<16x256xf32>, i32 -> vector<16x256xf32>
    %24 = vector.extract_strided_slice %0 {offsets = [3, 0], sizes = [1, 256], strides = [1, 1]} : vector<9x256xf32> to vector<1x256xf32>
    %25 = vector.broadcast %24 : vector<1x256xf32> to vector<16x256xf32>
    %26 = arith.mulf %23, %25 : vector<16x256xf32>
    %c255_i32 = arith.constant 255 : i32
    %27 = tpu.dynamic_rotate %4 by %c255_i32 dim 1 : vector<16x256xf32>, i32 -> vector<16x256xf32>
    %28 = vector.extract_strided_slice %0 {offsets = [5, 0], sizes = [1, 256], strides = [1, 1]} : vector<9x256xf32> to vector<1x256xf32>
    %29 = vector.broadcast %28 : vector<1x256xf32> to vector<16x256xf32>
    %30 = arith.mulf %27, %29 : vector<16x256xf32>
    %31 = tpu.concatenate %26, %4, %30 in 0 : vector<16x256xf32>, vector<16x256xf32>, vector<16x256xf32> -> vector<48x256xf32>
    %32 = arith.truncf %31 : vector<48x256xf32> to vector<48x256xbf16>
    %c1 = arith.constant 1 : index
    %c0_10 = arith.constant 0 : index
    %c0_11 = arith.constant 0 : index
    %33 = vector.load %arg3[%c1, %c0_10, %c0_11] : memref<3x16x48xf32, #tpu.memory_space<vmem>>, vector<1x16x48xf32>
    %34 = vector.shape_cast %33 : vector<1x16x48xf32> to vector<16x48xf32>
    %35 = arith.truncf %34 : vector<16x48xf32> to vector<16x48xbf16>
    %cst_12 = arith.constant dense<0.000000e+00> : vector<16x256xf32>
    %36 = tpu.matmul %35, %32, %cst_12 {dimension_numbers = #tpu.dot_dimension_numbers<[1], [0], [0], [1], [0, 0, 1, 1], [], []>} : vector<16x48xbf16>, vector<48x256xbf16>, vector<16x256xf32> -> vector<16x256xf32>
    %37 = arith.addf %22, %36 : vector<16x256xf32>
    %c241_i32 = arith.constant 241 : i32
    %38 = tpu.dynamic_rotate %4 by %c241_i32 dim 1 : vector<16x256xf32>, i32 -> vector<16x256xf32>
    %39 = vector.extract_strided_slice %0 {offsets = [6, 0], sizes = [1, 256], strides = [1, 1]} : vector<9x256xf32> to vector<1x256xf32>
    %40 = vector.broadcast %39 : vector<1x256xf32> to vector<16x256xf32>
    %41 = arith.mulf %38, %40 : vector<16x256xf32>
    %c240_i32 = arith.constant 240 : i32
    %42 = tpu.dynamic_rotate %4 by %c240_i32 dim 1 : vector<16x256xf32>, i32 -> vector<16x256xf32>
    %43 = vector.extract_strided_slice %0 {offsets = [7, 0], sizes = [1, 256], strides = [1, 1]} : vector<9x256xf32> to vector<1x256xf32>
    %44 = vector.broadcast %43 : vector<1x256xf32> to vector<16x256xf32>
    %45 = arith.mulf %42, %44 : vector<16x256xf32>
    %c239_i32 = arith.constant 239 : i32
    %46 = tpu.dynamic_rotate %4 by %c239_i32 dim 1 : vector<16x256xf32>, i32 -> vector<16x256xf32>
    %47 = vector.extract_strided_slice %0 {offsets = [8, 0], sizes = [1, 256], strides = [1, 1]} : vector<9x256xf32> to vector<1x256xf32>
    %48 = vector.broadcast %47 : vector<1x256xf32> to vector<16x256xf32>
    %49 = arith.mulf %46, %48 : vector<16x256xf32>
    %50 = tpu.concatenate %41, %45, %49 in 0 : vector<16x256xf32>, vector<16x256xf32>, vector<16x256xf32> -> vector<48x256xf32>
    %51 = arith.truncf %50 : vector<48x256xf32> to vector<48x256xbf16>
    %c2 = arith.constant 2 : index
    %c0_13 = arith.constant 0 : index
    %c0_14 = arith.constant 0 : index
    %52 = vector.load %arg3[%c2, %c0_13, %c0_14] : memref<3x16x48xf32, #tpu.memory_space<vmem>>, vector<1x16x48xf32>
    %53 = vector.shape_cast %52 : vector<1x16x48xf32> to vector<16x48xf32>
    %54 = arith.truncf %53 : vector<16x48xf32> to vector<16x48xbf16>
    %cst_15 = arith.constant dense<0.000000e+00> : vector<16x256xf32>
    %55 = tpu.matmul %54, %51, %cst_15 {dimension_numbers = #tpu.dot_dimension_numbers<[1], [0], [0], [1], [0, 0, 1, 1], [], []>} : vector<16x48xbf16>, vector<48x256xbf16>, vector<16x256xf32> -> vector<16x256xf32>
    %56 = arith.addf %37, %55 : vector<16x256xf32>
    %c0_16 = arith.constant 0 : index
    %c0_17 = arith.constant 0 : index
    %57 = vector.load %arg4[%c0_16, %c0_17] : memref<16x1xf32, #tpu.memory_space<vmem>>, vector<16x1xf32>
    %58 = vector.broadcast %57 : vector<16x1xf32> to vector<16x256xf32>
    %59 = arith.addf %56, %58 : vector<16x256xf32>
    %c17_i32_18 = arith.constant 17 : i32
    %60 = tpu.dynamic_rotate %2 by %c17_i32_18 dim 1 : vector<16x256xf32>, i32 -> vector<16x256xf32>
    %61 = vector.extract_strided_slice %0 {offsets = [0, 0], sizes = [1, 256], strides = [1, 1]} : vector<9x256xf32> to vector<1x256xf32>
    %62 = vector.broadcast %61 : vector<1x256xf32> to vector<16x256xf32>
    %63 = arith.mulf %60, %62 : vector<16x256xf32>
    %c16_i32_19 = arith.constant 16 : i32
    %64 = tpu.dynamic_rotate %2 by %c16_i32_19 dim 1 : vector<16x256xf32>, i32 -> vector<16x256xf32>
    %65 = vector.extract_strided_slice %0 {offsets = [1, 0], sizes = [1, 256], strides = [1, 1]} : vector<9x256xf32> to vector<1x256xf32>
    %66 = vector.broadcast %65 : vector<1x256xf32> to vector<16x256xf32>
    %67 = arith.mulf %64, %66 : vector<16x256xf32>
    %c15_i32_20 = arith.constant 15 : i32
    %68 = tpu.dynamic_rotate %2 by %c15_i32_20 dim 1 : vector<16x256xf32>, i32 -> vector<16x256xf32>
    %69 = vector.extract_strided_slice %0 {offsets = [2, 0], sizes = [1, 256], strides = [1, 1]} : vector<9x256xf32> to vector<1x256xf32>
    %70 = vector.broadcast %69 : vector<1x256xf32> to vector<16x256xf32>
    %71 = arith.mulf %68, %70 : vector<16x256xf32>
    %72 = tpu.concatenate %63, %67, %71 in 0 : vector<16x256xf32>, vector<16x256xf32>, vector<16x256xf32> -> vector<48x256xf32>
    %73 = arith.truncf %72 : vector<48x256xf32> to vector<48x256xbf16>
    %c0_21 = arith.constant 0 : index
    %c0_22 = arith.constant 0 : index
    %c0_23 = arith.constant 0 : index
    %74 = vector.load %arg5[%c0_21, %c0_22, %c0_23] : memref<3x16x48xf32, #tpu.memory_space<vmem>>, vector<1x16x48xf32>
    %75 = vector.shape_cast %74 : vector<1x16x48xf32> to vector<16x48xf32>
    %76 = arith.truncf %75 : vector<16x48xf32> to vector<16x48xbf16>
    %cst_24 = arith.constant dense<0.000000e+00> : vector<16x256xf32>
    %77 = tpu.matmul %76, %73, %cst_24 {dimension_numbers = #tpu.dot_dimension_numbers<[1], [0], [0], [1], [0, 0, 1, 1], [], []>} : vector<16x48xbf16>, vector<48x256xbf16>, vector<16x256xf32> -> vector<16x256xf32>
    %c1_i32_25 = arith.constant 1 : i32
    %78 = tpu.dynamic_rotate %2 by %c1_i32_25 dim 1 : vector<16x256xf32>, i32 -> vector<16x256xf32>
    %79 = vector.extract_strided_slice %0 {offsets = [3, 0], sizes = [1, 256], strides = [1, 1]} : vector<9x256xf32> to vector<1x256xf32>
    %80 = vector.broadcast %79 : vector<1x256xf32> to vector<16x256xf32>
    %81 = arith.mulf %78, %80 : vector<16x256xf32>
    %c255_i32_26 = arith.constant 255 : i32
    %82 = tpu.dynamic_rotate %2 by %c255_i32_26 dim 1 : vector<16x256xf32>, i32 -> vector<16x256xf32>
    %83 = vector.extract_strided_slice %0 {offsets = [5, 0], sizes = [1, 256], strides = [1, 1]} : vector<9x256xf32> to vector<1x256xf32>
    %84 = vector.broadcast %83 : vector<1x256xf32> to vector<16x256xf32>
    %85 = arith.mulf %82, %84 : vector<16x256xf32>
    %86 = tpu.concatenate %81, %2, %85 in 0 : vector<16x256xf32>, vector<16x256xf32>, vector<16x256xf32> -> vector<48x256xf32>
    %87 = arith.truncf %86 : vector<48x256xf32> to vector<48x256xbf16>
    %c1_27 = arith.constant 1 : index
    %c0_28 = arith.constant 0 : index
    %c0_29 = arith.constant 0 : index
    %88 = vector.load %arg5[%c1_27, %c0_28, %c0_29] : memref<3x16x48xf32, #tpu.memory_space<vmem>>, vector<1x16x48xf32>
    %89 = vector.shape_cast %88 : vector<1x16x48xf32> to vector<16x48xf32>
    %90 = arith.truncf %89 : vector<16x48xf32> to vector<16x48xbf16>
    %cst_30 = arith.constant dense<0.000000e+00> : vector<16x256xf32>
    %91 = tpu.matmul %90, %87, %cst_30 {dimension_numbers = #tpu.dot_dimension_numbers<[1], [0], [0], [1], [0, 0, 1, 1], [], []>} : vector<16x48xbf16>, vector<48x256xbf16>, vector<16x256xf32> -> vector<16x256xf32>
    %92 = arith.addf %77, %91 : vector<16x256xf32>
    %c241_i32_31 = arith.constant 241 : i32
    %93 = tpu.dynamic_rotate %2 by %c241_i32_31 dim 1 : vector<16x256xf32>, i32 -> vector<16x256xf32>
    %94 = vector.extract_strided_slice %0 {offsets = [6, 0], sizes = [1, 256], strides = [1, 1]} : vector<9x256xf32> to vector<1x256xf32>
    %95 = vector.broadcast %94 : vector<1x256xf32> to vector<16x256xf32>
    %96 = arith.mulf %93, %95 : vector<16x256xf32>
    %c240_i32_32 = arith.constant 240 : i32
    %97 = tpu.dynamic_rotate %2 by %c240_i32_32 dim 1 : vector<16x256xf32>, i32 -> vector<16x256xf32>
    %98 = vector.extract_strided_slice %0 {offsets = [7, 0], sizes = [1, 256], strides = [1, 1]} : vector<9x256xf32> to vector<1x256xf32>
    %99 = vector.broadcast %98 : vector<1x256xf32> to vector<16x256xf32>
    %100 = arith.mulf %97, %99 : vector<16x256xf32>
    %c239_i32_33 = arith.constant 239 : i32
    %101 = tpu.dynamic_rotate %2 by %c239_i32_33 dim 1 : vector<16x256xf32>, i32 -> vector<16x256xf32>
    %102 = vector.extract_strided_slice %0 {offsets = [8, 0], sizes = [1, 256], strides = [1, 1]} : vector<9x256xf32> to vector<1x256xf32>
    %103 = vector.broadcast %102 : vector<1x256xf32> to vector<16x256xf32>
    %104 = arith.mulf %101, %103 : vector<16x256xf32>
    %105 = tpu.concatenate %96, %100, %104 in 0 : vector<16x256xf32>, vector<16x256xf32>, vector<16x256xf32> -> vector<48x256xf32>
    %106 = arith.truncf %105 : vector<48x256xf32> to vector<48x256xbf16>
    %c2_34 = arith.constant 2 : index
    %c0_35 = arith.constant 0 : index
    %c0_36 = arith.constant 0 : index
    %107 = vector.load %arg5[%c2_34, %c0_35, %c0_36] : memref<3x16x48xf32, #tpu.memory_space<vmem>>, vector<1x16x48xf32>
    %108 = vector.shape_cast %107 : vector<1x16x48xf32> to vector<16x48xf32>
    %109 = arith.truncf %108 : vector<16x48xf32> to vector<16x48xbf16>
    %cst_37 = arith.constant dense<0.000000e+00> : vector<16x256xf32>
    %110 = tpu.matmul %109, %106, %cst_37 {dimension_numbers = #tpu.dot_dimension_numbers<[1], [0], [0], [1], [0, 0, 1, 1], [], []>} : vector<16x48xbf16>, vector<48x256xbf16>, vector<16x256xf32> -> vector<16x256xf32>
    %111 = arith.addf %92, %110 : vector<16x256xf32>
    %c0_38 = arith.constant 0 : index
    %c0_39 = arith.constant 0 : index
    %112 = vector.load %arg6[%c0_38, %c0_39] : memref<16x1xf32, #tpu.memory_space<vmem>>, vector<16x1xf32>
    %113 = vector.broadcast %112 : vector<16x1xf32> to vector<16x256xf32>
    %114 = arith.addf %111, %113 : vector<16x256xf32>
    %115 = arith.truncf %59 : vector<16x256xf32> to vector<16x256xbf16>
    %116 = arith.truncf %114 : vector<16x256xf32> to vector<16x256xbf16>
    %c0_40 = arith.constant 0 : index
    %c0_41 = arith.constant 0 : index
    %117 = vector.load %arg7[%c0_40, %c0_41] : memref<16x16xf32, #tpu.memory_space<vmem>>, vector<16x16xf32>
    %118 = arith.truncf %117 : vector<16x16xf32> to vector<16x16xbf16>
    %cst_42 = arith.constant dense<0.000000e+00> : vector<16x256xf32>
    %119 = tpu.matmul %118, %115, %cst_42 {dimension_numbers = #tpu.dot_dimension_numbers<[1], [0], [0], [1], [0, 0, 1, 1], [], []>} : vector<16x16xbf16>, vector<16x256xbf16>, vector<16x256xf32> -> vector<16x256xf32>
    %c0_43 = arith.constant 0 : index
    %c0_44 = arith.constant 0 : index
    %120 = vector.load %arg8[%c0_43, %c0_44] : memref<16x16xf32, #tpu.memory_space<vmem>>, vector<16x16xf32>
    %121 = arith.truncf %120 : vector<16x16xf32> to vector<16x16xbf16>
    %cst_45 = arith.constant dense<0.000000e+00> : vector<16x256xf32>
    %122 = tpu.matmul %121, %116, %cst_45 {dimension_numbers = #tpu.dot_dimension_numbers<[1], [0], [0], [1], [0, 0, 1, 1], [], []>} : vector<16x16xbf16>, vector<16x256xbf16>, vector<16x256xf32> -> vector<16x256xf32>
    %c0_46 = arith.constant 0 : index
    %c0_47 = arith.constant 0 : index
    %123 = vector.load %arg9[%c0_46, %c0_47] : memref<16x16xf32, #tpu.memory_space<vmem>>, vector<16x16xf32>
    %124 = arith.truncf %123 : vector<16x16xf32> to vector<16x16xbf16>
    %cst_48 = arith.constant dense<0.000000e+00> : vector<16x256xf32>
    %125 = tpu.matmul %124, %116, %cst_48 {dimension_numbers = #tpu.dot_dimension_numbers<[1], [0], [0], [1], [0, 0, 1, 1], [], []>} : vector<16x16xbf16>, vector<16x256xbf16>, vector<16x256xf32> -> vector<16x256xf32>
    %c0_49 = arith.constant 0 : index
    %c0_50 = arith.constant 0 : index
    %126 = vector.load %arg10[%c0_49, %c0_50] : memref<16x9xf32, #tpu.memory_space<vmem>>, vector<16x9xf32>
    %127 = vector.extract_strided_slice %126 {offsets = [0, 4], sizes = [16, 1], strides = [1, 1]} : vector<16x9xf32> to vector<16x1xf32>
    %128 = vector.broadcast %127 : vector<16x1xf32> to vector<16x256xf32>
    %129 = arith.mulf %119, %128 : vector<16x256xf32>
    %c17_i32_51 = arith.constant 17 : i32
    %130 = tpu.dynamic_rotate %119 by %c17_i32_51 dim 1 : vector<16x256xf32>, i32 -> vector<16x256xf32>
    %131 = vector.extract_strided_slice %0 {offsets = [0, 0], sizes = [1, 256], strides = [1, 1]} : vector<9x256xf32> to vector<1x256xf32>
    %132 = vector.broadcast %131 : vector<1x256xf32> to vector<16x256xf32>
    %133 = arith.mulf %130, %132 : vector<16x256xf32>
    %134 = vector.extract_strided_slice %126 {offsets = [0, 0], sizes = [16, 1], strides = [1, 1]} : vector<16x9xf32> to vector<16x1xf32>
    %135 = vector.broadcast %134 : vector<16x1xf32> to vector<16x256xf32>
    %136 = arith.mulf %133, %135 : vector<16x256xf32>
    %137 = arith.addf %129, %136 : vector<16x256xf32>
    %c16_i32_52 = arith.constant 16 : i32
    %138 = tpu.dynamic_rotate %119 by %c16_i32_52 dim 1 : vector<16x256xf32>, i32 -> vector<16x256xf32>
    %139 = vector.extract_strided_slice %0 {offsets = [1, 0], sizes = [1, 256], strides = [1, 1]} : vector<9x256xf32> to vector<1x256xf32>
    %140 = vector.broadcast %139 : vector<1x256xf32> to vector<16x256xf32>
    %141 = arith.mulf %138, %140 : vector<16x256xf32>
    %142 = vector.extract_strided_slice %126 {offsets = [0, 1], sizes = [16, 1], strides = [1, 1]} : vector<16x9xf32> to vector<16x1xf32>
    %143 = vector.broadcast %142 : vector<16x1xf32> to vector<16x256xf32>
    %144 = arith.mulf %141, %143 : vector<16x256xf32>
    %145 = arith.addf %137, %144 : vector<16x256xf32>
    %c15_i32_53 = arith.constant 15 : i32
    %146 = tpu.dynamic_rotate %119 by %c15_i32_53 dim 1 : vector<16x256xf32>, i32 -> vector<16x256xf32>
    %147 = vector.extract_strided_slice %0 {offsets = [2, 0], sizes = [1, 256], strides = [1, 1]} : vector<9x256xf32> to vector<1x256xf32>
    %148 = vector.broadcast %147 : vector<1x256xf32> to vector<16x256xf32>
    %149 = arith.mulf %146, %148 : vector<16x256xf32>
    %150 = vector.extract_strided_slice %126 {offsets = [0, 2], sizes = [16, 1], strides = [1, 1]} : vector<16x9xf32> to vector<16x1xf32>
    %151 = vector.broadcast %150 : vector<16x1xf32> to vector<16x256xf32>
    %152 = arith.mulf %149, %151 : vector<16x256xf32>
    %153 = arith.addf %145, %152 : vector<16x256xf32>
    %c1_i32_54 = arith.constant 1 : i32
    %154 = tpu.dynamic_rotate %119 by %c1_i32_54 dim 1 : vector<16x256xf32>, i32 -> vector<16x256xf32>
    %155 = vector.extract_strided_slice %0 {offsets = [3, 0], sizes = [1, 256], strides = [1, 1]} : vector<9x256xf32> to vector<1x256xf32>
    %156 = vector.broadcast %155 : vector<1x256xf32> to vector<16x256xf32>
    %157 = arith.mulf %154, %156 : vector<16x256xf32>
    %158 = vector.extract_strided_slice %126 {offsets = [0, 3], sizes = [16, 1], strides = [1, 1]} : vector<16x9xf32> to vector<16x1xf32>
    %159 = vector.broadcast %158 : vector<16x1xf32> to vector<16x256xf32>
    %160 = arith.mulf %157, %159 : vector<16x256xf32>
    %161 = arith.addf %153, %160 : vector<16x256xf32>
    %c255_i32_55 = arith.constant 255 : i32
    %162 = tpu.dynamic_rotate %119 by %c255_i32_55 dim 1 : vector<16x256xf32>, i32 -> vector<16x256xf32>
    %163 = vector.extract_strided_slice %0 {offsets = [5, 0], sizes = [1, 256], strides = [1, 1]} : vector<9x256xf32> to vector<1x256xf32>
    %164 = vector.broadcast %163 : vector<1x256xf32> to vector<16x256xf32>
    %165 = arith.mulf %162, %164 : vector<16x256xf32>
    %166 = vector.extract_strided_slice %126 {offsets = [0, 5], sizes = [16, 1], strides = [1, 1]} : vector<16x9xf32> to vector<16x1xf32>
    %167 = vector.broadcast %166 : vector<16x1xf32> to vector<16x256xf32>
    %168 = arith.mulf %165, %167 : vector<16x256xf32>
    %169 = arith.addf %161, %168 : vector<16x256xf32>
    %c241_i32_56 = arith.constant 241 : i32
    %170 = tpu.dynamic_rotate %119 by %c241_i32_56 dim 1 : vector<16x256xf32>, i32 -> vector<16x256xf32>
    %171 = vector.extract_strided_slice %0 {offsets = [6, 0], sizes = [1, 256], strides = [1, 1]} : vector<9x256xf32> to vector<1x256xf32>
    %172 = vector.broadcast %171 : vector<1x256xf32> to vector<16x256xf32>
    %173 = arith.mulf %170, %172 : vector<16x256xf32>
    %174 = vector.extract_strided_slice %126 {offsets = [0, 6], sizes = [16, 1], strides = [1, 1]} : vector<16x9xf32> to vector<16x1xf32>
    %175 = vector.broadcast %174 : vector<16x1xf32> to vector<16x256xf32>
    %176 = arith.mulf %173, %175 : vector<16x256xf32>
    %177 = arith.addf %169, %176 : vector<16x256xf32>
    %c240_i32_57 = arith.constant 240 : i32
    %178 = tpu.dynamic_rotate %119 by %c240_i32_57 dim 1 : vector<16x256xf32>, i32 -> vector<16x256xf32>
    %179 = vector.extract_strided_slice %0 {offsets = [7, 0], sizes = [1, 256], strides = [1, 1]} : vector<9x256xf32> to vector<1x256xf32>
    %180 = vector.broadcast %179 : vector<1x256xf32> to vector<16x256xf32>
    %181 = arith.mulf %178, %180 : vector<16x256xf32>
    %182 = vector.extract_strided_slice %126 {offsets = [0, 7], sizes = [16, 1], strides = [1, 1]} : vector<16x9xf32> to vector<16x1xf32>
    %183 = vector.broadcast %182 : vector<16x1xf32> to vector<16x256xf32>
    %184 = arith.mulf %181, %183 : vector<16x256xf32>
    %185 = arith.addf %177, %184 : vector<16x256xf32>
    %c239_i32_58 = arith.constant 239 : i32
    %186 = tpu.dynamic_rotate %119 by %c239_i32_58 dim 1 : vector<16x256xf32>, i32 -> vector<16x256xf32>
    %187 = vector.extract_strided_slice %0 {offsets = [8, 0], sizes = [1, 256], strides = [1, 1]} : vector<9x256xf32> to vector<1x256xf32>
    %188 = vector.broadcast %187 : vector<1x256xf32> to vector<16x256xf32>
    %189 = arith.mulf %186, %188 : vector<16x256xf32>
    %190 = vector.extract_strided_slice %126 {offsets = [0, 8], sizes = [16, 1], strides = [1, 1]} : vector<16x9xf32> to vector<16x1xf32>
    %191 = vector.broadcast %190 : vector<16x1xf32> to vector<16x256xf32>
    %192 = arith.mulf %189, %191 : vector<16x256xf32>
    %193 = arith.addf %185, %192 : vector<16x256xf32>
    %c0_59 = arith.constant 0 : index
    %c0_60 = arith.constant 0 : index
    %194 = vector.load %arg11[%c0_59, %c0_60] : memref<16x9xf32, #tpu.memory_space<vmem>>, vector<16x9xf32>
    %195 = vector.extract_strided_slice %194 {offsets = [0, 4], sizes = [16, 1], strides = [1, 1]} : vector<16x9xf32> to vector<16x1xf32>
    %196 = vector.broadcast %195 : vector<16x1xf32> to vector<16x256xf32>
    %197 = arith.mulf %122, %196 : vector<16x256xf32>
    %c17_i32_61 = arith.constant 17 : i32
    %198 = tpu.dynamic_rotate %122 by %c17_i32_61 dim 1 : vector<16x256xf32>, i32 -> vector<16x256xf32>
    %199 = vector.extract_strided_slice %0 {offsets = [0, 0], sizes = [1, 256], strides = [1, 1]} : vector<9x256xf32> to vector<1x256xf32>
    %200 = vector.broadcast %199 : vector<1x256xf32> to vector<16x256xf32>
    %201 = arith.mulf %198, %200 : vector<16x256xf32>
    %202 = vector.extract_strided_slice %194 {offsets = [0, 0], sizes = [16, 1], strides = [1, 1]} : vector<16x9xf32> to vector<16x1xf32>
    %203 = vector.broadcast %202 : vector<16x1xf32> to vector<16x256xf32>
    %204 = arith.mulf %201, %203 : vector<16x256xf32>
    %205 = arith.addf %197, %204 : vector<16x256xf32>
    %c16_i32_62 = arith.constant 16 : i32
    %206 = tpu.dynamic_rotate %122 by %c16_i32_62 dim 1 : vector<16x256xf32>, i32 -> vector<16x256xf32>
    %207 = vector.extract_strided_slice %0 {offsets = [1, 0], sizes = [1, 256], strides = [1, 1]} : vector<9x256xf32> to vector<1x256xf32>
    %208 = vector.broadcast %207 : vector<1x256xf32> to vector<16x256xf32>
    %209 = arith.mulf %206, %208 : vector<16x256xf32>
    %210 = vector.extract_strided_slice %194 {offsets = [0, 1], sizes = [16, 1], strides = [1, 1]} : vector<16x9xf32> to vector<16x1xf32>
    %211 = vector.broadcast %210 : vector<16x1xf32> to vector<16x256xf32>
    %212 = arith.mulf %209, %211 : vector<16x256xf32>
    %213 = arith.addf %205, %212 : vector<16x256xf32>
    %c15_i32_63 = arith.constant 15 : i32
    %214 = tpu.dynamic_rotate %122 by %c15_i32_63 dim 1 : vector<16x256xf32>, i32 -> vector<16x256xf32>
    %215 = vector.extract_strided_slice %0 {offsets = [2, 0], sizes = [1, 256], strides = [1, 1]} : vector<9x256xf32> to vector<1x256xf32>
    %216 = vector.broadcast %215 : vector<1x256xf32> to vector<16x256xf32>
    %217 = arith.mulf %214, %216 : vector<16x256xf32>
    %218 = vector.extract_strided_slice %194 {offsets = [0, 2], sizes = [16, 1], strides = [1, 1]} : vector<16x9xf32> to vector<16x1xf32>
    %219 = vector.broadcast %218 : vector<16x1xf32> to vector<16x256xf32>
    %220 = arith.mulf %217, %219 : vector<16x256xf32>
    %221 = arith.addf %213, %220 : vector<16x256xf32>
    %c1_i32_64 = arith.constant 1 : i32
    %222 = tpu.dynamic_rotate %122 by %c1_i32_64 dim 1 : vector<16x256xf32>, i32 -> vector<16x256xf32>
    %223 = vector.extract_strided_slice %0 {offsets = [3, 0], sizes = [1, 256], strides = [1, 1]} : vector<9x256xf32> to vector<1x256xf32>
    %224 = vector.broadcast %223 : vector<1x256xf32> to vector<16x256xf32>
    %225 = arith.mulf %222, %224 : vector<16x256xf32>
    %226 = vector.extract_strided_slice %194 {offsets = [0, 3], sizes = [16, 1], strides = [1, 1]} : vector<16x9xf32> to vector<16x1xf32>
    %227 = vector.broadcast %226 : vector<16x1xf32> to vector<16x256xf32>
    %228 = arith.mulf %225, %227 : vector<16x256xf32>
    %229 = arith.addf %221, %228 : vector<16x256xf32>
    %c255_i32_65 = arith.constant 255 : i32
    %230 = tpu.dynamic_rotate %122 by %c255_i32_65 dim 1 : vector<16x256xf32>, i32 -> vector<16x256xf32>
    %231 = vector.extract_strided_slice %0 {offsets = [5, 0], sizes = [1, 256], strides = [1, 1]} : vector<9x256xf32> to vector<1x256xf32>
    %232 = vector.broadcast %231 : vector<1x256xf32> to vector<16x256xf32>
    %233 = arith.mulf %230, %232 : vector<16x256xf32>
    %234 = vector.extract_strided_slice %194 {offsets = [0, 5], sizes = [16, 1], strides = [1, 1]} : vector<16x9xf32> to vector<16x1xf32>
    %235 = vector.broadcast %234 : vector<16x1xf32> to vector<16x256xf32>
    %236 = arith.mulf %233, %235 : vector<16x256xf32>
    %237 = arith.addf %229, %236 : vector<16x256xf32>
    %c241_i32_66 = arith.constant 241 : i32
    %238 = tpu.dynamic_rotate %122 by %c241_i32_66 dim 1 : vector<16x256xf32>, i32 -> vector<16x256xf32>
    %239 = vector.extract_strided_slice %0 {offsets = [6, 0], sizes = [1, 256], strides = [1, 1]} : vector<9x256xf32> to vector<1x256xf32>
    %240 = vector.broadcast %239 : vector<1x256xf32> to vector<16x256xf32>
    %241 = arith.mulf %238, %240 : vector<16x256xf32>
    %242 = vector.extract_strided_slice %194 {offsets = [0, 6], sizes = [16, 1], strides = [1, 1]} : vector<16x9xf32> to vector<16x1xf32>
    %243 = vector.broadcast %242 : vector<16x1xf32> to vector<16x256xf32>
    %244 = arith.mulf %241, %243 : vector<16x256xf32>
    %245 = arith.addf %237, %244 : vector<16x256xf32>
    %c240_i32_67 = arith.constant 240 : i32
    %246 = tpu.dynamic_rotate %122 by %c240_i32_67 dim 1 : vector<16x256xf32>, i32 -> vector<16x256xf32>
    %247 = vector.extract_strided_slice %0 {offsets = [7, 0], sizes = [1, 256], strides = [1, 1]} : vector<9x256xf32> to vector<1x256xf32>
    %248 = vector.broadcast %247 : vector<1x256xf32> to vector<16x256xf32>
    %249 = arith.mulf %246, %248 : vector<16x256xf32>
    %250 = vector.extract_strided_slice %194 {offsets = [0, 7], sizes = [16, 1], strides = [1, 1]} : vector<16x9xf32> to vector<16x1xf32>
    %251 = vector.broadcast %250 : vector<16x1xf32> to vector<16x256xf32>
    %252 = arith.mulf %249, %251 : vector<16x256xf32>
    %253 = arith.addf %245, %252 : vector<16x256xf32>
    %c239_i32_68 = arith.constant 239 : i32
    %254 = tpu.dynamic_rotate %122 by %c239_i32_68 dim 1 : vector<16x256xf32>, i32 -> vector<16x256xf32>
    %255 = vector.extract_strided_slice %0 {offsets = [8, 0], sizes = [1, 256], strides = [1, 1]} : vector<9x256xf32> to vector<1x256xf32>
    %256 = vector.broadcast %255 : vector<1x256xf32> to vector<16x256xf32>
    %257 = arith.mulf %254, %256 : vector<16x256xf32>
    %258 = vector.extract_strided_slice %194 {offsets = [0, 8], sizes = [16, 1], strides = [1, 1]} : vector<16x9xf32> to vector<16x1xf32>
    %259 = vector.broadcast %258 : vector<16x1xf32> to vector<16x256xf32>
    %260 = arith.mulf %257, %259 : vector<16x256xf32>
    %261 = arith.addf %253, %260 : vector<16x256xf32>
    %c0_69 = arith.constant 0 : index
    %c0_70 = arith.constant 0 : index
    %262 = vector.load %arg12[%c0_69, %c0_70] : memref<16x9xf32, #tpu.memory_space<vmem>>, vector<16x9xf32>
    %263 = vector.extract_strided_slice %262 {offsets = [0, 4], sizes = [16, 1], strides = [1, 1]} : vector<16x9xf32> to vector<16x1xf32>
    %264 = vector.broadcast %263 : vector<16x1xf32> to vector<16x256xf32>
    %265 = arith.mulf %125, %264 : vector<16x256xf32>
    %c17_i32_71 = arith.constant 17 : i32
    %266 = tpu.dynamic_rotate %125 by %c17_i32_71 dim 1 : vector<16x256xf32>, i32 -> vector<16x256xf32>
    %267 = vector.extract_strided_slice %0 {offsets = [0, 0], sizes = [1, 256], strides = [1, 1]} : vector<9x256xf32> to vector<1x256xf32>
    %268 = vector.broadcast %267 : vector<1x256xf32> to vector<16x256xf32>
    %269 = arith.mulf %266, %268 : vector<16x256xf32>
    %270 = vector.extract_strided_slice %262 {offsets = [0, 0], sizes = [16, 1], strides = [1, 1]} : vector<16x9xf32> to vector<16x1xf32>
    %271 = vector.broadcast %270 : vector<16x1xf32> to vector<16x256xf32>
    %272 = arith.mulf %269, %271 : vector<16x256xf32>
    %273 = arith.addf %265, %272 : vector<16x256xf32>
    %c16_i32_72 = arith.constant 16 : i32
    %274 = tpu.dynamic_rotate %125 by %c16_i32_72 dim 1 : vector<16x256xf32>, i32 -> vector<16x256xf32>
    %275 = vector.extract_strided_slice %0 {offsets = [1, 0], sizes = [1, 256], strides = [1, 1]} : vector<9x256xf32> to vector<1x256xf32>
    %276 = vector.broadcast %275 : vector<1x256xf32> to vector<16x256xf32>
    %277 = arith.mulf %274, %276 : vector<16x256xf32>
    %278 = vector.extract_strided_slice %262 {offsets = [0, 1], sizes = [16, 1], strides = [1, 1]} : vector<16x9xf32> to vector<16x1xf32>
    %279 = vector.broadcast %278 : vector<16x1xf32> to vector<16x256xf32>
    %280 = arith.mulf %277, %279 : vector<16x256xf32>
    %281 = arith.addf %273, %280 : vector<16x256xf32>
    %c15_i32_73 = arith.constant 15 : i32
    %282 = tpu.dynamic_rotate %125 by %c15_i32_73 dim 1 : vector<16x256xf32>, i32 -> vector<16x256xf32>
    %283 = vector.extract_strided_slice %0 {offsets = [2, 0], sizes = [1, 256], strides = [1, 1]} : vector<9x256xf32> to vector<1x256xf32>
    %284 = vector.broadcast %283 : vector<1x256xf32> to vector<16x256xf32>
    %285 = arith.mulf %282, %284 : vector<16x256xf32>
    %286 = vector.extract_strided_slice %262 {offsets = [0, 2], sizes = [16, 1], strides = [1, 1]} : vector<16x9xf32> to vector<16x1xf32>
    %287 = vector.broadcast %286 : vector<16x1xf32> to vector<16x256xf32>
    %288 = arith.mulf %285, %287 : vector<16x256xf32>
    %289 = arith.addf %281, %288 : vector<16x256xf32>
    %c1_i32_74 = arith.constant 1 : i32
    %290 = tpu.dynamic_rotate %125 by %c1_i32_74 dim 1 : vector<16x256xf32>, i32 -> vector<16x256xf32>
    %291 = vector.extract_strided_slice %0 {offsets = [3, 0], sizes = [1, 256], strides = [1, 1]} : vector<9x256xf32> to vector<1x256xf32>
    %292 = vector.broadcast %291 : vector<1x256xf32> to vector<16x256xf32>
    %293 = arith.mulf %290, %292 : vector<16x256xf32>
    %294 = vector.extract_strided_slice %262 {offsets = [0, 3], sizes = [16, 1], strides = [1, 1]} : vector<16x9xf32> to vector<16x1xf32>
    %295 = vector.broadcast %294 : vector<16x1xf32> to vector<16x256xf32>
    %296 = arith.mulf %293, %295 : vector<16x256xf32>
    %297 = arith.addf %289, %296 : vector<16x256xf32>
    %c255_i32_75 = arith.constant 255 : i32
    %298 = tpu.dynamic_rotate %125 by %c255_i32_75 dim 1 : vector<16x256xf32>, i32 -> vector<16x256xf32>
    %299 = vector.extract_strided_slice %0 {offsets = [5, 0], sizes = [1, 256], strides = [1, 1]} : vector<9x256xf32> to vector<1x256xf32>
    %300 = vector.broadcast %299 : vector<1x256xf32> to vector<16x256xf32>
    %301 = arith.mulf %298, %300 : vector<16x256xf32>
    %302 = vector.extract_strided_slice %262 {offsets = [0, 5], sizes = [16, 1], strides = [1, 1]} : vector<16x9xf32> to vector<16x1xf32>
    %303 = vector.broadcast %302 : vector<16x1xf32> to vector<16x256xf32>
    %304 = arith.mulf %301, %303 : vector<16x256xf32>
    %305 = arith.addf %297, %304 : vector<16x256xf32>
    %c241_i32_76 = arith.constant 241 : i32
    %306 = tpu.dynamic_rotate %125 by %c241_i32_76 dim 1 : vector<16x256xf32>, i32 -> vector<16x256xf32>
    %307 = vector.extract_strided_slice %0 {offsets = [6, 0], sizes = [1, 256], strides = [1, 1]} : vector<9x256xf32> to vector<1x256xf32>
    %308 = vector.broadcast %307 : vector<1x256xf32> to vector<16x256xf32>
    %309 = arith.mulf %306, %308 : vector<16x256xf32>
    %310 = vector.extract_strided_slice %262 {offsets = [0, 6], sizes = [16, 1], strides = [1, 1]} : vector<16x9xf32> to vector<16x1xf32>
    %311 = vector.broadcast %310 : vector<16x1xf32> to vector<16x256xf32>
    %312 = arith.mulf %309, %311 : vector<16x256xf32>
    %313 = arith.addf %305, %312 : vector<16x256xf32>
    %c240_i32_77 = arith.constant 240 : i32
    %314 = tpu.dynamic_rotate %125 by %c240_i32_77 dim 1 : vector<16x256xf32>, i32 -> vector<16x256xf32>
    %315 = vector.extract_strided_slice %0 {offsets = [7, 0], sizes = [1, 256], strides = [1, 1]} : vector<9x256xf32> to vector<1x256xf32>
    %316 = vector.broadcast %315 : vector<1x256xf32> to vector<16x256xf32>
    %317 = arith.mulf %314, %316 : vector<16x256xf32>
    %318 = vector.extract_strided_slice %262 {offsets = [0, 7], sizes = [16, 1], strides = [1, 1]} : vector<16x9xf32> to vector<16x1xf32>
    %319 = vector.broadcast %318 : vector<16x1xf32> to vector<16x256xf32>
    %320 = arith.mulf %317, %319 : vector<16x256xf32>
    %321 = arith.addf %313, %320 : vector<16x256xf32>
    %c239_i32_78 = arith.constant 239 : i32
    %322 = tpu.dynamic_rotate %125 by %c239_i32_78 dim 1 : vector<16x256xf32>, i32 -> vector<16x256xf32>
    %323 = vector.extract_strided_slice %0 {offsets = [8, 0], sizes = [1, 256], strides = [1, 1]} : vector<9x256xf32> to vector<1x256xf32>
    %324 = vector.broadcast %323 : vector<1x256xf32> to vector<16x256xf32>
    %325 = arith.mulf %322, %324 : vector<16x256xf32>
    %326 = vector.extract_strided_slice %262 {offsets = [0, 8], sizes = [16, 1], strides = [1, 1]} : vector<16x9xf32> to vector<16x1xf32>
    %327 = vector.broadcast %326 : vector<16x1xf32> to vector<16x256xf32>
    %328 = arith.mulf %325, %327 : vector<16x256xf32>
    %329 = arith.addf %321, %328 : vector<16x256xf32>
    %330 = arith.mulf %193, %193 : vector<16x256xf32>
    %cst_79 = arith.constant dense<0.000000e+00> : vector<16xf32>
    %331 = vector.multi_reduction <add>, %330, %cst_79 [1] : vector<16x256xf32> to vector<16xf32>
    %332 = vector.shape_cast %331 : vector<16xf32> to vector<16x1xf32>
    %cst_80 = arith.constant 1.000000e-24 : f32
    %333 = vector.broadcast %cst_80 : f32 to vector<16x1xf32>
    %334 = arith.maximumf %332, %333 : vector<16x1xf32>
    %335 = math.rsqrt %334 : vector<16x1xf32>
    %336 = vector.broadcast %335 : vector<16x1xf32> to vector<16x256xf32>
    %337 = arith.mulf %193, %336 : vector<16x256xf32>
    %338 = arith.mulf %261, %261 : vector<16x256xf32>
    %cst_81 = arith.constant dense<0.000000e+00> : vector<16xf32>
    %339 = vector.multi_reduction <add>, %338, %cst_81 [1] : vector<16x256xf32> to vector<16xf32>
    %340 = vector.shape_cast %339 : vector<16xf32> to vector<16x1xf32>
    %cst_82 = arith.constant 1.000000e-24 : f32
    %341 = vector.broadcast %cst_82 : f32 to vector<16x1xf32>
    %342 = arith.maximumf %340, %341 : vector<16x1xf32>
    %343 = math.rsqrt %342 : vector<16x1xf32>
    %344 = vector.broadcast %343 : vector<16x1xf32> to vector<16x256xf32>
    %345 = arith.mulf %261, %344 : vector<16x256xf32>
    %c0_83 = arith.constant 0 : index
    %c0_84 = arith.constant 0 : index
    %346 = vector.load %arg14[%c0_83, %c0_84] : memref<16x1xf32, #tpu.memory_space<vmem>>, vector<16x1xf32>
    %347 = vector.broadcast %346 : vector<16x1xf32> to vector<16x256xf32>
    %348 = arith.mulf %337, %347 : vector<16x256xf32>
    %349 = arith.truncf %348 : vector<16x256xf32> to vector<16x256xbf16>
    %350 = arith.truncf %345 : vector<16x256xf32> to vector<16x256xbf16>
    %cst_85 = arith.constant dense<0.000000e+00> : vector<16x16xf32>
    %351 = tpu.matmul %349, %350, %cst_85 {dimension_numbers = #tpu.dot_dimension_numbers<[1], [1], [0], [0], [0, 0, 1, 0], [], []>} : vector<16x256xbf16>, vector<16x256xbf16>, vector<16x16xf32> -> vector<16x16xf32>
    %c0_86 = arith.constant 0 : index
    %c0_87 = arith.constant 0 : index
    %352 = vector.load %arg15[%c0_86, %c0_87] : memref<16x16xf32, #tpu.memory_space<vmem>>, vector<16x16xf32>
    %353 = arith.addf %351, %352 : vector<16x16xf32>
    %cst_88 = arith.constant dense<0xFF800000> : vector<16xf32>
    %354 = vector.multi_reduction <maximumf>, %353, %cst_88 [1] : vector<16x16xf32> to vector<16xf32>
    %355 = vector.shape_cast %354 : vector<16xf32> to vector<16x1xf32>
    %356 = vector.broadcast %355 : vector<16x1xf32> to vector<16x16xf32>
    %357 = arith.subf %353, %356 : vector<16x16xf32>
    %358 = math.exp %357 : vector<16x16xf32>
    %cst_89 = arith.constant dense<0.000000e+00> : vector<16xf32>
    %359 = vector.multi_reduction <add>, %358, %cst_89 [1] : vector<16x16xf32> to vector<16xf32>
    %360 = vector.shape_cast %359 : vector<16xf32> to vector<16x1xf32>
    %361 = vector.broadcast %360 : vector<16x1xf32> to vector<16x16xf32>
    %362 = arith.divf %358, %361 : vector<16x16xf32>
    %363 = arith.truncf %362 : vector<16x16xf32> to vector<16x16xbf16>
    %364 = arith.truncf %329 : vector<16x256xf32> to vector<16x256xbf16>
    %cst_90 = arith.constant dense<0.000000e+00> : vector<16x256xf32>
    %365 = tpu.matmul %363, %364, %cst_90 {dimension_numbers = #tpu.dot_dimension_numbers<[1], [0], [0], [1], [0, 0, 1, 1], [], []>} : vector<16x16xbf16>, vector<16x256xbf16>, vector<16x256xf32> -> vector<16x256xf32>
    %c0_91 = arith.constant 0 : index
    %c0_92 = arith.constant 0 : index
    %366 = vector.load %arg13[%c0_91, %c0_92] : memref<16x16xf32, #tpu.memory_space<vmem>>, vector<16x16xf32>
    %367 = arith.truncf %366 : vector<16x16xf32> to vector<16x16xbf16>
    %368 = arith.truncf %365 : vector<16x256xf32> to vector<16x256xbf16>
    %cst_93 = arith.constant dense<0.000000e+00> : vector<16x256xf32>
    %369 = tpu.matmul %367, %368, %cst_93 {dimension_numbers = #tpu.dot_dimension_numbers<[1], [0], [0], [1], [0, 0, 1, 1], [], []>} : vector<16x16xbf16>, vector<16x256xbf16>, vector<16x256xf32> -> vector<16x256xf32>
    %370 = arith.addf %59, %369 : vector<16x256xf32>
    %371 = arith.truncf %114 : vector<16x256xf32> to vector<16x256xbf16>
    %372 = arith.truncf %370 : vector<16x256xf32> to vector<16x256xbf16>
    %c0_94 = arith.constant 0 : index
    %c0_95 = arith.constant 0 : index
    %373 = vector.load %arg7[%c0_94, %c0_95] : memref<16x16xf32, #tpu.memory_space<vmem>>, vector<16x16xf32>
    %374 = arith.truncf %373 : vector<16x16xf32> to vector<16x16xbf16>
    %cst_96 = arith.constant dense<0.000000e+00> : vector<16x256xf32>
    %375 = tpu.matmul %374, %371, %cst_96 {dimension_numbers = #tpu.dot_dimension_numbers<[1], [0], [0], [1], [0, 0, 1, 1], [], []>} : vector<16x16xbf16>, vector<16x256xbf16>, vector<16x256xf32> -> vector<16x256xf32>
    %c0_97 = arith.constant 0 : index
    %c0_98 = arith.constant 0 : index
    %376 = vector.load %arg8[%c0_97, %c0_98] : memref<16x16xf32, #tpu.memory_space<vmem>>, vector<16x16xf32>
    %377 = arith.truncf %376 : vector<16x16xf32> to vector<16x16xbf16>
    %cst_99 = arith.constant dense<0.000000e+00> : vector<16x256xf32>
    %378 = tpu.matmul %377, %372, %cst_99 {dimension_numbers = #tpu.dot_dimension_numbers<[1], [0], [0], [1], [0, 0, 1, 1], [], []>} : vector<16x16xbf16>, vector<16x256xbf16>, vector<16x256xf32> -> vector<16x256xf32>
    %c0_100 = arith.constant 0 : index
    %c0_101 = arith.constant 0 : index
    %379 = vector.load %arg9[%c0_100, %c0_101] : memref<16x16xf32, #tpu.memory_space<vmem>>, vector<16x16xf32>
    %380 = arith.truncf %379 : vector<16x16xf32> to vector<16x16xbf16>
    %cst_102 = arith.constant dense<0.000000e+00> : vector<16x256xf32>
    %381 = tpu.matmul %380, %372, %cst_102 {dimension_numbers = #tpu.dot_dimension_numbers<[1], [0], [0], [1], [0, 0, 1, 1], [], []>} : vector<16x16xbf16>, vector<16x256xbf16>, vector<16x256xf32> -> vector<16x256xf32>
    %c0_103 = arith.constant 0 : index
    %c0_104 = arith.constant 0 : index
    %382 = vector.load %arg10[%c0_103, %c0_104] : memref<16x9xf32, #tpu.memory_space<vmem>>, vector<16x9xf32>
    %383 = vector.extract_strided_slice %382 {offsets = [0, 4], sizes = [16, 1], strides = [1, 1]} : vector<16x9xf32> to vector<16x1xf32>
    %384 = vector.broadcast %383 : vector<16x1xf32> to vector<16x256xf32>
    %385 = arith.mulf %375, %384 : vector<16x256xf32>
    %c17_i32_105 = arith.constant 17 : i32
    %386 = tpu.dynamic_rotate %375 by %c17_i32_105 dim 1 : vector<16x256xf32>, i32 -> vector<16x256xf32>
    %387 = vector.extract_strided_slice %0 {offsets = [0, 0], sizes = [1, 256], strides = [1, 1]} : vector<9x256xf32> to vector<1x256xf32>
    %388 = vector.broadcast %387 : vector<1x256xf32> to vector<16x256xf32>
    %389 = arith.mulf %386, %388 : vector<16x256xf32>
    %390 = vector.extract_strided_slice %382 {offsets = [0, 0], sizes = [16, 1], strides = [1, 1]} : vector<16x9xf32> to vector<16x1xf32>
    %391 = vector.broadcast %390 : vector<16x1xf32> to vector<16x256xf32>
    %392 = arith.mulf %389, %391 : vector<16x256xf32>
    %393 = arith.addf %385, %392 : vector<16x256xf32>
    %c16_i32_106 = arith.constant 16 : i32
    %394 = tpu.dynamic_rotate %375 by %c16_i32_106 dim 1 : vector<16x256xf32>, i32 -> vector<16x256xf32>
    %395 = vector.extract_strided_slice %0 {offsets = [1, 0], sizes = [1, 256], strides = [1, 1]} : vector<9x256xf32> to vector<1x256xf32>
    %396 = vector.broadcast %395 : vector<1x256xf32> to vector<16x256xf32>
    %397 = arith.mulf %394, %396 : vector<16x256xf32>
    %398 = vector.extract_strided_slice %382 {offsets = [0, 1], sizes = [16, 1], strides = [1, 1]} : vector<16x9xf32> to vector<16x1xf32>
    %399 = vector.broadcast %398 : vector<16x1xf32> to vector<16x256xf32>
    %400 = arith.mulf %397, %399 : vector<16x256xf32>
    %401 = arith.addf %393, %400 : vector<16x256xf32>
    %c15_i32_107 = arith.constant 15 : i32
    %402 = tpu.dynamic_rotate %375 by %c15_i32_107 dim 1 : vector<16x256xf32>, i32 -> vector<16x256xf32>
    %403 = vector.extract_strided_slice %0 {offsets = [2, 0], sizes = [1, 256], strides = [1, 1]} : vector<9x256xf32> to vector<1x256xf32>
    %404 = vector.broadcast %403 : vector<1x256xf32> to vector<16x256xf32>
    %405 = arith.mulf %402, %404 : vector<16x256xf32>
    %406 = vector.extract_strided_slice %382 {offsets = [0, 2], sizes = [16, 1], strides = [1, 1]} : vector<16x9xf32> to vector<16x1xf32>
    %407 = vector.broadcast %406 : vector<16x1xf32> to vector<16x256xf32>
    %408 = arith.mulf %405, %407 : vector<16x256xf32>
    %409 = arith.addf %401, %408 : vector<16x256xf32>
    %c1_i32_108 = arith.constant 1 : i32
    %410 = tpu.dynamic_rotate %375 by %c1_i32_108 dim 1 : vector<16x256xf32>, i32 -> vector<16x256xf32>
    %411 = vector.extract_strided_slice %0 {offsets = [3, 0], sizes = [1, 256], strides = [1, 1]} : vector<9x256xf32> to vector<1x256xf32>
    %412 = vector.broadcast %411 : vector<1x256xf32> to vector<16x256xf32>
    %413 = arith.mulf %410, %412 : vector<16x256xf32>
    %414 = vector.extract_strided_slice %382 {offsets = [0, 3], sizes = [16, 1], strides = [1, 1]} : vector<16x9xf32> to vector<16x1xf32>
    %415 = vector.broadcast %414 : vector<16x1xf32> to vector<16x256xf32>
    %416 = arith.mulf %413, %415 : vector<16x256xf32>
    %417 = arith.addf %409, %416 : vector<16x256xf32>
    %c255_i32_109 = arith.constant 255 : i32
    %418 = tpu.dynamic_rotate %375 by %c255_i32_109 dim 1 : vector<16x256xf32>, i32 -> vector<16x256xf32>
    %419 = vector.extract_strided_slice %0 {offsets = [5, 0], sizes = [1, 256], strides = [1, 1]} : vector<9x256xf32> to vector<1x256xf32>
    %420 = vector.broadcast %419 : vector<1x256xf32> to vector<16x256xf32>
    %421 = arith.mulf %418, %420 : vector<16x256xf32>
    %422 = vector.extract_strided_slice %382 {offsets = [0, 5], sizes = [16, 1], strides = [1, 1]} : vector<16x9xf32> to vector<16x1xf32>
    %423 = vector.broadcast %422 : vector<16x1xf32> to vector<16x256xf32>
    %424 = arith.mulf %421, %423 : vector<16x256xf32>
    %425 = arith.addf %417, %424 : vector<16x256xf32>
    %c241_i32_110 = arith.constant 241 : i32
    %426 = tpu.dynamic_rotate %375 by %c241_i32_110 dim 1 : vector<16x256xf32>, i32 -> vector<16x256xf32>
    %427 = vector.extract_strided_slice %0 {offsets = [6, 0], sizes = [1, 256], strides = [1, 1]} : vector<9x256xf32> to vector<1x256xf32>
    %428 = vector.broadcast %427 : vector<1x256xf32> to vector<16x256xf32>
    %429 = arith.mulf %426, %428 : vector<16x256xf32>
    %430 = vector.extract_strided_slice %382 {offsets = [0, 6], sizes = [16, 1], strides = [1, 1]} : vector<16x9xf32> to vector<16x1xf32>
    %431 = vector.broadcast %430 : vector<16x1xf32> to vector<16x256xf32>
    %432 = arith.mulf %429, %431 : vector<16x256xf32>
    %433 = arith.addf %425, %432 : vector<16x256xf32>
    %c240_i32_111 = arith.constant 240 : i32
    %434 = tpu.dynamic_rotate %375 by %c240_i32_111 dim 1 : vector<16x256xf32>, i32 -> vector<16x256xf32>
    %435 = vector.extract_strided_slice %0 {offsets = [7, 0], sizes = [1, 256], strides = [1, 1]} : vector<9x256xf32> to vector<1x256xf32>
    %436 = vector.broadcast %435 : vector<1x256xf32> to vector<16x256xf32>
    %437 = arith.mulf %434, %436 : vector<16x256xf32>
    %438 = vector.extract_strided_slice %382 {offsets = [0, 7], sizes = [16, 1], strides = [1, 1]} : vector<16x9xf32> to vector<16x1xf32>
    %439 = vector.broadcast %438 : vector<16x1xf32> to vector<16x256xf32>
    %440 = arith.mulf %437, %439 : vector<16x256xf32>
    %441 = arith.addf %433, %440 : vector<16x256xf32>
    %c239_i32_112 = arith.constant 239 : i32
    %442 = tpu.dynamic_rotate %375 by %c239_i32_112 dim 1 : vector<16x256xf32>, i32 -> vector<16x256xf32>
    %443 = vector.extract_strided_slice %0 {offsets = [8, 0], sizes = [1, 256], strides = [1, 1]} : vector<9x256xf32> to vector<1x256xf32>
    %444 = vector.broadcast %443 : vector<1x256xf32> to vector<16x256xf32>
    %445 = arith.mulf %442, %444 : vector<16x256xf32>
    %446 = vector.extract_strided_slice %382 {offsets = [0, 8], sizes = [16, 1], strides = [1, 1]} : vector<16x9xf32> to vector<16x1xf32>
    %447 = vector.broadcast %446 : vector<16x1xf32> to vector<16x256xf32>
    %448 = arith.mulf %445, %447 : vector<16x256xf32>
    %449 = arith.addf %441, %448 : vector<16x256xf32>
    %c0_113 = arith.constant 0 : index
    %c0_114 = arith.constant 0 : index
    %450 = vector.load %arg11[%c0_113, %c0_114] : memref<16x9xf32, #tpu.memory_space<vmem>>, vector<16x9xf32>
    %451 = vector.extract_strided_slice %450 {offsets = [0, 4], sizes = [16, 1], strides = [1, 1]} : vector<16x9xf32> to vector<16x1xf32>
    %452 = vector.broadcast %451 : vector<16x1xf32> to vector<16x256xf32>
    %453 = arith.mulf %378, %452 : vector<16x256xf32>
    %c17_i32_115 = arith.constant 17 : i32
    %454 = tpu.dynamic_rotate %378 by %c17_i32_115 dim 1 : vector<16x256xf32>, i32 -> vector<16x256xf32>
    %455 = vector.extract_strided_slice %0 {offsets = [0, 0], sizes = [1, 256], strides = [1, 1]} : vector<9x256xf32> to vector<1x256xf32>
    %456 = vector.broadcast %455 : vector<1x256xf32> to vector<16x256xf32>
    %457 = arith.mulf %454, %456 : vector<16x256xf32>
    %458 = vector.extract_strided_slice %450 {offsets = [0, 0], sizes = [16, 1], strides = [1, 1]} : vector<16x9xf32> to vector<16x1xf32>
    %459 = vector.broadcast %458 : vector<16x1xf32> to vector<16x256xf32>
    %460 = arith.mulf %457, %459 : vector<16x256xf32>
    %461 = arith.addf %453, %460 : vector<16x256xf32>
    %c16_i32_116 = arith.constant 16 : i32
    %462 = tpu.dynamic_rotate %378 by %c16_i32_116 dim 1 : vector<16x256xf32>, i32 -> vector<16x256xf32>
    %463 = vector.extract_strided_slice %0 {offsets = [1, 0], sizes = [1, 256], strides = [1, 1]} : vector<9x256xf32> to vector<1x256xf32>
    %464 = vector.broadcast %463 : vector<1x256xf32> to vector<16x256xf32>
    %465 = arith.mulf %462, %464 : vector<16x256xf32>
    %466 = vector.extract_strided_slice %450 {offsets = [0, 1], sizes = [16, 1], strides = [1, 1]} : vector<16x9xf32> to vector<16x1xf32>
    %467 = vector.broadcast %466 : vector<16x1xf32> to vector<16x256xf32>
    %468 = arith.mulf %465, %467 : vector<16x256xf32>
    %469 = arith.addf %461, %468 : vector<16x256xf32>
    %c15_i32_117 = arith.constant 15 : i32
    %470 = tpu.dynamic_rotate %378 by %c15_i32_117 dim 1 : vector<16x256xf32>, i32 -> vector<16x256xf32>
    %471 = vector.extract_strided_slice %0 {offsets = [2, 0], sizes = [1, 256], strides = [1, 1]} : vector<9x256xf32> to vector<1x256xf32>
    %472 = vector.broadcast %471 : vector<1x256xf32> to vector<16x256xf32>
    %473 = arith.mulf %470, %472 : vector<16x256xf32>
    %474 = vector.extract_strided_slice %450 {offsets = [0, 2], sizes = [16, 1], strides = [1, 1]} : vector<16x9xf32> to vector<16x1xf32>
    %475 = vector.broadcast %474 : vector<16x1xf32> to vector<16x256xf32>
    %476 = arith.mulf %473, %475 : vector<16x256xf32>
    %477 = arith.addf %469, %476 : vector<16x256xf32>
    %c1_i32_118 = arith.constant 1 : i32
    %478 = tpu.dynamic_rotate %378 by %c1_i32_118 dim 1 : vector<16x256xf32>, i32 -> vector<16x256xf32>
    %479 = vector.extract_strided_slice %0 {offsets = [3, 0], sizes = [1, 256], strides = [1, 1]} : vector<9x256xf32> to vector<1x256xf32>
    %480 = vector.broadcast %479 : vector<1x256xf32> to vector<16x256xf32>
    %481 = arith.mulf %478, %480 : vector<16x256xf32>
    %482 = vector.extract_strided_slice %450 {offsets = [0, 3], sizes = [16, 1], strides = [1, 1]} : vector<16x9xf32> to vector<16x1xf32>
    %483 = vector.broadcast %482 : vector<16x1xf32> to vector<16x256xf32>
    %484 = arith.mulf %481, %483 : vector<16x256xf32>
    %485 = arith.addf %477, %484 : vector<16x256xf32>
    %c255_i32_119 = arith.constant 255 : i32
    %486 = tpu.dynamic_rotate %378 by %c255_i32_119 dim 1 : vector<16x256xf32>, i32 -> vector<16x256xf32>
    %487 = vector.extract_strided_slice %0 {offsets = [5, 0], sizes = [1, 256], strides = [1, 1]} : vector<9x256xf32> to vector<1x256xf32>
    %488 = vector.broadcast %487 : vector<1x256xf32> to vector<16x256xf32>
    %489 = arith.mulf %486, %488 : vector<16x256xf32>
    %490 = vector.extract_strided_slice %450 {offsets = [0, 5], sizes = [16, 1], strides = [1, 1]} : vector<16x9xf32> to vector<16x1xf32>
    %491 = vector.broadcast %490 : vector<16x1xf32> to vector<16x256xf32>
    %492 = arith.mulf %489, %491 : vector<16x256xf32>
    %493 = arith.addf %485, %492 : vector<16x256xf32>
    %c241_i32_120 = arith.constant 241 : i32
    %494 = tpu.dynamic_rotate %378 by %c241_i32_120 dim 1 : vector<16x256xf32>, i32 -> vector<16x256xf32>
    %495 = vector.extract_strided_slice %0 {offsets = [6, 0], sizes = [1, 256], strides = [1, 1]} : vector<9x256xf32> to vector<1x256xf32>
    %496 = vector.broadcast %495 : vector<1x256xf32> to vector<16x256xf32>
    %497 = arith.mulf %494, %496 : vector<16x256xf32>
    %498 = vector.extract_strided_slice %450 {offsets = [0, 6], sizes = [16, 1], strides = [1, 1]} : vector<16x9xf32> to vector<16x1xf32>
    %499 = vector.broadcast %498 : vector<16x1xf32> to vector<16x256xf32>
    %500 = arith.mulf %497, %499 : vector<16x256xf32>
    %501 = arith.addf %493, %500 : vector<16x256xf32>
    %c240_i32_121 = arith.constant 240 : i32
    %502 = tpu.dynamic_rotate %378 by %c240_i32_121 dim 1 : vector<16x256xf32>, i32 -> vector<16x256xf32>
    %503 = vector.extract_strided_slice %0 {offsets = [7, 0], sizes = [1, 256], strides = [1, 1]} : vector<9x256xf32> to vector<1x256xf32>
    %504 = vector.broadcast %503 : vector<1x256xf32> to vector<16x256xf32>
    %505 = arith.mulf %502, %504 : vector<16x256xf32>
    %506 = vector.extract_strided_slice %450 {offsets = [0, 7], sizes = [16, 1], strides = [1, 1]} : vector<16x9xf32> to vector<16x1xf32>
    %507 = vector.broadcast %506 : vector<16x1xf32> to vector<16x256xf32>
    %508 = arith.mulf %505, %507 : vector<16x256xf32>
    %509 = arith.addf %501, %508 : vector<16x256xf32>
    %c239_i32_122 = arith.constant 239 : i32
    %510 = tpu.dynamic_rotate %378 by %c239_i32_122 dim 1 : vector<16x256xf32>, i32 -> vector<16x256xf32>
    %511 = vector.extract_strided_slice %0 {offsets = [8, 0], sizes = [1, 256], strides = [1, 1]} : vector<9x256xf32> to vector<1x256xf32>
    %512 = vector.broadcast %511 : vector<1x256xf32> to vector<16x256xf32>
    %513 = arith.mulf %510, %512 : vector<16x256xf32>
    %514 = vector.extract_strided_slice %450 {offsets = [0, 8], sizes = [16, 1], strides = [1, 1]} : vector<16x9xf32> to vector<16x1xf32>
    %515 = vector.broadcast %514 : vector<16x1xf32> to vector<16x256xf32>
    %516 = arith.mulf %513, %515 : vector<16x256xf32>
    %517 = arith.addf %509, %516 : vector<16x256xf32>
    %c0_123 = arith.constant 0 : index
    %c0_124 = arith.constant 0 : index
    %518 = vector.load %arg12[%c0_123, %c0_124] : memref<16x9xf32, #tpu.memory_space<vmem>>, vector<16x9xf32>
    %519 = vector.extract_strided_slice %518 {offsets = [0, 4], sizes = [16, 1], strides = [1, 1]} : vector<16x9xf32> to vector<16x1xf32>
    %520 = vector.broadcast %519 : vector<16x1xf32> to vector<16x256xf32>
    %521 = arith.mulf %381, %520 : vector<16x256xf32>
    %c17_i32_125 = arith.constant 17 : i32
    %522 = tpu.dynamic_rotate %381 by %c17_i32_125 dim 1 : vector<16x256xf32>, i32 -> vector<16x256xf32>
    %523 = vector.extract_strided_slice %0 {offsets = [0, 0], sizes = [1, 256], strides = [1, 1]} : vector<9x256xf32> to vector<1x256xf32>
    %524 = vector.broadcast %523 : vector<1x256xf32> to vector<16x256xf32>
    %525 = arith.mulf %522, %524 : vector<16x256xf32>
    %526 = vector.extract_strided_slice %518 {offsets = [0, 0], sizes = [16, 1], strides = [1, 1]} : vector<16x9xf32> to vector<16x1xf32>
    %527 = vector.broadcast %526 : vector<16x1xf32> to vector<16x256xf32>
    %528 = arith.mulf %525, %527 : vector<16x256xf32>
    %529 = arith.addf %521, %528 : vector<16x256xf32>
    %c16_i32_126 = arith.constant 16 : i32
    %530 = tpu.dynamic_rotate %381 by %c16_i32_126 dim 1 : vector<16x256xf32>, i32 -> vector<16x256xf32>
    %531 = vector.extract_strided_slice %0 {offsets = [1, 0], sizes = [1, 256], strides = [1, 1]} : vector<9x256xf32> to vector<1x256xf32>
    %532 = vector.broadcast %531 : vector<1x256xf32> to vector<16x256xf32>
    %533 = arith.mulf %530, %532 : vector<16x256xf32>
    %534 = vector.extract_strided_slice %518 {offsets = [0, 1], sizes = [16, 1], strides = [1, 1]} : vector<16x9xf32> to vector<16x1xf32>
    %535 = vector.broadcast %534 : vector<16x1xf32> to vector<16x256xf32>
    %536 = arith.mulf %533, %535 : vector<16x256xf32>
    %537 = arith.addf %529, %536 : vector<16x256xf32>
    %c15_i32_127 = arith.constant 15 : i32
    %538 = tpu.dynamic_rotate %381 by %c15_i32_127 dim 1 : vector<16x256xf32>, i32 -> vector<16x256xf32>
    %539 = vector.extract_strided_slice %0 {offsets = [2, 0], sizes = [1, 256], strides = [1, 1]} : vector<9x256xf32> to vector<1x256xf32>
    %540 = vector.broadcast %539 : vector<1x256xf32> to vector<16x256xf32>
    %541 = arith.mulf %538, %540 : vector<16x256xf32>
    %542 = vector.extract_strided_slice %518 {offsets = [0, 2], sizes = [16, 1], strides = [1, 1]} : vector<16x9xf32> to vector<16x1xf32>
    %543 = vector.broadcast %542 : vector<16x1xf32> to vector<16x256xf32>
    %544 = arith.mulf %541, %543 : vector<16x256xf32>
    %545 = arith.addf %537, %544 : vector<16x256xf32>
    %c1_i32_128 = arith.constant 1 : i32
    %546 = tpu.dynamic_rotate %381 by %c1_i32_128 dim 1 : vector<16x256xf32>, i32 -> vector<16x256xf32>
    %547 = vector.extract_strided_slice %0 {offsets = [3, 0], sizes = [1, 256], strides = [1, 1]} : vector<9x256xf32> to vector<1x256xf32>
    %548 = vector.broadcast %547 : vector<1x256xf32> to vector<16x256xf32>
    %549 = arith.mulf %546, %548 : vector<16x256xf32>
    %550 = vector.extract_strided_slice %518 {offsets = [0, 3], sizes = [16, 1], strides = [1, 1]} : vector<16x9xf32> to vector<16x1xf32>
    %551 = vector.broadcast %550 : vector<16x1xf32> to vector<16x256xf32>
    %552 = arith.mulf %549, %551 : vector<16x256xf32>
    %553 = arith.addf %545, %552 : vector<16x256xf32>
    %c255_i32_129 = arith.constant 255 : i32
    %554 = tpu.dynamic_rotate %381 by %c255_i32_129 dim 1 : vector<16x256xf32>, i32 -> vector<16x256xf32>
    %555 = vector.extract_strided_slice %0 {offsets = [5, 0], sizes = [1, 256], strides = [1, 1]} : vector<9x256xf32> to vector<1x256xf32>
    %556 = vector.broadcast %555 : vector<1x256xf32> to vector<16x256xf32>
    %557 = arith.mulf %554, %556 : vector<16x256xf32>
    %558 = vector.extract_strided_slice %518 {offsets = [0, 5], sizes = [16, 1], strides = [1, 1]} : vector<16x9xf32> to vector<16x1xf32>
    %559 = vector.broadcast %558 : vector<16x1xf32> to vector<16x256xf32>
    %560 = arith.mulf %557, %559 : vector<16x256xf32>
    %561 = arith.addf %553, %560 : vector<16x256xf32>
    %c241_i32_130 = arith.constant 241 : i32
    %562 = tpu.dynamic_rotate %381 by %c241_i32_130 dim 1 : vector<16x256xf32>, i32 -> vector<16x256xf32>
    %563 = vector.extract_strided_slice %0 {offsets = [6, 0], sizes = [1, 256], strides = [1, 1]} : vector<9x256xf32> to vector<1x256xf32>
    %564 = vector.broadcast %563 : vector<1x256xf32> to vector<16x256xf32>
    %565 = arith.mulf %562, %564 : vector<16x256xf32>
    %566 = vector.extract_strided_slice %518 {offsets = [0, 6], sizes = [16, 1], strides = [1, 1]} : vector<16x9xf32> to vector<16x1xf32>
    %567 = vector.broadcast %566 : vector<16x1xf32> to vector<16x256xf32>
    %568 = arith.mulf %565, %567 : vector<16x256xf32>
    %569 = arith.addf %561, %568 : vector<16x256xf32>
    %c240_i32_131 = arith.constant 240 : i32
    %570 = tpu.dynamic_rotate %381 by %c240_i32_131 dim 1 : vector<16x256xf32>, i32 -> vector<16x256xf32>
    %571 = vector.extract_strided_slice %0 {offsets = [7, 0], sizes = [1, 256], strides = [1, 1]} : vector<9x256xf32> to vector<1x256xf32>
    %572 = vector.broadcast %571 : vector<1x256xf32> to vector<16x256xf32>
    %573 = arith.mulf %570, %572 : vector<16x256xf32>
    %574 = vector.extract_strided_slice %518 {offsets = [0, 7], sizes = [16, 1], strides = [1, 1]} : vector<16x9xf32> to vector<16x1xf32>
    %575 = vector.broadcast %574 : vector<16x1xf32> to vector<16x256xf32>
    %576 = arith.mulf %573, %575 : vector<16x256xf32>
    %577 = arith.addf %569, %576 : vector<16x256xf32>
    %c239_i32_132 = arith.constant 239 : i32
    %578 = tpu.dynamic_rotate %381 by %c239_i32_132 dim 1 : vector<16x256xf32>, i32 -> vector<16x256xf32>
    %579 = vector.extract_strided_slice %0 {offsets = [8, 0], sizes = [1, 256], strides = [1, 1]} : vector<9x256xf32> to vector<1x256xf32>
    %580 = vector.broadcast %579 : vector<1x256xf32> to vector<16x256xf32>
    %581 = arith.mulf %578, %580 : vector<16x256xf32>
    %582 = vector.extract_strided_slice %518 {offsets = [0, 8], sizes = [16, 1], strides = [1, 1]} : vector<16x9xf32> to vector<16x1xf32>
    %583 = vector.broadcast %582 : vector<16x1xf32> to vector<16x256xf32>
    %584 = arith.mulf %581, %583 : vector<16x256xf32>
    %585 = arith.addf %577, %584 : vector<16x256xf32>
    %586 = arith.mulf %449, %449 : vector<16x256xf32>
    %cst_133 = arith.constant dense<0.000000e+00> : vector<16xf32>
    %587 = vector.multi_reduction <add>, %586, %cst_133 [1] : vector<16x256xf32> to vector<16xf32>
    %588 = vector.shape_cast %587 : vector<16xf32> to vector<16x1xf32>
    %cst_134 = arith.constant 1.000000e-24 : f32
    %589 = vector.broadcast %cst_134 : f32 to vector<16x1xf32>
    %590 = arith.maximumf %588, %589 : vector<16x1xf32>
    %591 = math.rsqrt %590 : vector<16x1xf32>
    %592 = vector.broadcast %591 : vector<16x1xf32> to vector<16x256xf32>
    %593 = arith.mulf %449, %592 : vector<16x256xf32>
    %594 = arith.mulf %517, %517 : vector<16x256xf32>
    %cst_135 = arith.constant dense<0.000000e+00> : vector<16xf32>
    %595 = vector.multi_reduction <add>, %594, %cst_135 [1] : vector<16x256xf32> to vector<16xf32>
    %596 = vector.shape_cast %595 : vector<16xf32> to vector<16x1xf32>
    %cst_136 = arith.constant 1.000000e-24 : f32
    %597 = vector.broadcast %cst_136 : f32 to vector<16x1xf32>
    %598 = arith.maximumf %596, %597 : vector<16x1xf32>
    %599 = math.rsqrt %598 : vector<16x1xf32>
    %600 = vector.broadcast %599 : vector<16x1xf32> to vector<16x256xf32>
    %601 = arith.mulf %517, %600 : vector<16x256xf32>
    %c0_137 = arith.constant 0 : index
    %c0_138 = arith.constant 0 : index
    %602 = vector.load %arg14[%c0_137, %c0_138] : memref<16x1xf32, #tpu.memory_space<vmem>>, vector<16x1xf32>
    %603 = vector.broadcast %602 : vector<16x1xf32> to vector<16x256xf32>
    %604 = arith.mulf %593, %603 : vector<16x256xf32>
    %605 = arith.truncf %604 : vector<16x256xf32> to vector<16x256xbf16>
    %606 = arith.truncf %601 : vector<16x256xf32> to vector<16x256xbf16>
    %cst_139 = arith.constant dense<0.000000e+00> : vector<16x16xf32>
    %607 = tpu.matmul %605, %606, %cst_139 {dimension_numbers = #tpu.dot_dimension_numbers<[1], [1], [0], [0], [0, 0, 1, 0], [], []>} : vector<16x256xbf16>, vector<16x256xbf16>, vector<16x16xf32> -> vector<16x16xf32>
    %c0_140 = arith.constant 0 : index
    %c0_141 = arith.constant 0 : index
    %608 = vector.load %arg15[%c0_140, %c0_141] : memref<16x16xf32, #tpu.memory_space<vmem>>, vector<16x16xf32>
    %609 = arith.addf %607, %608 : vector<16x16xf32>
    %cst_142 = arith.constant dense<0xFF800000> : vector<16xf32>
    %610 = vector.multi_reduction <maximumf>, %609, %cst_142 [1] : vector<16x16xf32> to vector<16xf32>
    %611 = vector.shape_cast %610 : vector<16xf32> to vector<16x1xf32>
    %612 = vector.broadcast %611 : vector<16x1xf32> to vector<16x16xf32>
    %613 = arith.subf %609, %612 : vector<16x16xf32>
    %614 = math.exp %613 : vector<16x16xf32>
    %cst_143 = arith.constant dense<0.000000e+00> : vector<16xf32>
    %615 = vector.multi_reduction <add>, %614, %cst_143 [1] : vector<16x16xf32> to vector<16xf32>
    %616 = vector.shape_cast %615 : vector<16xf32> to vector<16x1xf32>
    %617 = vector.broadcast %616 : vector<16x1xf32> to vector<16x16xf32>
    %618 = arith.divf %614, %617 : vector<16x16xf32>
    %619 = arith.truncf %618 : vector<16x16xf32> to vector<16x16xbf16>
    %620 = arith.truncf %585 : vector<16x256xf32> to vector<16x256xbf16>
    %cst_144 = arith.constant dense<0.000000e+00> : vector<16x256xf32>
    %621 = tpu.matmul %619, %620, %cst_144 {dimension_numbers = #tpu.dot_dimension_numbers<[1], [0], [0], [1], [0, 0, 1, 1], [], []>} : vector<16x16xbf16>, vector<16x256xbf16>, vector<16x256xf32> -> vector<16x256xf32>
    %c0_145 = arith.constant 0 : index
    %c0_146 = arith.constant 0 : index
    %622 = vector.load %arg13[%c0_145, %c0_146] : memref<16x16xf32, #tpu.memory_space<vmem>>, vector<16x16xf32>
    %623 = arith.truncf %622 : vector<16x16xf32> to vector<16x16xbf16>
    %624 = arith.truncf %621 : vector<16x256xf32> to vector<16x256xbf16>
    %cst_147 = arith.constant dense<0.000000e+00> : vector<16x256xf32>
    %625 = tpu.matmul %623, %624, %cst_147 {dimension_numbers = #tpu.dot_dimension_numbers<[1], [0], [0], [1], [0, 0, 1, 1], [], []>} : vector<16x16xbf16>, vector<16x256xbf16>, vector<16x256xf32> -> vector<16x256xf32>
    %626 = arith.addf %114, %625 : vector<16x256xf32>
    %c17_i32_148 = arith.constant 17 : i32
    %627 = tpu.dynamic_rotate %370 by %c17_i32_148 dim 1 : vector<16x256xf32>, i32 -> vector<16x256xf32>
    %628 = vector.extract_strided_slice %0 {offsets = [0, 0], sizes = [1, 256], strides = [1, 1]} : vector<9x256xf32> to vector<1x256xf32>
    %629 = vector.broadcast %628 : vector<1x256xf32> to vector<16x256xf32>
    %630 = arith.mulf %627, %629 : vector<16x256xf32>
    %c16_i32_149 = arith.constant 16 : i32
    %631 = tpu.dynamic_rotate %370 by %c16_i32_149 dim 1 : vector<16x256xf32>, i32 -> vector<16x256xf32>
    %632 = vector.extract_strided_slice %0 {offsets = [1, 0], sizes = [1, 256], strides = [1, 1]} : vector<9x256xf32> to vector<1x256xf32>
    %633 = vector.broadcast %632 : vector<1x256xf32> to vector<16x256xf32>
    %634 = arith.mulf %631, %633 : vector<16x256xf32>
    %c15_i32_150 = arith.constant 15 : i32
    %635 = tpu.dynamic_rotate %370 by %c15_i32_150 dim 1 : vector<16x256xf32>, i32 -> vector<16x256xf32>
    %636 = vector.extract_strided_slice %0 {offsets = [2, 0], sizes = [1, 256], strides = [1, 1]} : vector<9x256xf32> to vector<1x256xf32>
    %637 = vector.broadcast %636 : vector<1x256xf32> to vector<16x256xf32>
    %638 = arith.mulf %635, %637 : vector<16x256xf32>
    %639 = tpu.concatenate %630, %634, %638 in 0 : vector<16x256xf32>, vector<16x256xf32>, vector<16x256xf32> -> vector<48x256xf32>
    %640 = arith.truncf %639 : vector<48x256xf32> to vector<48x256xbf16>
    %c0_151 = arith.constant 0 : index
    %c0_152 = arith.constant 0 : index
    %c0_153 = arith.constant 0 : index
    %641 = vector.load %arg16[%c0_151, %c0_152, %c0_153] : memref<3x16x48xf32, #tpu.memory_space<vmem>>, vector<1x16x48xf32>
    %642 = vector.shape_cast %641 : vector<1x16x48xf32> to vector<16x48xf32>
    %643 = arith.truncf %642 : vector<16x48xf32> to vector<16x48xbf16>
    %cst_154 = arith.constant dense<0.000000e+00> : vector<16x256xf32>
    %644 = tpu.matmul %643, %640, %cst_154 {dimension_numbers = #tpu.dot_dimension_numbers<[1], [0], [0], [1], [0, 0, 1, 1], [], []>} : vector<16x48xbf16>, vector<48x256xbf16>, vector<16x256xf32> -> vector<16x256xf32>
    %c1_i32_155 = arith.constant 1 : i32
    %645 = tpu.dynamic_rotate %370 by %c1_i32_155 dim 1 : vector<16x256xf32>, i32 -> vector<16x256xf32>
    %646 = vector.extract_strided_slice %0 {offsets = [3, 0], sizes = [1, 256], strides = [1, 1]} : vector<9x256xf32> to vector<1x256xf32>
    %647 = vector.broadcast %646 : vector<1x256xf32> to vector<16x256xf32>
    %648 = arith.mulf %645, %647 : vector<16x256xf32>
    %c255_i32_156 = arith.constant 255 : i32
    %649 = tpu.dynamic_rotate %370 by %c255_i32_156 dim 1 : vector<16x256xf32>, i32 -> vector<16x256xf32>
    %650 = vector.extract_strided_slice %0 {offsets = [5, 0], sizes = [1, 256], strides = [1, 1]} : vector<9x256xf32> to vector<1x256xf32>
    %651 = vector.broadcast %650 : vector<1x256xf32> to vector<16x256xf32>
    %652 = arith.mulf %649, %651 : vector<16x256xf32>
    %653 = tpu.concatenate %648, %370, %652 in 0 : vector<16x256xf32>, vector<16x256xf32>, vector<16x256xf32> -> vector<48x256xf32>
    %654 = arith.truncf %653 : vector<48x256xf32> to vector<48x256xbf16>
    %c1_157 = arith.constant 1 : index
    %c0_158 = arith.constant 0 : index
    %c0_159 = arith.constant 0 : index
    %655 = vector.load %arg16[%c1_157, %c0_158, %c0_159] : memref<3x16x48xf32, #tpu.memory_space<vmem>>, vector<1x16x48xf32>
    %656 = vector.shape_cast %655 : vector<1x16x48xf32> to vector<16x48xf32>
    %657 = arith.truncf %656 : vector<16x48xf32> to vector<16x48xbf16>
    %cst_160 = arith.constant dense<0.000000e+00> : vector<16x256xf32>
    %658 = tpu.matmul %657, %654, %cst_160 {dimension_numbers = #tpu.dot_dimension_numbers<[1], [0], [0], [1], [0, 0, 1, 1], [], []>} : vector<16x48xbf16>, vector<48x256xbf16>, vector<16x256xf32> -> vector<16x256xf32>
    %659 = arith.addf %644, %658 : vector<16x256xf32>
    %c241_i32_161 = arith.constant 241 : i32
    %660 = tpu.dynamic_rotate %370 by %c241_i32_161 dim 1 : vector<16x256xf32>, i32 -> vector<16x256xf32>
    %661 = vector.extract_strided_slice %0 {offsets = [6, 0], sizes = [1, 256], strides = [1, 1]} : vector<9x256xf32> to vector<1x256xf32>
    %662 = vector.broadcast %661 : vector<1x256xf32> to vector<16x256xf32>
    %663 = arith.mulf %660, %662 : vector<16x256xf32>
    %c240_i32_162 = arith.constant 240 : i32
    %664 = tpu.dynamic_rotate %370 by %c240_i32_162 dim 1 : vector<16x256xf32>, i32 -> vector<16x256xf32>
    %665 = vector.extract_strided_slice %0 {offsets = [7, 0], sizes = [1, 256], strides = [1, 1]} : vector<9x256xf32> to vector<1x256xf32>
    %666 = vector.broadcast %665 : vector<1x256xf32> to vector<16x256xf32>
    %667 = arith.mulf %664, %666 : vector<16x256xf32>
    %c239_i32_163 = arith.constant 239 : i32
    %668 = tpu.dynamic_rotate %370 by %c239_i32_163 dim 1 : vector<16x256xf32>, i32 -> vector<16x256xf32>
    %669 = vector.extract_strided_slice %0 {offsets = [8, 0], sizes = [1, 256], strides = [1, 1]} : vector<9x256xf32> to vector<1x256xf32>
    %670 = vector.broadcast %669 : vector<1x256xf32> to vector<16x256xf32>
    %671 = arith.mulf %668, %670 : vector<16x256xf32>
    %672 = tpu.concatenate %663, %667, %671 in 0 : vector<16x256xf32>, vector<16x256xf32>, vector<16x256xf32> -> vector<48x256xf32>
    %673 = arith.truncf %672 : vector<48x256xf32> to vector<48x256xbf16>
    %c2_164 = arith.constant 2 : index
    %c0_165 = arith.constant 0 : index
    %c0_166 = arith.constant 0 : index
    %674 = vector.load %arg16[%c2_164, %c0_165, %c0_166] : memref<3x16x48xf32, #tpu.memory_space<vmem>>, vector<1x16x48xf32>
    %675 = vector.shape_cast %674 : vector<1x16x48xf32> to vector<16x48xf32>
    %676 = arith.truncf %675 : vector<16x48xf32> to vector<16x48xbf16>
    %cst_167 = arith.constant dense<0.000000e+00> : vector<16x256xf32>
    %677 = tpu.matmul %676, %673, %cst_167 {dimension_numbers = #tpu.dot_dimension_numbers<[1], [0], [0], [1], [0, 0, 1, 1], [], []>} : vector<16x48xbf16>, vector<48x256xbf16>, vector<16x256xf32> -> vector<16x256xf32>
    %678 = arith.addf %659, %677 : vector<16x256xf32>
    %c17_i32_168 = arith.constant 17 : i32
    %679 = tpu.dynamic_rotate %626 by %c17_i32_168 dim 1 : vector<16x256xf32>, i32 -> vector<16x256xf32>
    %680 = vector.extract_strided_slice %0 {offsets = [0, 0], sizes = [1, 256], strides = [1, 1]} : vector<9x256xf32> to vector<1x256xf32>
    %681 = vector.broadcast %680 : vector<1x256xf32> to vector<16x256xf32>
    %682 = arith.mulf %679, %681 : vector<16x256xf32>
    %c16_i32_169 = arith.constant 16 : i32
    %683 = tpu.dynamic_rotate %626 by %c16_i32_169 dim 1 : vector<16x256xf32>, i32 -> vector<16x256xf32>
    %684 = vector.extract_strided_slice %0 {offsets = [1, 0], sizes = [1, 256], strides = [1, 1]} : vector<9x256xf32> to vector<1x256xf32>
    %685 = vector.broadcast %684 : vector<1x256xf32> to vector<16x256xf32>
    %686 = arith.mulf %683, %685 : vector<16x256xf32>
    %c15_i32_170 = arith.constant 15 : i32
    %687 = tpu.dynamic_rotate %626 by %c15_i32_170 dim 1 : vector<16x256xf32>, i32 -> vector<16x256xf32>
    %688 = vector.extract_strided_slice %0 {offsets = [2, 0], sizes = [1, 256], strides = [1, 1]} : vector<9x256xf32> to vector<1x256xf32>
    %689 = vector.broadcast %688 : vector<1x256xf32> to vector<16x256xf32>
    %690 = arith.mulf %687, %689 : vector<16x256xf32>
    %691 = tpu.concatenate %682, %686, %690 in 0 : vector<16x256xf32>, vector<16x256xf32>, vector<16x256xf32> -> vector<48x256xf32>
    %692 = arith.truncf %691 : vector<48x256xf32> to vector<48x256xbf16>
    %c0_171 = arith.constant 0 : index
    %c0_172 = arith.constant 0 : index
    %c0_173 = arith.constant 0 : index
    %693 = vector.load %arg17[%c0_171, %c0_172, %c0_173] : memref<3x16x48xf32, #tpu.memory_space<vmem>>, vector<1x16x48xf32>
    %694 = vector.shape_cast %693 : vector<1x16x48xf32> to vector<16x48xf32>
    %695 = arith.truncf %694 : vector<16x48xf32> to vector<16x48xbf16>
    %cst_174 = arith.constant dense<0.000000e+00> : vector<16x256xf32>
    %696 = tpu.matmul %695, %692, %cst_174 {dimension_numbers = #tpu.dot_dimension_numbers<[1], [0], [0], [1], [0, 0, 1, 1], [], []>} : vector<16x48xbf16>, vector<48x256xbf16>, vector<16x256xf32> -> vector<16x256xf32>
    %c1_i32_175 = arith.constant 1 : i32
    %697 = tpu.dynamic_rotate %626 by %c1_i32_175 dim 1 : vector<16x256xf32>, i32 -> vector<16x256xf32>
    %698 = vector.extract_strided_slice %0 {offsets = [3, 0], sizes = [1, 256], strides = [1, 1]} : vector<9x256xf32> to vector<1x256xf32>
    %699 = vector.broadcast %698 : vector<1x256xf32> to vector<16x256xf32>
    %700 = arith.mulf %697, %699 : vector<16x256xf32>
    %c255_i32_176 = arith.constant 255 : i32
    %701 = tpu.dynamic_rotate %626 by %c255_i32_176 dim 1 : vector<16x256xf32>, i32 -> vector<16x256xf32>
    %702 = vector.extract_strided_slice %0 {offsets = [5, 0], sizes = [1, 256], strides = [1, 1]} : vector<9x256xf32> to vector<1x256xf32>
    %703 = vector.broadcast %702 : vector<1x256xf32> to vector<16x256xf32>
    %704 = arith.mulf %701, %703 : vector<16x256xf32>
    %705 = tpu.concatenate %700, %626, %704 in 0 : vector<16x256xf32>, vector<16x256xf32>, vector<16x256xf32> -> vector<48x256xf32>
    %706 = arith.truncf %705 : vector<48x256xf32> to vector<48x256xbf16>
    %c1_177 = arith.constant 1 : index
    %c0_178 = arith.constant 0 : index
    %c0_179 = arith.constant 0 : index
    %707 = vector.load %arg17[%c1_177, %c0_178, %c0_179] : memref<3x16x48xf32, #tpu.memory_space<vmem>>, vector<1x16x48xf32>
    %708 = vector.shape_cast %707 : vector<1x16x48xf32> to vector<16x48xf32>
    %709 = arith.truncf %708 : vector<16x48xf32> to vector<16x48xbf16>
    %cst_180 = arith.constant dense<0.000000e+00> : vector<16x256xf32>
    %710 = tpu.matmul %709, %706, %cst_180 {dimension_numbers = #tpu.dot_dimension_numbers<[1], [0], [0], [1], [0, 0, 1, 1], [], []>} : vector<16x48xbf16>, vector<48x256xbf16>, vector<16x256xf32> -> vector<16x256xf32>
    %711 = arith.addf %696, %710 : vector<16x256xf32>
    %c241_i32_181 = arith.constant 241 : i32
    %712 = tpu.dynamic_rotate %626 by %c241_i32_181 dim 1 : vector<16x256xf32>, i32 -> vector<16x256xf32>
    %713 = vector.extract_strided_slice %0 {offsets = [6, 0], sizes = [1, 256], strides = [1, 1]} : vector<9x256xf32> to vector<1x256xf32>
    %714 = vector.broadcast %713 : vector<1x256xf32> to vector<16x256xf32>
    %715 = arith.mulf %712, %714 : vector<16x256xf32>
    %c240_i32_182 = arith.constant 240 : i32
    %716 = tpu.dynamic_rotate %626 by %c240_i32_182 dim 1 : vector<16x256xf32>, i32 -> vector<16x256xf32>
    %717 = vector.extract_strided_slice %0 {offsets = [7, 0], sizes = [1, 256], strides = [1, 1]} : vector<9x256xf32> to vector<1x256xf32>
    %718 = vector.broadcast %717 : vector<1x256xf32> to vector<16x256xf32>
    %719 = arith.mulf %716, %718 : vector<16x256xf32>
    %c239_i32_183 = arith.constant 239 : i32
    %720 = tpu.dynamic_rotate %626 by %c239_i32_183 dim 1 : vector<16x256xf32>, i32 -> vector<16x256xf32>
    %721 = vector.extract_strided_slice %0 {offsets = [8, 0], sizes = [1, 256], strides = [1, 1]} : vector<9x256xf32> to vector<1x256xf32>
    %722 = vector.broadcast %721 : vector<1x256xf32> to vector<16x256xf32>
    %723 = arith.mulf %720, %722 : vector<16x256xf32>
    %724 = tpu.concatenate %715, %719, %723 in 0 : vector<16x256xf32>, vector<16x256xf32>, vector<16x256xf32> -> vector<48x256xf32>
    %725 = arith.truncf %724 : vector<48x256xf32> to vector<48x256xbf16>
    %c2_184 = arith.constant 2 : index
    %c0_185 = arith.constant 0 : index
    %c0_186 = arith.constant 0 : index
    %726 = vector.load %arg17[%c2_184, %c0_185, %c0_186] : memref<3x16x48xf32, #tpu.memory_space<vmem>>, vector<1x16x48xf32>
    %727 = vector.shape_cast %726 : vector<1x16x48xf32> to vector<16x48xf32>
    %728 = arith.truncf %727 : vector<16x48xf32> to vector<16x48xbf16>
    %cst_187 = arith.constant dense<0.000000e+00> : vector<16x256xf32>
    %729 = tpu.matmul %728, %725, %cst_187 {dimension_numbers = #tpu.dot_dimension_numbers<[1], [0], [0], [1], [0, 0, 1, 1], [], []>} : vector<16x48xbf16>, vector<48x256xbf16>, vector<16x256xf32> -> vector<16x256xf32>
    %730 = arith.addf %711, %729 : vector<16x256xf32>
    %731 = arith.addf %678, %730 : vector<16x256xf32>
    %c0_188 = arith.constant 0 : index
    %c0_189 = arith.constant 0 : index
    %732 = vector.load %arg18[%c0_188, %c0_189] : memref<16x1xf32, #tpu.memory_space<vmem>>, vector<16x1xf32>
    %733 = vector.broadcast %732 : vector<16x1xf32> to vector<16x256xf32>
    %734 = arith.addf %731, %733 : vector<16x256xf32>
    %c17_i32_190 = arith.constant 17 : i32
    %735 = tpu.dynamic_rotate %734 by %c17_i32_190 dim 1 : vector<16x256xf32>, i32 -> vector<16x256xf32>
    %736 = vector.extract_strided_slice %0 {offsets = [0, 0], sizes = [1, 256], strides = [1, 1]} : vector<9x256xf32> to vector<1x256xf32>
    %737 = vector.broadcast %736 : vector<1x256xf32> to vector<16x256xf32>
    %738 = arith.mulf %735, %737 : vector<16x256xf32>
    %c16_i32_191 = arith.constant 16 : i32
    %739 = tpu.dynamic_rotate %734 by %c16_i32_191 dim 1 : vector<16x256xf32>, i32 -> vector<16x256xf32>
    %740 = vector.extract_strided_slice %0 {offsets = [1, 0], sizes = [1, 256], strides = [1, 1]} : vector<9x256xf32> to vector<1x256xf32>
    %741 = vector.broadcast %740 : vector<1x256xf32> to vector<16x256xf32>
    %742 = arith.mulf %739, %741 : vector<16x256xf32>
    %c15_i32_192 = arith.constant 15 : i32
    %743 = tpu.dynamic_rotate %734 by %c15_i32_192 dim 1 : vector<16x256xf32>, i32 -> vector<16x256xf32>
    %744 = vector.extract_strided_slice %0 {offsets = [2, 0], sizes = [1, 256], strides = [1, 1]} : vector<9x256xf32> to vector<1x256xf32>
    %745 = vector.broadcast %744 : vector<1x256xf32> to vector<16x256xf32>
    %746 = arith.mulf %743, %745 : vector<16x256xf32>
    %747 = tpu.concatenate %738, %742, %746 in 0 : vector<16x256xf32>, vector<16x256xf32>, vector<16x256xf32> -> vector<48x256xf32>
    %748 = arith.truncf %747 : vector<48x256xf32> to vector<48x256xbf16>
    %c0_193 = arith.constant 0 : index
    %c0_194 = arith.constant 0 : index
    %c0_195 = arith.constant 0 : index
    %749 = vector.load %arg19[%c0_193, %c0_194, %c0_195] : memref<3x16x48xf32, #tpu.memory_space<vmem>>, vector<1x16x48xf32>
    %750 = vector.shape_cast %749 : vector<1x16x48xf32> to vector<16x48xf32>
    %751 = arith.truncf %750 : vector<16x48xf32> to vector<16x48xbf16>
    %cst_196 = arith.constant dense<0.000000e+00> : vector<16x256xf32>
    %752 = tpu.matmul %751, %748, %cst_196 {dimension_numbers = #tpu.dot_dimension_numbers<[1], [0], [0], [1], [0, 0, 1, 1], [], []>} : vector<16x48xbf16>, vector<48x256xbf16>, vector<16x256xf32> -> vector<16x256xf32>
    %c1_i32_197 = arith.constant 1 : i32
    %753 = tpu.dynamic_rotate %734 by %c1_i32_197 dim 1 : vector<16x256xf32>, i32 -> vector<16x256xf32>
    %754 = vector.extract_strided_slice %0 {offsets = [3, 0], sizes = [1, 256], strides = [1, 1]} : vector<9x256xf32> to vector<1x256xf32>
    %755 = vector.broadcast %754 : vector<1x256xf32> to vector<16x256xf32>
    %756 = arith.mulf %753, %755 : vector<16x256xf32>
    %c255_i32_198 = arith.constant 255 : i32
    %757 = tpu.dynamic_rotate %734 by %c255_i32_198 dim 1 : vector<16x256xf32>, i32 -> vector<16x256xf32>
    %758 = vector.extract_strided_slice %0 {offsets = [5, 0], sizes = [1, 256], strides = [1, 1]} : vector<9x256xf32> to vector<1x256xf32>
    %759 = vector.broadcast %758 : vector<1x256xf32> to vector<16x256xf32>
    %760 = arith.mulf %757, %759 : vector<16x256xf32>
    %761 = tpu.concatenate %756, %734, %760 in 0 : vector<16x256xf32>, vector<16x256xf32>, vector<16x256xf32> -> vector<48x256xf32>
    %762 = arith.truncf %761 : vector<48x256xf32> to vector<48x256xbf16>
    %c1_199 = arith.constant 1 : index
    %c0_200 = arith.constant 0 : index
    %c0_201 = arith.constant 0 : index
    %763 = vector.load %arg19[%c1_199, %c0_200, %c0_201] : memref<3x16x48xf32, #tpu.memory_space<vmem>>, vector<1x16x48xf32>
    %764 = vector.shape_cast %763 : vector<1x16x48xf32> to vector<16x48xf32>
    %765 = arith.truncf %764 : vector<16x48xf32> to vector<16x48xbf16>
    %cst_202 = arith.constant dense<0.000000e+00> : vector<16x256xf32>
    %766 = tpu.matmul %765, %762, %cst_202 {dimension_numbers = #tpu.dot_dimension_numbers<[1], [0], [0], [1], [0, 0, 1, 1], [], []>} : vector<16x48xbf16>, vector<48x256xbf16>, vector<16x256xf32> -> vector<16x256xf32>
    %767 = arith.addf %752, %766 : vector<16x256xf32>
    %c241_i32_203 = arith.constant 241 : i32
    %768 = tpu.dynamic_rotate %734 by %c241_i32_203 dim 1 : vector<16x256xf32>, i32 -> vector<16x256xf32>
    %769 = vector.extract_strided_slice %0 {offsets = [6, 0], sizes = [1, 256], strides = [1, 1]} : vector<9x256xf32> to vector<1x256xf32>
    %770 = vector.broadcast %769 : vector<1x256xf32> to vector<16x256xf32>
    %771 = arith.mulf %768, %770 : vector<16x256xf32>
    %c240_i32_204 = arith.constant 240 : i32
    %772 = tpu.dynamic_rotate %734 by %c240_i32_204 dim 1 : vector<16x256xf32>, i32 -> vector<16x256xf32>
    %773 = vector.extract_strided_slice %0 {offsets = [7, 0], sizes = [1, 256], strides = [1, 1]} : vector<9x256xf32> to vector<1x256xf32>
    %774 = vector.broadcast %773 : vector<1x256xf32> to vector<16x256xf32>
    %775 = arith.mulf %772, %774 : vector<16x256xf32>
    %c239_i32_205 = arith.constant 239 : i32
    %776 = tpu.dynamic_rotate %734 by %c239_i32_205 dim 1 : vector<16x256xf32>, i32 -> vector<16x256xf32>
    %777 = vector.extract_strided_slice %0 {offsets = [8, 0], sizes = [1, 256], strides = [1, 1]} : vector<9x256xf32> to vector<1x256xf32>
    %778 = vector.broadcast %777 : vector<1x256xf32> to vector<16x256xf32>
    %779 = arith.mulf %776, %778 : vector<16x256xf32>
    %780 = tpu.concatenate %771, %775, %779 in 0 : vector<16x256xf32>, vector<16x256xf32>, vector<16x256xf32> -> vector<48x256xf32>
    %781 = arith.truncf %780 : vector<48x256xf32> to vector<48x256xbf16>
    %c2_206 = arith.constant 2 : index
    %c0_207 = arith.constant 0 : index
    %c0_208 = arith.constant 0 : index
    %782 = vector.load %arg19[%c2_206, %c0_207, %c0_208] : memref<3x16x48xf32, #tpu.memory_space<vmem>>, vector<1x16x48xf32>
    %783 = vector.shape_cast %782 : vector<1x16x48xf32> to vector<16x48xf32>
    %784 = arith.truncf %783 : vector<16x48xf32> to vector<16x48xbf16>
    %cst_209 = arith.constant dense<0.000000e+00> : vector<16x256xf32>
    %785 = tpu.matmul %784, %781, %cst_209 {dimension_numbers = #tpu.dot_dimension_numbers<[1], [0], [0], [1], [0, 0, 1, 1], [], []>} : vector<16x48xbf16>, vector<48x256xbf16>, vector<16x256xf32> -> vector<16x256xf32>
    %786 = arith.addf %767, %785 : vector<16x256xf32>
    %c0_210 = arith.constant 0 : index
    %c0_211 = arith.constant 0 : index
    %787 = vector.load %arg20[%c0_210, %c0_211] : memref<16x1xf32, #tpu.memory_space<vmem>>, vector<16x1xf32>
    %788 = vector.broadcast %787 : vector<16x1xf32> to vector<16x256xf32>
    %789 = arith.addf %786, %788 : vector<16x256xf32>
    %790 = arith.negf %789 : vector<16x256xf32>
    %791 = math.exp %790 : vector<16x256xf32>
    %cst_212 = arith.constant 1.000000e+00 : f32
    %792 = vector.broadcast %cst_212 : f32 to vector<16x256xf32>
    %793 = arith.addf %792, %791 : vector<16x256xf32>
    %794 = arith.divf %792, %793 : vector<16x256xf32>
    %c17_i32_213 = arith.constant 17 : i32
    %795 = tpu.dynamic_rotate %734 by %c17_i32_213 dim 1 : vector<16x256xf32>, i32 -> vector<16x256xf32>
    %796 = vector.extract_strided_slice %0 {offsets = [0, 0], sizes = [1, 256], strides = [1, 1]} : vector<9x256xf32> to vector<1x256xf32>
    %797 = vector.broadcast %796 : vector<1x256xf32> to vector<16x256xf32>
    %798 = arith.mulf %795, %797 : vector<16x256xf32>
    %c16_i32_214 = arith.constant 16 : i32
    %799 = tpu.dynamic_rotate %734 by %c16_i32_214 dim 1 : vector<16x256xf32>, i32 -> vector<16x256xf32>
    %800 = vector.extract_strided_slice %0 {offsets = [1, 0], sizes = [1, 256], strides = [1, 1]} : vector<9x256xf32> to vector<1x256xf32>
    %801 = vector.broadcast %800 : vector<1x256xf32> to vector<16x256xf32>
    %802 = arith.mulf %799, %801 : vector<16x256xf32>
    %c15_i32_215 = arith.constant 15 : i32
    %803 = tpu.dynamic_rotate %734 by %c15_i32_215 dim 1 : vector<16x256xf32>, i32 -> vector<16x256xf32>
    %804 = vector.extract_strided_slice %0 {offsets = [2, 0], sizes = [1, 256], strides = [1, 1]} : vector<9x256xf32> to vector<1x256xf32>
    %805 = vector.broadcast %804 : vector<1x256xf32> to vector<16x256xf32>
    %806 = arith.mulf %803, %805 : vector<16x256xf32>
    %807 = tpu.concatenate %798, %802, %806 in 0 : vector<16x256xf32>, vector<16x256xf32>, vector<16x256xf32> -> vector<48x256xf32>
    %808 = arith.truncf %807 : vector<48x256xf32> to vector<48x256xbf16>
    %c0_216 = arith.constant 0 : index
    %c0_217 = arith.constant 0 : index
    %c0_218 = arith.constant 0 : index
    %809 = vector.load %arg21[%c0_216, %c0_217, %c0_218] : memref<3x16x48xf32, #tpu.memory_space<vmem>>, vector<1x16x48xf32>
    %810 = vector.shape_cast %809 : vector<1x16x48xf32> to vector<16x48xf32>
    %811 = arith.truncf %810 : vector<16x48xf32> to vector<16x48xbf16>
    %cst_219 = arith.constant dense<0.000000e+00> : vector<16x256xf32>
    %812 = tpu.matmul %811, %808, %cst_219 {dimension_numbers = #tpu.dot_dimension_numbers<[1], [0], [0], [1], [0, 0, 1, 1], [], []>} : vector<16x48xbf16>, vector<48x256xbf16>, vector<16x256xf32> -> vector<16x256xf32>
    %c1_i32_220 = arith.constant 1 : i32
    %813 = tpu.dynamic_rotate %734 by %c1_i32_220 dim 1 : vector<16x256xf32>, i32 -> vector<16x256xf32>
    %814 = vector.extract_strided_slice %0 {offsets = [3, 0], sizes = [1, 256], strides = [1, 1]} : vector<9x256xf32> to vector<1x256xf32>
    %815 = vector.broadcast %814 : vector<1x256xf32> to vector<16x256xf32>
    %816 = arith.mulf %813, %815 : vector<16x256xf32>
    %c255_i32_221 = arith.constant 255 : i32
    %817 = tpu.dynamic_rotate %734 by %c255_i32_221 dim 1 : vector<16x256xf32>, i32 -> vector<16x256xf32>
    %818 = vector.extract_strided_slice %0 {offsets = [5, 0], sizes = [1, 256], strides = [1, 1]} : vector<9x256xf32> to vector<1x256xf32>
    %819 = vector.broadcast %818 : vector<1x256xf32> to vector<16x256xf32>
    %820 = arith.mulf %817, %819 : vector<16x256xf32>
    %821 = tpu.concatenate %816, %734, %820 in 0 : vector<16x256xf32>, vector<16x256xf32>, vector<16x256xf32> -> vector<48x256xf32>
    %822 = arith.truncf %821 : vector<48x256xf32> to vector<48x256xbf16>
    %c1_222 = arith.constant 1 : index
    %c0_223 = arith.constant 0 : index
    %c0_224 = arith.constant 0 : index
    %823 = vector.load %arg21[%c1_222, %c0_223, %c0_224] : memref<3x16x48xf32, #tpu.memory_space<vmem>>, vector<1x16x48xf32>
    %824 = vector.shape_cast %823 : vector<1x16x48xf32> to vector<16x48xf32>
    %825 = arith.truncf %824 : vector<16x48xf32> to vector<16x48xbf16>
    %cst_225 = arith.constant dense<0.000000e+00> : vector<16x256xf32>
    %826 = tpu.matmul %825, %822, %cst_225 {dimension_numbers = #tpu.dot_dimension_numbers<[1], [0], [0], [1], [0, 0, 1, 1], [], []>} : vector<16x48xbf16>, vector<48x256xbf16>, vector<16x256xf32> -> vector<16x256xf32>
    %827 = arith.addf %812, %826 : vector<16x256xf32>
    %c241_i32_226 = arith.constant 241 : i32
    %828 = tpu.dynamic_rotate %734 by %c241_i32_226 dim 1 : vector<16x256xf32>, i32 -> vector<16x256xf32>
    %829 = vector.extract_strided_slice %0 {offsets = [6, 0], sizes = [1, 256], strides = [1, 1]} : vector<9x256xf32> to vector<1x256xf32>
    %830 = vector.broadcast %829 : vector<1x256xf32> to vector<16x256xf32>
    %831 = arith.mulf %828, %830 : vector<16x256xf32>
    %c240_i32_227 = arith.constant 240 : i32
    %832 = tpu.dynamic_rotate %734 by %c240_i32_227 dim 1 : vector<16x256xf32>, i32 -> vector<16x256xf32>
    %833 = vector.extract_strided_slice %0 {offsets = [7, 0], sizes = [1, 256], strides = [1, 1]} : vector<9x256xf32> to vector<1x256xf32>
    %834 = vector.broadcast %833 : vector<1x256xf32> to vector<16x256xf32>
    %835 = arith.mulf %832, %834 : vector<16x256xf32>
    %c239_i32_228 = arith.constant 239 : i32
    %836 = tpu.dynamic_rotate %734 by %c239_i32_228 dim 1 : vector<16x256xf32>, i32 -> vector<16x256xf32>
    %837 = vector.extract_strided_slice %0 {offsets = [8, 0], sizes = [1, 256], strides = [1, 1]} : vector<9x256xf32> to vector<1x256xf32>
    %838 = vector.broadcast %837 : vector<1x256xf32> to vector<16x256xf32>
    %839 = arith.mulf %836, %838 : vector<16x256xf32>
    %840 = tpu.concatenate %831, %835, %839 in 0 : vector<16x256xf32>, vector<16x256xf32>, vector<16x256xf32> -> vector<48x256xf32>
    %841 = arith.truncf %840 : vector<48x256xf32> to vector<48x256xbf16>
    %c2_229 = arith.constant 2 : index
    %c0_230 = arith.constant 0 : index
    %c0_231 = arith.constant 0 : index
    %842 = vector.load %arg21[%c2_229, %c0_230, %c0_231] : memref<3x16x48xf32, #tpu.memory_space<vmem>>, vector<1x16x48xf32>
    %843 = vector.shape_cast %842 : vector<1x16x48xf32> to vector<16x48xf32>
    %844 = arith.truncf %843 : vector<16x48xf32> to vector<16x48xbf16>
    %cst_232 = arith.constant dense<0.000000e+00> : vector<16x256xf32>
    %845 = tpu.matmul %844, %841, %cst_232 {dimension_numbers = #tpu.dot_dimension_numbers<[1], [0], [0], [1], [0, 0, 1, 1], [], []>} : vector<16x48xbf16>, vector<48x256xbf16>, vector<16x256xf32> -> vector<16x256xf32>
    %846 = arith.addf %827, %845 : vector<16x256xf32>
    %c0_233 = arith.constant 0 : index
    %c0_234 = arith.constant 0 : index
    %847 = vector.load %arg22[%c0_233, %c0_234] : memref<16x1xf32, #tpu.memory_space<vmem>>, vector<16x1xf32>
    %848 = vector.broadcast %847 : vector<16x1xf32> to vector<16x256xf32>
    %849 = arith.addf %846, %848 : vector<16x256xf32>
    %850 = arith.negf %849 : vector<16x256xf32>
    %851 = math.exp %850 : vector<16x256xf32>
    %cst_235 = arith.constant 1.000000e+00 : f32
    %852 = vector.broadcast %cst_235 : f32 to vector<16x256xf32>
    %853 = arith.addf %852, %851 : vector<16x256xf32>
    %854 = arith.divf %852, %853 : vector<16x256xf32>
    %855 = arith.mulf %370, %794 : vector<16x256xf32>
    %856 = arith.mulf %626, %854 : vector<16x256xf32>
    %857 = arith.addf %855, %856 : vector<16x256xf32>
    %858 = arith.cmpf one, %857, %857 : vector<16x256xf32>
    %859 = math.absf %857 : vector<16x256xf32>
    %cst_236 = arith.constant 0x7F800000 : f32
    %860 = vector.broadcast %cst_236 : f32 to vector<16x256xf32>
    %861 = arith.cmpf oeq, %859, %860 : vector<16x256xf32>
    %862 = arith.ori %858, %861 : vector<16x256xi1>
    %cst_237 = arith.constant 9.99999974E-6 : f32
    %863 = vector.broadcast %cst_237 : f32 to vector<16x256xf32>
    %864 = arith.select %862, %863, %857 : vector<16x256xi1>, vector<16x256xf32>
    %c0_238 = arith.constant 0 : index
    %c0_239 = arith.constant 0 : index
    %c0_240 = arith.constant 0 : index
    %865 = vector.load %arg24[%c0_238, %c0_239, %c0_240] : memref<1x16x256xf32, #tpu.memory_space<vmem>>, vector<1x16x256xf32>
    %866 = vector.shape_cast %865 : vector<1x16x256xf32> to vector<16x256xf32>
    %867 = vector.shape_cast %864 : vector<16x256xf32> to vector<1x16x256xf32>
    tpu.vector_store %arg24[%c0_238, %c0_239, %c0_240], %867 {strides = array<i32>} : memref<1x16x256xf32, #tpu.memory_space<vmem>>, vector<1x16x256xf32>,
    return
  }
  func.func @transform_0(%arg0: i32) -> (i32, i32, i32) {
    %c0_i32 = arith.constant 0 : i32
    %c0_i32_0 = arith.constant 0 : i32
    %c0_i32_1 = arith.constant 0 : i32
    return %arg0, %c0_i32, %c0_i32_0 : i32, i32, i32
  }
  func.func @transform_1(%arg0: i32) -> (i32, i32, i32) {
    %c0_i32 = arith.constant 0 : i32
    %c0_i32_0 = arith.constant 0 : i32
    %c0_i32_1 = arith.constant 0 : i32
    return %arg0, %c0_i32, %c0_i32_0 : i32, i32, i32
  }
  func.func @transform_2(%arg0: i32) -> (i32, i32, i32) {
    %c0_i32 = arith.constant 0 : i32
    %c0_i32_0 = arith.constant 0 : i32
    %c0_i32_1 = arith.constant 0 : i32
    %c0_i32_2 = arith.constant 0 : i32
    return %c0_i32, %c0_i32_0, %c0_i32_1 : i32, i32, i32
  }
  func.func @transform_3(%arg0: i32) -> (i32, i32) {
    %c0_i32 = arith.constant 0 : i32
    %c0_i32_0 = arith.constant 0 : i32
    %c0_i32_1 = arith.constant 0 : i32
    return %c0_i32, %c0_i32_0 : i32, i32
  }
  func.func @transform_4(%arg0: i32) -> (i32, i32, i32) {
    %c0_i32 = arith.constant 0 : i32
    %c0_i32_0 = arith.constant 0 : i32
    %c0_i32_1 = arith.constant 0 : i32
    %c0_i32_2 = arith.constant 0 : i32
    return %c0_i32, %c0_i32_0, %c0_i32_1 : i32, i32, i32
  }
  func.func @transform_5(%arg0: i32) -> (i32, i32) {
    %c0_i32 = arith.constant 0 : i32
    %c0_i32_0 = arith.constant 0 : i32
    %c0_i32_1 = arith.constant 0 : i32
    return %c0_i32, %c0_i32_0 : i32, i32
  }
  func.func @transform_6(%arg0: i32) -> (i32, i32) {
    %c0_i32 = arith.constant 0 : i32
    %c0_i32_0 = arith.constant 0 : i32
    %c0_i32_1 = arith.constant 0 : i32
    return %c0_i32, %c0_i32_0 : i32, i32
  }
  func.func @transform_7(%arg0: i32) -> (i32, i32) {
    %c0_i32 = arith.constant 0 : i32
    %c0_i32_0 = arith.constant 0 : i32
    %c0_i32_1 = arith.constant 0 : i32
    return %c0_i32, %c0_i32_0 : i32, i32
  }
  func.func @transform_8(%arg0: i32) -> (i32, i32) {
    %c0_i32 = arith.constant 0 : i32
    %c0_i32_0 = arith.constant 0 : i32
    %c0_i32_1 = arith.constant 0 : i32
    return %c0_i32, %c0_i32_0 : i32, i32
  }
  func.func @transform_9(%arg0: i32) -> (i32, i32) {
    %c0_i32 = arith.constant 0 : i32
    %c0_i32_0 = arith.constant 0 : i32
    %c0_i32_1 = arith.constant 0 : i32
    return %c0_i32, %c0_i32_0 : i32, i32
  }
  func.func @transform_10(%arg0: i32) -> (i32, i32) {
    %c0_i32 = arith.constant 0 : i32
    %c0_i32_0 = arith.constant 0 : i32
    %c0_i32_1 = arith.constant 0 : i32
    return %c0_i32, %c0_i32_0 : i32, i32
  }
  func.func @transform_11(%arg0: i32) -> (i32, i32) {
    %c0_i32 = arith.constant 0 : i32
    %c0_i32_0 = arith.constant 0 : i32
    %c0_i32_1 = arith.constant 0 : i32
    return %c0_i32, %c0_i32_0 : i32, i32
  }
  func.func @transform_12(%arg0: i32) -> (i32, i32) {
    %c0_i32 = arith.constant 0 : i32
    %c0_i32_0 = arith.constant 0 : i32
    %c0_i32_1 = arith.constant 0 : i32
    return %c0_i32, %c0_i32_0 : i32, i32
  }
  func.func @transform_13(%arg0: i32) -> (i32, i32) {
    %c0_i32 = arith.constant 0 : i32
    %c0_i32_0 = arith.constant 0 : i32
    %c0_i32_1 = arith.constant 0 : i32
    return %c0_i32, %c0_i32_0 : i32, i32
  }
  func.func @transform_14(%arg0: i32) -> (i32, i32) {
    %c0_i32 = arith.constant 0 : i32
    %c0_i32_0 = arith.constant 0 : i32
    %c0_i32_1 = arith.constant 0 : i32
    return %c0_i32, %c0_i32_0 : i32, i32
  }
  func.func @transform_15(%arg0: i32) -> (i32, i32, i32) {
    %c0_i32 = arith.constant 0 : i32
    %c0_i32_0 = arith.constant 0 : i32
    %c0_i32_1 = arith.constant 0 : i32
    %c0_i32_2 = arith.constant 0 : i32
    return %c0_i32, %c0_i32_0, %c0_i32_1 : i32, i32, i32
  }
  func.func @transform_16(%arg0: i32) -> (i32, i32, i32) {
    %c0_i32 = arith.constant 0 : i32
    %c0_i32_0 = arith.constant 0 : i32
    %c0_i32_1 = arith.constant 0 : i32
    %c0_i32_2 = arith.constant 0 : i32
    return %c0_i32, %c0_i32_0, %c0_i32_1 : i32, i32, i32
  }
  func.func @transform_17(%arg0: i32) -> (i32, i32) {
    %c0_i32 = arith.constant 0 : i32
    %c0_i32_0 = arith.constant 0 : i32
    %c0_i32_1 = arith.constant 0 : i32
    return %c0_i32, %c0_i32_0 : i32, i32
  }
  func.func @transform_18(%arg0: i32) -> (i32, i32, i32) {
    %c0_i32 = arith.constant 0 : i32
    %c0_i32_0 = arith.constant 0 : i32
    %c0_i32_1 = arith.constant 0 : i32
    %c0_i32_2 = arith.constant 0 : i32
    return %c0_i32, %c0_i32_0, %c0_i32_1 : i32, i32, i32
  }
  func.func @transform_19(%arg0: i32) -> (i32, i32) {
    %c0_i32 = arith.constant 0 : i32
    %c0_i32_0 = arith.constant 0 : i32
    %c0_i32_1 = arith.constant 0 : i32
    return %c0_i32, %c0_i32_0 : i32, i32
  }
  func.func @transform_20(%arg0: i32) -> (i32, i32, i32) {
    %c0_i32 = arith.constant 0 : i32
    %c0_i32_0 = arith.constant 0 : i32
    %c0_i32_1 = arith.constant 0 : i32
    %c0_i32_2 = arith.constant 0 : i32
    return %c0_i32, %c0_i32_0, %c0_i32_1 : i32, i32, i32
  }
  func.func @transform_21(%arg0: i32) -> (i32, i32) {
    %c0_i32 = arith.constant 0 : i32
    %c0_i32_0 = arith.constant 0 : i32
    %c0_i32_1 = arith.constant 0 : i32
    return %c0_i32, %c0_i32_0 : i32, i32
  }
  func.func @transform_22(%arg0: i32) -> (i32, i32) {
    %c0_i32 = arith.constant 0 : i32
    %c0_i32_0 = arith.constant 0 : i32
    %c0_i32_1 = arith.constant 0 : i32
    return %c0_i32, %c0_i32_0 : i32, i32
  }
  func.func @transform_23(%arg0: i32) -> (i32, i32, i32) {
    %c0_i32 = arith.constant 0 : i32
    %c0_i32_0 = arith.constant 0 : i32
    %c0_i32_1 = arith.constant 0 : i32
    return %arg0, %c0_i32, %c0_i32_0 : i32, i32, i32
  }
}

</mosaic_0001>

<llo_original>
// kernel: fuse_block7.1
$region0: #{fuse_block7.1}
  #allocation0 [shape = 'u32[]', space=smem, size = 0x4, offset = 0x4, fixed_abs, tag = 'smem constant byte address 0x4 - core index']
  #allocation1 [shape = 'u32[72,128]{1,0:T(1,128)}', space=vmem, size = 0x9000, scoped, tag = 'internal scratch']
  %s0 = inlined_call_operand.vmem [shape: f32[2,16,256], index: 0, kind: input, shape index: {}]
  %s1 = inlined_call_operand.vmem [shape: f32[2,16,256], index: 1, kind: input, shape index: {}]
  %s2 = inlined_call_operand.vmem [shape: f32[3,16,48], index: 2, kind: input, shape index: {}]
  %s3 = inlined_call_operand.vmem [shape: f32[16,1], index: 3, kind: input, shape index: {}]
  %s4 = inlined_call_operand.vmem [shape: f32[3,16,48], index: 4, kind: input, shape index: {}]
  %s5 = inlined_call_operand.vmem [shape: f32[16,1], index: 5, kind: input, shape index: {}]
  %s6 = inlined_call_operand.vmem [shape: f32[16,16], index: 6, kind: input, shape index: {}]
  %s7 = inlined_call_operand.vmem [shape: f32[16,16], index: 7, kind: input, shape index: {}]
  %s8 = inlined_call_operand.vmem [shape: f32[16,16], index: 8, kind: input, shape index: {}]
  %s9 = inlined_call_operand.vmem [shape: f32[16,9], index: 9, kind: input, shape index: {}]
  %s10 = inlined_call_operand.vmem [shape: f32[16,9], index: 10, kind: input, shape index: {}]
  %s11 = inlined_call_operand.vmem [shape: f32[16,9], index: 11, kind: input, shape index: {}]
  %s12 = inlined_call_operand.vmem [shape: f32[16,16], index: 12, kind: input, shape index: {}]
  %s13 = inlined_call_operand.vmem [shape: f32[16,1], index: 13, kind: input, shape index: {}]
  %s14 = inlined_call_operand.vmem [shape: f32[16,16], index: 14, kind: input, shape index: {}]
  %s15 = inlined_call_operand.vmem [shape: f32[3,16,48], index: 15, kind: input, shape index: {}]
  %s16 = inlined_call_operand.vmem [shape: f32[3,16,48], index: 16, kind: input, shape index: {}]
  %s17 = inlined_call_operand.vmem [shape: f32[16,1], index: 17, kind: input, shape index: {}]
  %s18 = inlined_call_operand.vmem [shape: f32[3,16,48], index: 18, kind: input, shape index: {}]
  %s19 = inlined_call_operand.vmem [shape: f32[16,1], index: 19, kind: input, shape index: {}]
  %s20 = inlined_call_operand.vmem [shape: f32[3,16,48], index: 20, kind: input, shape index: {}]
  %s21 = inlined_call_operand.vmem [shape: f32[16,1], index: 21, kind: input, shape index: {}]
  %s22 = inlined_call_operand.vmem [shape: f32[9,256], index: 22, kind: input, shape index: {}]
  %s23 = inlined_call_operand.vmem [shape: f32[2,16,256], index: 23, kind: output, shape index: {}]
  %s24 = sld [smem:[#allocation0]]
  $region125: #{fuse_block7.1} parent=0
    _
  %s26 = ssub.s32 1, %s24
  %s27 = scalar_select 0, %s26, %s24
  loop: start=0, step=1, limit=4
  $region2: #{fuse_block7.1} parent=0 // loop_pre_header
    _
  $region3: #{fuse_block7.1} parent=0 // loop_header
    %s29 = sphi 0, %s33
    %p30 = scmp.ge.s32.totalorder %s29, 4
    %s39 = sphi 0, %s41
    %s42 = sphi 0, %s39
    %s43 = sphi 0, %s42
    %s59 = sphi 0, %s43
    %s65 = sphi 0, %s67
    %s68 = sphi 0, %s65
    %s69 = sphi 0, %s68
    %s85 = sphi 0, %s69
    %s89 = sphi 0, %s89
    %s91 = sphi 0, %s89
    %s92 = sphi 0, %s91
    %s106 = sphi 0, %s92
    %s110 = sphi 0, %s110
    %s112 = sphi 0, %s110
    %s113 = sphi 0, %s112
    %s127 = sphi 0, %s113
    %s131 = sphi 0, %s131
    %s133 = sphi 0, %s131
    %s134 = sphi 0, %s133
    %s148 = sphi 0, %s134
    %s152 = sphi 0, %s152
    %s154 = sphi 0, %s152
    %s155 = sphi 0, %s154
    %s169 = sphi 0, %s155
    %s173 = sphi 0, %s173
    %s175 = sphi 0, %s173
    %s176 = sphi 0, %s175
    %s190 = sphi 0, %s176
    %s194 = sphi 0, %s194
    %s196 = sphi 0, %s194
    %s197 = sphi 0, %s196
    %s211 = sphi 0, %s197
    %s215 = sphi 0, %s215
    %s217 = sphi 0, %s215
    %s218 = sphi 0, %s217
    %s232 = sphi 0, %s218
    %s236 = sphi 0, %s236
    %s238 = sphi 0, %s236
    %s239 = sphi 0, %s238
    %s253 = sphi 0, %s239
    %s257 = sphi 0, %s257
    %s259 = sphi 0, %s257
    %s260 = sphi 0, %s259
    %s274 = sphi 0, %s260
    %s278 = sphi 0, %s278
    %s280 = sphi 0, %s278
    %s281 = sphi 0, %s280
    %s295 = sphi 0, %s281
    %s299 = sphi 0, %s299
    %s301 = sphi 0, %s299
    %s302 = sphi 0, %s301
    %s316 = sphi 0, %s302
    %s320 = sphi 0, %s320
    %s322 = sphi 0, %s320
    %s323 = sphi 0, %s322
    %s337 = sphi 0, %s323
    %s341 = sphi 0, %s341
    %s343 = sphi 0, %s341
    %s344 = sphi 0, %s343
    %s358 = sphi 0, %s344
    %s362 = sphi 0, %s362
    %s364 = sphi 0, %s362
    %s365 = sphi 0, %s364
    %s379 = sphi 0, %s365
    %s383 = sphi 0, %s383
    %s385 = sphi 0, %s383
    %s386 = sphi 0, %s385
    %s400 = sphi 0, %s386
    %s404 = sphi 0, %s404
    %s406 = sphi 0, %s404
    %s407 = sphi 0, %s406
    %s421 = sphi 0, %s407
    %s425 = sphi 0, %s425
    %s427 = sphi 0, %s425
    %s428 = sphi 0, %s427
    %s442 = sphi 0, %s428
    %s446 = sphi 0, %s446
    %s448 = sphi 0, %s446
    %s449 = sphi 0, %s448
    %s463 = sphi 0, %s449
    %s467 = sphi 0, %s467
    %s469 = sphi 0, %s467
    %s470 = sphi 0, %s469
    %s484 = sphi 0, %s470
    %s488 = sphi 0, %s488
    %s490 = sphi 0, %s488
    %s491 = sphi 0, %s490
    %s505 = sphi 0, %s491
    %s509 = sphi 0, %s509
    %s511 = sphi 0, %s509
    %s512 = sphi 0, %s511
    %s526 = sphi 0, %s512
    %s532 = sphi 0, %s534
    %s535 = sphi 0, %s532
    %s536 = sphi 0, %s535
    %s552 = sphi 0, %s536
  $region4: #{fuse_block7.1} parent=0 // loop_header_branch
    %32 = sbr.rel (%p30) target = $region8
  $region5: #{fuse_block7.1} parent=0 // loop_body
    %s34 = ssub.s32 %s29, 1
    %s35 = ssub.s32 %s29, 2
    %s36 = sadd.s32 %s29, 1
    %s37 = ssub.s32 %s29, %s36
    %p38 = scmp.eq.s32.totalorder %s37, 0
    %s40 = sadd.s32 %s39, 1
    %s41 = scalar_select %p38, %s39, %s40
    %p44 = pneg %p38
    %p45 = scmp.eq.s32.totalorder %s29, 1
    %p46 = por %p44, %p45
    %p47 = scmp.ne.s32.totalorder %s39, %s42
    %p48 = scmp.eq.s32.totalorder %s29, 0
    %p49 = por %p47, %p48
    %p50 = scmp.ne.s32.totalorder %s39, %s42
    %p51 = scmp.eq.s32.totalorder %s34, 1
    %p52 = por %p50, %p51
    %p53 = scmp.ne.s32.totalorder %s42, %s43
    %p54 = scmp.eq.s32.totalorder %s34, 0
    %p55 = por %p53, %p54
    %p56 = scmp.ne.s32.totalorder %s42, %s43
    %p57 = scmp.eq.s32.totalorder %s35, 1
    %p58 = por %p56, %p57
    %p60 = scmp.ne.s32.totalorder %s43, %s59
    %p61 = scmp.eq.s32.totalorder %s35, 0
    %p62 = por %p60, %p61
    %s63 = ssub.s32 %s29, %s36
    %p64 = scmp.eq.s32.totalorder %s63, 0
    %s66 = sadd.s32 %s65, 1
    %s67 = scalar_select %p64, %s65, %s66
    %p70 = pneg %p64
    %p71 = scmp.eq.s32.totalorder %s29, 1
    %p72 = por %p70, %p71
    %p73 = scmp.ne.s32.totalorder %s65, %s68
    %p74 = scmp.eq.s32.totalorder %s29, 0
    %p75 = por %p73, %p74
    %p76 = scmp.ne.s32.totalorder %s65, %s68
    %p77 = scmp.eq.s32.totalorder %s34, 1
    %p78 = por %p76, %p77
    %p79 = scmp.ne.s32.totalorder %s68, %s69
    %p80 = scmp.eq.s32.totalorder %s34, 0
    %p81 = por %p79, %p80
    %p82 = scmp.ne.s32.totalorder %s68, %s69
    %p83 = scmp.eq.s32.totalorder %s35, 1
    %p84 = por %p82, %p83
    %p86 = scmp.ne.s32.totalorder %s69, %s85
    %p87 = scmp.eq.s32.totalorder %s35, 0
    %p88 = por %p86, %p87
    %s90 = sadd.s32 %s89, 1
    %p93 = scmp.eq.s32.totalorder %s29, 1
    %p94 = scmp.ne.s32.totalorder %s89, %s91
    %p95 = scmp.eq.s32.totalorder %s29, 0
    %p96 = por %p94, %p95
    %p97 = scmp.ne.s32.totalorder %s89, %s91
    %p98 = scmp.eq.s32.totalorder %s34, 1
    %p99 = por %p97, %p98
    %p100 = scmp.ne.s32.totalorder %s91, %s92
    %p101 = scmp.eq.s32.totalorder %s34, 0
    %p102 = por %p100, %p101
    %p103 = scmp.ne.s32.totalorder %s91, %s92
    %p104 = scmp.eq.s32.totalorder %s35, 1
    %p105 = por %p103, %p104
    %p107 = scmp.ne.s32.totalorder %s92, %s106
    %p108 = scmp.eq.s32.totalorder %s35, 0
    %p109 = por %p107, %p108
    %s111 = sadd.s32 %s110, 1
    %p114 = scmp.eq.s32.totalorder %s29, 1
    %p115 = scmp.ne.s32.totalorder %s110, %s112
    %p116 = scmp.eq.s32.totalorder %s29, 0
    %p117 = por %p115, %p116
    %p118 = scmp.ne.s32.totalorder %s110, %s112
    %p119 = scmp.eq.s32.totalorder %s34, 1
    %p120 = por %p118, %p119
    %p121 = scmp.ne.s32.totalorder %s112, %s113
    %p122 = scmp.eq.s32.totalorder %s34, 0
    %p123 = por %p121, %p122
    %p124 = scmp.ne.s32.totalorder %s112, %s113
    %p125 = scmp.eq.s32.totalorder %s35, 1
    %p126 = por %p124, %p125
    %p128 = scmp.ne.s32.totalorder %s113, %s127
    %p129 = scmp.eq.s32.totalorder %s35, 0
    %p130 = por %p128, %p129
    %s132 = sadd.s32 %s131, 1
    %p135 = scmp.eq.s32.totalorder %s29, 1
    %p136 = scmp.ne.s32.totalorder %s131, %s133
    %p137 = scmp.eq.s32.totalorder %s29, 0
    %p138 = por %p136, %p137
    %p139 = scmp.ne.s32.totalorder %s131, %s133
    %p140 = scmp.eq.s32.totalorder %s34, 1
    %p141 = por %p139, %p140
    %p142 = scmp.ne.s32.totalorder %s133, %s134
    %p143 = scmp.eq.s32.totalorder %s34, 0
    %p144 = por %p142, %p143
    %p145 = scmp.ne.s32.totalorder %s133, %s134
    %p146 = scmp.eq.s32.totalorder %s35, 1
    %p147 = por %p145, %p146
    %p149 = scmp.ne.s32.totalorder %s134, %s148
    %p150 = scmp.eq.s32.totalorder %s35, 0
    %p151 = por %p149, %p150
    %s153 = sadd.s32 %s152, 1
    %p156 = scmp.eq.s32.totalorder %s29, 1
    %p157 = scmp.ne.s32.totalorder %s152, %s154
    %p158 = scmp.eq.s32.totalorder %s29, 0
    %p159 = por %p157, %p158
    %p160 = scmp.ne.s32.totalorder %s152, %s154
    %p161 = scmp.eq.s32.totalorder %s34, 1
    %p162 = por %p160, %p161
    %p163 = scmp.ne.s32.totalorder %s154, %s155
    %p164 = scmp.eq.s32.totalorder %s34, 0
    %p165 = por %p163, %p164
    %p166 = scmp.ne.s32.totalorder %s154, %s155
    %p167 = scmp.eq.s32.totalorder %s35, 1
    %p168 = por %p166, %p167
    %p170 = scmp.ne.s32.totalorder %s155, %s169
    %p171 = scmp.eq.s32.totalorder %s35, 0
    %p172 = por %p170, %p171
    %s174 = sadd.s32 %s173, 1
    %p177 = scmp.eq.s32.totalorder %s29, 1
    %p178 = scmp.ne.s32.totalorder %s173, %s175
    %p179 = scmp.eq.s32.totalorder %s29, 0
    %p180 = por %p178, %p179
    %p181 = scmp.ne.s32.totalorder %s173, %s175
    %p182 = scmp.eq.s32.totalorder %s34, 1
    %p183 = por %p181, %p182
    %p184 = scmp.ne.s32.totalorder %s175, %s176
    %p185 = scmp.eq.s32.totalorder %s34, 0
    %p186 = por %p184, %p185
    %p187 = scmp.ne.s32.totalorder %s175, %s176
    %p188 = scmp.eq.s32.totalorder %s35, 1
    %p189 = por %p187, %p188
    %p191 = scmp.ne.s32.totalorder %s176, %s190
    %p192 = scmp.eq.s32.totalorder %s35, 0
    %p193 = por %p191, %p192
    %s195 = sadd.s32 %s194, 1
    %p198 = scmp.eq.s32.totalorder %s29, 1
    %p199 = scmp.ne.s32.totalorder %s194, %s196
    %p200 = scmp.eq.s32.totalorder %s29, 0
    %p201 = por %p199, %p200
    %p202 = scmp.ne.s32.totalorder %s194, %s196
    %p203 = scmp.eq.s32.totalorder %s34, 1
    %p204 = por %p202, %p203
    %p205 = scmp.ne.s32.totalorder %s196, %s197
    %p206 = scmp.eq.s32.totalorder %s34, 0
    %p207 = por %p205, %p206
    %p208 = scmp.ne.s32.totalorder %s196, %s197
    %p209 = scmp.eq.s32.totalorder %s35, 1
    %p210 = por %p208, %p209
    %p212 = scmp.ne.s32.totalorder %s197, %s211
    %p213 = scmp.eq.s32.totalorder %s35, 0
    %p214 = por %p212, %p213
    %s216 = sadd.s32 %s215, 1
    %p219 = scmp.eq.s32.totalorder %s29, 1
    %p220 = scmp.ne.s32.totalorder %s215, %s217
    %p221 = scmp.eq.s32.totalorder %s29, 0
    %p222 = por %p220, %p221
    %p223 = scmp.ne.s32.totalorder %s215, %s217
    %p224 = scmp.eq.s32.totalorder %s34, 1
    %p225 = por %p223, %p224
    %p226 = scmp.ne.s32.totalorder %s217, %s218
    %p227 = scmp.eq.s32.totalorder %s34, 0
    %p228 = por %p226, %p227
    %p229 = scmp.ne.s32.totalorder %s217, %s218
    %p230 = scmp.eq.s32.totalorder %s35, 1
    %p231 = por %p229, %p230
    %p233 = scmp.ne.s32.totalorder %s218, %s232
    %p234 = scmp.eq.s32.totalorder %s35, 0
    %p235 = por %p233, %p234
    %s237 = sadd.s32 %s236, 1
    %p240 = scmp.eq.s32.totalorder %s29, 1
    %p241 = scmp.ne.s32.totalorder %s236, %s238
    %p242 = scmp.eq.s32.totalorder %s29, 0
    %p243 = por %p241, %p242
    %p244 = scmp.ne.s32.totalorder %s236, %s238
    %p245 = scmp.eq.s32.totalorder %s34, 1
    %p246 = por %p244, %p245
    %p247 = scmp.ne.s32.totalorder %s238, %s239
    %p248 = scmp.eq.s32.totalorder %s34, 0
    %p249 = por %p247, %p248
    %p250 = scmp.ne.s32.totalorder %s238, %s239
    %p251 = scmp.eq.s32.totalorder %s35, 1
    %p252 = por %p250, %p251
    %p254 = scmp.ne.s32.totalorder %s239, %s253
    %p255 = scmp.eq.s32.totalorder %s35, 0
    %p256 = por %p254, %p255
    %s258 = sadd.s32 %s257, 1
    %p261 = scmp.eq.s32.totalorder %s29, 1
    %p262 = scmp.ne.s32.totalorder %s257, %s259
    %p263 = scmp.eq.s32.totalorder %s29, 0
    %p264 = por %p262, %p263
    %p265 = scmp.ne.s32.totalorder %s257, %s259
    %p266 = scmp.eq.s32.totalorder %s34, 1
    %p267 = por %p265, %p266
    %p268 = scmp.ne.s32.totalorder %s259, %s260
    %p269 = scmp.eq.s32.totalorder %s34, 0
    %p270 = por %p268, %p269
    %p271 = scmp.ne.s32.totalorder %s259, %s260
    %p272 = scmp.eq.s32.totalorder %s35, 1
    %p273 = por %p271, %p272
    %p275 = scmp.ne.s32.totalorder %s260, %s274
    %p276 = scmp.eq.s32.totalorder %s35, 0
    %p277 = por %p275, %p276
    %s279 = sadd.s32 %s278, 1
    %p282 = scmp.eq.s32.totalorder %s29, 1
    %p283 = scmp.ne.s32.totalorder %s278, %s280
    %p284 = scmp.eq.s32.totalorder %s29, 0
    %p285 = por %p283, %p284
    %p286 = scmp.ne.s32.totalorder %s278, %s280
    %p287 = scmp.eq.s32.totalorder %s34, 1
    %p288 = por %p286, %p287
    %p289 = scmp.ne.s32.totalorder %s280, %s281
    %p290 = scmp.eq.s32.totalorder %s34, 0
    %p291 = por %p289, %p290
    %p292 = scmp.ne.s32.totalorder %s280, %s281
    %p293 = scmp.eq.s32.totalorder %s35, 1
    %p294 = por %p292, %p293
    %p296 = scmp.ne.s32.totalorder %s281, %s295
    %p297 = scmp.eq.s32.totalorder %s35, 0
    %p298 = por %p296, %p297
    %s300 = sadd.s32 %s299, 1
    %p303 = scmp.eq.s32.totalorder %s29, 1
    %p304 = scmp.ne.s32.totalorder %s299, %s301
    %p305 = scmp.eq.s32.totalorder %s29, 0
    %p306 = por %p304, %p305
    %p307 = scmp.ne.s32.totalorder %s299, %s301
    %p308 = scmp.eq.s32.totalorder %s34, 1
    %p309 = por %p307, %p308
    %p310 = scmp.ne.s32.totalorder %s301, %s302
    %p311 = scmp.eq.s32.totalorder %s34, 0
    %p312 = por %p310, %p311
    %p313 = scmp.ne.s32.totalorder %s301, %s302
    %p314 = scmp.eq.s32.totalorder %s35, 1
    %p315 = por %p313, %p314
    %p317 = scmp.ne.s32.totalorder %s302, %s316
    %p318 = scmp.eq.s32.totalorder %s35, 0
    %p319 = por %p317, %p318
    %s321 = sadd.s32 %s320, 1
    %p324 = scmp.eq.s32.totalorder %s29, 1
    %p325 = scmp.ne.s32.totalorder %s320, %s322
    %p326 = scmp.eq.s32.totalorder %s29, 0
    %p327 = por %p325, %p326
    %p328 = scmp.ne.s32.totalorder %s320, %s322
    %p329 = scmp.eq.s32.totalorder %s34, 1
    %p330 = por %p328, %p329
    %p331 = scmp.ne.s32.totalorder %s322, %s323
    %p332 = scmp.eq.s32.totalorder %s34, 0
    %p333 = por %p331, %p332
    %p334 = scmp.ne.s32.totalorder %s322, %s323
    %p335 = scmp.eq.s32.totalorder %s35, 1
    %p336 = por %p334, %p335
    %p338 = scmp.ne.s32.totalorder %s323, %s337
    %p339 = scmp.eq.s32.totalorder %s35, 0
    %p340 = por %p338, %p339
    %s342 = sadd.s32 %s341, 1
    %p345 = scmp.eq.s32.totalorder %s29, 1
    %p346 = scmp.ne.s32.totalorder %s341, %s343
    %p347 = scmp.eq.s32.totalorder %s29, 0
    %p348 = por %p346, %p347
    %p349 = scmp.ne.s32.totalorder %s341, %s343
    %p350 = scmp.eq.s32.totalorder %s34, 1
    %p351 = por %p349, %p350
    %p352 = scmp.ne.s32.totalorder %s343, %s344
    %p353 = scmp.eq.s32.totalorder %s34, 0
    %p354 = por %p352, %p353
    %p355 = scmp.ne.s32.totalorder %s343, %s344
    %p356 = scmp.eq.s32.totalorder %s35, 1
    %p357 = por %p355, %p356
    %p359 = scmp.ne.s32.totalorder %s344, %s358
    %p360 = scmp.eq.s32.totalorder %s35, 0
    %p361 = por %p359, %p360
    %s363 = sadd.s32 %s362, 1
    %p366 = scmp.eq.s32.totalorder %s29, 1
    %p367 = scmp.ne.s32.totalorder %s362, %s364
    %p368 = scmp.eq.s32.totalorder %s29, 0
    %p369 = por %p367, %p368
    %p370 = scmp.ne.s32.totalorder %s362, %s364
    %p371 = scmp.eq.s32.totalorder %s34, 1
    %p372 = por %p370, %p371
    %p373 = scmp.ne.s32.totalorder %s364, %s365
    %p374 = scmp.eq.s32.totalorder %s34, 0
    %p375 = por %p373, %p374
    %p376 = scmp.ne.s32.totalorder %s364, %s365
    %p377 = scmp.eq.s32.totalorder %s35, 1
    %p378 = por %p376, %p377
    %p380 = scmp.ne.s32.totalorder %s365, %s379
    %p381 = scmp.eq.s32.totalorder %s35, 0
    %p382 = por %p380, %p381
    %s384 = sadd.s32 %s383, 1
    %p387 = scmp.eq.s32.totalorder %s29, 1
    %p388 = scmp.ne.s32.totalorder %s383, %s385
    %p389 = scmp.eq.s32.totalorder %s29, 0
    %p390 = por %p388, %p389
    %p391 = scmp.ne.s32.totalorder %s383, %s385
    %p392 = scmp.eq.s32.totalorder %s34, 1
    %p393 = por %p391, %p392
    %p394 = scmp.ne.s32.totalorder %s385, %s386
    %p395 = scmp.eq.s32.totalorder %s34, 0
    %p396 = por %p394, %p395
    %p397 = scmp.ne.s32.totalorder %s385, %s386
    %p398 = scmp.eq.s32.totalorder %s35, 1
    %p399 = por %p397, %p398
    %p401 = scmp.ne.s32.totalorder %s386, %s400
    %p402 = scmp.eq.s32.totalorder %s35, 0
    %p403 = por %p401, %p402
    %s405 = sadd.s32 %s404, 1
    %p408 = scmp.eq.s32.totalorder %s29, 1
    %p409 = scmp.ne.s32.totalorder %s404, %s406
    %p410 = scmp.eq.s32.totalorder %s29, 0
    %p411 = por %p409, %p410
    %p412 = scmp.ne.s32.totalorder %s404, %s406
    %p413 = scmp.eq.s32.totalorder %s34, 1
    %p414 = por %p412, %p413
    %p415 = scmp.ne.s32.totalorder %s406, %s407
    %p416 = scmp.eq.s32.totalorder %s34, 0
    %p417 = por %p415, %p416
    %p418 = scmp.ne.s32.totalorder %s406, %s407
    %p419 = scmp.eq.s32.totalorder %s35, 1
    %p420 = por %p418, %p419
    %p422 = scmp.ne.s32.totalorder %s407, %s421
    %p423 = scmp.eq.s32.totalorder %s35, 0
    %p424 = por %p422, %p423
    %s426 = sadd.s32 %s425, 1
    %p429 = scmp.eq.s32.totalorder %s29, 1
    %p430 = scmp.ne.s32.totalorder %s425, %s427
    %p431 = scmp.eq.s32.totalorder %s29, 0
    %p432 = por %p430, %p431
    %p433 = scmp.ne.s32.totalorder %s425, %s427
    %p434 = scmp.eq.s32.totalorder %s34, 1
    %p435 = por %p433, %p434
    %p436 = scmp.ne.s32.totalorder %s427, %s428
    %p437 = scmp.eq.s32.totalorder %s34, 0
    %p438 = por %p436, %p437
    %p439 = scmp.ne.s32.totalorder %s427, %s428
    %p440 = scmp.eq.s32.totalorder %s35, 1
    %p441 = por %p439, %p440
    %p443 = scmp.ne.s32.totalorder %s428, %s442
    %p444 = scmp.eq.s32.totalorder %s35, 0
    %p445 = por %p443, %p444
    %s447 = sadd.s32 %s446, 1
    %p450 = scmp.eq.s32.totalorder %s29, 1
    %p451 = scmp.ne.s32.totalorder %s446, %s448
    %p452 = scmp.eq.s32.totalorder %s29, 0
    %p453 = por %p451, %p452
    %p454 = scmp.ne.s32.totalorder %s446, %s448
    %p455 = scmp.eq.s32.totalorder %s34, 1
    %p456 = por %p454, %p455
    %p457 = scmp.ne.s32.totalorder %s448, %s449
    %p458 = scmp.eq.s32.totalorder %s34, 0
    %p459 = por %p457, %p458
    %p460 = scmp.ne.s32.totalorder %s448, %s449
    %p461 = scmp.eq.s32.totalorder %s35, 1
    %p462 = por %p460, %p461
    %p464 = scmp.ne.s32.totalorder %s449, %s463
    %p465 = scmp.eq.s32.totalorder %s35, 0
    %p466 = por %p464, %p465
    %s468 = sadd.s32 %s467, 1
    %p471 = scmp.eq.s32.totalorder %s29, 1
    %p472 = scmp.ne.s32.totalorder %s467, %s469
    %p473 = scmp.eq.s32.totalorder %s29, 0
    %p474 = por %p472, %p473
    %p475 = scmp.ne.s32.totalorder %s467, %s469
    %p476 = scmp.eq.s32.totalorder %s34, 1
    %p477 = por %p475, %p476
    %p478 = scmp.ne.s32.totalorder %s469, %s470
    %p479 = scmp.eq.s32.totalorder %s34, 0
    %p480 = por %p478, %p479
    %p481 = scmp.ne.s32.totalorder %s469, %s470
    %p482 = scmp.eq.s32.totalorder %s35, 1
    %p483 = por %p481, %p482
    %p485 = scmp.ne.s32.totalorder %s470, %s484
    %p486 = scmp.eq.s32.totalorder %s35, 0
    %p487 = por %p485, %p486
    %s489 = sadd.s32 %s488, 1
    %p492 = scmp.eq.s32.totalorder %s29, 1
    %p493 = scmp.ne.s32.totalorder %s488, %s490
    %p494 = scmp.eq.s32.totalorder %s29, 0
    %p495 = por %p493, %p494
    %p496 = scmp.ne.s32.totalorder %s488, %s490
    %p497 = scmp.eq.s32.totalorder %s34, 1
    %p498 = por %p496, %p497
    %p499 = scmp.ne.s32.totalorder %s490, %s491
    %p500 = scmp.eq.s32.totalorder %s34, 0
    %p501 = por %p499, %p500
    %p502 = scmp.ne.s32.totalorder %s490, %s491
    %p503 = scmp.eq.s32.totalorder %s35, 1
    %p504 = por %p502, %p503
    %p506 = scmp.ne.s32.totalorder %s491, %s505
    %p507 = scmp.eq.s32.totalorder %s35, 0
    %p508 = por %p506, %p507
    %s510 = sadd.s32 %s509, 1
    %p513 = scmp.eq.s32.totalorder %s29, 1
    %p514 = scmp.ne.s32.totalorder %s509, %s511
    %p515 = scmp.eq.s32.totalorder %s29, 0
    %p516 = por %p514, %p515
    %p517 = scmp.ne.s32.totalorder %s509, %s511
    %p518 = scmp.eq.s32.totalorder %s34, 1
    %p519 = por %p517, %p518
    %p520 = scmp.ne.s32.totalorder %s511, %s512
    %p521 = scmp.eq.s32.totalorder %s34, 0
    %p522 = por %p520, %p521
    %p523 = scmp.ne.s32.totalorder %s511, %s512
    %p524 = scmp.eq.s32.totalorder %s35, 1
    %p525 = por %p523, %p524
    %p527 = scmp.ne.s32.totalorder %s512, %s526
    %p528 = scmp.eq.s32.totalorder %s35, 0
    %p529 = por %p527, %p528
    %s530 = ssub.s32 %s29, %s36
    %p531 = scmp.eq.s32.totalorder %s530, 0
    %s533 = sadd.s32 %s532, 1
    %s534 = scalar_select %p531, %s532, %s533
    %p537 = pneg %p531
    %p538 = scmp.eq.s32.totalorder %s29, 1
    %p539 = por %p537, %p538
    %p540 = scmp.ne.s32.totalorder %s532, %s535
    %p541 = scmp.eq.s32.totalorder %s29, 0
    %p542 = por %p540, %p541
    %p543 = scmp.ne.s32.totalorder %s532, %s535
    %p544 = scmp.eq.s32.totalorder %s34, 1
    %p545 = por %p543, %p544
    %p546 = scmp.ne.s32.totalorder %s535, %s536
    %p547 = scmp.eq.s32.totalorder %s34, 0
    %p548 = por %p546, %p547
    %p549 = scmp.ne.s32.totalorder %s535, %s536
    %p550 = scmp.eq.s32.totalorder %s35, 1
    %p551 = por %p549, %p550
    %p553 = scmp.ne.s32.totalorder %s536, %s552
    %p554 = scmp.eq.s32.totalorder %s35, 0
    %p555 = por %p553, %p554
    %p556 = scmp.le.s32.totalorder 1, %s29
    %p557 = scmp.lt.s32.totalorder %s29, 3
    %p558 = pnand %p556, %p557
    %p559 = pneg %p558
    // Predicated region
    $region9: #{fuse_block7.1} parent=5 // pred_check
      _
    $region10: #{fuse_block7.1} parent=5 // pred_check_branch
      %561 = sbr.rel (%p558) target = $region12
    $region11: #{fuse_block7.1} parent=5 // pred_region
      %s562 = ssub.s32 %s29, 1
      // Predicated region
      $region13: #{fuse_block7.1} parent=11 // pred_check
        %p563 = pneg %p102
      $region14: #{fuse_block7.1} parent=11 // pred_check_branch
        %565 = sbr.rel (%p563) target = $region16
      $region15: #{fuse_block7.1} parent=11 // pred_region
        _
      $region16: #{fuse_block7.1} parent=11 // pred_fallthru
        _
      // Predicated region
      $region17: #{fuse_block7.1} parent=11 // pred_check
        %p566 = pneg %p123
      $region18: #{fuse_block7.1} parent=11 // pred_check_branch
        %568 = sbr.rel (%p566) target = $region20
      $region19: #{fuse_block7.1} parent=11 // pred_region
        _
      $region20: #{fuse_block7.1} parent=11 // pred_fallthru
        _
      // Predicated region
      $region21: #{fuse_block7.1} parent=11 // pred_check
        %p569 = pneg %p144
      $region22: #{fuse_block7.1} parent=11 // pred_check_branch
        %571 = sbr.rel (%p569) target = $region24
      $region23: #{fuse_block7.1} parent=11 // pred_region
        _
      $region24: #{fuse_block7.1} parent=11 // pred_fallthru
        _
      // Predicated region
      $region25: #{fuse_block7.1} parent=11 // pred_check
        %p572 = pneg %p165
      $region26: #{fuse_block7.1} parent=11 // pred_check_branch
        %574 = sbr.rel (%p572) target = $region28
      $region27: #{fuse_block7.1} parent=11 // pred_region
        _
      $region28: #{fuse_block7.1} parent=11 // pred_fallthru
        _
      // Predicated region
      $region29: #{fuse_block7.1} parent=11 // pred_check
        %p575 = pneg %p186
      $region30: #{fuse_block7.1} parent=11 // pred_check_branch
        %577 = sbr.rel (%p575) target = $region32
      $region31: #{fuse_block7.1} parent=11 // pred_region
        _
      $region32: #{fuse_block7.1} parent=11 // pred_fallthru
        _
      // Predicated region
      $region33: #{fuse_block7.1} parent=11 // pred_check
        %p578 = pneg %p207
      $region34: #{fuse_block7.1} parent=11 // pred_check_branch
        %580 = sbr.rel (%p578) target = $region36
      $region35: #{fuse_block7.1} parent=11 // pred_region
        _
      $region36: #{fuse_block7.1} parent=11 // pred_fallthru
        _
      // Predicated region
      $region37: #{fuse_block7.1} parent=11 // pred_check
        %p581 = pneg %p228
      $region38: #{fuse_block7.1} parent=11 // pred_check_branch
        %583 = sbr.rel (%p581) target = $region40
      $region39: #{fuse_block7.1} parent=11 // pred_region
        _
      $region40: #{fuse_block7.1} parent=11 // pred_fallthru
        _
      // Predicated region
      $region41: #{fuse_block7.1} parent=11 // pred_check
        %p584 = pneg %p249
      $region42: #{fuse_block7.1} parent=11 // pred_check_branch
        %586 = sbr.rel (%p584) target = $region44
      $region43: #{fuse_block7.1} parent=11 // pred_region
        _
      $region44: #{fuse_block7.1} parent=11 // pred_fallthru
        _
      // Predicated region
      $region45: #{fuse_block7.1} parent=11 // pred_check
        %p587 = pneg %p270
      $region46: #{fuse_block7.1} parent=11 // pred_check_branch
        %589 = sbr.rel (%p587) target = $region48
      $region47: #{fuse_block7.1} parent=11 // pred_region
        _
      $region48: #{fuse_block7.1} parent=11 // pred_fallthru
        _
      // Predicated region
      $region49: #{fuse_block7.1} parent=11 // pred_check
        %p590 = pneg %p291
      $region50: #{fuse_block7.1} parent=11 // pred_check_branch
        %592 = sbr.rel (%p590) target = $region52
      $region51: #{fuse_block7.1} parent=11 // pred_region
        _
      $region52: #{fuse_block7.1} parent=11 // pred_fallthru
        _
      // Predicated region
      $region53: #{fuse_block7.1} parent=11 // pred_check
        %p593 = pneg %p312
      $region54: #{fuse_block7.1} parent=11 // pred_check_branch
        %595 = sbr.rel (%p593) target = $region56
      $region55: #{fuse_block7.1} parent=11 // pred_region
        _
      $region56: #{fuse_block7.1} parent=11 // pred_fallthru
        _
      // Predicated region
      $region57: #{fuse_block7.1} parent=11 // pred_check
        %p596 = pneg %p333
      $region58: #{fuse_block7.1} parent=11 // pred_check_branch
        %598 = sbr.rel (%p596) target = $region60
      $region59: #{fuse_block7.1} parent=11 // pred_region
        _
      $region60: #{fuse_block7.1} parent=11 // pred_fallthru
        _
      // Predicated region
      $region61: #{fuse_block7.1} parent=11 // pred_check
        %p599 = pneg %p354
      $region62: #{fuse_block7.1} parent=11 // pred_check_branch
        %601 = sbr.rel (%p599) target = $region64
      $region63: #{fuse_block7.1} parent=11 // pred_region
        _
      $region64: #{fuse_block7.1} parent=11 // pred_fallthru
        _
      // Predicated region
      $region65: #{fuse_block7.1} parent=11 // pred_check
        %p602 = pneg %p375
      $region66: #{fuse_block7.1} parent=11 // pred_check_branch
        %604 = sbr.rel (%p602) target = $region68
      $region67: #{fuse_block7.1} parent=11 // pred_region
        _
      $region68: #{fuse_block7.1} parent=11 // pred_fallthru
        _
      // Predicated region
      $region69: #{fuse_block7.1} parent=11 // pred_check
        %p605 = pneg %p396
      $region70: #{fuse_block7.1} parent=11 // pred_check_branch
        %607 = sbr.rel (%p605) target = $region72
      $region71: #{fuse_block7.1} parent=11 // pred_region
        _
      $region72: #{fuse_block7.1} parent=11 // pred_fallthru
        _
      // Predicated region
      $region73: #{fuse_block7.1} parent=11 // pred_check
        %p608 = pneg %p417
      $region74: #{fuse_block7.1} parent=11 // pred_check_branch
        %610 = sbr.rel (%p608) target = $region76
      $region75: #{fuse_block7.1} parent=11 // pred_region
        _
      $region76: #{fuse_block7.1} parent=11 // pred_fallthru
        _
      // Predicated region
      $region77: #{fuse_block7.1} parent=11 // pred_check
        %p611 = pneg %p438
      $region78: #{fuse_block7.1} parent=11 // pred_check_branch
        %613 = sbr.rel (%p611) target = $region80
      $region79: #{fuse_block7.1} parent=11 // pred_region
        _
      $region80: #{fuse_block7.1} parent=11 // pred_fallthru
        _
      // Predicated region
      $region81: #{fuse_block7.1} parent=11 // pred_check
        %p614 = pneg %p459
      $region82: #{fuse_block7.1} parent=11 // pred_check_branch
        %616 = sbr.rel (%p614) target = $region84
      $region83: #{fuse_block7.1} parent=11 // pred_region
        _
      $region84: #{fuse_block7.1} parent=11 // pred_fallthru
        _
      // Predicated region
      $region85: #{fuse_block7.1} parent=11 // pred_check
        %p617 = pneg %p480
      $region86: #{fuse_block7.1} parent=11 // pred_check_branch
        %619 = sbr.rel (%p617) target = $region88
      $region87: #{fuse_block7.1} parent=11 // pred_region
        _
      $region88: #{fuse_block7.1} parent=11 // pred_fallthru
        _
      // Predicated region
      $region89: #{fuse_block7.1} parent=11 // pred_check
        %p620 = pneg %p501
      $region90: #{fuse_block7.1} parent=11 // pred_check_branch
        %622 = sbr.rel (%p620) target = $region92
      $region91: #{fuse_block7.1} parent=11 // pred_region
        _
      $region92: #{fuse_block7.1} parent=11 // pred_fallthru
        _
      // Predicated region
      $region93: #{fuse_block7.1} parent=11 // pred_check
        %p623 = pneg %p522
      $region94: #{fuse_block7.1} parent=11 // pred_check_branch
        %625 = sbr.rel (%p623) target = $region96
      $region95: #{fuse_block7.1} parent=11 // pred_region
        _
      $region96: #{fuse_block7.1} parent=11 // pred_fallthru
        _
    $region12: #{fuse_block7.1} parent=5 // pred_fallthru
      _
    %p626 = scmp.lt.s32.totalorder %s29, 2
    // Predicated region
    $region97: #{fuse_block7.1} parent=5 // pred_check
      %p627 = pneg %p626
    $region98: #{fuse_block7.1} parent=5 // pred_check_branch
      %629 = sbr.rel (%p627) target = $region100
    $region99: #{fuse_block7.1} parent=5 // pred_region
      // Predicated region
      $region101: #{fuse_block7.1} parent=99 // pred_check
        %p630 = pneg %p49
      $region102: #{fuse_block7.1} parent=99 // pred_check_branch
        %632 = sbr.rel (%p630) target = $region104
      $region103: #{fuse_block7.1} parent=99 // pred_region
        %p633 = scmp.lt.s32.totalorder %s29, 1
        %s634 = scalar_select %p633, %s29, 1
        %s635 = smul.addr %s634, 4
        %s636 = smul.addr %s635, 8
        %s637 = scalar_lea.vmem %s0, %s636
      $region104: #{fuse_block7.1} parent=99 // pred_fallthru
        _
      // Predicated region
      $region105: #{fuse_block7.1} parent=99 // pred_check
        %p638 = pneg %p75
      $region106: #{fuse_block7.1} parent=99 // pred_check_branch
        %640 = sbr.rel (%p638) target = $region108
      $region107: #{fuse_block7.1} parent=99 // pred_region
        %p641 = scmp.lt.s32.totalorder %s29, 1
        %s642 = scalar_select %p641, %s29, 1
        %s643 = smul.addr %s642, 4
        %s644 = smul.addr %s643, 8
        %s645 = scalar_lea.vmem %s1, %s644
      $region108: #{fuse_block7.1} parent=99 // pred_fallthru
        _
    $region100: #{fuse_block7.1} parent=5 // pred_fallthru
      _
    %p646 = scmp.le.s32.totalorder 1, %s29
    %p647 = scmp.lt.s32.totalorder %s29, 3
    %p648 = pnand %p646, %p647
    %p649 = pneg %p648
    // Predicated region
    $region109: #{fuse_block7.1} parent=5 // pred_check
      _
    $region110: #{fuse_block7.1} parent=5 // pred_check_branch
      %651 = sbr.rel (%p648) target = $region112
    $region111: #{fuse_block7.1} parent=5 // pred_region
      %s652 = ssub.s32 %s29, 1
      %p653 = scmp.lt.s32.totalorder %s34, 1
      %s654 = scalar_select %p653, %s34, 1
      %s655 = smul.addr %s654, 4
      %s656 = smul.addr %s655, 8
      %s657 = scalar_lea.vmem %s0, %s656
      %p658 = pneg %p55
      %p659 = pneg %p52
      %p660 = scmp.lt.s32.totalorder %s34, 1
      %s661 = scalar_select %p660, %s34, 1
      %s662 = smul.addr %s661, 4
      %s663 = smul.addr %s662, 8
      %s664 = scalar_lea.vmem %s1, %s663
      %p665 = pneg %p81
      %p666 = pneg %p78
      %p667 = pneg %p102
      %p668 = pneg %p99
      %p669 = pneg %p123
      %p670 = pneg %p120
      %p671 = pneg %p144
      %p672 = pneg %p141
      %p673 = pneg %p165
      %p674 = pneg %p162
      %p675 = pneg %p186
      %p676 = pneg %p183
      %p677 = pneg %p207
      %p678 = pneg %p204
      %p679 = pneg %p228
      %p680 = pneg %p225
      %p681 = pneg %p249
      %p682 = pneg %p246
      %p683 = pneg %p270
      %p684 = pneg %p267
      %p685 = pneg %p291
      %p686 = pneg %p288
      %p687 = pneg %p312
      %p688 = pneg %p309
      %p689 = pneg %p333
      %p690 = pneg %p330
      %p691 = pneg %p354
      %p692 = pneg %p351
      %p693 = pneg %p375
      %p694 = pneg %p372
      %p695 = pneg %p396
      %p696 = pneg %p393
      %p697 = pneg %p417
      %p698 = pneg %p414
      %p699 = pneg %p438
      %p700 = pneg %p435
      %p701 = pneg %p459
      %p702 = pneg %p456
      %p703 = pneg %p480
      %p704 = pneg %p477
      %p705 = pneg %p501
      %p706 = pneg %p498
      %p707 = pneg %p522
      %p708 = pneg %p519
      %p709 = pneg %p548
      %p710 = pneg %p545
      %p711 = scmp.lt.s32.totalorder %s34, 1
      %s712 = scalar_select %p711, %s34, 1
      %s713 = smul.addr %s712, 4
      %s714 = smul.addr %s713, 8
      %s715 = scalar_lea.vmem %s23, %s714
      %p716 = scmp.lt.s32.totalorder %s34, 1
      %s717 = scalar_select %p716, %s34, 1
      %s718 = smul.addr %s717, 4
      %s719 = smul.addr %s718, 8
      %s720 = scalar_lea.vmem %s0, %s719
      %p721 = scmp.lt.s32.totalorder %s34, 1
      %s722 = scalar_select %p721, %s34, 1
      %s723 = smul.addr %s722, 4
      %s724 = smul.addr %s723, 8
      %s725 = scalar_lea.vmem %s1, %s724
      %p726 = scmp.lt.s32.totalorder %s34, 1
      %s727 = scalar_select %p726, %s34, 1
      %s728 = smul.addr %s727, 4
      %s729 = smul.addr %s728, 8
      %s730 = scalar_lea.vmem %s23, %s729
      %v732 = vld [vmem:[%s22] sm:$0xff]
      %v733 = vld [vmem:[%s22 + $0x8] sm:$0xff]
      %v734 = vld [vmem:[%s22 + $0x10] sm:$0x1]
      %v735 = vld [vmem:[%s22 + $0x18] sm:$0x1]
      %v736 = vld [vmem:[%s720] sm:$0xff]
      %v737 = vld [vmem:[%s720 + $0x8] sm:$0xff]
      %v738 = vld [vmem:[%s720 + $0x10] sm:$0xff]
      %v739 = vld [vmem:[%s720 + $0x18] sm:$0xff]
      %v740 = vld [vmem:[%s725] sm:$0xff]
      %v741 = vld [vmem:[%s725 + $0x8] sm:$0xff]
      %v742 = vld [vmem:[%s725 + $0x10] sm:$0xff]
      %v743 = vld [vmem:[%s725 + $0x18] sm:$0xff]
      %744 = vrot.lane.b32.xlu0 %v740, 17
      %v745 = vpop.permute.xlu0 %744
      %746 = vrot.lane.b32.xlu0 %v742, 17
      %v747 = vpop.permute.xlu0 %746
      %748 = vrot.lane.b32.xlu0 %v741, 17
      %v749 = vpop.permute.xlu0 %748
      %750 = vrot.lane.b32.xlu0 %v743, 17
      %v751 = vpop.permute.xlu0 %750
      %v752 = vlaneseq
      %v753 = vand.u32 %v752, 127
      %vm754 = vcmp.lt.s32.totalorder %v753, 17
      %v755 = vsel %vm754, %v745, %v749
      %v756 = vsel %vm754, %v747, %v751
      %v757 = vsel %vm754, %v749, %v745
      %v758 = vsel %vm754, %v751, %v747
      %v759 = vperm.slane %v732, 0
      %v760 = vperm.slane %v733, 0
      %v761 = vmul.f32 %v757, %v759
      %v762 = vmul.f32 %v755, %v760
      %v763 = vmul.f32 %v758, %v759
      %v764 = vmul.f32 %v756, %v760
      %765 = vrot.lane.b32.xlu0 %v740, 16
      %v766 = vpop.permute.xlu0 %765
      %767 = vrot.lane.b32.xlu0 %v742, 16
      %v768 = vpop.permute.xlu0 %767
      %769 = vrot.lane.b32.xlu0 %v741, 16
      %v770 = vpop.permute.xlu0 %769
      %771 = vrot.lane.b32.xlu0 %v743, 16
      %v772 = vpop.permute.xlu0 %771
      %vm773 = vcmp.lt.s32.totalorder %v753, 16
      %v774 = vsel %vm773, %v766, %v770
      %v775 = vsel %vm773, %v768, %v772
      %v776 = vsel %vm773, %v770, %v766
      %v777 = vsel %vm773, %v772, %v768
      %v778 = vperm.slane %v732, 1
      %v779 = vperm.slane %v733, 1
      %v780 = vmul.f32 %v776, %v778
      %v781 = vmul.f32 %v774, %v779
      %v782 = vmul.f32 %v777, %v778
      %v783 = vmul.f32 %v775, %v779
      %784 = vrot.lane.b32.xlu0 %v740, 15
      %v785 = vpop.permute.xlu0 %784
      %786 = vrot.lane.b32.xlu0 %v742, 15
      %v787 = vpop.permute.xlu0 %786
      %788 = vrot.lane.b32.xlu0 %v741, 15
      %v789 = vpop.permute.xlu0 %788
      %790 = vrot.lane.b32.xlu0 %v743, 15
      %v791 = vpop.permute.xlu0 %790
      %vm792 = vcmp.lt.s32.totalorder %v753, 15
      %v793 = vsel %vm792, %v785, %v789
      %v794 = vsel %vm792, %v787, %v791
      %v795 = vsel %vm792, %v789, %v785
      %v796 = vsel %vm792, %v791, %v787
      %v797 = vperm.slane %v732, 2
      %v798 = vperm.slane %v733, 2
      %v799 = vmul.f32 %v795, %v797
      %v800 = vmul.f32 %v793, %v798
      %v801 = vmul.f32 %v796, %v797
      %v802 = vmul.f32 %v794, %v798
      %v803 = vpack.c.bf16 %v763, %v761
      %v804 = vpack.c.bf16 %v764, %v762
      %v805 = vpack.c.bf16 %v782, %v780
      %v806 = vpack.c.bf16 %v783, %v781
      %v807 = vpack.c.bf16 %v801, %v799
      %v808 = vpack.c.bf16 %v802, %v800
      %v809 = vld [vmem:[%s2] sm:$0xff]
      %v810 = vld [vmem:[%s2 + $0x8] sm:$0xff]
      %v811 = vpack.c.bf16 %v810, %v809
      %812 = vrot.lane.b32.xlu0 %v740, 1
      %v813 = vpop.permute.xlu0 %812
      %814 = vrot.lane.b32.xlu0 %v742, 1
      %v815 = vpop.permute.xlu0 %814
      %816 = vrot.lane.b32.xlu0 %v741, 1
      %v817 = vpop.permute.xlu0 %816
      %818 = vrot.lane.b32.xlu0 %v743, 1
      %v819 = vpop.permute.xlu0 %818
      %vm820 = vcmp.lt.s32.totalorder %v753, 1
      %v821 = vsel %vm820, %v813, %v817
      %v822 = vsel %vm820, %v815, %v819
      %v823 = vsel %vm820, %v817, %v813
      %v824 = vsel %vm820, %v819, %v815
      %v825 = vperm.slane %v732, 3
      %v826 = vperm.slane %v733, 3
      %v827 = vmul.f32 %v823, %v825
      %v828 = vmul.f32 %v821, %v826
      %v829 = vmul.f32 %v824, %v825
      %v830 = vmul.f32 %v822, %v826
      %831 = vrot.lane.b32.xlu0 %v740, 127
      %v832 = vpop.permute.xlu0 %831
      %833 = vrot.lane.b32.xlu0 %v742, 127
      %v834 = vpop.permute.xlu0 %833
      %835 = vrot.lane.b32.xlu0 %v741, 127
      %v836 = vpop.permute.xlu0 %835
      %837 = vrot.lane.b32.xlu0 %v743, 127
      %v838 = vpop.permute.xlu0 %837
      %vm839 = vcmp.lt.s32.totalorder %v753, 127
      %v840 = vsel %vm839, %v832, %v836
      %v841 = vsel %vm839, %v834, %v838
      %v842 = vsel %vm839, %v836, %v832
      %v843 = vsel %vm839, %v838, %v834
      %v844 = vperm.slane %v732, 5
      %v845 = vperm.slane %v733, 5
      %v846 = vmul.f32 %v840, %v844
      %v847 = vmul.f32 %v842, %v845
      %v848 = vmul.f32 %v841, %v844
      %v849 = vmul.f32 %v843, %v845
      %v850 = vpack.c.bf16 %v829, %v827
      %v851 = vpack.c.bf16 %v830, %v828
      %v852 = vpack.c.bf16 %v742, %v740
      %v853 = vpack.c.bf16 %v743, %v741
      %v854 = vpack.c.bf16 %v848, %v846
      %v855 = vpack.c.bf16 %v849, %v847
      %s856 = scalar_lea.vmem %s2, 16
      %v857 = vld [vmem:[%s856] sm:$0xff]
      %v858 = vld [vmem:[%s856 + $0x8] sm:$0xff]
      %v859 = vpack.c.bf16 %v858, %v857
      %vm860 = vcmask 392192
      %v862 = vsel %vm860, %v859, 0
      %864 = vmatpush.bf16.msra.mxu0 0
      %865 = vmatpush.bf16.msra.mxu0 0
      %866 = vmatpush.bf16.msra.mxu0 0
      %867 = vmatpush.bf16.msra.mxu0 0
      %868 = vmatpush.bf16.msra.mxu0 0
      %869 = vmatpush.bf16.msra.mxu0 %v854
      %870 = vmatpush.bf16.msra.mxu0 %v852
      %871 = vmatpush.bf16.msra.mxu0 %v850
      %872 = vmatmul.bf16.gmra.mxu0 %v862
      %v873 = vpop.f32.mrf.mxu0
      %v874 = vadd.f32 0.0, %v873
      %v875 = vpop.f32.mrf.mxu0
      %v876 = vadd.f32 0.0, %v875
      %877 = vdwg.mxu0
      %878 = vmatpush.bf16.msra.mxu0 0
      %879 = vmatpush.bf16.msra.mxu0 0
      %880 = vmatpush.bf16.msra.mxu0 0
      %881 = vmatpush.bf16.msra.mxu0 0
      %882 = vmatpush.bf16.msra.mxu0 0
      %883 = vmatpush.bf16.msra.mxu0 %v855
      %884 = vmatpush.bf16.msra.mxu0 %v853
      %885 = vmatpush.bf16.msra.mxu0 %v851
      %886 = vmatmul.bf16.gmra.mxu0 %v862
      %v887 = vpop.f32.mrf.mxu0
      %v888 = vadd.f32 0.0, %v887
      %v889 = vpop.f32.mrf.mxu0
      %v890 = vadd.f32 0.0, %v889
      %891 = vdwg.mxu0
      %v893 = vsel %vm860, %v811, 0
      %895 = vmatpush.bf16.msra.mxu0 0
      %896 = vmatpush.bf16.msra.mxu0 0
      %897 = vmatpush.bf16.msra.mxu0 0
      %898 = vmatpush.bf16.msra.mxu0 0
      %899 = vmatpush.bf16.msra.mxu0 0
      %900 = vmatpush.bf16.msra.mxu0 %v807
      %901 = vmatpush.bf16.msra.mxu0 %v805
      %902 = vmatpush.bf16.msra.mxu0 %v803
      %903 = vmatmul.bf16.gmra.mxu0 %v893
      %v904 = vpop.f32.mrf.mxu0
      %v905 = vadd.f32 %v874, %v904
      %v906 = vpop.f32.mrf.mxu0
      %v907 = vadd.f32 %v876, %v906
      %908 = vdwg.mxu0
      %909 = vmatpush.bf16.msra.mxu0 0
      %910 = vmatpush.bf16.msra.mxu0 0
      %911 = vmatpush.bf16.msra.mxu0 0
      %912 = vmatpush.bf16.msra.mxu0 0
      %913 = vmatpush.bf16.msra.mxu0 0
      %914 = vmatpush.bf16.msra.mxu0 %v808
      %915 = vmatpush.bf16.msra.mxu0 %v806
      %916 = vmatpush.bf16.msra.mxu0 %v804
      %917 = vmatmul.bf16.gmra.mxu0 %v893
      %v918 = vpop.f32.mrf.mxu0
      %v919 = vadd.f32 %v888, %v918
      %v920 = vpop.f32.mrf.mxu0
      %v921 = vadd.f32 %v890, %v920
      %922 = vdwg.mxu0
      %923 = vrot.lane.b32.xlu0 %v740, 113
      %v924 = vpop.permute.xlu0 %923
      %925 = vrot.lane.b32.xlu0 %v742, 113
      %v926 = vpop.permute.xlu0 %925
      %927 = vrot.lane.b32.xlu0 %v741, 113
      %v928 = vpop.permute.xlu0 %927
      %929 = vrot.lane.b32.xlu0 %v743, 113
      %v930 = vpop.permute.xlu0 %929
      %vm931 = vcmp.lt.s32.totalorder %v753, 113
      %v932 = vsel %vm931, %v924, %v928
      %v933 = vsel %vm931, %v926, %v930
      %v934 = vsel %vm931, %v928, %v924
      %v935 = vsel %vm931, %v930, %v926
      %v936 = vperm.slane %v732, 6
      %v937 = vperm.slane %v733, 6
      %v938 = vmul.f32 %v932, %v936
      %v939 = vmul.f32 %v934, %v937
      %v940 = vmul.f32 %v933, %v936
      %v941 = vmul.f32 %v935, %v937
      %942 = vrot.lane.b32.xlu0 %v740, 112
      %v943 = vpop.permute.xlu0 %942
      %944 = vrot.lane.b32.xlu0 %v742, 112
      %v945 = vpop.permute.xlu0 %944
      %946 = vrot.lane.b32.xlu0 %v741, 112
      %v947 = vpop.permute.xlu0 %946
      %948 = vrot.lane.b32.xlu0 %v743, 112
      %v949 = vpop.permute.xlu0 %948
      %vm950 = vcmp.lt.s32.totalorder %v753, 112
      %v951 = vsel %vm950, %v943, %v947
      %v952 = vsel %vm950, %v945, %v949
      %v953 = vsel %vm950, %v947, %v943
      %v954 = vsel %vm950, %v949, %v945
      %v955 = vperm.slane %v732, 7
      %v956 = vperm.slane %v733, 7
      %v957 = vmul.f32 %v951, %v955
      %v958 = vmul.f32 %v953, %v956
      %v959 = vmul.f32 %v952, %v955
      %v960 = vmul.f32 %v954, %v956
      %961 = vrot.lane.b32.xlu0 %v740, 111
      %v962 = vpop.permute.xlu0 %961
      %963 = vrot.lane.b32.xlu0 %v742, 111
      %v964 = vpop.permute.xlu0 %963
      %965 = vrot.lane.b32.xlu0 %v741, 111
      %v966 = vpop.permute.xlu0 %965
      %967 = vrot.lane.b32.xlu0 %v743, 111
      %v968 = vpop.permute.xlu0 %967
      %vm969 = vcmp.lt.s32.totalorder %v753, 111
      %v970 = vsel %vm969, %v962, %v966
      %v971 = vsel %vm969, %v964, %v968
      %v972 = vsel %vm969, %v966, %v962
      %v973 = vsel %vm969, %v968, %v964
      %v974 = vperm.slane %v734, 0
      %v975 = vperm.slane %v735, 0
      %v976 = vmul.f32 %v970, %v974
      %v977 = vmul.f32 %v972, %v975
      %v978 = vmul.f32 %v971, %v974
      %v979 = vmul.f32 %v973, %v975
      %v980 = vpack.c.bf16 %v940, %v938
      %v981 = vpack.c.bf16 %v941, %v939
      %v982 = vpack.c.bf16 %v959, %v957
      %v983 = vpack.c.bf16 %v960, %v958
      %v984 = vpack.c.bf16 %v978, %v976
      %v985 = vpack.c.bf16 %v979, %v977
      %s986 = scalar_lea.vmem %s2, 32
      %v987 = vld [vmem:[%s986] sm:$0xff]
      %v988 = vld [vmem:[%s986 + $0x8] sm:$0xff]
      %v989 = vpack.c.bf16 %v988, %v987
      %v991 = vsel %vm860, %v989, 0
      %993 = vmatpush.bf16.msra.mxu0 0
      %994 = vmatpush.bf16.msra.mxu0 0
      %995 = vmatpush.bf16.msra.mxu0 0
      %996 = vmatpush.bf16.msra.mxu0 0
      %997 = vmatpush.bf16.msra.mxu0 0
      %998 = vmatpush.bf16.msra.mxu0 %v984
      %999 = vmatpush.bf16.msra.mxu0 %v982
      %1000 = vmatpush.bf16.msra.mxu0 %v980
      %1001 = vmatmul.bf16.gmra.mxu0 %v991
      %v1002 = vpop.f32.mrf.mxu0
      %v1003 = vadd.f32 0.0, %v1002
      %v1004 = vpop.f32.mrf.mxu0
      %v1005 = vadd.f32 0.0, %v1004
      %1006 = vdwg.mxu0
      %1007 = vmatpush.bf16.msra.mxu0 0
      %1008 = vmatpush.bf16.msra.mxu0 0
      %1009 = vmatpush.bf16.msra.mxu0 0
      %1010 = vmatpush.bf16.msra.mxu0 0
      %1011 = vmatpush.bf16.msra.mxu0 0
      %1012 = vmatpush.bf16.msra.mxu0 %v985
      %1013 = vmatpush.bf16.msra.mxu0 %v983
      %1014 = vmatpush.bf16.msra.mxu0 %v981
      %1015 = vmatmul.bf16.gmra.mxu0 %v991
      %v1016 = vpop.f32.mrf.mxu0
      %v1017 = vadd.f32 0.0, %v1016
      %v1018 = vpop.f32.mrf.mxu0
      %v1019 = vadd.f32 0.0, %v1018
      %1020 = vdwg.mxu0
      %v1021 = vadd.f32 %v905, %v1003
      %v1022 = vadd.f32 %v919, %v1017
      %v1023 = vadd.f32 %v907, %v1005
      %v1024 = vadd.f32 %v921, %v1019
      %v1025 = vld [vmem:[%s3] sm:$0xff]
      %v1026 = vld [vmem:[%s3 + $0x8] sm:$0xff]
      %1028 = vset.pattern.permute.xlu0 0
      %1029 = vperm.xlu0 %1028, %v1025
      %v1030 = vpop.permute.xlu0 %1029
      %1033 = vset.pattern.permute.xlu0 0
      %1034 = vperm.xlu0 %1033, %v1026
      %v1035 = vpop.permute.xlu0 %1034
      %v1037 = vadd.f32 %v1021, %v1030
      %v1038 = vadd.f32 %v1022, %v1030
      %v1039 = vadd.f32 %v1023, %v1035
      %v1040 = vadd.f32 %v1024, %v1035
      %1041 = vrot.lane.b32.xlu0 %v736, 17
      %v1042 = vpop.permute.xlu0 %1041
      %1043 = vrot.lane.b32.xlu0 %v738, 17
      %v1044 = vpop.permute.xlu0 %1043
      %1045 = vrot.lane.b32.xlu0 %v737, 17
      %v1046 = vpop.permute.xlu0 %1045
      %1047 = vrot.lane.b32.xlu0 %v739, 17
      %v1048 = vpop.permute.xlu0 %1047
      %v1049 = vsel %vm754, %v1042, %v1046
      %v1050 = vsel %vm754, %v1044, %v1048
      %v1051 = vsel %vm754, %v1046, %v1042
      %v1052 = vsel %vm754, %v1048, %v1044
      %v1053 = vmul.f32 %v1051, %v759
      %v1054 = vmul.f32 %v1049, %v760
      %v1055 = vmul.f32 %v1052, %v759
      %v1056 = vmul.f32 %v1050, %v760
      %1057 = vrot.lane.b32.xlu0 %v736, 16
      %v1058 = vpop.permute.xlu0 %1057
      %1059 = vrot.lane.b32.xlu0 %v738, 16
      %v1060 = vpop.permute.xlu0 %1059
      %1061 = vrot.lane.b32.xlu0 %v737, 16
      %v1062 = vpop.permute.xlu0 %1061
      %1063 = vrot.lane.b32.xlu0 %v739, 16
      %v1064 = vpop.permute.xlu0 %1063
      %v1065 = vsel %vm773, %v1058, %v1062
      %v1066 = vsel %vm773, %v1060, %v1064
      %v1067 = vsel %vm773, %v1062, %v1058
      %v1068 = vsel %vm773, %v1064, %v1060
      %v1069 = vmul.f32 %v1067, %v778
      %v1070 = vmul.f32 %v1065, %v779
      %v1071 = vmul.f32 %v1068, %v778
      %v1072 = vmul.f32 %v1066, %v779
      %1073 = vrot.lane.b32.xlu0 %v736, 15
      %v1074 = vpop.permute.xlu0 %1073
      %1075 = vrot.lane.b32.xlu0 %v738, 15
      %v1076 = vpop.permute.xlu0 %1075
      %1077 = vrot.lane.b32.xlu0 %v737, 15
      %v1078 = vpop.permute.xlu0 %1077
      %1079 = vrot.lane.b32.xlu0 %v739, 15
      %v1080 = vpop.permute.xlu0 %1079
      %v1081 = vsel %vm792, %v1074, %v1078
      %v1082 = vsel %vm792, %v1076, %v1080
      %v1083 = vsel %vm792, %v1078, %v1074
      %v1084 = vsel %vm792, %v1080, %v1076
      %v1085 = vmul.f32 %v1083, %v797
      %v1086 = vmul.f32 %v1081, %v798
      %v1087 = vmul.f32 %v1084, %v797
      %v1088 = vmul.f32 %v1082, %v798
      %v1089 = vpack.c.bf16 %v1055, %v1053
      %v1090 = vpack.c.bf16 %v1056, %v1054
      %v1091 = vpack.c.bf16 %v1071, %v1069
      %v1092 = vpack.c.bf16 %v1072, %v1070
      %v1093 = vpack.c.bf16 %v1087, %v1085
      %v1094 = vpack.c.bf16 %v1088, %v1086
      %v1095 = vld [vmem:[%s4] sm:$0xff]
      %v1096 = vld [vmem:[%s4 + $0x8] sm:$0xff]
      %v1097 = vpack.c.bf16 %v1096, %v1095
      %1098 = vrot.lane.b32.xlu0 %v736, 1
      %v1099 = vpop.permute.xlu0 %1098
      %1100 = vrot.lane.b32.xlu0 %v738, 1
      %v1101 = vpop.permute.xlu0 %1100
      %1102 = vrot.lane.b32.xlu0 %v737, 1
      %v1103 = vpop.permute.xlu0 %1102
      %1104 = vrot.lane.b32.xlu0 %v739, 1
      %v1105 = vpop.permute.xlu0 %1104
      %v1106 = vsel %vm820, %v1099, %v1103
      %v1107 = vsel %vm820, %v1101, %v1105
      %v1108 = vsel %vm820, %v1103, %v1099
      %v1109 = vsel %vm820, %v1105, %v1101
      %v1110 = vmul.f32 %v1108, %v825
      %v1111 = vmul.f32 %v1106, %v826
      %v1112 = vmul.f32 %v1109, %v825
      %v1113 = vmul.f32 %v1107, %v826
      %1114 = vrot.lane.b32.xlu0 %v736, 127
      %v1115 = vpop.permute.xlu0 %1114
      %1116 = vrot.lane.b32.xlu0 %v738, 127
      %v1117 = vpop.permute.xlu0 %1116
      %1118 = vrot.lane.b32.xlu0 %v737, 127
      %v1119 = vpop.permute.xlu0 %1118
      %1120 = vrot.lane.b32.xlu0 %v739, 127
      %v1121 = vpop.permute.xlu0 %1120
      %v1122 = vsel %vm839, %v1115, %v1119
      %v1123 = vsel %vm839, %v1117, %v1121
      %v1124 = vsel %vm839, %v1119, %v1115
      %v1125 = vsel %vm839, %v1121, %v1117
      %v1126 = vmul.f32 %v1122, %v844
      %v1127 = vmul.f32 %v1124, %v845
      %v1128 = vmul.f32 %v1123, %v844
      %v1129 = vmul.f32 %v1125, %v845
      %v1130 = vpack.c.bf16 %v1112, %v1110
      %v1131 = vpack.c.bf16 %v1113, %v1111
      %v1132 = vpack.c.bf16 %v738, %v736
      %v1133 = vpack.c.bf16 %v739, %v737
      %v1134 = vpack.c.bf16 %v1128, %v1126
      %v1135 = vpack.c.bf16 %v1129, %v1127
      %s1136 = scalar_lea.vmem %s4, 16
      %v1137 = vld [vmem:[%s1136] sm:$0xff]
      %v1138 = vld [vmem:[%s1136 + $0x8] sm:$0xff]
      %v1139 = vpack.c.bf16 %v1138, %v1137
      %v1141 = vsel %vm860, %v1139, 0
      %1143 = vmatpush.bf16.msra.mxu0 0
      %1144 = vmatpush.bf16.msra.mxu0 0
      %1145 = vmatpush.bf16.msra.mxu0 0
      %1146 = vmatpush.bf16.msra.mxu0 0
      %1147 = vmatpush.bf16.msra.mxu0 0
      %1148 = vmatpush.bf16.msra.mxu0 %v1134
      %1149 = vmatpush.bf16.msra.mxu0 %v1132
      %1150 = vmatpush.bf16.msra.mxu0 %v1130
      %1151 = vmatmul.bf16.gmra.mxu0 %v1141
      %v1152 = vpop.f32.mrf.mxu0
      %v1153 = vadd.f32 0.0, %v1152
      %v1154 = vpop.f32.mrf.mxu0
      %v1155 = vadd.f32 0.0, %v1154
      %1156 = vdwg.mxu0
      %1157 = vmatpush.bf16.msra.mxu0 0
      %1158 = vmatpush.bf16.msra.mxu0 0
      %1159 = vmatpush.bf16.msra.mxu0 0
      %1160 = vmatpush.bf16.msra.mxu0 0
      %1161 = vmatpush.bf16.msra.mxu0 0
      %1162 = vmatpush.bf16.msra.mxu0 %v1135
      %1163 = vmatpush.bf16.msra.mxu0 %v1133
      %1164 = vmatpush.bf16.msra.mxu0 %v1131
      %1165 = vmatmul.bf16.gmra.mxu0 %v1141
      %v1166 = vpop.f32.mrf.mxu0
      %v1167 = vadd.f32 0.0, %v1166
      %v1168 = vpop.f32.mrf.mxu0
      %v1169 = vadd.f32 0.0, %v1168
      %1170 = vdwg.mxu0
      %v1172 = vsel %vm860, %v1097, 0
      %1174 = vmatpush.bf16.msra.mxu0 0
      %1175 = vmatpush.bf16.msra.mxu0 0
      %1176 = vmatpush.bf16.msra.mxu0 0
      %1177 = vmatpush.bf16.msra.mxu0 0
      %1178 = vmatpush.bf16.msra.mxu0 0
      %1179 = vmatpush.bf16.msra.mxu0 %v1093
      %1180 = vmatpush.bf16.msra.mxu0 %v1091
      %1181 = vmatpush.bf16.msra.mxu0 %v1089
      %1182 = vmatmul.bf16.gmra.mxu0 %v1172
      %v1183 = vpop.f32.mrf.mxu0
      %v1184 = vadd.f32 %v1153, %v1183
      %v1185 = vpop.f32.mrf.mxu0
      %v1186 = vadd.f32 %v1155, %v1185
      %1187 = vdwg.mxu0
      %1188 = vmatpush.bf16.msra.mxu0 0
      %1189 = vmatpush.bf16.msra.mxu0 0
      %1190 = vmatpush.bf16.msra.mxu0 0
      %1191 = vmatpush.bf16.msra.mxu0 0
      %1192 = vmatpush.bf16.msra.mxu0 0
      %1193 = vmatpush.bf16.msra.mxu0 %v1094
      %1194 = vmatpush.bf16.msra.mxu0 %v1092
      %1195 = vmatpush.bf16.msra.mxu0 %v1090
      %1196 = vmatmul.bf16.gmra.mxu0 %v1172
      %v1197 = vpop.f32.mrf.mxu0
      %v1198 = vadd.f32 %v1167, %v1197
      %v1199 = vpop.f32.mrf.mxu0
      %v1200 = vadd.f32 %v1169, %v1199
      %1201 = vdwg.mxu0
      %1202 = vrot.lane.b32.xlu0 %v736, 113
      %v1203 = vpop.permute.xlu0 %1202
      %1204 = vrot.lane.b32.xlu0 %v738, 113
      %v1205 = vpop.permute.xlu0 %1204
      %1206 = vrot.lane.b32.xlu0 %v737, 113
      %v1207 = vpop.permute.xlu0 %1206
      %1208 = vrot.lane.b32.xlu0 %v739, 113
      %v1209 = vpop.permute.xlu0 %1208
      %v1210 = vsel %vm931, %v1203, %v1207
      %v1211 = vsel %vm931, %v1205, %v1209
      %v1212 = vsel %vm931, %v1207, %v1203
      %v1213 = vsel %vm931, %v1209, %v1205
      %v1214 = vmul.f32 %v1210, %v936
      %v1215 = vmul.f32 %v1212, %v937
      %v1216 = vmul.f32 %v1211, %v936
      %v1217 = vmul.f32 %v1213, %v937
      %1218 = vrot.lane.b32.xlu0 %v736, 112
      %v1219 = vpop.permute.xlu0 %1218
      %1220 = vrot.lane.b32.xlu0 %v738, 112
      %v1221 = vpop.permute.xlu0 %1220
      %1222 = vrot.lane.b32.xlu0 %v737, 112
      %v1223 = vpop.permute.xlu0 %1222
      %1224 = vrot.lane.b32.xlu0 %v739, 112
      %v1225 = vpop.permute.xlu0 %1224
      %v1226 = vsel %vm950, %v1219, %v1223
      %v1227 = vsel %vm950, %v1221, %v1225
      %v1228 = vsel %vm950, %v1223, %v1219
      %v1229 = vsel %vm950, %v1225, %v1221
      %v1230 = vmul.f32 %v1226, %v955
      %v1231 = vmul.f32 %v1228, %v956
      %v1232 = vmul.f32 %v1227, %v955
      %v1233 = vmul.f32 %v1229, %v956
      %1234 = vrot.lane.b32.xlu0 %v736, 111
      %v1235 = vpop.permute.xlu0 %1234
      %1236 = vrot.lane.b32.xlu0 %v738, 111
      %v1237 = vpop.permute.xlu0 %1236
      %1238 = vrot.lane.b32.xlu0 %v737, 111
      %v1239 = vpop.permute.xlu0 %1238
      %1240 = vrot.lane.b32.xlu0 %v739, 111
      %v1241 = vpop.permute.xlu0 %1240
      %v1242 = vsel %vm969, %v1235, %v1239
      %v1243 = vsel %vm969, %v1237, %v1241
      %v1244 = vsel %vm969, %v1239, %v1235
      %v1245 = vsel %vm969, %v1241, %v1237
      %v1246 = vmul.f32 %v1242, %v974
      %v1247 = vmul.f32 %v1244, %v975
      %v1248 = vmul.f32 %v1243, %v974
      %v1249 = vmul.f32 %v1245, %v975
      %v1250 = vpack.c.bf16 %v1216, %v1214
      %v1251 = vpack.c.bf16 %v1217, %v1215
      %v1252 = vpack.c.bf16 %v1232, %v1230
      %v1253 = vpack.c.bf16 %v1233, %v1231
      %v1254 = vpack.c.bf16 %v1248, %v1246
      %v1255 = vpack.c.bf16 %v1249, %v1247
      %s1256 = scalar_lea.vmem %s4, 32
      %v1257 = vld [vmem:[%s1256] sm:$0xff]
      %v1258 = vld [vmem:[%s1256 + $0x8] sm:$0xff]
      %v1259 = vpack.c.bf16 %v1258, %v1257
      %v1261 = vsel %vm860, %v1259, 0
      %1263 = vmatpush.bf16.msra.mxu0 0
      %1264 = vmatpush.bf16.msra.mxu0 0
      %1265 = vmatpush.bf16.msra.mxu0 0
      %1266 = vmatpush.bf16.msra.mxu0 0
      %1267 = vmatpush.bf16.msra.mxu0 0
      %1268 = vmatpush.bf16.msra.mxu0 %v1254
      %1269 = vmatpush.bf16.msra.mxu0 %v1252
      %1270 = vmatpush.bf16.msra.mxu0 %v1250
      %1271 = vmatmul.bf16.gmra.mxu0 %v1261
      %v1272 = vpop.f32.mrf.mxu0
      %v1273 = vadd.f32 0.0, %v1272
      %v1274 = vpop.f32.mrf.mxu0
      %v1275 = vadd.f32 0.0, %v1274
      %1276 = vdwg.mxu0
      %1277 = vmatpush.bf16.msra.mxu0 0
      %1278 = vmatpush.bf16.msra.mxu0 0
      %1279 = vmatpush.bf16.msra.mxu0 0
      %1280 = vmatpush.bf16.msra.mxu0 0
      %1281 = vmatpush.bf16.msra.mxu0 0
      %1282 = vmatpush.bf16.msra.mxu0 %v1255
      %1283 = vmatpush.bf16.msra.mxu0 %v1253
      %1284 = vmatpush.bf16.msra.mxu0 %v1251
      %1285 = vmatmul.bf16.gmra.mxu0 %v1261
      %v1286 = vpop.f32.mrf.mxu0
      %v1287 = vadd.f32 0.0, %v1286
      %v1288 = vpop.f32.mrf.mxu0
      %v1289 = vadd.f32 0.0, %v1288
      %1290 = vdwg.mxu0
      %v1291 = vadd.f32 %v1184, %v1273
      %v1292 = vadd.f32 %v1198, %v1287
      %v1293 = vadd.f32 %v1186, %v1275
      %v1294 = vadd.f32 %v1200, %v1289
      %v1295 = vld [vmem:[%s5] sm:$0xff]
      %v1296 = vld [vmem:[%s5 + $0x8] sm:$0xff]
      %1298 = vset.pattern.permute.xlu0 0
      %1299 = vperm.xlu0 %1298, %v1295
      %v1300 = vpop.permute.xlu0 %1299
      %1303 = vset.pattern.permute.xlu0 0
      %1304 = vperm.xlu0 %1303, %v1296
      %v1305 = vpop.permute.xlu0 %1304
      %v1307 = vadd.f32 %v1291, %v1300
      %v1308 = vadd.f32 %v1292, %v1300
      %v1309 = vadd.f32 %v1293, %v1305
      %v1310 = vadd.f32 %v1294, %v1305
      %v1311 = vpack.c.bf16 %v1039, %v1037
      %v1312 = vpack.c.bf16 %v1040, %v1038
      %v1313 = vpack.c.bf16 %v1309, %v1307
      %v1314 = vpack.c.bf16 %v1310, %v1308
      %v1315 = vld [vmem:[%s6] sm:$0xff]
      %v1316 = vld [vmem:[%s6 + $0x8] sm:$0xff]
      %v1317 = vpack.c.bf16 %v1316, %v1315
      %vm1318 = vcmask 130048
      %v1320 = vsel %vm1318, %v1317, 0
      %1322 = vmatpush.bf16.msra.mxu0 0
      %1323 = vmatpush.bf16.msra.mxu0 0
      %1324 = vmatpush.bf16.msra.mxu0 0
      %1325 = vmatpush.bf16.msra.mxu0 0
      %1326 = vmatpush.bf16.msra.mxu0 0
      %1327 = vmatpush.bf16.msra.mxu0 0
      %1328 = vmatpush.bf16.msra.mxu0 0
      %1329 = vmatpush.bf16.msra.mxu0 %v1311
      %1330 = vmatmul.bf16.gmra.mxu0 %v1320
      %v1331 = vpop.f32.mrf.mxu0
      %v1332 = vadd.f32 0.0, %v1331
      %v1333 = vpop.f32.mrf.mxu0
      %v1334 = vadd.f32 0.0, %v1333
      %1335 = vdwg.mxu0
      %1336 = vmatpush.bf16.msra.mxu0 0
      %1337 = vmatpush.bf16.msra.mxu0 0
      %1338 = vmatpush.bf16.msra.mxu0 0
      %1339 = vmatpush.bf16.msra.mxu0 0
      %1340 = vmatpush.bf16.msra.mxu0 0
      %1341 = vmatpush.bf16.msra.mxu0 0
      %1342 = vmatpush.bf16.msra.mxu0 0
      %1343 = vmatpush.bf16.msra.mxu0 %v1312
      %1344 = vmatmul.bf16.gmra.mxu0 %v1320
      %v1345 = vpop.f32.mrf.mxu0
      %v1346 = vadd.f32 0.0, %v1345
      %v1347 = vpop.f32.mrf.mxu0
      %v1348 = vadd.f32 0.0, %v1347
      %1349 = vdwg.mxu0
      %v1350 = vld [vmem:[%s7] sm:$0xff]
      %v1351 = vld [vmem:[%s7 + $0x8] sm:$0xff]
      %v1352 = vpack.c.bf16 %v1351, %v1350
      %v1354 = vsel %vm1318, %v1352, 0
      %1356 = vmatpush.bf16.msra.mxu0 0
      %1357 = vmatpush.bf16.msra.mxu0 0
      %1358 = vmatpush.bf16.msra.mxu0 0
      %1359 = vmatpush.bf16.msra.mxu0 0
      %1360 = vmatpush.bf16.msra.mxu0 0
      %1361 = vmatpush.bf16.msra.mxu0 0
      %1362 = vmatpush.bf16.msra.mxu0 0
      %1363 = vmatpush.bf16.msra.mxu0 %v1313
      %1364 = vmatmul.bf16.gmra.mxu0 %v1354
      %v1365 = vpop.f32.mrf.mxu0
      %v1366 = vadd.f32 0.0, %v1365
      %v1367 = vpop.f32.mrf.mxu0
      %v1368 = vadd.f32 0.0, %v1367
      %1369 = vdwg.mxu0
      %1370 = vmatpush.bf16.msra.mxu0 0
      %1371 = vmatpush.bf16.msra.mxu0 0
      %1372 = vmatpush.bf16.msra.mxu0 0
      %1373 = vmatpush.bf16.msra.mxu0 0
      %1374 = vmatpush.bf16.msra.mxu0 0
      %1375 = vmatpush.bf16.msra.mxu0 0
      %1376 = vmatpush.bf16.msra.mxu0 0
      %1377 = vmatpush.bf16.msra.mxu0 %v1314
      %1378 = vmatmul.bf16.gmra.mxu0 %v1354
      %v1379 = vpop.f32.mrf.mxu0
      %v1380 = vadd.f32 0.0, %v1379
      %v1381 = vpop.f32.mrf.mxu0
      %v1382 = vadd.f32 0.0, %v1381
      %1383 = vdwg.mxu0
      %v1384 = vld [vmem:[%s8] sm:$0xff]
      %v1385 = vld [vmem:[%s8 + $0x8] sm:$0xff]
      %v1386 = vpack.c.bf16 %v1385, %v1384
      %v1388 = vsel %vm1318, %v1386, 0
      %1390 = vmatpush.bf16.msra.mxu0 0
      %1391 = vmatpush.bf16.msra.mxu0 0
      %1392 = vmatpush.bf16.msra.mxu0 0
      %1393 = vmatpush.bf16.msra.mxu0 0
      %1394 = vmatpush.bf16.msra.mxu0 0
      %1395 = vmatpush.bf16.msra.mxu0 0
      %1396 = vmatpush.bf16.msra.mxu0 0
      %1397 = vmatpush.bf16.msra.mxu0 %v1313
      %1398 = vmatmul.bf16.gmra.mxu0 %v1388
      %v1399 = vpop.f32.mrf.mxu0
      %v1400 = vadd.f32 0.0, %v1399
      %v1401 = vpop.f32.mrf.mxu0
      %v1402 = vadd.f32 0.0, %v1401
      %1403 = vdwg.mxu0
      %1404 = vmatpush.bf16.msra.mxu0 0
      %1405 = vmatpush.bf16.msra.mxu0 0
      %1406 = vmatpush.bf16.msra.mxu0 0
      %1407 = vmatpush.bf16.msra.mxu0 0
      %1408 = vmatpush.bf16.msra.mxu0 0
      %1409 = vmatpush.bf16.msra.mxu0 0
      %1410 = vmatpush.bf16.msra.mxu0 0
      %1411 = vmatpush.bf16.msra.mxu0 %v1314
      %1412 = vmatmul.bf16.gmra.mxu0 %v1388
      %v1413 = vpop.f32.mrf.mxu0
      %v1414 = vadd.f32 0.0, %v1413
      %v1415 = vpop.f32.mrf.mxu0
      %v1416 = vadd.f32 0.0, %v1415
      %1417 = vdwg.mxu0
      %v1418 = vld [vmem:[%s9] sm:$0xff]
      %v1419 = vld [vmem:[%s9 + $0x8] sm:$0xff]
      %1421 = vset.pattern.permute.xlu0 4
      %1422 = vperm.xlu0 %1421, %v1418
      %v1423 = vpop.permute.xlu0 %1422
      %1426 = vset.pattern.permute.xlu0 4
      %1427 = vperm.xlu0 %1426, %v1419
      %v1428 = vpop.permute.xlu0 %1427
      %v1430 = vmul.f32 %v1332, %v1423
      %v1431 = vmul.f32 %v1346, %v1423
      %v1432 = vmul.f32 %v1334, %v1428
      %v1433 = vmul.f32 %v1348, %v1428
      %1434 = vrot.lane.b32.xlu0 %v1332, 17
      %v1435 = vpop.permute.xlu0 %1434
      %1436 = vrot.lane.b32.xlu0 %v1334, 17
      %v1437 = vpop.permute.xlu0 %1436
      %1438 = vrot.lane.b32.xlu0 %v1346, 17
      %v1439 = vpop.permute.xlu0 %1438
      %1440 = vrot.lane.b32.xlu0 %v1348, 17
      %v1441 = vpop.permute.xlu0 %1440
      %v1442 = vsel %vm754, %v1435, %v1439
      %v1443 = vsel %vm754, %v1437, %v1441
      %v1444 = vsel %vm754, %v1439, %v1435
      %v1445 = vsel %vm754, %v1441, %v1437
      %v1446 = vmul.f32 %v1444, %v759
      %v1447 = vmul.f32 %v1442, %v760
      %v1448 = vmul.f32 %v1445, %v759
      %v1449 = vmul.f32 %v1443, %v760
      %1450 = vset.pattern.permute.xlu0 0
      %1451 = vperm.xlu0 %1450, %v1418
      %v1452 = vpop.permute.xlu0 %1451
      %1454 = vset.pattern.permute.xlu0 0
      %1455 = vperm.xlu0 %1454, %v1419
      %v1456 = vpop.permute.xlu0 %1455
      %v1458 = vmul.f32 %v1446, %v1452
      %v1459 = vmul.f32 %v1447, %v1452
      %v1460 = vmul.f32 %v1448, %v1456
      %v1461 = vmul.f32 %v1449, %v1456
      %v1462 = vadd.f32 %v1430, %v1458
      %v1463 = vadd.f32 %v1431, %v1459
      %v1464 = vadd.f32 %v1432, %v1460
      %v1465 = vadd.f32 %v1433, %v1461
      %1466 = vrot.lane.b32.xlu0 %v1332, 16
      %v1467 = vpop.permute.xlu0 %1466
      %1468 = vrot.lane.b32.xlu0 %v1334, 16
      %v1469 = vpop.permute.xlu0 %1468
      %1470 = vrot.lane.b32.xlu0 %v1346, 16
      %v1471 = vpop.permute.xlu0 %1470
      %1472 = vrot.lane.b32.xlu0 %v1348, 16
      %v1473 = vpop.permute.xlu0 %1472
      %v1474 = vsel %vm773, %v1467, %v1471
      %v1475 = vsel %vm773, %v1469, %v1473
      %v1476 = vsel %vm773, %v1471, %v1467
      %v1477 = vsel %vm773, %v1473, %v1469
      %v1478 = vmul.f32 %v1476, %v778
      %v1479 = vmul.f32 %v1474, %v779
      %v1480 = vmul.f32 %v1477, %v778
      %v1481 = vmul.f32 %v1475, %v779
      %1482 = vset.pattern.permute.xlu0 1
      %1483 = vperm.xlu0 %1482, %v1418
      %v1484 = vpop.permute.xlu0 %1483
      %1486 = vset.pattern.permute.xlu0 1
      %1487 = vperm.xlu0 %1486, %v1419
      %v1488 = vpop.permute.xlu0 %1487
      %v1490 = vmul.f32 %v1478, %v1484
      %v1491 = vmul.f32 %v1479, %v1484
      %v1492 = vmul.f32 %v1480, %v1488
      %v1493 = vmul.f32 %v1481, %v1488
      %v1494 = vadd.f32 %v1462, %v1490
      %v1495 = vadd.f32 %v1463, %v1491
      %v1496 = vadd.f32 %v1464, %v1492
      %v1497 = vadd.f32 %v1465, %v1493
      %1498 = vrot.lane.b32.xlu0 %v1332, 15
      %v1499 = vpop.permute.xlu0 %1498
      %1500 = vrot.lane.b32.xlu0 %v1334, 15
      %v1501 = vpop.permute.xlu0 %1500
      %1502 = vrot.lane.b32.xlu0 %v1346, 15
      %v1503 = vpop.permute.xlu0 %1502
      %1504 = vrot.lane.b32.xlu0 %v1348, 15
      %v1505 = vpop.permute.xlu0 %1504
      %v1506 = vsel %vm792, %v1499, %v1503
      %v1507 = vsel %vm792, %v1501, %v1505
      %v1508 = vsel %vm792, %v1503, %v1499
      %v1509 = vsel %vm792, %v1505, %v1501
      %v1510 = vmul.f32 %v1508, %v797
      %v1511 = vmul.f32 %v1506, %v798
      %v1512 = vmul.f32 %v1509, %v797
      %v1513 = vmul.f32 %v1507, %v798
      %1514 = vset.pattern.permute.xlu0 2
      %1515 = vperm.xlu0 %1514, %v1418
      %v1516 = vpop.permute.xlu0 %1515
      %1518 = vset.pattern.permute.xlu0 2
      %1519 = vperm.xlu0 %1518, %v1419
      %v1520 = vpop.permute.xlu0 %1519
      %v1522 = vmul.f32 %v1510, %v1516
      %v1523 = vmul.f32 %v1511, %v1516
      %v1524 = vmul.f32 %v1512, %v1520
      %v1525 = vmul.f32 %v1513, %v1520
      %v1526 = vadd.f32 %v1494, %v1522
      %v1527 = vadd.f32 %v1495, %v1523
      %v1528 = vadd.f32 %v1496, %v1524
      %v1529 = vadd.f32 %v1497, %v1525
      %1530 = vrot.lane.b32.xlu0 %v1332, 1
      %v1531 = vpop.permute.xlu0 %1530
      %1532 = vrot.lane.b32.xlu0 %v1334, 1
      %v1533 = vpop.permute.xlu0 %1532
      %1534 = vrot.lane.b32.xlu0 %v1346, 1
      %v1535 = vpop.permute.xlu0 %1534
      %1536 = vrot.lane.b32.xlu0 %v1348, 1
      %v1537 = vpop.permute.xlu0 %1536
      %v1538 = vsel %vm820, %v1531, %v1535
      %v1539 = vsel %vm820, %v1533, %v1537
      %v1540 = vsel %vm820, %v1535, %v1531
      %v1541 = vsel %vm820, %v1537, %v1533
      %v1542 = vmul.f32 %v1540, %v825
      %v1543 = vmul.f32 %v1538, %v826
      %v1544 = vmul.f32 %v1541, %v825
      %v1545 = vmul.f32 %v1539, %v826
      %1546 = vset.pattern.permute.xlu0 3
      %1547 = vperm.xlu0 %1546, %v1418
      %v1548 = vpop.permute.xlu0 %1547
      %1550 = vset.pattern.permute.xlu0 3
      %1551 = vperm.xlu0 %1550, %v1419
      %v1552 = vpop.permute.xlu0 %1551
      %v1554 = vmul.f32 %v1542, %v1548
      %v1555 = vmul.f32 %v1543, %v1548
      %v1556 = vmul.f32 %v1544, %v1552
      %v1557 = vmul.f32 %v1545, %v1552
      %v1558 = vadd.f32 %v1526, %v1554
      %v1559 = vadd.f32 %v1527, %v1555
      %v1560 = vadd.f32 %v1528, %v1556
      %v1561 = vadd.f32 %v1529, %v1557
      %1562 = vrot.lane.b32.xlu0 %v1332, 127
      %v1563 = vpop.permute.xlu0 %1562
      %1564 = vrot.lane.b32.xlu0 %v1334, 127
      %v1565 = vpop.permute.xlu0 %1564
      %1566 = vrot.lane.b32.xlu0 %v1346, 127
      %v1567 = vpop.permute.xlu0 %1566
      %1568 = vrot.lane.b32.xlu0 %v1348, 127
      %v1569 = vpop.permute.xlu0 %1568
      %v1570 = vsel %vm839, %v1563, %v1567
      %v1571 = vsel %vm839, %v1565, %v1569
      %v1572 = vsel %vm839, %v1567, %v1563
      %v1573 = vsel %vm839, %v1569, %v1565
      %v1574 = vmul.f32 %v1570, %v844
      %v1575 = vmul.f32 %v1572, %v845
      %v1576 = vmul.f32 %v1571, %v844
      %v1577 = vmul.f32 %v1573, %v845
      %1578 = vset.pattern.permute.xlu0 5
      %1579 = vperm.xlu0 %1578, %v1418
      %v1580 = vpop.permute.xlu0 %1579
      %1582 = vset.pattern.permute.xlu0 5
      %1583 = vperm.xlu0 %1582, %v1419
      %v1584 = vpop.permute.xlu0 %1583
      %v1586 = vmul.f32 %v1574, %v1580
      %v1587 = vmul.f32 %v1575, %v1580
      %v1588 = vmul.f32 %v1576, %v1584
      %v1589 = vmul.f32 %v1577, %v1584
      %v1590 = vadd.f32 %v1558, %v1586
      %v1591 = vadd.f32 %v1559, %v1587
      %v1592 = vadd.f32 %v1560, %v1588
      %v1593 = vadd.f32 %v1561, %v1589
      %1594 = vrot.lane.b32.xlu0 %v1332, 113
      %v1595 = vpop.permute.xlu0 %1594
      %1596 = vrot.lane.b32.xlu0 %v1334, 113
      %v1597 = vpop.permute.xlu0 %1596
      %1598 = vrot.lane.b32.xlu0 %v1346, 113
      %v1599 = vpop.permute.xlu0 %1598
      %1600 = vrot.lane.b32.xlu0 %v1348, 113
      %v1601 = vpop.permute.xlu0 %1600
      %v1602 = vsel %vm931, %v1595, %v1599
      %v1603 = vsel %vm931, %v1597, %v1601
      %v1604 = vsel %vm931, %v1599, %v1595
      %v1605 = vsel %vm931, %v1601, %v1597
      %v1606 = vmul.f32 %v1602, %v936
      %v1607 = vmul.f32 %v1604, %v937
      %v1608 = vmul.f32 %v1603, %v936
      %v1609 = vmul.f32 %v1605, %v937
      %1610 = vset.pattern.permute.xlu0 6
      %1611 = vperm.xlu0 %1610, %v1418
      %v1612 = vpop.permute.xlu0 %1611
      %1614 = vset.pattern.permute.xlu0 6
      %1615 = vperm.xlu0 %1614, %v1419
      %v1616 = vpop.permute.xlu0 %1615
      %v1618 = vmul.f32 %v1606, %v1612
      %v1619 = vmul.f32 %v1607, %v1612
      %v1620 = vmul.f32 %v1608, %v1616
      %v1621 = vmul.f32 %v1609, %v1616
      %v1622 = vadd.f32 %v1590, %v1618
      %v1623 = vadd.f32 %v1591, %v1619
      %v1624 = vadd.f32 %v1592, %v1620
      %v1625 = vadd.f32 %v1593, %v1621
      %1626 = vrot.lane.b32.xlu0 %v1332, 112
      %v1627 = vpop.permute.xlu0 %1626
      %1628 = vrot.lane.b32.xlu0 %v1334, 112
      %v1629 = vpop.permute.xlu0 %1628
      %1630 = vrot.lane.b32.xlu0 %v1346, 112
      %v1631 = vpop.permute.xlu0 %1630
      %1632 = vrot.lane.b32.xlu0 %v1348, 112
      %v1633 = vpop.permute.xlu0 %1632
      %v1634 = vsel %vm950, %v1627, %v1631
      %v1635 = vsel %vm950, %v1629, %v1633
      %v1636 = vsel %vm950, %v1631, %v1627
      %v1637 = vsel %vm950, %v1633, %v1629
      %v1638 = vmul.f32 %v1634, %v955
      %v1639 = vmul.f32 %v1636, %v956
      %v1640 = vmul.f32 %v1635, %v955
      %v1641 = vmul.f32 %v1637, %v956
      %1642 = vset.pattern.permute.xlu0 7
      %1643 = vperm.xlu0 %1642, %v1418
      %v1644 = vpop.permute.xlu0 %1643
      %1646 = vset.pattern.permute.xlu0 7
      %1647 = vperm.xlu0 %1646, %v1419
      %v1648 = vpop.permute.xlu0 %1647
      %v1650 = vmul.f32 %v1638, %v1644
      %v1651 = vmul.f32 %v1639, %v1644
      %v1652 = vmul.f32 %v1640, %v1648
      %v1653 = vmul.f32 %v1641, %v1648
      %v1654 = vadd.f32 %v1622, %v1650
      %v1655 = vadd.f32 %v1623, %v1651
      %v1656 = vadd.f32 %v1624, %v1652
      %v1657 = vadd.f32 %v1625, %v1653
      %1658 = vrot.lane.b32.xlu0 %v1332, 111
      %v1659 = vpop.permute.xlu0 %1658
      %1660 = vrot.lane.b32.xlu0 %v1334, 111
      %v1661 = vpop.permute.xlu0 %1660
      %1662 = vrot.lane.b32.xlu0 %v1346, 111
      %v1663 = vpop.permute.xlu0 %1662
      %1664 = vrot.lane.b32.xlu0 %v1348, 111
      %v1665 = vpop.permute.xlu0 %1664
      %v1666 = vsel %vm969, %v1659, %v1663
      %v1667 = vsel %vm969, %v1661, %v1665
      %v1668 = vsel %vm969, %v1663, %v1659
      %v1669 = vsel %vm969, %v1665, %v1661
      %v1670 = vmul.f32 %v1666, %v974
      %v1671 = vmul.f32 %v1668, %v975
      %v1672 = vmul.f32 %v1667, %v974
      %v1673 = vmul.f32 %v1669, %v975
      %1674 = vset.pattern.permute.xlu0 8
      %1675 = vperm.xlu0 %1674, %v1418
      %v1676 = vpop.permute.xlu0 %1675
      %1678 = vset.pattern.permute.xlu0 8
      %1679 = vperm.xlu0 %1678, %v1419
      %v1680 = vpop.permute.xlu0 %1679
      %v1682 = vmul.f32 %v1670, %v1676
      %v1683 = vmul.f32 %v1671, %v1676
      %v1684 = vmul.f32 %v1672, %v1680
      %v1685 = vmul.f32 %v1673, %v1680
      %v1686 = vadd.f32 %v1654, %v1682
      %v1687 = vadd.f32 %v1655, %v1683
      %v1688 = vadd.f32 %v1656, %v1684
      %v1689 = vadd.f32 %v1657, %v1685
      %v1690 = vld [vmem:[%s10] sm:$0xff]
      %v1691 = vld [vmem:[%s10 + $0x8] sm:$0xff]
      %1693 = vset.pattern.permute.xlu0 4
      %1694 = vperm.xlu0 %1693, %v1690
      %v1695 = vpop.permute.xlu0 %1694
      %1698 = vset.pattern.permute.xlu0 4
      %1699 = vperm.xlu0 %1698, %v1691
      %v1700 = vpop.permute.xlu0 %1699
      %v1702 = vmul.f32 %v1366, %v1695
      %v1703 = vmul.f32 %v1380, %v1695
      %v1704 = vmul.f32 %v1368, %v1700
      %v1705 = vmul.f32 %v1382, %v1700
      %1706 = vrot.lane.b32.xlu0 %v1366, 17
      %v1707 = vpop.permute.xlu0 %1706
      %1708 = vrot.lane.b32.xlu0 %v1368, 17
      %v1709 = vpop.permute.xlu0 %1708
      %1710 = vrot.lane.b32.xlu0 %v1380, 17
      %v1711 = vpop.permute.xlu0 %1710
      %1712 = vrot.lane.b32.xlu0 %v1382, 17
      %v1713 = vpop.permute.xlu0 %1712
      %v1714 = vsel %vm754, %v1707, %v1711
      %v1715 = vsel %vm754, %v1709, %v1713
      %v1716 = vsel %vm754, %v1711, %v1707
      %v1717 = vsel %vm754, %v1713, %v1709
      %v1718 = vmul.f32 %v1716, %v759
      %v1719 = vmul.f32 %v1714, %v760
      %v1720 = vmul.f32 %v1717, %v759
      %v1721 = vmul.f32 %v1715, %v760
      %1722 = vset.pattern.permute.xlu0 0
      %1723 = vperm.xlu0 %1722, %v1690
      %v1724 = vpop.permute.xlu0 %1723
      %1726 = vset.pattern.permute.xlu0 0
      %1727 = vperm.xlu0 %1726, %v1691
      %v1728 = vpop.permute.xlu0 %1727
      %v1730 = vmul.f32 %v1718, %v1724
      %v1731 = vmul.f32 %v1719, %v1724
      %v1732 = vmul.f32 %v1720, %v1728
      %v1733 = vmul.f32 %v1721, %v1728
      %v1734 = vadd.f32 %v1702, %v1730
      %v1735 = vadd.f32 %v1703, %v1731
      %v1736 = vadd.f32 %v1704, %v1732
      %v1737 = vadd.f32 %v1705, %v1733
      %1738 = vrot.lane.b32.xlu0 %v1366, 16
      %v1739 = vpop.permute.xlu0 %1738
      %1740 = vrot.lane.b32.xlu0 %v1368, 16
      %v1741 = vpop.permute.xlu0 %1740
      %1742 = vrot.lane.b32.xlu0 %v1380, 16
      %v1743 = vpop.permute.xlu0 %1742
      %1744 = vrot.lane.b32.xlu0 %v1382, 16
      %v1745 = vpop.permute.xlu0 %1744
      %v1746 = vsel %vm773, %v1739, %v1743
      %v1747 = vsel %vm773, %v1741, %v1745
      %v1748 = vsel %vm773, %v1743, %v1739
      %v1749 = vsel %vm773, %v1745, %v1741
      %v1750 = vmul.f32 %v1748, %v778
      %v1751 = vmul.f32 %v1746, %v779
      %v1752 = vmul.f32 %v1749, %v778
      %v1753 = vmul.f32 %v1747, %v779
      %1754 = vset.pattern.permute.xlu0 1
      %1755 = vperm.xlu0 %1754, %v1690
      %v1756 = vpop.permute.xlu0 %1755
      %1758 = vset.pattern.permute.xlu0 1
      %1759 = vperm.xlu0 %1758, %v1691
      %v1760 = vpop.permute.xlu0 %1759
      %v1762 = vmul.f32 %v1750, %v1756
      %v1763 = vmul.f32 %v1751, %v1756
      %v1764 = vmul.f32 %v1752, %v1760
      %v1765 = vmul.f32 %v1753, %v1760
      %v1766 = vadd.f32 %v1734, %v1762
      %v1767 = vadd.f32 %v1735, %v1763
      %v1768 = vadd.f32 %v1736, %v1764
      %v1769 = vadd.f32 %v1737, %v1765
      %1770 = vrot.lane.b32.xlu0 %v1366, 15
      %v1771 = vpop.permute.xlu0 %1770
      %1772 = vrot.lane.b32.xlu0 %v1368, 15
      %v1773 = vpop.permute.xlu0 %1772
      %1774 = vrot.lane.b32.xlu0 %v1380, 15
      %v1775 = vpop.permute.xlu0 %1774
      %1776 = vrot.lane.b32.xlu0 %v1382, 15
      %v1777 = vpop.permute.xlu0 %1776
      %v1778 = vsel %vm792, %v1771, %v1775
      %v1779 = vsel %vm792, %v1773, %v1777
      %v1780 = vsel %vm792, %v1775, %v1771
      %v1781 = vsel %vm792, %v1777, %v1773
      %v1782 = vmul.f32 %v1780, %v797
      %v1783 = vmul.f32 %v1778, %v798
      %v1784 = vmul.f32 %v1781, %v797
      %v1785 = vmul.f32 %v1779, %v798
      %1786 = vset.pattern.permute.xlu0 2
      %1787 = vperm.xlu0 %1786, %v1690
      %v1788 = vpop.permute.xlu0 %1787
      %1790 = vset.pattern.permute.xlu0 2
      %1791 = vperm.xlu0 %1790, %v1691
      %v1792 = vpop.permute.xlu0 %1791
      %v1794 = vmul.f32 %v1782, %v1788
      %v1795 = vmul.f32 %v1783, %v1788
      %v1796 = vmul.f32 %v1784, %v1792
      %v1797 = vmul.f32 %v1785, %v1792
      %v1798 = vadd.f32 %v1766, %v1794
      %v1799 = vadd.f32 %v1767, %v1795
      %v1800 = vadd.f32 %v1768, %v1796
      %v1801 = vadd.f32 %v1769, %v1797
      %1802 = vrot.lane.b32.xlu0 %v1366, 1
      %v1803 = vpop.permute.xlu0 %1802
      %1804 = vrot.lane.b32.xlu0 %v1368, 1
      %v1805 = vpop.permute.xlu0 %1804
      %1806 = vrot.lane.b32.xlu0 %v1380, 1
      %v1807 = vpop.permute.xlu0 %1806
      %1808 = vrot.lane.b32.xlu0 %v1382, 1
      %v1809 = vpop.permute.xlu0 %1808
      %v1810 = vsel %vm820, %v1803, %v1807
      %v1811 = vsel %vm820, %v1805, %v1809
      %v1812 = vsel %vm820, %v1807, %v1803
      %v1813 = vsel %vm820, %v1809, %v1805
      %v1814 = vmul.f32 %v1812, %v825
      %v1815 = vmul.f32 %v1810, %v826
      %v1816 = vmul.f32 %v1813, %v825
      %v1817 = vmul.f32 %v1811, %v826
      %1818 = vset.pattern.permute.xlu0 3
      %1819 = vperm.xlu0 %1818, %v1690
      %v1820 = vpop.permute.xlu0 %1819
      %1822 = vset.pattern.permute.xlu0 3
      %1823 = vperm.xlu0 %1822, %v1691
      %v1824 = vpop.permute.xlu0 %1823
      %v1826 = vmul.f32 %v1814, %v1820
      %v1827 = vmul.f32 %v1815, %v1820
      %v1828 = vmul.f32 %v1816, %v1824
      %v1829 = vmul.f32 %v1817, %v1824
      %v1830 = vadd.f32 %v1798, %v1826
      %v1831 = vadd.f32 %v1799, %v1827
      %v1832 = vadd.f32 %v1800, %v1828
      %v1833 = vadd.f32 %v1801, %v1829
      %1834 = vrot.lane.b32.xlu0 %v1366, 127
      %v1835 = vpop.permute.xlu0 %1834
      %1836 = vrot.lane.b32.xlu0 %v1368, 127
      %v1837 = vpop.permute.xlu0 %1836
      %1838 = vrot.lane.b32.xlu0 %v1380, 127
      %v1839 = vpop.permute.xlu0 %1838
      %1840 = vrot.lane.b32.xlu0 %v1382, 127
      %v1841 = vpop.permute.xlu0 %1840
      %v1842 = vsel %vm839, %v1835, %v1839
      %v1843 = vsel %vm839, %v1837, %v1841
      %v1844 = vsel %vm839, %v1839, %v1835
      %v1845 = vsel %vm839, %v1841, %v1837
      %v1846 = vmul.f32 %v1842, %v844
      %v1847 = vmul.f32 %v1844, %v845
      %v1848 = vmul.f32 %v1843, %v844
      %v1849 = vmul.f32 %v1845, %v845
      %1850 = vset.pattern.permute.xlu0 5
      %1851 = vperm.xlu0 %1850, %v1690
      %v1852 = vpop.permute.xlu0 %1851
      %1854 = vset.pattern.permute.xlu0 5
      %1855 = vperm.xlu0 %1854, %v1691
      %v1856 = vpop.permute.xlu0 %1855
      %v1858 = vmul.f32 %v1846, %v1852
      %v1859 = vmul.f32 %v1847, %v1852
      %v1860 = vmul.f32 %v1848, %v1856
      %v1861 = vmul.f32 %v1849, %v1856
      %v1862 = vadd.f32 %v1830, %v1858
      %v1863 = vadd.f32 %v1831, %v1859
      %v1864 = vadd.f32 %v1832, %v1860
      %v1865 = vadd.f32 %v1833, %v1861
      %1866 = vrot.lane.b32.xlu0 %v1366, 113
      %v1867 = vpop.permute.xlu0 %1866
      %1868 = vrot.lane.b32.xlu0 %v1368, 113
      %v1869 = vpop.permute.xlu0 %1868
      %1870 = vrot.lane.b32.xlu0 %v1380, 113
      %v1871 = vpop.permute.xlu0 %1870
      %1872 = vrot.lane.b32.xlu0 %v1382, 113
      %v1873 = vpop.permute.xlu0 %1872
      %v1874 = vsel %vm931, %v1867, %v1871
      %v1875 = vsel %vm931, %v1869, %v1873
      %v1876 = vsel %vm931, %v1871, %v1867
      %v1877 = vsel %vm931, %v1873, %v1869
      %v1878 = vmul.f32 %v1874, %v936
      %v1879 = vmul.f32 %v1876, %v937
      %v1880 = vmul.f32 %v1875, %v936
      %v1881 = vmul.f32 %v1877, %v937
      %1882 = vset.pattern.permute.xlu0 6
      %1883 = vperm.xlu0 %1882, %v1690
      %v1884 = vpop.permute.xlu0 %1883
      %1886 = vset.pattern.permute.xlu0 6
      %1887 = vperm.xlu0 %1886, %v1691
      %v1888 = vpop.permute.xlu0 %1887
      %v1890 = vmul.f32 %v1878, %v1884
      %v1891 = vmul.f32 %v1879, %v1884
      %v1892 = vmul.f32 %v1880, %v1888
      %v1893 = vmul.f32 %v1881, %v1888
      %v1894 = vadd.f32 %v1862, %v1890
      %v1895 = vadd.f32 %v1863, %v1891
      %v1896 = vadd.f32 %v1864, %v1892
      %v1897 = vadd.f32 %v1865, %v1893
      %1898 = vrot.lane.b32.xlu0 %v1366, 112
      %v1899 = vpop.permute.xlu0 %1898
      %1900 = vrot.lane.b32.xlu0 %v1368, 112
      %v1901 = vpop.permute.xlu0 %1900
      %1902 = vrot.lane.b32.xlu0 %v1380, 112
      %v1903 = vpop.permute.xlu0 %1902
      %1904 = vrot.lane.b32.xlu0 %v1382, 112
      %v1905 = vpop.permute.xlu0 %1904
      %v1906 = vsel %vm950, %v1899, %v1903
      %v1907 = vsel %vm950, %v1901, %v1905
      %v1908 = vsel %vm950, %v1903, %v1899
      %v1909 = vsel %vm950, %v1905, %v1901
      %v1910 = vmul.f32 %v1906, %v955
      %v1911 = vmul.f32 %v1908, %v956
      %v1912 = vmul.f32 %v1907, %v955
      %v1913 = vmul.f32 %v1909, %v956
      %1914 = vset.pattern.permute.xlu0 7
      %1915 = vperm.xlu0 %1914, %v1690
      %v1916 = vpop.permute.xlu0 %1915
      %1918 = vset.pattern.permute.xlu0 7
      %1919 = vperm.xlu0 %1918, %v1691
      %v1920 = vpop.permute.xlu0 %1919
      %v1922 = vmul.f32 %v1910, %v1916
      %v1923 = vmul.f32 %v1911, %v1916
      %v1924 = vmul.f32 %v1912, %v1920
      %v1925 = vmul.f32 %v1913, %v1920
      %v1926 = vadd.f32 %v1894, %v1922
      %v1927 = vadd.f32 %v1895, %v1923
      %v1928 = vadd.f32 %v1896, %v1924
      %v1929 = vadd.f32 %v1897, %v1925
      %1930 = vrot.lane.b32.xlu0 %v1366, 111
      %v1931 = vpop.permute.xlu0 %1930
      %1932 = vrot.lane.b32.xlu0 %v1368, 111
      %v1933 = vpop.permute.xlu0 %1932
      %1934 = vrot.lane.b32.xlu0 %v1380, 111
      %v1935 = vpop.permute.xlu0 %1934
      %1936 = vrot.lane.b32.xlu0 %v1382, 111
      %v1937 = vpop.permute.xlu0 %1936
      %v1938 = vsel %vm969, %v1931, %v1935
      %v1939 = vsel %vm969, %v1933, %v1937
      %v1940 = vsel %vm969, %v1935, %v1931
      %v1941 = vsel %vm969, %v1937, %v1933
      %v1942 = vmul.f32 %v1938, %v974
      %v1943 = vmul.f32 %v1940, %v975
      %v1944 = vmul.f32 %v1939, %v974
      %v1945 = vmul.f32 %v1941, %v975
      %1946 = vset.pattern.permute.xlu0 8
      %1947 = vperm.xlu0 %1946, %v1690
      %v1948 = vpop.permute.xlu0 %1947
      %1950 = vset.pattern.permute.xlu0 8
      %1951 = vperm.xlu0 %1950, %v1691
      %v1952 = vpop.permute.xlu0 %1951
      %v1954 = vmul.f32 %v1942, %v1948
      %v1955 = vmul.f32 %v1943, %v1948
      %v1956 = vmul.f32 %v1944, %v1952
      %v1957 = vmul.f32 %v1945, %v1952
      %v1958 = vadd.f32 %v1926, %v1954
      %v1959 = vadd.f32 %v1927, %v1955
      %v1960 = vadd.f32 %v1928, %v1956
      %v1961 = vadd.f32 %v1929, %v1957
      %v1962 = vld [vmem:[%s11] sm:$0xff]
      %v1963 = vld [vmem:[%s11 + $0x8] sm:$0xff]
      %1965 = vset.pattern.permute.xlu0 4
      %1966 = vperm.xlu0 %1965, %v1962
      %v1967 = vpop.permute.xlu0 %1966
      %1970 = vset.pattern.permute.xlu0 4
      %1971 = vperm.xlu0 %1970, %v1963
      %v1972 = vpop.permute.xlu0 %1971
      %v1974 = vmul.f32 %v1400, %v1967
      %v1975 = vmul.f32 %v1414, %v1967
      %v1976 = vmul.f32 %v1402, %v1972
      %v1977 = vmul.f32 %v1416, %v1972
      %1978 = vrot.lane.b32.xlu0 %v1400, 17
      %v1979 = vpop.permute.xlu0 %1978
      %1980 = vrot.lane.b32.xlu0 %v1402, 17
      %v1981 = vpop.permute.xlu0 %1980
      %1982 = vrot.lane.b32.xlu0 %v1414, 17
      %v1983 = vpop.permute.xlu0 %1982
      %1984 = vrot.lane.b32.xlu0 %v1416, 17
      %v1985 = vpop.permute.xlu0 %1984
      %v1986 = vsel %vm754, %v1979, %v1983
      %v1987 = vsel %vm754, %v1981, %v1985
      %v1988 = vsel %vm754, %v1983, %v1979
      %v1989 = vsel %vm754, %v1985, %v1981
      %v1990 = vmul.f32 %v1988, %v759
      %v1991 = vmul.f32 %v1986, %v760
      %v1992 = vmul.f32 %v1989, %v759
      %v1993 = vmul.f32 %v1987, %v760
      %1994 = vset.pattern.permute.xlu0 0
      %1995 = vperm.xlu0 %1994, %v1962
      %v1996 = vpop.permute.xlu0 %1995
      %1998 = vset.pattern.permute.xlu0 0
      %1999 = vperm.xlu0 %1998, %v1963
      %v2000 = vpop.permute.xlu0 %1999
      %v2002 = vmul.f32 %v1990, %v1996
      %v2003 = vmul.f32 %v1991, %v1996
      %v2004 = vmul.f32 %v1992, %v2000
      %v2005 = vmul.f32 %v1993, %v2000
      %v2006 = vadd.f32 %v1974, %v2002
      %v2007 = vadd.f32 %v1975, %v2003
      %v2008 = vadd.f32 %v1976, %v2004
      %v2009 = vadd.f32 %v1977, %v2005
      %2010 = vrot.lane.b32.xlu0 %v1400, 16
      %v2011 = vpop.permute.xlu0 %2010
      %2012 = vrot.lane.b32.xlu0 %v1402, 16
      %v2013 = vpop.permute.xlu0 %2012
      %2014 = vrot.lane.b32.xlu0 %v1414, 16
      %v2015 = vpop.permute.xlu0 %2014
      %2016 = vrot.lane.b32.xlu0 %v1416, 16
      %v2017 = vpop.permute.xlu0 %2016
      %v2018 = vsel %vm773, %v2011, %v2015
      %v2019 = vsel %vm773, %v2013, %v2017
      %v2020 = vsel %vm773, %v2015, %v2011
      %v2021 = vsel %vm773, %v2017, %v2013
      %v2022 = vmul.f32 %v2020, %v778
      %v2023 = vmul.f32 %v2018, %v779
      %v2024 = vmul.f32 %v2021, %v778
      %v2025 = vmul.f32 %v2019, %v779
      %2026 = vset.pattern.permute.xlu0 1
      %2027 = vperm.xlu0 %2026, %v1962
      %v2028 = vpop.permute.xlu0 %2027
      %2030 = vset.pattern.permute.xlu0 1
      %2031 = vperm.xlu0 %2030, %v1963
      %v2032 = vpop.permute.xlu0 %2031
      %v2034 = vmul.f32 %v2022, %v2028
      %v2035 = vmul.f32 %v2023, %v2028
      %v2036 = vmul.f32 %v2024, %v2032
      %v2037 = vmul.f32 %v2025, %v2032
      %v2038 = vadd.f32 %v2006, %v2034
      %v2039 = vadd.f32 %v2007, %v2035
      %v2040 = vadd.f32 %v2008, %v2036
      %v2041 = vadd.f32 %v2009, %v2037
      %2042 = vrot.lane.b32.xlu0 %v1400, 15
      %v2043 = vpop.permute.xlu0 %2042
      %2044 = vrot.lane.b32.xlu0 %v1402, 15
      %v2045 = vpop.permute.xlu0 %2044
      %2046 = vrot.lane.b32.xlu0 %v1414, 15
      %v2047 = vpop.permute.xlu0 %2046
      %2048 = vrot.lane.b32.xlu0 %v1416, 15
      %v2049 = vpop.permute.xlu0 %2048
      %v2050 = vsel %vm792, %v2043, %v2047
      %v2051 = vsel %vm792, %v2045, %v2049
      %v2052 = vsel %vm792, %v2047, %v2043
      %v2053 = vsel %vm792, %v2049, %v2045
      %v2054 = vmul.f32 %v2052, %v797
      %v2055 = vmul.f32 %v2050, %v798
      %v2056 = vmul.f32 %v2053, %v797
      %v2057 = vmul.f32 %v2051, %v798
      %2058 = vset.pattern.permute.xlu0 2
      %2059 = vperm.xlu0 %2058, %v1962
      %v2060 = vpop.permute.xlu0 %2059
      %2062 = vset.pattern.permute.xlu0 2
      %2063 = vperm.xlu0 %2062, %v1963
      %v2064 = vpop.permute.xlu0 %2063
      %v2066 = vmul.f32 %v2054, %v2060
      %v2067 = vmul.f32 %v2055, %v2060
      %v2068 = vmul.f32 %v2056, %v2064
      %v2069 = vmul.f32 %v2057, %v2064
      %v2070 = vadd.f32 %v2038, %v2066
      %v2071 = vadd.f32 %v2039, %v2067
      %v2072 = vadd.f32 %v2040, %v2068
      %v2073 = vadd.f32 %v2041, %v2069
      %2074 = vrot.lane.b32.xlu0 %v1400, 1
      %v2075 = vpop.permute.xlu0 %2074
      %2076 = vrot.lane.b32.xlu0 %v1402, 1
      %v2077 = vpop.permute.xlu0 %2076
      %2078 = vrot.lane.b32.xlu0 %v1414, 1
      %v2079 = vpop.permute.xlu0 %2078
      %2080 = vrot.lane.b32.xlu0 %v1416, 1
      %v2081 = vpop.permute.xlu0 %2080
      %v2082 = vsel %vm820, %v2075, %v2079
      %v2083 = vsel %vm820, %v2077, %v2081
      %v2084 = vsel %vm820, %v2079, %v2075
      %v2085 = vsel %vm820, %v2081, %v2077
      %v2086 = vmul.f32 %v2084, %v825
      %v2087 = vmul.f32 %v2082, %v826
      %v2088 = vmul.f32 %v2085, %v825
      %v2089 = vmul.f32 %v2083, %v826
      %2090 = vset.pattern.permute.xlu0 3
      %2091 = vperm.xlu0 %2090, %v1962
      %v2092 = vpop.permute.xlu0 %2091
      %2094 = vset.pattern.permute.xlu0 3
      %2095 = vperm.xlu0 %2094, %v1963
      %v2096 = vpop.permute.xlu0 %2095
      %v2098 = vmul.f32 %v2086, %v2092
      %v2099 = vmul.f32 %v2087, %v2092
      %v2100 = vmul.f32 %v2088, %v2096
      %v2101 = vmul.f32 %v2089, %v2096
      %v2102 = vadd.f32 %v2070, %v2098
      %v2103 = vadd.f32 %v2071, %v2099
      %v2104 = vadd.f32 %v2072, %v2100
      %v2105 = vadd.f32 %v2073, %v2101
      %2106 = vrot.lane.b32.xlu0 %v1400, 127
      %v2107 = vpop.permute.xlu0 %2106
      %2108 = vrot.lane.b32.xlu0 %v1402, 127
      %v2109 = vpop.permute.xlu0 %2108
      %2110 = vrot.lane.b32.xlu0 %v1414, 127
      %v2111 = vpop.permute.xlu0 %2110
      %2112 = vrot.lane.b32.xlu0 %v1416, 127
      %v2113 = vpop.permute.xlu0 %2112
      %v2114 = vsel %vm839, %v2107, %v2111
      %v2115 = vsel %vm839, %v2109, %v2113
      %v2116 = vsel %vm839, %v2111, %v2107
      %v2117 = vsel %vm839, %v2113, %v2109
      %v2118 = vmul.f32 %v2114, %v844
      %v2119 = vmul.f32 %v2116, %v845
      %v2120 = vmul.f32 %v2115, %v844
      %v2121 = vmul.f32 %v2117, %v845
      %2122 = vset.pattern.permute.xlu0 5
      %2123 = vperm.xlu0 %2122, %v1962
      %v2124 = vpop.permute.xlu0 %2123
      %2126 = vset.pattern.permute.xlu0 5
      %2127 = vperm.xlu0 %2126, %v1963
      %v2128 = vpop.permute.xlu0 %2127
      %v2130 = vmul.f32 %v2118, %v2124
      %v2131 = vmul.f32 %v2119, %v2124
      %v2132 = vmul.f32 %v2120, %v2128
      %v2133 = vmul.f32 %v2121, %v2128
      %v2134 = vadd.f32 %v2102, %v2130
      %v2135 = vadd.f32 %v2103, %v2131
      %v2136 = vadd.f32 %v2104, %v2132
      %v2137 = vadd.f32 %v2105, %v2133
      %2138 = vrot.lane.b32.xlu0 %v1400, 113
      %v2139 = vpop.permute.xlu0 %2138
      %2140 = vrot.lane.b32.xlu0 %v1402, 113
      %v2141 = vpop.permute.xlu0 %2140
      %2142 = vrot.lane.b32.xlu0 %v1414, 113
      %v2143 = vpop.permute.xlu0 %2142
      %2144 = vrot.lane.b32.xlu0 %v1416, 113
      %v2145 = vpop.permute.xlu0 %2144
      %v2146 = vsel %vm931, %v2139, %v2143
      %v2147 = vsel %vm931, %v2141, %v2145
      %v2148 = vsel %vm931, %v2143, %v2139
      %v2149 = vsel %vm931, %v2145, %v2141
      %v2150 = vmul.f32 %v2146, %v936
      %v2151 = vmul.f32 %v2148, %v937
      %v2152 = vmul.f32 %v2147, %v936
      %v2153 = vmul.f32 %v2149, %v937
      %2154 = vset.pattern.permute.xlu0 6
      %2155 = vperm.xlu0 %2154, %v1962
      %v2156 = vpop.permute.xlu0 %2155
      %2158 = vset.pattern.permute.xlu0 6
      %2159 = vperm.xlu0 %2158, %v1963
      %v2160 = vpop.permute.xlu0 %2159
      %v2162 = vmul.f32 %v2150, %v2156
      %v2163 = vmul.f32 %v2151, %v2156
      %v2164 = vmul.f32 %v2152, %v2160
      %v2165 = vmul.f32 %v2153, %v2160
      %v2166 = vadd.f32 %v2134, %v2162
      %v2167 = vadd.f32 %v2135, %v2163
      %v2168 = vadd.f32 %v2136, %v2164
      %v2169 = vadd.f32 %v2137, %v2165
      %2170 = vrot.lane.b32.xlu0 %v1400, 112
      %v2171 = vpop.permute.xlu0 %2170
      %2172 = vrot.lane.b32.xlu0 %v1402, 112
      %v2173 = vpop.permute.xlu0 %2172
      %2174 = vrot.lane.b32.xlu0 %v1414, 112
      %v2175 = vpop.permute.xlu0 %2174
      %2176 = vrot.lane.b32.xlu0 %v1416, 112
      %v2177 = vpop.permute.xlu0 %2176
      %v2178 = vsel %vm950, %v2171, %v2175
      %v2179 = vsel %vm950, %v2173, %v2177
      %v2180 = vsel %vm950, %v2175, %v2171
      %v2181 = vsel %vm950, %v2177, %v2173
      %v2182 = vmul.f32 %v2178, %v955
      %v2183 = vmul.f32 %v2180, %v956
      %v2184 = vmul.f32 %v2179, %v955
      %v2185 = vmul.f32 %v2181, %v956
      %2186 = vset.pattern.permute.xlu0 7
      %2187 = vperm.xlu0 %2186, %v1962
      %v2188 = vpop.permute.xlu0 %2187
      %2190 = vset.pattern.permute.xlu0 7
      %2191 = vperm.xlu0 %2190, %v1963
      %v2192 = vpop.permute.xlu0 %2191
      %v2194 = vmul.f32 %v2182, %v2188
      %v2195 = vmul.f32 %v2183, %v2188
      %v2196 = vmul.f32 %v2184, %v2192
      %v2197 = vmul.f32 %v2185, %v2192
      %v2198 = vadd.f32 %v2166, %v2194
      %v2199 = vadd.f32 %v2167, %v2195
      %v2200 = vadd.f32 %v2168, %v2196
      %v2201 = vadd.f32 %v2169, %v2197
      %2202 = vrot.lane.b32.xlu0 %v1400, 111
      %v2203 = vpop.permute.xlu0 %2202
      %2204 = vrot.lane.b32.xlu0 %v1402, 111
      %v2205 = vpop.permute.xlu0 %2204
      %2206 = vrot.lane.b32.xlu0 %v1414, 111
      %v2207 = vpop.permute.xlu0 %2206
      %2208 = vrot.lane.b32.xlu0 %v1416, 111
      %v2209 = vpop.permute.xlu0 %2208
      %v2210 = vsel %vm969, %v2203, %v2207
      %v2211 = vsel %vm969, %v2205, %v2209
      %v2212 = vsel %vm969, %v2207, %v2203
      %v2213 = vsel %vm969, %v2209, %v2205
      %v2214 = vmul.f32 %v2210, %v974
      %v2215 = vmul.f32 %v2212, %v975
      %v2216 = vmul.f32 %v2211, %v974
      %v2217 = vmul.f32 %v2213, %v975
      %2218 = vset.pattern.permute.xlu0 8
      %2219 = vperm.xlu0 %2218, %v1962
      %v2220 = vpop.permute.xlu0 %2219
      %2222 = vset.pattern.permute.xlu0 8
      %2223 = vperm.xlu0 %2222, %v1963
      %v2224 = vpop.permute.xlu0 %2223
      %v2226 = vmul.f32 %v2214, %v2220
      %v2227 = vmul.f32 %v2215, %v2220
      %v2228 = vmul.f32 %v2216, %v2224
      %v2229 = vmul.f32 %v2217, %v2224
      %v2230 = vadd.f32 %v2198, %v2226
      %v2231 = vadd.f32 %v2199, %v2227
      %v2232 = vadd.f32 %v2200, %v2228
      %v2233 = vadd.f32 %v2201, %v2229
      %v2234 = vmul.f32 %v1686, %v1686
      %v2235 = vmul.f32 %v1687, %v1687
      %v2236 = vmul.f32 %v1688, %v1688
      %v2237 = vmul.f32 %v1689, %v1689
      %v2238 = vadd.f32 %v2234, %v2235
      %2239 = vadd.xlane.f32.xlu0 %v2238
      %v2240 = vpop.xlane.xlu0 %2239
      %v2241 = vadd.f32 %v2236, %v2237
      %2242 = vadd.xlane.f32.xlu0 %v2241
      %v2243 = vpop.xlane.xlu0 %2242
      %v2244 = vmax.f32 %v2240, 1e-24
      %v2245 = vmax.f32 %v2243, 1e-24
      %v2246 = vrsqrt.pop %v2244
      %v2247 = vmul.f32 %v2246, %v2244
      %v2248 = vmul.f32 %v2247, %v2246
      %v2249 = vmul.f32 0.5, %v2248
      %v2250 = vsub.f32 1.5, %v2249
      %v2251 = vmul.f32 %v2246, %v2250
      %vm2252 = vweird.f32 %v2244
      %vm2253 = vweird.f32 %v2246
      %vm2254 = vmor %vm2252, %vm2253
      %v2255 = vsel %vm2254, %v2246, %v2251
      %v2256 = vrsqrt.pop %v2245
      %v2257 = vmul.f32 %v2256, %v2245
      %v2258 = vmul.f32 %v2257, %v2256
      %v2259 = vmul.f32 0.5, %v2258
      %v2260 = vsub.f32 1.5, %v2259
      %v2261 = vmul.f32 %v2256, %v2260
      %vm2262 = vweird.f32 %v2245
      %vm2263 = vweird.f32 %v2256
      %vm2264 = vmor %vm2262, %vm2263
      %v2265 = vsel %vm2264, %v2256, %v2261
      %v2266 = vmul.f32 %v1686, %v2255
      %v2267 = vmul.f32 %v1687, %v2255
      %v2268 = vmul.f32 %v1688, %v2265
      %v2269 = vmul.f32 %v1689, %v2265
      %v2270 = vmul.f32 %v1958, %v1958
      %v2271 = vmul.f32 %v1959, %v1959
      %v2272 = vmul.f32 %v1960, %v1960
      %v2273 = vmul.f32 %v1961, %v1961
      %v2274 = vadd.f32 %v2270, %v2271
      %2275 = vadd.xlane.f32.xlu0 %v2274
      %v2276 = vpop.xlane.xlu0 %2275
      %v2277 = vadd.f32 %v2272, %v2273
      %2278 = vadd.xlane.f32.xlu0 %v2277
      %v2279 = vpop.xlane.xlu0 %2278
      %v2280 = vmax.f32 %v2276, 1e-24
      %v2281 = vmax.f32 %v2279, 1e-24
      %v2282 = vrsqrt.pop %v2280
      %v2283 = vmul.f32 %v2282, %v2280
      %v2284 = vmul.f32 %v2283, %v2282
      %v2285 = vmul.f32 0.5, %v2284
      %v2286 = vsub.f32 1.5, %v2285
      %v2287 = vmul.f32 %v2282, %v2286
      %vm2288 = vweird.f32 %v2280
      %vm2289 = vweird.f32 %v2282
      %vm2290 = vmor %vm2288, %vm2289
      %v2291 = vsel %vm2290, %v2282, %v2287
      %v2292 = vrsqrt.pop %v2281
      %v2293 = vmul.f32 %v2292, %v2281
      %v2294 = vmul.f32 %v2293, %v2292
      %v2295 = vmul.f32 0.5, %v2294
      %v2296 = vsub.f32 1.5, %v2295
      %v2297 = vmul.f32 %v2292, %v2296
      %vm2298 = vweird.f32 %v2281
      %vm2299 = vweird.f32 %v2292
      %vm2300 = vmor %vm2298, %vm2299
      %v2301 = vsel %vm2300, %v2292, %v2297
      %v2302 = vmul.f32 %v1958, %v2291
      %v2303 = vmul.f32 %v1959, %v2291
      %v2304 = vmul.f32 %v1960, %v2301
      %v2305 = vmul.f32 %v1961, %v2301
      %v2306 = vld [vmem:[%s13] sm:$0xff]
      %v2307 = vld [vmem:[%s13 + $0x8] sm:$0xff]
      %2309 = vset.pattern.permute.xlu0 0
      %2310 = vperm.xlu0 %2309, %v2306
      %v2311 = vpop.permute.xlu0 %2310
      %2314 = vset.pattern.permute.xlu0 0
      %2315 = vperm.xlu0 %2314, %v2307
      %v2316 = vpop.permute.xlu0 %2315
      %v2318 = vmul.f32 %v2266, %v2311
      %v2319 = vmul.f32 %v2267, %v2311
      %v2320 = vmul.f32 %v2268, %v2316
      %v2321 = vmul.f32 %v2269, %v2316
      %v2322 = vpack.c.bf16 %v2320, %v2318
      %v2323 = vpack.c.bf16 %v2321, %v2319
      %v2324 = vpack.c.bf16 %v2304, %v2302
      %v2325 = vpack.c.bf16 %v2305, %v2303
      %v2326 = vld [vmem:[%s14] sm:$0xff]
      %v2327 = vld [vmem:[%s14 + $0x8] sm:$0xff]
      %2328 = vmatpush.bf16.xpose.msra.mxu0 0
      %2329 = vmatpush.bf16.xpose.msra.mxu0 0
      %2330 = vmatpush.bf16.xpose.msra.mxu0 0
      %2331 = vmatpush.bf16.xpose.msra.mxu0 0
      %2332 = vmatpush.bf16.xpose.msra.mxu0 0
      %2333 = vmatpush.bf16.xpose.msra.mxu0 0
      %2334 = vmatpush.bf16.xpose.msra.mxu0 0
      %2335 = vmatpush.bf16.xpose.msra.mxu0 %v2324
      %2336 = vmatmul.bf16.gmra.mxu0 %v2322
      %v2337 = vpop.f32.mrf.mxu0
      %v2338 = vadd.f32 %v2326, %v2337
      %v2339 = vpop.f32.mrf.mxu0
      %v2340 = vadd.f32 %v2327, %v2339
      %2341 = vdwg.mxu0
      %2342 = vmatpush.bf16.xpose.msra.mxu0 0
      %2343 = vmatpush.bf16.xpose.msra.mxu0 0
      %2344 = vmatpush.bf16.xpose.msra.mxu0 0
      %2345 = vmatpush.bf16.xpose.msra.mxu0 0
      %2346 = vmatpush.bf16.xpose.msra.mxu0 0
      %2347 = vmatpush.bf16.xpose.msra.mxu0 0
      %2348 = vmatpush.bf16.xpose.msra.mxu0 0
      %2349 = vmatpush.bf16.xpose.msra.mxu0 %v2325
      %2350 = vmatmul.bf16.gmra.mxu0 %v2323
      %v2351 = vpop.f32.mrf.mxu0
      %v2352 = vadd.f32 %v2338, %v2351
      %v2353 = vpop.f32.mrf.mxu0
      %v2354 = vadd.f32 %v2340, %v2353
      %2355 = vdwg.mxu0
      %v2356 = vsel %vm1318, %v2352, -inf
      %2357 = vmax.xlane.f32.xlu0 %v2356
      %v2358 = vpop.xlane.xlu0 %2357
      %v2359 = vsel %vm1318, %v2354, -inf
      %2360 = vmax.xlane.f32.xlu0 %v2359
      %v2361 = vpop.xlane.xlu0 %2360
      %v2362 = vsub.f32 %v2352, %v2358
      %v2363 = vsub.f32 %v2354, %v2361
      %v2364 = vmul.f32 %v2362, 1.442695
      %v2365 = vpow.pop %v2364
      %v2366 = vmul.f32 %v2363, 1.442695
      %v2367 = vpow.pop %v2366
      %v2368 = vsel %vm1318, %v2365, 0.0
      %2369 = vadd.xlane.f32.xlu0 %v2368
      %v2370 = vpop.xlane.xlu0 %2369
      %v2371 = vsel %vm1318, %v2367, 0.0
      %2372 = vadd.xlane.f32.xlu0 %v2371
      %v2373 = vpop.xlane.xlu0 %2372
      %v2374 = vrcp.pop %v2370
      %v2375 = vmul.f32 %v2370, %v2374
      %v2376 = vsub.f32 1.0, %v2375
      %v2377 = vmul.f32 %v2374, %v2376
      %v2378 = vadd.f32 %v2374, %v2377
      %vm2379 = vweird.f32 %v2370
      %vm2380 = vweird.f32 %v2374
      %vm2381 = vmor %vm2379, %vm2380
      %v2382 = vsel %vm2381, %v2374, %v2378
      %v2383 = vand.u32 2147483647, %v2370
      %vm2384 = vcmp.eq.f32.partialorder %v2383, 8.507059e+37
      %v2385 = vand.u32 %v2370, 2147483648
      %v2386 = vor.u32 1.1754944e-38, %v2385
      %v2387 = vsel %vm2384, %v2386, %v2382
      %v2388 = vmul.f32 %v2365, %v2387
      %v2389 = vrcp.pop %v2373
      %v2390 = vmul.f32 %v2373, %v2389
      %v2391 = vsub.f32 1.0, %v2390
      %v2392 = vmul.f32 %v2389, %v2391
      %v2393 = vadd.f32 %v2389, %v2392
      %vm2394 = vweird.f32 %v2373
      %vm2395 = vweird.f32 %v2389
      %vm2396 = vmor %vm2394, %vm2395
      %v2397 = vsel %vm2396, %v2389, %v2393
      %v2398 = vand.u32 2147483647, %v2373
      %vm2399 = vcmp.eq.f32.partialorder %v2398, 8.507059e+37
      %v2400 = vand.u32 %v2373, 2147483648
      %v2401 = vor.u32 1.1754944e-38, %v2400
      %v2402 = vsel %vm2399, %v2401, %v2397
      %v2403 = vmul.f32 %v2367, %v2402
      %v2404 = vpack.c.bf16 %v2403, %v2388
      %v2405 = vpack.c.bf16 %v2232, %v2230
      %v2406 = vpack.c.bf16 %v2233, %v2231
      %v2408 = vsel %vm1318, %v2404, 0
      %2410 = vmatpush.bf16.msra.mxu0 0
      %2411 = vmatpush.bf16.msra.mxu0 0
      %2412 = vmatpush.bf16.msra.mxu0 0
      %2413 = vmatpush.bf16.msra.mxu0 0
      %2414 = vmatpush.bf16.msra.mxu0 0
      %2415 = vmatpush.bf16.msra.mxu0 0
      %2416 = vmatpush.bf16.msra.mxu0 0
      %2417 = vmatpush.bf16.msra.mxu0 %v2405
      %2418 = vmatmul.bf16.gmra.mxu0 %v2408
      %v2419 = vpop.f32.mrf.mxu0
      %v2420 = vadd.f32 0.0, %v2419
      %v2421 = vpop.f32.mrf.mxu0
      %v2422 = vadd.f32 0.0, %v2421
      %2423 = vdwg.mxu0
      %2424 = vmatpush.bf16.msra.mxu0 0
      %2425 = vmatpush.bf16.msra.mxu0 0
      %2426 = vmatpush.bf16.msra.mxu0 0
      %2427 = vmatpush.bf16.msra.mxu0 0
      %2428 = vmatpush.bf16.msra.mxu0 0
      %2429 = vmatpush.bf16.msra.mxu0 0
      %2430 = vmatpush.bf16.msra.mxu0 0
      %2431 = vmatpush.bf16.msra.mxu0 %v2406
      %2432 = vmatmul.bf16.gmra.mxu0 %v2408
      %v2433 = vpop.f32.mrf.mxu0
      %v2434 = vadd.f32 0.0, %v2433
      %v2435 = vpop.f32.mrf.mxu0
      %v2436 = vadd.f32 0.0, %v2435
      %2437 = vdwg.mxu0
      %v2438 = vld [vmem:[%s12] sm:$0xff]
      %v2439 = vld [vmem:[%s12 + $0x8] sm:$0xff]
      %v2440 = vpack.c.bf16 %v2439, %v2438
      %v2441 = vpack.c.bf16 %v2422, %v2420
      %v2442 = vpack.c.bf16 %v2436, %v2434
      %v2444 = vsel %vm1318, %v2440, 0
      %2446 = vmatpush.bf16.msra.mxu0 0
      %2447 = vmatpush.bf16.msra.mxu0 0
      %2448 = vmatpush.bf16.msra.mxu0 0
      %2449 = vmatpush.bf16.msra.mxu0 0
      %2450 = vmatpush.bf16.msra.mxu0 0
      %2451 = vmatpush.bf16.msra.mxu0 0
      %2452 = vmatpush.bf16.msra.mxu0 0
      %2453 = vmatpush.bf16.msra.mxu0 %v2441
      %2454 = vmatmul.bf16.gmra.mxu0 %v2444
      %v2455 = vpop.f32.mrf.mxu0
      %v2456 = vadd.f32 0.0, %v2455
      %v2457 = vpop.f32.mrf.mxu0
      %v2458 = vadd.f32 0.0, %v2457
      %2459 = vdwg.mxu0
      %2460 = vmatpush.bf16.msra.mxu0 0
      %2461 = vmatpush.bf16.msra.mxu0 0
      %2462 = vmatpush.bf16.msra.mxu0 0
      %2463 = vmatpush.bf16.msra.mxu0 0
      %2464 = vmatpush.bf16.msra.mxu0 0
      %2465 = vmatpush.bf16.msra.mxu0 0
      %2466 = vmatpush.bf16.msra.mxu0 0
      %2467 = vmatpush.bf16.msra.mxu0 %v2442
      %2468 = vmatmul.bf16.gmra.mxu0 %v2444
      %v2469 = vpop.f32.mrf.mxu0
      %v2470 = vadd.f32 0.0, %v2469
      %v2471 = vpop.f32.mrf.mxu0
      %v2472 = vadd.f32 0.0, %v2471
      %2473 = vdwg.mxu0
      %v2474 = vadd.f32 %v1037, %v2456
      %v2475 = vadd.f32 %v1038, %v2470
      %v2476 = vadd.f32 %v1039, %v2458
      %v2477 = vadd.f32 %v1040, %v2472
      %v2478 = vpack.c.bf16 %v2476, %v2474
      %v2479 = vpack.c.bf16 %v2477, %v2475
      %2480 = vmatpush.bf16.msra.mxu0 0
      %2481 = vmatpush.bf16.msra.mxu0 0
      %2482 = vmatpush.bf16.msra.mxu0 0
      %2483 = vmatpush.bf16.msra.mxu0 0
      %2484 = vmatpush.bf16.msra.mxu0 0
      %2485 = vmatpush.bf16.msra.mxu0 0
      %2486 = vmatpush.bf16.msra.mxu0 0
      %2487 = vmatpush.bf16.msra.mxu0 %v1313
      %2488 = vmatmul.bf16.gmra.mxu0 %v1320
      %v2489 = vpop.f32.mrf.mxu0
      %v2490 = vadd.f32 0.0, %v2489
      %v2491 = vpop.f32.mrf.mxu0
      %v2492 = vadd.f32 0.0, %v2491
      %2493 = vdwg.mxu0
      %2494 = vmatpush.bf16.msra.mxu0 0
      %2495 = vmatpush.bf16.msra.mxu0 0
      %2496 = vmatpush.bf16.msra.mxu0 0
      %2497 = vmatpush.bf16.msra.mxu0 0
      %2498 = vmatpush.bf16.msra.mxu0 0
      %2499 = vmatpush.bf16.msra.mxu0 0
      %2500 = vmatpush.bf16.msra.mxu0 0
      %2501 = vmatpush.bf16.msra.mxu0 %v1314
      %2502 = vmatmul.bf16.gmra.mxu0 %v1320
      %v2503 = vpop.f32.mrf.mxu0
      %v2504 = vadd.f32 0.0, %v2503
      %v2505 = vpop.f32.mrf.mxu0
      %v2506 = vadd.f32 0.0, %v2505
      %2507 = vdwg.mxu0
      %2508 = vmatpush.bf16.msra.mxu0 0
      %2509 = vmatpush.bf16.msra.mxu0 0
      %2510 = vmatpush.bf16.msra.mxu0 0
      %2511 = vmatpush.bf16.msra.mxu0 0
      %2512 = vmatpush.bf16.msra.mxu0 0
      %2513 = vmatpush.bf16.msra.mxu0 0
      %2514 = vmatpush.bf16.msra.mxu0 0
      %2515 = vmatpush.bf16.msra.mxu0 %v2478
      %2516 = vmatmul.bf16.gmra.mxu0 %v1354
      %v2517 = vpop.f32.mrf.mxu0
      %v2518 = vadd.f32 0.0, %v2517
      %v2519 = vpop.f32.mrf.mxu0
      %v2520 = vadd.f32 0.0, %v2519
      %2521 = vdwg.mxu0
      %2522 = vmatpush.bf16.msra.mxu0 0
      %2523 = vmatpush.bf16.msra.mxu0 0
      %2524 = vmatpush.bf16.msra.mxu0 0
      %2525 = vmatpush.bf16.msra.mxu0 0
      %2526 = vmatpush.bf16.msra.mxu0 0
      %2527 = vmatpush.bf16.msra.mxu0 0
      %2528 = vmatpush.bf16.msra.mxu0 0
      %2529 = vmatpush.bf16.msra.mxu0 %v2479
      %2530 = vmatmul.bf16.gmra.mxu0 %v1354
      %v2531 = vpop.f32.mrf.mxu0
      %v2532 = vadd.f32 0.0, %v2531
      %v2533 = vpop.f32.mrf.mxu0
      %v2534 = vadd.f32 0.0, %v2533
      %2535 = vdwg.mxu0
      %2536 = vmatpush.bf16.msra.mxu0 0
      %2537 = vmatpush.bf16.msra.mxu0 0
      %2538 = vmatpush.bf16.msra.mxu0 0
      %2539 = vmatpush.bf16.msra.mxu0 0
      %2540 = vmatpush.bf16.msra.mxu0 0
      %2541 = vmatpush.bf16.msra.mxu0 0
      %2542 = vmatpush.bf16.msra.mxu0 0
      %2543 = vmatpush.bf16.msra.mxu0 %v2478
      %2544 = vmatmul.bf16.gmra.mxu0 %v1388
      %v2545 = vpop.f32.mrf.mxu0
      %v2546 = vadd.f32 0.0, %v2545
      %v2547 = vpop.f32.mrf.mxu0
      %v2548 = vadd.f32 0.0, %v2547
      %2549 = vdwg.mxu0
      %2550 = vmatpush.bf16.msra.mxu0 0
      %2551 = vmatpush.bf16.msra.mxu0 0
      %2552 = vmatpush.bf16.msra.mxu0 0
      %2553 = vmatpush.bf16.msra.mxu0 0
      %2554 = vmatpush.bf16.msra.mxu0 0
      %2555 = vmatpush.bf16.msra.mxu0 0
      %2556 = vmatpush.bf16.msra.mxu0 0
      %2557 = vmatpush.bf16.msra.mxu0 %v2479
      %2558 = vmatmul.bf16.gmra.mxu0 %v1388
      %v2559 = vpop.f32.mrf.mxu0
      %v2560 = vadd.f32 0.0, %v2559
      %v2561 = vpop.f32.mrf.mxu0
      %v2562 = vadd.f32 0.0, %v2561
      %2563 = vdwg.mxu0
      %v2564 = vmul.f32 %v2490, %v1423
      %v2565 = vmul.f32 %v2504, %v1423
      %v2566 = vmul.f32 %v2492, %v1428
      %v2567 = vmul.f32 %v2506, %v1428
      %2568 = vrot.lane.b32.xlu0 %v2490, 17
      %v2569 = vpop.permute.xlu0 %2568
      %2570 = vrot.lane.b32.xlu0 %v2492, 17
      %v2571 = vpop.permute.xlu0 %2570
      %2572 = vrot.lane.b32.xlu0 %v2504, 17
      %v2573 = vpop.permute.xlu0 %2572
      %2574 = vrot.lane.b32.xlu0 %v2506, 17
      %v2575 = vpop.permute.xlu0 %2574
      %v2576 = vsel %vm754, %v2569, %v2573
      %v2577 = vsel %vm754, %v2571, %v2575
      %v2578 = vsel %vm754, %v2573, %v2569
      %v2579 = vsel %vm754, %v2575, %v2571
      %v2580 = vmul.f32 %v2578, %v759
      %v2581 = vmul.f32 %v2576, %v760
      %v2582 = vmul.f32 %v2579, %v759
      %v2583 = vmul.f32 %v2577, %v760
      %v2584 = vmul.f32 %v2580, %v1452
      %v2585 = vmul.f32 %v2581, %v1452
      %v2586 = vmul.f32 %v2582, %v1456
      %v2587 = vmul.f32 %v2583, %v1456
      %v2588 = vadd.f32 %v2564, %v2584
      %v2589 = vadd.f32 %v2565, %v2585
      %v2590 = vadd.f32 %v2566, %v2586
      %v2591 = vadd.f32 %v2567, %v2587
      %2592 = vrot.lane.b32.xlu0 %v2490, 16
      %v2593 = vpop.permute.xlu0 %2592
      %2594 = vrot.lane.b32.xlu0 %v2492, 16
      %v2595 = vpop.permute.xlu0 %2594
      %2596 = vrot.lane.b32.xlu0 %v2504, 16
      %v2597 = vpop.permute.xlu0 %2596
      %2598 = vrot.lane.b32.xlu0 %v2506, 16
      %v2599 = vpop.permute.xlu0 %2598
      %v2600 = vsel %vm773, %v2593, %v2597
      %v2601 = vsel %vm773, %v2595, %v2599
      %v2602 = vsel %vm773, %v2597, %v2593
      %v2603 = vsel %vm773, %v2599, %v2595
      %v2604 = vmul.f32 %v2602, %v778
      %v2605 = vmul.f32 %v2600, %v779
      %v2606 = vmul.f32 %v2603, %v778
      %v2607 = vmul.f32 %v2601, %v779
      %v2608 = vmul.f32 %v2604, %v1484
      %v2609 = vmul.f32 %v2605, %v1484
      %v2610 = vmul.f32 %v2606, %v1488
      %v2611 = vmul.f32 %v2607, %v1488
      %v2612 = vadd.f32 %v2588, %v2608
      %v2613 = vadd.f32 %v2589, %v2609
      %v2614 = vadd.f32 %v2590, %v2610
      %v2615 = vadd.f32 %v2591, %v2611
      %2616 = vrot.lane.b32.xlu0 %v2490, 15
      %v2617 = vpop.permute.xlu0 %2616
      %2618 = vrot.lane.b32.xlu0 %v2492, 15
      %v2619 = vpop.permute.xlu0 %2618
      %2620 = vrot.lane.b32.xlu0 %v2504, 15
      %v2621 = vpop.permute.xlu0 %2620
      %2622 = vrot.lane.b32.xlu0 %v2506, 15
      %v2623 = vpop.permute.xlu0 %2622
      %v2624 = vsel %vm792, %v2617, %v2621
      %v2625 = vsel %vm792, %v2619, %v2623
      %v2626 = vsel %vm792, %v2621, %v2617
      %v2627 = vsel %vm792, %v2623, %v2619
      %v2628 = vmul.f32 %v2626, %v797
      %v2629 = vmul.f32 %v2624, %v798
      %v2630 = vmul.f32 %v2627, %v797
      %v2631 = vmul.f32 %v2625, %v798
      %v2632 = vmul.f32 %v2628, %v1516
      %v2633 = vmul.f32 %v2629, %v1516
      %v2634 = vmul.f32 %v2630, %v1520
      %v2635 = vmul.f32 %v2631, %v1520
      %v2636 = vadd.f32 %v2612, %v2632
      %v2637 = vadd.f32 %v2613, %v2633
      %v2638 = vadd.f32 %v2614, %v2634
      %v2639 = vadd.f32 %v2615, %v2635
      %2640 = vrot.lane.b32.xlu0 %v2490, 1
      %v2641 = vpop.permute.xlu0 %2640
      %2642 = vrot.lane.b32.xlu0 %v2492, 1
      %v2643 = vpop.permute.xlu0 %2642
      %2644 = vrot.lane.b32.xlu0 %v2504, 1
      %v2645 = vpop.permute.xlu0 %2644
      %2646 = vrot.lane.b32.xlu0 %v2506, 1
      %v2647 = vpop.permute.xlu0 %2646
      %v2648 = vsel %vm820, %v2641, %v2645
      %v2649 = vsel %vm820, %v2643, %v2647
      %v2650 = vsel %vm820, %v2645, %v2641
      %v2651 = vsel %vm820, %v2647, %v2643
      %v2652 = vmul.f32 %v2650, %v825
      %v2653 = vmul.f32 %v2648, %v826
      %v2654 = vmul.f32 %v2651, %v825
      %v2655 = vmul.f32 %v2649, %v826
      %v2656 = vmul.f32 %v2652, %v1548
      %v2657 = vmul.f32 %v2653, %v1548
      %v2658 = vmul.f32 %v2654, %v1552
      %v2659 = vmul.f32 %v2655, %v1552
      %v2660 = vadd.f32 %v2636, %v2656
      %v2661 = vadd.f32 %v2637, %v2657
      %v2662 = vadd.f32 %v2638, %v2658
      %v2663 = vadd.f32 %v2639, %v2659
      %2664 = vrot.lane.b32.xlu0 %v2490, 127
      %v2665 = vpop.permute.xlu0 %2664
      %2666 = vrot.lane.b32.xlu0 %v2492, 127
      %v2667 = vpop.permute.xlu0 %2666
      %2668 = vrot.lane.b32.xlu0 %v2504, 127
      %v2669 = vpop.permute.xlu0 %2668
      %2670 = vrot.lane.b32.xlu0 %v2506, 127
      %v2671 = vpop.permute.xlu0 %2670
      %v2672 = vsel %vm839, %v2665, %v2669
      %v2673 = vsel %vm839, %v2667, %v2671
      %v2674 = vsel %vm839, %v2669, %v2665
      %v2675 = vsel %vm839, %v2671, %v2667
      %v2676 = vmul.f32 %v2672, %v844
      %v2677 = vmul.f32 %v2674, %v845
      %v2678 = vmul.f32 %v2673, %v844
      %v2679 = vmul.f32 %v2675, %v845
      %v2680 = vmul.f32 %v2676, %v1580
      %v2681 = vmul.f32 %v2677, %v1580
      %v2682 = vmul.f32 %v2678, %v1584
      %v2683 = vmul.f32 %v2679, %v1584
      %v2684 = vadd.f32 %v2660, %v2680
      %v2685 = vadd.f32 %v2661, %v2681
      %v2686 = vadd.f32 %v2662, %v2682
      %v2687 = vadd.f32 %v2663, %v2683
      %2688 = vrot.lane.b32.xlu0 %v2490, 113
      %v2689 = vpop.permute.xlu0 %2688
      %2690 = vrot.lane.b32.xlu0 %v2492, 113
      %v2691 = vpop.permute.xlu0 %2690
      %2692 = vrot.lane.b32.xlu0 %v2504, 113
      %v2693 = vpop.permute.xlu0 %2692
      %2694 = vrot.lane.b32.xlu0 %v2506, 113
      %v2695 = vpop.permute.xlu0 %2694
      %v2696 = vsel %vm931, %v2689, %v2693
      %v2697 = vsel %vm931, %v2691, %v2695
      %v2698 = vsel %vm931, %v2693, %v2689
      %v2699 = vsel %vm931, %v2695, %v2691
      %v2700 = vmul.f32 %v2696, %v936
      %v2701 = vmul.f32 %v2698, %v937
      %v2702 = vmul.f32 %v2697, %v936
      %v2703 = vmul.f32 %v2699, %v937
      %v2704 = vmul.f32 %v2700, %v1612
      %v2705 = vmul.f32 %v2701, %v1612
      %v2706 = vmul.f32 %v2702, %v1616
      %v2707 = vmul.f32 %v2703, %v1616
      %v2708 = vadd.f32 %v2684, %v2704
      %v2709 = vadd.f32 %v2685, %v2705
      %v2710 = vadd.f32 %v2686, %v2706
      %v2711 = vadd.f32 %v2687, %v2707
      %2712 = vrot.lane.b32.xlu0 %v2490, 112
      %v2713 = vpop.permute.xlu0 %2712
      %2714 = vrot.lane.b32.xlu0 %v2492, 112
      %v2715 = vpop.permute.xlu0 %2714
      %2716 = vrot.lane.b32.xlu0 %v2504, 112
      %v2717 = vpop.permute.xlu0 %2716
      %2718 = vrot.lane.b32.xlu0 %v2506, 112
      %v2719 = vpop.permute.xlu0 %2718
      %v2720 = vsel %vm950, %v2713, %v2717
      %v2721 = vsel %vm950, %v2715, %v2719
      %v2722 = vsel %vm950, %v2717, %v2713
      %v2723 = vsel %vm950, %v2719, %v2715
      %v2724 = vmul.f32 %v2720, %v955
      %v2725 = vmul.f32 %v2722, %v956
      %v2726 = vmul.f32 %v2721, %v955
      %v2727 = vmul.f32 %v2723, %v956
      %v2728 = vmul.f32 %v2724, %v1644
      %v2729 = vmul.f32 %v2725, %v1644
      %v2730 = vmul.f32 %v2726, %v1648
      %v2731 = vmul.f32 %v2727, %v1648
      %v2732 = vadd.f32 %v2708, %v2728
      %v2733 = vadd.f32 %v2709, %v2729
      %v2734 = vadd.f32 %v2710, %v2730
      %v2735 = vadd.f32 %v2711, %v2731
      %2736 = vrot.lane.b32.xlu0 %v2490, 111
      %v2737 = vpop.permute.xlu0 %2736
      %2738 = vrot.lane.b32.xlu0 %v2492, 111
      %v2739 = vpop.permute.xlu0 %2738
      %2740 = vrot.lane.b32.xlu0 %v2504, 111
      %v2741 = vpop.permute.xlu0 %2740
      %2742 = vrot.lane.b32.xlu0 %v2506, 111
      %v2743 = vpop.permute.xlu0 %2742
      %v2744 = vsel %vm969, %v2737, %v2741
      %v2745 = vsel %vm969, %v2739, %v2743
      %v2746 = vsel %vm969, %v2741, %v2737
      %v2747 = vsel %vm969, %v2743, %v2739
      %v2748 = vmul.f32 %v2744, %v974
      %v2749 = vmul.f32 %v2746, %v975
      %v2750 = vmul.f32 %v2745, %v974
      %v2751 = vmul.f32 %v2747, %v975
      %v2752 = vmul.f32 %v2748, %v1676
      %v2753 = vmul.f32 %v2749, %v1676
      %v2754 = vmul.f32 %v2750, %v1680
      %v2755 = vmul.f32 %v2751, %v1680
      %v2756 = vadd.f32 %v2732, %v2752
      %v2757 = vadd.f32 %v2733, %v2753
      %v2758 = vadd.f32 %v2734, %v2754
      %v2759 = vadd.f32 %v2735, %v2755
      %v2760 = vmul.f32 %v2518, %v1695
      %v2761 = vmul.f32 %v2532, %v1695
      %v2762 = vmul.f32 %v2520, %v1700
      %v2763 = vmul.f32 %v2534, %v1700
      %2764 = vrot.lane.b32.xlu0 %v2518, 17
      %v2765 = vpop.permute.xlu0 %2764
      %2766 = vrot.lane.b32.xlu0 %v2520, 17
      %v2767 = vpop.permute.xlu0 %2766
      %2768 = vrot.lane.b32.xlu0 %v2532, 17
      %v2769 = vpop.permute.xlu0 %2768
      %2770 = vrot.lane.b32.xlu0 %v2534, 17
      %v2771 = vpop.permute.xlu0 %2770
      %v2772 = vsel %vm754, %v2765, %v2769
      %v2773 = vsel %vm754, %v2767, %v2771
      %v2774 = vsel %vm754, %v2769, %v2765
      %v2775 = vsel %vm754, %v2771, %v2767
      %v2776 = vmul.f32 %v2774, %v759
      %v2777 = vmul.f32 %v2772, %v760
      %v2778 = vmul.f32 %v2775, %v759
      %v2779 = vmul.f32 %v2773, %v760
      %v2780 = vmul.f32 %v2776, %v1724
      %v2781 = vmul.f32 %v2777, %v1724
      %v2782 = vmul.f32 %v2778, %v1728
      %v2783 = vmul.f32 %v2779, %v1728
      %v2784 = vadd.f32 %v2760, %v2780
      %v2785 = vadd.f32 %v2761, %v2781
      %v2786 = vadd.f32 %v2762, %v2782
      %v2787 = vadd.f32 %v2763, %v2783
      %2788 = vrot.lane.b32.xlu0 %v2518, 16
      %v2789 = vpop.permute.xlu0 %2788
      %2790 = vrot.lane.b32.xlu0 %v2520, 16
      %v2791 = vpop.permute.xlu0 %2790
      %2792 = vrot.lane.b32.xlu0 %v2532, 16
      %v2793 = vpop.permute.xlu0 %2792
      %2794 = vrot.lane.b32.xlu0 %v2534, 16
      %v2795 = vpop.permute.xlu0 %2794
      %v2796 = vsel %vm773, %v2789, %v2793
      %v2797 = vsel %vm773, %v2791, %v2795
      %v2798 = vsel %vm773, %v2793, %v2789
      %v2799 = vsel %vm773, %v2795, %v2791
      %v2800 = vmul.f32 %v2798, %v778
      %v2801 = vmul.f32 %v2796, %v779
      %v2802 = vmul.f32 %v2799, %v778
      %v2803 = vmul.f32 %v2797, %v779
      %v2804 = vmul.f32 %v2800, %v1756
      %v2805 = vmul.f32 %v2801, %v1756
      %v2806 = vmul.f32 %v2802, %v1760
      %v2807 = vmul.f32 %v2803, %v1760
      %v2808 = vadd.f32 %v2784, %v2804
      %v2809 = vadd.f32 %v2785, %v2805
      %v2810 = vadd.f32 %v2786, %v2806
      %v2811 = vadd.f32 %v2787, %v2807
      %2812 = vrot.lane.b32.xlu0 %v2518, 15
      %v2813 = vpop.permute.xlu0 %2812
      %2814 = vrot.lane.b32.xlu0 %v2520, 15
      %v2815 = vpop.permute.xlu0 %2814
      %2816 = vrot.lane.b32.xlu0 %v2532, 15
      %v2817 = vpop.permute.xlu0 %2816
      %2818 = vrot.lane.b32.xlu0 %v2534, 15
      %v2819 = vpop.permute.xlu0 %2818
      %v2820 = vsel %vm792, %v2813, %v2817
      %v2821 = vsel %vm792, %v2815, %v2819
      %v2822 = vsel %vm792, %v2817, %v2813
      %v2823 = vsel %vm792, %v2819, %v2815
      %v2824 = vmul.f32 %v2822, %v797
      %v2825 = vmul.f32 %v2820, %v798
      %v2826 = vmul.f32 %v2823, %v797
      %v2827 = vmul.f32 %v2821, %v798
      %v2828 = vmul.f32 %v2824, %v1788
      %v2829 = vmul.f32 %v2825, %v1788
      %v2830 = vmul.f32 %v2826, %v1792
      %v2831 = vmul.f32 %v2827, %v1792
      %v2832 = vadd.f32 %v2808, %v2828
      %v2833 = vadd.f32 %v2809, %v2829
      %v2834 = vadd.f32 %v2810, %v2830
      %v2835 = vadd.f32 %v2811, %v2831
      %2836 = vrot.lane.b32.xlu0 %v2518, 1
      %v2837 = vpop.permute.xlu0 %2836
      %2838 = vrot.lane.b32.xlu0 %v2520, 1
      %v2839 = vpop.permute.xlu0 %2838
      %2840 = vrot.lane.b32.xlu0 %v2532, 1
      %v2841 = vpop.permute.xlu0 %2840
      %2842 = vrot.lane.b32.xlu0 %v2534, 1
      %v2843 = vpop.permute.xlu0 %2842
      %v2844 = vsel %vm820, %v2837, %v2841
      %v2845 = vsel %vm820, %v2839, %v2843
      %v2846 = vsel %vm820, %v2841, %v2837
      %v2847 = vsel %vm820, %v2843, %v2839
      %v2848 = vmul.f32 %v2846, %v825
      %v2849 = vmul.f32 %v2844, %v826
      %v2850 = vmul.f32 %v2847, %v825
      %v2851 = vmul.f32 %v2845, %v826
      %v2852 = vmul.f32 %v2848, %v1820
      %v2853 = vmul.f32 %v2849, %v1820
      %v2854 = vmul.f32 %v2850, %v1824
      %v2855 = vmul.f32 %v2851, %v1824
      %v2856 = vadd.f32 %v2832, %v2852
      %v2857 = vadd.f32 %v2833, %v2853
      %v2858 = vadd.f32 %v2834, %v2854
      %v2859 = vadd.f32 %v2835, %v2855
      %2860 = vrot.lane.b32.xlu0 %v2518, 127
      %v2861 = vpop.permute.xlu0 %2860
      %2862 = vrot.lane.b32.xlu0 %v2520, 127
      %v2863 = vpop.permute.xlu0 %2862
      %2864 = vrot.lane.b32.xlu0 %v2532, 127
      %v2865 = vpop.permute.xlu0 %2864
      %2866 = vrot.lane.b32.xlu0 %v2534, 127
      %v2867 = vpop.permute.xlu0 %2866
      %v2868 = vsel %vm839, %v2861, %v2865
      %v2869 = vsel %vm839, %v2863, %v2867
      %v2870 = vsel %vm839, %v2865, %v2861
      %v2871 = vsel %vm839, %v2867, %v2863
      %v2872 = vmul.f32 %v2868, %v844
      %v2873 = vmul.f32 %v2870, %v845
      %v2874 = vmul.f32 %v2869, %v844
      %v2875 = vmul.f32 %v2871, %v845
      %v2876 = vmul.f32 %v2872, %v1852
      %v2877 = vmul.f32 %v2873, %v1852
      %v2878 = vmul.f32 %v2874, %v1856
      %v2879 = vmul.f32 %v2875, %v1856
      %v2880 = vadd.f32 %v2856, %v2876
      %v2881 = vadd.f32 %v2857, %v2877
      %v2882 = vadd.f32 %v2858, %v2878
      %v2883 = vadd.f32 %v2859, %v2879
      %2884 = vrot.lane.b32.xlu0 %v2518, 113
      %v2885 = vpop.permute.xlu0 %2884
      %2886 = vrot.lane.b32.xlu0 %v2520, 113
      %v2887 = vpop.permute.xlu0 %2886
      %2888 = vrot.lane.b32.xlu0 %v2532, 113
      %v2889 = vpop.permute.xlu0 %2888
      %2890 = vrot.lane.b32.xlu0 %v2534, 113
      %v2891 = vpop.permute.xlu0 %2890
      %v2892 = vsel %vm931, %v2885, %v2889
      %v2893 = vsel %vm931, %v2887, %v2891
      %v2894 = vsel %vm931, %v2889, %v2885
      %v2895 = vsel %vm931, %v2891, %v2887
      %v2896 = vmul.f32 %v2892, %v936
      %v2897 = vmul.f32 %v2894, %v937
      %v2898 = vmul.f32 %v2893, %v936
      %v2899 = vmul.f32 %v2895, %v937
      %v2900 = vmul.f32 %v2896, %v1884
      %v2901 = vmul.f32 %v2897, %v1884
      %v2902 = vmul.f32 %v2898, %v1888
      %v2903 = vmul.f32 %v2899, %v1888
      %v2904 = vadd.f32 %v2880, %v2900
      %v2905 = vadd.f32 %v2881, %v2901
      %v2906 = vadd.f32 %v2882, %v2902
      %v2907 = vadd.f32 %v2883, %v2903
      %2908 = vrot.lane.b32.xlu0 %v2518, 112
      %v2909 = vpop.permute.xlu0 %2908
      %2910 = vrot.lane.b32.xlu0 %v2520, 112
      %v2911 = vpop.permute.xlu0 %2910
      %2912 = vrot.lane.b32.xlu0 %v2532, 112
      %v2913 = vpop.permute.xlu0 %2912
      %2914 = vrot.lane.b32.xlu0 %v2534, 112
      %v2915 = vpop.permute.xlu0 %2914
      %v2916 = vsel %vm950, %v2909, %v2913
      %v2917 = vsel %vm950, %v2911, %v2915
      %v2918 = vsel %vm950, %v2913, %v2909
      %v2919 = vsel %vm950, %v2915, %v2911
      %v2920 = vmul.f32 %v2916, %v955
      %v2921 = vmul.f32 %v2918, %v956
      %v2922 = vmul.f32 %v2917, %v955
      %v2923 = vmul.f32 %v2919, %v956
      %v2924 = vmul.f32 %v2920, %v1916
      %v2925 = vmul.f32 %v2921, %v1916
      %v2926 = vmul.f32 %v2922, %v1920
      %v2927 = vmul.f32 %v2923, %v1920
      %v2928 = vadd.f32 %v2904, %v2924
      %v2929 = vadd.f32 %v2905, %v2925
      %v2930 = vadd.f32 %v2906, %v2926
      %v2931 = vadd.f32 %v2907, %v2927
      %2932 = vrot.lane.b32.xlu0 %v2518, 111
      %v2933 = vpop.permute.xlu0 %2932
      %2934 = vrot.lane.b32.xlu0 %v2520, 111
      %v2935 = vpop.permute.xlu0 %2934
      %2936 = vrot.lane.b32.xlu0 %v2532, 111
      %v2937 = vpop.permute.xlu0 %2936
      %2938 = vrot.lane.b32.xlu0 %v2534, 111
      %v2939 = vpop.permute.xlu0 %2938
      %v2940 = vsel %vm969, %v2933, %v2937
      %v2941 = vsel %vm969, %v2935, %v2939
      %v2942 = vsel %vm969, %v2937, %v2933
      %v2943 = vsel %vm969, %v2939, %v2935
      %v2944 = vmul.f32 %v2940, %v974
      %v2945 = vmul.f32 %v2942, %v975
      %v2946 = vmul.f32 %v2941, %v974
      %v2947 = vmul.f32 %v2943, %v975
      %v2948 = vmul.f32 %v2944, %v1948
      %v2949 = vmul.f32 %v2945, %v1948
      %v2950 = vmul.f32 %v2946, %v1952
      %v2951 = vmul.f32 %v2947, %v1952
      %v2952 = vadd.f32 %v2928, %v2948
      %v2953 = vadd.f32 %v2929, %v2949
      %v2954 = vadd.f32 %v2930, %v2950
      %v2955 = vadd.f32 %v2931, %v2951
      %v2956 = vmul.f32 %v2546, %v1967
      %v2957 = vmul.f32 %v2560, %v1967
      %v2958 = vmul.f32 %v2548, %v1972
      %v2959 = vmul.f32 %v2562, %v1972
      %2960 = vrot.lane.b32.xlu0 %v2546, 17
      %v2961 = vpop.permute.xlu0 %2960
      %2962 = vrot.lane.b32.xlu0 %v2548, 17
      %v2963 = vpop.permute.xlu0 %2962
      %2964 = vrot.lane.b32.xlu0 %v2560, 17
      %v2965 = vpop.permute.xlu0 %2964
      %2966 = vrot.lane.b32.xlu0 %v2562, 17
      %v2967 = vpop.permute.xlu0 %2966
      %v2968 = vsel %vm754, %v2961, %v2965
      %v2969 = vsel %vm754, %v2963, %v2967
      %v2970 = vsel %vm754, %v2965, %v2961
      %v2971 = vsel %vm754, %v2967, %v2963
      %v2972 = vmul.f32 %v2970, %v759
      %v2973 = vmul.f32 %v2968, %v760
      %v2974 = vmul.f32 %v2971, %v759
      %v2975 = vmul.f32 %v2969, %v760
      %v2976 = vmul.f32 %v2972, %v1996
      %v2977 = vmul.f32 %v2973, %v1996
      %v2978 = vmul.f32 %v2974, %v2000
      %v2979 = vmul.f32 %v2975, %v2000
      %v2980 = vadd.f32 %v2956, %v2976
      %v2981 = vadd.f32 %v2957, %v2977
      %v2982 = vadd.f32 %v2958, %v2978
      %v2983 = vadd.f32 %v2959, %v2979
      %2984 = vrot.lane.b32.xlu0 %v2546, 16
      %v2985 = vpop.permute.xlu0 %2984
      %2986 = vrot.lane.b32.xlu0 %v2548, 16
      %v2987 = vpop.permute.xlu0 %2986
      %2988 = vrot.lane.b32.xlu0 %v2560, 16
      %v2989 = vpop.permute.xlu0 %2988
      %2990 = vrot.lane.b32.xlu0 %v2562, 16
      %v2991 = vpop.permute.xlu0 %2990
      %v2992 = vsel %vm773, %v2985, %v2989
      %v2993 = vsel %vm773, %v2987, %v2991
      %v2994 = vsel %vm773, %v2989, %v2985
      %v2995 = vsel %vm773, %v2991, %v2987
      %v2996 = vmul.f32 %v2994, %v778
      %v2997 = vmul.f32 %v2992, %v779
      %v2998 = vmul.f32 %v2995, %v778
      %v2999 = vmul.f32 %v2993, %v779
      %v3000 = vmul.f32 %v2996, %v2028
      %v3001 = vmul.f32 %v2997, %v2028
      %v3002 = vmul.f32 %v2998, %v2032
      %v3003 = vmul.f32 %v2999, %v2032
      %v3004 = vadd.f32 %v2980, %v3000
      %v3005 = vadd.f32 %v2981, %v3001
      %v3006 = vadd.f32 %v2982, %v3002
      %v3007 = vadd.f32 %v2983, %v3003
      %3008 = vrot.lane.b32.xlu0 %v2546, 15
      %v3009 = vpop.permute.xlu0 %3008
      %3010 = vrot.lane.b32.xlu0 %v2548, 15
      %v3011 = vpop.permute.xlu0 %3010
      %3012 = vrot.lane.b32.xlu0 %v2560, 15
      %v3013 = vpop.permute.xlu0 %3012
      %3014 = vrot.lane.b32.xlu0 %v2562, 15
      %v3015 = vpop.permute.xlu0 %3014
      %v3016 = vsel %vm792, %v3009, %v3013
      %v3017 = vsel %vm792, %v3011, %v3015
      %v3018 = vsel %vm792, %v3013, %v3009
      %v3019 = vsel %vm792, %v3015, %v3011
      %v3020 = vmul.f32 %v3018, %v797
      %v3021 = vmul.f32 %v3016, %v798
      %v3022 = vmul.f32 %v3019, %v797
      %v3023 = vmul.f32 %v3017, %v798
      %v3024 = vmul.f32 %v3020, %v2060
      %v3025 = vmul.f32 %v3021, %v2060
      %v3026 = vmul.f32 %v3022, %v2064
      %v3027 = vmul.f32 %v3023, %v2064
      %v3028 = vadd.f32 %v3004, %v3024
      %v3029 = vadd.f32 %v3005, %v3025
      %v3030 = vadd.f32 %v3006, %v3026
      %v3031 = vadd.f32 %v3007, %v3027
      %3032 = vrot.lane.b32.xlu0 %v2546, 1
      %v3033 = vpop.permute.xlu0 %3032
      %3034 = vrot.lane.b32.xlu0 %v2548, 1
      %v3035 = vpop.permute.xlu0 %3034
      %3036 = vrot.lane.b32.xlu0 %v2560, 1
      %v3037 = vpop.permute.xlu0 %3036
      %3038 = vrot.lane.b32.xlu0 %v2562, 1
      %v3039 = vpop.permute.xlu0 %3038
      %v3040 = vsel %vm820, %v3033, %v3037
      %v3041 = vsel %vm820, %v3035, %v3039
      %v3042 = vsel %vm820, %v3037, %v3033
      %v3043 = vsel %vm820, %v3039, %v3035
      %v3044 = vmul.f32 %v3042, %v825
      %v3045 = vmul.f32 %v3040, %v826
      %v3046 = vmul.f32 %v3043, %v825
      %v3047 = vmul.f32 %v3041, %v826
      %v3048 = vmul.f32 %v3044, %v2092
      %v3049 = vmul.f32 %v3045, %v2092
      %v3050 = vmul.f32 %v3046, %v2096
      %v3051 = vmul.f32 %v3047, %v2096
      %v3052 = vadd.f32 %v3028, %v3048
      %v3053 = vadd.f32 %v3029, %v3049
      %v3054 = vadd.f32 %v3030, %v3050
      %v3055 = vadd.f32 %v3031, %v3051
      %3056 = vrot.lane.b32.xlu0 %v2546, 127
      %v3057 = vpop.permute.xlu0 %3056
      %3058 = vrot.lane.b32.xlu0 %v2548, 127
      %v3059 = vpop.permute.xlu0 %3058
      %3060 = vrot.lane.b32.xlu0 %v2560, 127
      %v3061 = vpop.permute.xlu0 %3060
      %3062 = vrot.lane.b32.xlu0 %v2562, 127
      %v3063 = vpop.permute.xlu0 %3062
      %v3064 = vsel %vm839, %v3057, %v3061
      %v3065 = vsel %vm839, %v3059, %v3063
      %v3066 = vsel %vm839, %v3061, %v3057
      %v3067 = vsel %vm839, %v3063, %v3059
      %v3068 = vmul.f32 %v3064, %v844
      %v3069 = vmul.f32 %v3066, %v845
      %v3070 = vmul.f32 %v3065, %v844
      %v3071 = vmul.f32 %v3067, %v845
      %v3072 = vmul.f32 %v3068, %v2124
      %v3073 = vmul.f32 %v3069, %v2124
      %v3074 = vmul.f32 %v3070, %v2128
      %v3075 = vmul.f32 %v3071, %v2128
      %v3076 = vadd.f32 %v3052, %v3072
      %v3077 = vadd.f32 %v3053, %v3073
      %v3078 = vadd.f32 %v3054, %v3074
      %v3079 = vadd.f32 %v3055, %v3075
      %3080 = vrot.lane.b32.xlu0 %v2546, 113
      %v3081 = vpop.permute.xlu0 %3080
      %3082 = vrot.lane.b32.xlu0 %v2548, 113
      %v3083 = vpop.permute.xlu0 %3082
      %3084 = vrot.lane.b32.xlu0 %v2560, 113
      %v3085 = vpop.permute.xlu0 %3084
      %3086 = vrot.lane.b32.xlu0 %v2562, 113
      %v3087 = vpop.permute.xlu0 %3086
      %v3088 = vsel %vm931, %v3081, %v3085
      %v3089 = vsel %vm931, %v3083, %v3087
      %v3090 = vsel %vm931, %v3085, %v3081
      %v3091 = vsel %vm931, %v3087, %v3083
      %v3092 = vmul.f32 %v3088, %v936
      %v3093 = vmul.f32 %v3090, %v937
      %v3094 = vmul.f32 %v3089, %v936
      %v3095 = vmul.f32 %v3091, %v937
      %v3096 = vmul.f32 %v3092, %v2156
      %v3097 = vmul.f32 %v3093, %v2156
      %v3098 = vmul.f32 %v3094, %v2160
      %v3099 = vmul.f32 %v3095, %v2160
      %v3100 = vadd.f32 %v3076, %v3096
      %v3101 = vadd.f32 %v3077, %v3097
      %v3102 = vadd.f32 %v3078, %v3098
      %v3103 = vadd.f32 %v3079, %v3099
      %3104 = vrot.lane.b32.xlu0 %v2546, 112
      %v3105 = vpop.permute.xlu0 %3104
      %3106 = vrot.lane.b32.xlu0 %v2548, 112
      %v3107 = vpop.permute.xlu0 %3106
      %3108 = vrot.lane.b32.xlu0 %v2560, 112
      %v3109 = vpop.permute.xlu0 %3108
      %3110 = vrot.lane.b32.xlu0 %v2562, 112
      %v3111 = vpop.permute.xlu0 %3110
      %v3112 = vsel %vm950, %v3105, %v3109
      %v3113 = vsel %vm950, %v3107, %v3111
      %v3114 = vsel %vm950, %v3109, %v3105
      %v3115 = vsel %vm950, %v3111, %v3107
      %v3116 = vmul.f32 %v3112, %v955
      %v3117 = vmul.f32 %v3114, %v956
      %v3118 = vmul.f32 %v3113, %v955
      %v3119 = vmul.f32 %v3115, %v956
      %v3120 = vmul.f32 %v3116, %v2188
      %v3121 = vmul.f32 %v3117, %v2188
      %v3122 = vmul.f32 %v3118, %v2192
      %v3123 = vmul.f32 %v3119, %v2192
      %v3124 = vadd.f32 %v3100, %v3120
      %v3125 = vadd.f32 %v3101, %v3121
      %v3126 = vadd.f32 %v3102, %v3122
      %v3127 = vadd.f32 %v3103, %v3123
      %3128 = vrot.lane.b32.xlu0 %v2546, 111
      %v3129 = vpop.permute.xlu0 %3128
      %3130 = vrot.lane.b32.xlu0 %v2548, 111
      %v3131 = vpop.permute.xlu0 %3130
      %3132 = vrot.lane.b32.xlu0 %v2560, 111
      %v3133 = vpop.permute.xlu0 %3132
      %3134 = vrot.lane.b32.xlu0 %v2562, 111
      %v3135 = vpop.permute.xlu0 %3134
      %v3136 = vsel %vm969, %v3129, %v3133
      %v3137 = vsel %vm969, %v3131, %v3135
      %v3138 = vsel %vm969, %v3133, %v3129
      %v3139 = vsel %vm969, %v3135, %v3131
      %v3140 = vmul.f32 %v3136, %v974
      %v3141 = vmul.f32 %v3138, %v975
      %v3142 = vmul.f32 %v3137, %v974
      %v3143 = vmul.f32 %v3139, %v975
      %v3144 = vmul.f32 %v3140, %v2220
      %v3145 = vmul.f32 %v3141, %v2220
      %v3146 = vmul.f32 %v3142, %v2224
      %v3147 = vmul.f32 %v3143, %v2224
      %v3148 = vadd.f32 %v3124, %v3144
      %v3149 = vadd.f32 %v3125, %v3145
      %v3150 = vadd.f32 %v3126, %v3146
      %v3151 = vadd.f32 %v3127, %v3147
      %v3152 = vmul.f32 %v2756, %v2756
      %v3153 = vmul.f32 %v2757, %v2757
      %v3154 = vmul.f32 %v2758, %v2758
      %v3155 = vmul.f32 %v2759, %v2759
      %v3156 = vadd.f32 %v3152, %v3153
      %3157 = vadd.xlane.f32.xlu0 %v3156
      %v3158 = vpop.xlane.xlu0 %3157
      %v3159 = vadd.f32 %v3154, %v3155
      %3160 = vadd.xlane.f32.xlu0 %v3159
      %v3161 = vpop.xlane.xlu0 %3160
      %v3162 = vmax.f32 %v3158, 1e-24
      %v3163 = vmax.f32 %v3161, 1e-24
      %v3164 = vrsqrt.pop %v3162
      %v3165 = vmul.f32 %v3164, %v3162
      %v3166 = vmul.f32 %v3165, %v3164
      %v3167 = vmul.f32 0.5, %v3166
      %v3168 = vsub.f32 1.5, %v3167
      %v3169 = vmul.f32 %v3164, %v3168
      %vm3170 = vweird.f32 %v3162
      %vm3171 = vweird.f32 %v3164
      %vm3172 = vmor %vm3170, %vm3171
      %v3173 = vsel %vm3172, %v3164, %v3169
      %v3174 = vrsqrt.pop %v3163
      %v3175 = vmul.f32 %v3174, %v3163
      %v3176 = vmul.f32 %v3175, %v3174
      %v3177 = vmul.f32 0.5, %v3176
      %v3178 = vsub.f32 1.5, %v3177
      %v3179 = vmul.f32 %v3174, %v3178
      %vm3180 = vweird.f32 %v3163
      %vm3181 = vweird.f32 %v3174
      %vm3182 = vmor %vm3180, %vm3181
      %v3183 = vsel %vm3182, %v3174, %v3179
      %v3184 = vmul.f32 %v2756, %v3173
      %v3185 = vmul.f32 %v2757, %v3173
      %v3186 = vmul.f32 %v2758, %v3183
      %v3187 = vmul.f32 %v2759, %v3183
      %v3188 = vmul.f32 %v2952, %v2952
      %v3189 = vmul.f32 %v2953, %v2953
      %v3190 = vmul.f32 %v2954, %v2954
      %v3191 = vmul.f32 %v2955, %v2955
      %v3192 = vadd.f32 %v3188, %v3189
      %3193 = vadd.xlane.f32.xlu0 %v3192
      %v3194 = vpop.xlane.xlu0 %3193
      %v3195 = vadd.f32 %v3190, %v3191
      %3196 = vadd.xlane.f32.xlu0 %v3195
      %v3197 = vpop.xlane.xlu0 %3196
      %v3198 = vmax.f32 %v3194, 1e-24
      %v3199 = vmax.f32 %v3197, 1e-24
      %v3200 = vrsqrt.pop %v3198
      %v3201 = vmul.f32 %v3200, %v3198
      %v3202 = vmul.f32 %v3201, %v3200
      %v3203 = vmul.f32 0.5, %v3202
      %v3204 = vsub.f32 1.5, %v3203
      %v3205 = vmul.f32 %v3200, %v3204
      %vm3206 = vweird.f32 %v3198
      %vm3207 = vweird.f32 %v3200
      %vm3208 = vmor %vm3206, %vm3207
      %v3209 = vsel %vm3208, %v3200, %v3205
      %v3210 = vrsqrt.pop %v3199
      %v3211 = vmul.f32 %v3210, %v3199
      %v3212 = vmul.f32 %v3211, %v3210
      %v3213 = vmul.f32 0.5, %v3212
      %v3214 = vsub.f32 1.5, %v3213
      %v3215 = vmul.f32 %v3210, %v3214
      %vm3216 = vweird.f32 %v3199
      %vm3217 = vweird.f32 %v3210
      %vm3218 = vmor %vm3216, %vm3217
      %v3219 = vsel %vm3218, %v3210, %v3215
      %v3220 = vmul.f32 %v2952, %v3209
      %v3221 = vmul.f32 %v2953, %v3209
      %v3222 = vmul.f32 %v2954, %v3219
      %v3223 = vmul.f32 %v2955, %v3219
      %v3224 = vmul.f32 %v3184, %v2311
      %v3225 = vmul.f32 %v3185, %v2311
      %v3226 = vmul.f32 %v3186, %v2316
      %v3227 = vmul.f32 %v3187, %v2316
      %v3228 = vpack.c.bf16 %v3226, %v3224
      %v3229 = vpack.c.bf16 %v3227, %v3225
      %v3230 = vpack.c.bf16 %v3222, %v3220
      %v3231 = vpack.c.bf16 %v3223, %v3221
      %3232 = vmatpush.bf16.xpose.msra.mxu0 0
      %3233 = vmatpush.bf16.xpose.msra.mxu0 0
      %3234 = vmatpush.bf16.xpose.msra.mxu0 0
      %3235 = vmatpush.bf16.xpose.msra.mxu0 0
      %3236 = vmatpush.bf16.xpose.msra.mxu0 0
      %3237 = vmatpush.bf16.xpose.msra.mxu0 0
      %3238 = vmatpush.bf16.xpose.msra.mxu0 0
      %3239 = vmatpush.bf16.xpose.msra.mxu0 %v3230
      %3240 = vmatmul.bf16.gmra.mxu0 %v3228
      %v3241 = vpop.f32.mrf.mxu0
      %v3242 = vadd.f32 %v2326, %v3241
      %v3243 = vpop.f32.mrf.mxu0
      %v3244 = vadd.f32 %v2327, %v3243
      %3245 = vdwg.mxu0
      %3246 = vmatpush.bf16.xpose.msra.mxu0 0
      %3247 = vmatpush.bf16.xpose.msra.mxu0 0
      %3248 = vmatpush.bf16.xpose.msra.mxu0 0
      %3249 = vmatpush.bf16.xpose.msra.mxu0 0
      %3250 = vmatpush.bf16.xpose.msra.mxu0 0
      %3251 = vmatpush.bf16.xpose.msra.mxu0 0
      %3252 = vmatpush.bf16.xpose.msra.mxu0 0
      %3253 = vmatpush.bf16.xpose.msra.mxu0 %v3231
      %3254 = vmatmul.bf16.gmra.mxu0 %v3229
      %v3255 = vpop.f32.mrf.mxu0
      %v3256 = vadd.f32 %v3242, %v3255
      %v3257 = vpop.f32.mrf.mxu0
      %v3258 = vadd.f32 %v3244, %v3257
      %3259 = vdwg.mxu0
      %v3260 = vsel %vm1318, %v3256, -inf
      %3261 = vmax.xlane.f32.xlu0 %v3260
      %v3262 = vpop.xlane.xlu0 %3261
      %v3263 = vsel %vm1318, %v3258, -inf
      %3264 = vmax.xlane.f32.xlu0 %v3263
      %v3265 = vpop.xlane.xlu0 %3264
      %v3266 = vsub.f32 %v3256, %v3262
      %v3267 = vsub.f32 %v3258, %v3265
      %v3268 = vmul.f32 %v3266, 1.442695
      %v3269 = vpow.pop %v3268
      %v3270 = vmul.f32 %v3267, 1.442695
      %v3271 = vpow.pop %v3270
      %v3272 = vsel %vm1318, %v3269, 0.0
      %3273 = vadd.xlane.f32.xlu0 %v3272
      %v3274 = vpop.xlane.xlu0 %3273
      %v3275 = vsel %vm1318, %v3271, 0.0
      %3276 = vadd.xlane.f32.xlu0 %v3275
      %v3277 = vpop.xlane.xlu0 %3276
      %v3278 = vrcp.pop %v3274
      %v3279 = vmul.f32 %v3274, %v3278
      %v3280 = vsub.f32 1.0, %v3279
      %v3281 = vmul.f32 %v3278, %v3280
      %v3282 = vadd.f32 %v3278, %v3281
      %vm3283 = vweird.f32 %v3274
      %vm3284 = vweird.f32 %v3278
      %vm3285 = vmor %vm3283, %vm3284
      %v3286 = vsel %vm3285, %v3278, %v3282
      %v3287 = vand.u32 2147483647, %v3274
      %vm3288 = vcmp.eq.f32.partialorder %v3287, 8.507059e+37
      %v3289 = vand.u32 %v3274, 2147483648
      %v3290 = vor.u32 1.1754944e-38, %v3289
      %v3291 = vsel %vm3288, %v3290, %v3286
      %v3292 = vmul.f32 %v3269, %v3291
      %v3293 = vrcp.pop %v3277
      %v3294 = vmul.f32 %v3277, %v3293
      %v3295 = vsub.f32 1.0, %v3294
      %v3296 = vmul.f32 %v3293, %v3295
      %v3297 = vadd.f32 %v3293, %v3296
      %vm3298 = vweird.f32 %v3277
      %vm3299 = vweird.f32 %v3293
      %vm3300 = vmor %vm3298, %vm3299
      %v3301 = vsel %vm3300, %v3293, %v3297
      %v3302 = vand.u32 2147483647, %v3277
      %vm3303 = vcmp.eq.f32.partialorder %v3302, 8.507059e+37
      %v3304 = vand.u32 %v3277, 2147483648
      %v3305 = vor.u32 1.1754944e-38, %v3304
      %v3306 = vsel %vm3303, %v3305, %v3301
      %v3307 = vmul.f32 %v3271, %v3306
      %v3308 = vpack.c.bf16 %v3307, %v3292
      %v3309 = vpack.c.bf16 %v3150, %v3148
      %v3310 = vpack.c.bf16 %v3151, %v3149
      %v3312 = vsel %vm1318, %v3308, 0
      %3314 = vmatpush.bf16.msra.mxu0 0
      %3315 = vmatpush.bf16.msra.mxu0 0
      %3316 = vmatpush.bf16.msra.mxu0 0
      %3317 = vmatpush.bf16.msra.mxu0 0
      %3318 = vmatpush.bf16.msra.mxu0 0
      %3319 = vmatpush.bf16.msra.mxu0 0
      %3320 = vmatpush.bf16.msra.mxu0 0
      %3321 = vmatpush.bf16.msra.mxu0 %v3309
      %3322 = vmatmul.bf16.gmra.mxu0 %v3312
      %v3323 = vpop.f32.mrf.mxu0
      %v3324 = vadd.f32 0.0, %v3323
      %v3325 = vpop.f32.mrf.mxu0
      %v3326 = vadd.f32 0.0, %v3325
      %3327 = vdwg.mxu0
      %3328 = vmatpush.bf16.msra.mxu0 0
      %3329 = vmatpush.bf16.msra.mxu0 0
      %3330 = vmatpush.bf16.msra.mxu0 0
      %3331 = vmatpush.bf16.msra.mxu0 0
      %3332 = vmatpush.bf16.msra.mxu0 0
      %3333 = vmatpush.bf16.msra.mxu0 0
      %3334 = vmatpush.bf16.msra.mxu0 0
      %3335 = vmatpush.bf16.msra.mxu0 %v3310
      %3336 = vmatmul.bf16.gmra.mxu0 %v3312
      %v3337 = vpop.f32.mrf.mxu0
      %v3338 = vadd.f32 0.0, %v3337
      %v3339 = vpop.f32.mrf.mxu0
      %v3340 = vadd.f32 0.0, %v3339
      %3341 = vdwg.mxu0
      %v3342 = vpack.c.bf16 %v3326, %v3324
      %v3343 = vpack.c.bf16 %v3340, %v3338
      %3344 = vmatpush.bf16.msra.mxu0 0
      %3345 = vmatpush.bf16.msra.mxu0 0
      %3346 = vmatpush.bf16.msra.mxu0 0
      %3347 = vmatpush.bf16.msra.mxu0 0
      %3348 = vmatpush.bf16.msra.mxu0 0
      %3349 = vmatpush.bf16.msra.mxu0 0
      %3350 = vmatpush.bf16.msra.mxu0 0
      %3351 = vmatpush.bf16.msra.mxu0 %v3342
      %3352 = vmatmul.bf16.gmra.mxu0 %v2444
      %v3353 = vpop.f32.mrf.mxu0
      %v3354 = vadd.f32 0.0, %v3353
      %v3355 = vpop.f32.mrf.mxu0
      %v3356 = vadd.f32 0.0, %v3355
      %3357 = vdwg.mxu0
      %3358 = vmatpush.bf16.msra.mxu0 0
      %3359 = vmatpush.bf16.msra.mxu0 0
      %3360 = vmatpush.bf16.msra.mxu0 0
      %3361 = vmatpush.bf16.msra.mxu0 0
      %3362 = vmatpush.bf16.msra.mxu0 0
      %3363 = vmatpush.bf16.msra.mxu0 0
      %3364 = vmatpush.bf16.msra.mxu0 0
      %3365 = vmatpush.bf16.msra.mxu0 %v3343
      %3366 = vmatmul.bf16.gmra.mxu0 %v2444
      %v3367 = vpop.f32.mrf.mxu0
      %v3368 = vadd.f32 0.0, %v3367
      %v3369 = vpop.f32.mrf.mxu0
      %v3370 = vadd.f32 0.0, %v3369
      %3371 = vdwg.mxu0
      %v3372 = vadd.f32 %v1307, %v3354
      %v3373 = vadd.f32 %v1308, %v3368
      %v3374 = vadd.f32 %v1309, %v3356
      %v3375 = vadd.f32 %v1310, %v3370
      %3376 = vrot.lane.b32.xlu0 %v2474, 17
      %v3377 = vpop.permute.xlu0 %3376
      %3378 = vrot.lane.b32.xlu0 %v2476, 17
      %v3379 = vpop.permute.xlu0 %3378
      %3380 = vrot.lane.b32.xlu0 %v2475, 17
      %v3381 = vpop.permute.xlu0 %3380
      %3382 = vrot.lane.b32.xlu0 %v2477, 17
      %v3383 = vpop.permute.xlu0 %3382
      %v3384 = vsel %vm754, %v3377, %v3381
      %v3385 = vsel %vm754, %v3379, %v3383
      %v3386 = vsel %vm754, %v3381, %v3377
      %v3387 = vsel %vm754, %v3383, %v3379
      %v3388 = vmul.f32 %v3386, %v759
      %v3389 = vmul.f32 %v3384, %v760
      %v3390 = vmul.f32 %v3387, %v759
      %v3391 = vmul.f32 %v3385, %v760
      %3392 = vrot.lane.b32.xlu0 %v2474, 16
      %v3393 = vpop.permute.xlu0 %3392
      %3394 = vrot.lane.b32.xlu0 %v2476, 16
      %v3395 = vpop.permute.xlu0 %3394
      %3396 = vrot.lane.b32.xlu0 %v2475, 16
      %v3397 = vpop.permute.xlu0 %3396
      %3398 = vrot.lane.b32.xlu0 %v2477, 16
      %v3399 = vpop.permute.xlu0 %3398
      %v3400 = vsel %vm773, %v3393, %v3397
      %v3401 = vsel %vm773, %v3395, %v3399
      %v3402 = vsel %vm773, %v3397, %v3393
      %v3403 = vsel %vm773, %v3399, %v3395
      %v3404 = vmul.f32 %v3402, %v778
      %v3405 = vmul.f32 %v3400, %v779
      %v3406 = vmul.f32 %v3403, %v778
      %v3407 = vmul.f32 %v3401, %v779
      %3408 = vrot.lane.b32.xlu0 %v2474, 15
      %v3409 = vpop.permute.xlu0 %3408
      %3410 = vrot.lane.b32.xlu0 %v2476, 15
      %v3411 = vpop.permute.xlu0 %3410
      %3412 = vrot.lane.b32.xlu0 %v2475, 15
      %v3413 = vpop.permute.xlu0 %3412
      %3414 = vrot.lane.b32.xlu0 %v2477, 15
      %v3415 = vpop.permute.xlu0 %3414
      %v3416 = vsel %vm792, %v3409, %v3413
      %v3417 = vsel %vm792, %v3411, %v3415
      %v3418 = vsel %vm792, %v3413, %v3409
      %v3419 = vsel %vm792, %v3415, %v3411
      %v3420 = vmul.f32 %v3418, %v797
      %v3421 = vmul.f32 %v3416, %v798
      %v3422 = vmul.f32 %v3419, %v797
      %v3423 = vmul.f32 %v3417, %v798
      %v3424 = vpack.c.bf16 %v3390, %v3388
      %v3425 = vpack.c.bf16 %v3391, %v3389
      %v3426 = vpack.c.bf16 %v3406, %v3404
      %v3427 = vpack.c.bf16 %v3407, %v3405
      %v3428 = vpack.c.bf16 %v3422, %v3420
      %v3429 = vpack.c.bf16 %v3423, %v3421
      %v3430 = vld [vmem:[%s15] sm:$0xff]
      %v3431 = vld [vmem:[%s15 + $0x8] sm:$0xff]
      %v3432 = vpack.c.bf16 %v3431, %v3430
      %3433 = vrot.lane.b32.xlu0 %v2474, 1
      %v3434 = vpop.permute.xlu0 %3433
      %3435 = vrot.lane.b32.xlu0 %v2476, 1
      %v3436 = vpop.permute.xlu0 %3435
      %3437 = vrot.lane.b32.xlu0 %v2475, 1
      %v3438 = vpop.permute.xlu0 %3437
      %3439 = vrot.lane.b32.xlu0 %v2477, 1
      %v3440 = vpop.permute.xlu0 %3439
      %v3441 = vsel %vm820, %v3434, %v3438
      %v3442 = vsel %vm820, %v3436, %v3440
      %v3443 = vsel %vm820, %v3438, %v3434
      %v3444 = vsel %vm820, %v3440, %v3436
      %v3445 = vmul.f32 %v3443, %v825
      %v3446 = vmul.f32 %v3441, %v826
      %v3447 = vmul.f32 %v3444, %v825
      %v3448 = vmul.f32 %v3442, %v826
      %3449 = vrot.lane.b32.xlu0 %v2474, 127
      %v3450 = vpop.permute.xlu0 %3449
      %3451 = vrot.lane.b32.xlu0 %v2476, 127
      %v3452 = vpop.permute.xlu0 %3451
      %3453 = vrot.lane.b32.xlu0 %v2475, 127
      %v3454 = vpop.permute.xlu0 %3453
      %3455 = vrot.lane.b32.xlu0 %v2477, 127
      %v3456 = vpop.permute.xlu0 %3455
      %v3457 = vsel %vm839, %v3450, %v3454
      %v3458 = vsel %vm839, %v3452, %v3456
      %v3459 = vsel %vm839, %v3454, %v3450
      %v3460 = vsel %vm839, %v3456, %v3452
      %v3461 = vmul.f32 %v3457, %v844
      %v3462 = vmul.f32 %v3459, %v845
      %v3463 = vmul.f32 %v3458, %v844
      %v3464 = vmul.f32 %v3460, %v845
      %v3465 = vpack.c.bf16 %v3447, %v3445
      %v3466 = vpack.c.bf16 %v3448, %v3446
      %v3467 = vpack.c.bf16 %v3463, %v3461
      %v3468 = vpack.c.bf16 %v3464, %v3462
      %s3469 = scalar_lea.vmem %s15, 16
      %v3470 = vld [vmem:[%s3469] sm:$0xff]
      %v3471 = vld [vmem:[%s3469 + $0x8] sm:$0xff]
      %v3472 = vpack.c.bf16 %v3471, %v3470
      %v3474 = vsel %vm860, %v3472, 0
      %3476 = vmatpush.bf16.msra.mxu0 0
      %3477 = vmatpush.bf16.msra.mxu0 0
      %3478 = vmatpush.bf16.msra.mxu0 0
      %3479 = vmatpush.bf16.msra.mxu0 0
      %3480 = vmatpush.bf16.msra.mxu0 0
      %3481 = vmatpush.bf16.msra.mxu0 %v3467
      %3482 = vmatpush.bf16.msra.mxu0 %v2478
      %3483 = vmatpush.bf16.msra.mxu0 %v3465
      %3484 = vmatmul.bf16.gmra.mxu0 %v3474
      %v3485 = vpop.f32.mrf.mxu0
      %v3486 = vadd.f32 0.0, %v3485
      %v3487 = vpop.f32.mrf.mxu0
      %v3488 = vadd.f32 0.0, %v3487
      %3489 = vdwg.mxu0
      %3490 = vmatpush.bf16.msra.mxu0 0
      %3491 = vmatpush.bf16.msra.mxu0 0
      %3492 = vmatpush.bf16.msra.mxu0 0
      %3493 = vmatpush.bf16.msra.mxu0 0
      %3494 = vmatpush.bf16.msra.mxu0 0
      %3495 = vmatpush.bf16.msra.mxu0 %v3468
      %3496 = vmatpush.bf16.msra.mxu0 %v2479
      %3497 = vmatpush.bf16.msra.mxu0 %v3466
      %3498 = vmatmul.bf16.gmra.mxu0 %v3474
      %v3499 = vpop.f32.mrf.mxu0
      %v3500 = vadd.f32 0.0, %v3499
      %v3501 = vpop.f32.mrf.mxu0
      %v3502 = vadd.f32 0.0, %v3501
      %3503 = vdwg.mxu0
      %v3505 = vsel %vm860, %v3432, 0
      %3507 = vmatpush.bf16.msra.mxu0 0
      %3508 = vmatpush.bf16.msra.mxu0 0
      %3509 = vmatpush.bf16.msra.mxu0 0
      %3510 = vmatpush.bf16.msra.mxu0 0
      %3511 = vmatpush.bf16.msra.mxu0 0
      %3512 = vmatpush.bf16.msra.mxu0 %v3428
      %3513 = vmatpush.bf16.msra.mxu0 %v3426
      %3514 = vmatpush.bf16.msra.mxu0 %v3424
      %3515 = vmatmul.bf16.gmra.mxu0 %v3505
      %v3516 = vpop.f32.mrf.mxu0
      %v3517 = vadd.f32 %v3486, %v3516
      %v3518 = vpop.f32.mrf.mxu0
      %v3519 = vadd.f32 %v3488, %v3518
      %3520 = vdwg.mxu0
      %3521 = vmatpush.bf16.msra.mxu0 0
      %3522 = vmatpush.bf16.msra.mxu0 0
      %3523 = vmatpush.bf16.msra.mxu0 0
      %3524 = vmatpush.bf16.msra.mxu0 0
      %3525 = vmatpush.bf16.msra.mxu0 0
      %3526 = vmatpush.bf16.msra.mxu0 %v3429
      %3527 = vmatpush.bf16.msra.mxu0 %v3427
      %3528 = vmatpush.bf16.msra.mxu0 %v3425
      %3529 = vmatmul.bf16.gmra.mxu0 %v3505
      %v3530 = vpop.f32.mrf.mxu0
      %v3531 = vadd.f32 %v3500, %v3530
      %v3532 = vpop.f32.mrf.mxu0
      %v3533 = vadd.f32 %v3502, %v3532
      %3534 = vdwg.mxu0
      %3535 = vrot.lane.b32.xlu0 %v2474, 113
      %v3536 = vpop.permute.xlu0 %3535
      %3537 = vrot.lane.b32.xlu0 %v2476, 113
      %v3538 = vpop.permute.xlu0 %3537
      %3539 = vrot.lane.b32.xlu0 %v2475, 113
      %v3540 = vpop.permute.xlu0 %3539
      %3541 = vrot.lane.b32.xlu0 %v2477, 113
      %v3542 = vpop.permute.xlu0 %3541
      %v3543 = vsel %vm931, %v3536, %v3540
      %v3544 = vsel %vm931, %v3538, %v3542
      %v3545 = vsel %vm931, %v3540, %v3536
      %v3546 = vsel %vm931, %v3542, %v3538
      %v3547 = vmul.f32 %v3543, %v936
      %v3548 = vmul.f32 %v3545, %v937
      %v3549 = vmul.f32 %v3544, %v936
      %v3550 = vmul.f32 %v3546, %v937
      %3551 = vrot.lane.b32.xlu0 %v2474, 112
      %v3552 = vpop.permute.xlu0 %3551
      %3553 = vrot.lane.b32.xlu0 %v2476, 112
      %v3554 = vpop.permute.xlu0 %3553
      %3555 = vrot.lane.b32.xlu0 %v2475, 112
      %v3556 = vpop.permute.xlu0 %3555
      %3557 = vrot.lane.b32.xlu0 %v2477, 112
      %v3558 = vpop.permute.xlu0 %3557
      %v3559 = vsel %vm950, %v3552, %v3556
      %v3560 = vsel %vm950, %v3554, %v3558
      %v3561 = vsel %vm950, %v3556, %v3552
      %v3562 = vsel %vm950, %v3558, %v3554
      %v3563 = vmul.f32 %v3559, %v955
      %v3564 = vmul.f32 %v3561, %v956
      %v3565 = vmul.f32 %v3560, %v955
      %v3566 = vmul.f32 %v3562, %v956
      %3567 = vrot.lane.b32.xlu0 %v2474, 111
      %v3568 = vpop.permute.xlu0 %3567
      %3569 = vrot.lane.b32.xlu0 %v2476, 111
      %v3570 = vpop.permute.xlu0 %3569
      %3571 = vrot.lane.b32.xlu0 %v2475, 111
      %v3572 = vpop.permute.xlu0 %3571
      %3573 = vrot.lane.b32.xlu0 %v2477, 111
      %v3574 = vpop.permute.xlu0 %3573
      %v3575 = vsel %vm969, %v3568, %v3572
      %v3576 = vsel %vm969, %v3570, %v3574
      %v3577 = vsel %vm969, %v3572, %v3568
      %v3578 = vsel %vm969, %v3574, %v3570
      %v3579 = vmul.f32 %v3575, %v974
      %v3580 = vmul.f32 %v3577, %v975
      %v3581 = vmul.f32 %v3576, %v974
      %v3582 = vmul.f32 %v3578, %v975
      %v3583 = vpack.c.bf16 %v3549, %v3547
      %v3584 = vpack.c.bf16 %v3550, %v3548
      %v3585 = vpack.c.bf16 %v3565, %v3563
      %v3586 = vpack.c.bf16 %v3566, %v3564
      %v3587 = vpack.c.bf16 %v3581, %v3579
      %v3588 = vpack.c.bf16 %v3582, %v3580
      %s3589 = scalar_lea.vmem %s15, 32
      %v3590 = vld [vmem:[%s3589] sm:$0xff]
      %v3591 = vld [vmem:[%s3589 + $0x8] sm:$0xff]
      %v3592 = vpack.c.bf16 %v3591, %v3590
      %v3594 = vsel %vm860, %v3592, 0
      %3596 = vmatpush.bf16.msra.mxu0 0
      %3597 = vmatpush.bf16.msra.mxu0 0
      %3598 = vmatpush.bf16.msra.mxu0 0
      %3599 = vmatpush.bf16.msra.mxu0 0
      %3600 = vmatpush.bf16.msra.mxu0 0
      %3601 = vmatpush.bf16.msra.mxu0 %v3587
      %3602 = vmatpush.bf16.msra.mxu0 %v3585
      %3603 = vmatpush.bf16.msra.mxu0 %v3583
      %3604 = vmatmul.bf16.gmra.mxu0 %v3594
      %v3605 = vpop.f32.mrf.mxu0
      %v3606 = vadd.f32 0.0, %v3605
      %v3607 = vpop.f32.mrf.mxu0
      %v3608 = vadd.f32 0.0, %v3607
      %3609 = vdwg.mxu0
      %3610 = vmatpush.bf16.msra.mxu0 0
      %3611 = vmatpush.bf16.msra.mxu0 0
      %3612 = vmatpush.bf16.msra.mxu0 0
      %3613 = vmatpush.bf16.msra.mxu0 0
      %3614 = vmatpush.bf16.msra.mxu0 0
      %3615 = vmatpush.bf16.msra.mxu0 %v3588
      %3616 = vmatpush.bf16.msra.mxu0 %v3586
      %3617 = vmatpush.bf16.msra.mxu0 %v3584
      %3618 = vmatmul.bf16.gmra.mxu0 %v3594
      %v3619 = vpop.f32.mrf.mxu0
      %v3620 = vadd.f32 0.0, %v3619
      %v3621 = vpop.f32.mrf.mxu0
      %v3622 = vadd.f32 0.0, %v3621
      %3623 = vdwg.mxu0
      %v3624 = vadd.f32 %v3517, %v3606
      %v3625 = vadd.f32 %v3531, %v3620
      %v3626 = vadd.f32 %v3519, %v3608
      %v3627 = vadd.f32 %v3533, %v3622
      %3628 = vrot.lane.b32.xlu0 %v3372, 17
      %v3629 = vpop.permute.xlu0 %3628
      %3630 = vrot.lane.b32.xlu0 %v3374, 17
      %v3631 = vpop.permute.xlu0 %3630
      %3632 = vrot.lane.b32.xlu0 %v3373, 17
      %v3633 = vpop.permute.xlu0 %3632
      %3634 = vrot.lane.b32.xlu0 %v3375, 17
      %v3635 = vpop.permute.xlu0 %3634
      %v3636 = vsel %vm754, %v3629, %v3633
      %v3637 = vsel %vm754, %v3631, %v3635
      %v3638 = vsel %vm754, %v3633, %v3629
      %v3639 = vsel %vm754, %v3635, %v3631
      %v3640 = vmul.f32 %v3638, %v759
      %v3641 = vmul.f32 %v3636, %v760
      %v3642 = vmul.f32 %v3639, %v759
      %v3643 = vmul.f32 %v3637, %v760
      %3644 = vrot.lane.b32.xlu0 %v3372, 16
      %v3645 = vpop.permute.xlu0 %3644
      %3646 = vrot.lane.b32.xlu0 %v3374, 16
      %v3647 = vpop.permute.xlu0 %3646
      %3648 = vrot.lane.b32.xlu0 %v3373, 16
      %v3649 = vpop.permute.xlu0 %3648
      %3650 = vrot.lane.b32.xlu0 %v3375, 16
      %v3651 = vpop.permute.xlu0 %3650
      %v3652 = vsel %vm773, %v3645, %v3649
      %v3653 = vsel %vm773, %v3647, %v3651
      %v3654 = vsel %vm773, %v3649, %v3645
      %v3655 = vsel %vm773, %v3651, %v3647
      %v3656 = vmul.f32 %v3654, %v778
      %v3657 = vmul.f32 %v3652, %v779
      %v3658 = vmul.f32 %v3655, %v778
      %v3659 = vmul.f32 %v3653, %v779
      %3660 = vrot.lane.b32.xlu0 %v3372, 15
      %v3661 = vpop.permute.xlu0 %3660
      %3662 = vrot.lane.b32.xlu0 %v3374, 15
      %v3663 = vpop.permute.xlu0 %3662
      %3664 = vrot.lane.b32.xlu0 %v3373, 15
      %v3665 = vpop.permute.xlu0 %3664
      %3666 = vrot.lane.b32.xlu0 %v3375, 15
      %v3667 = vpop.permute.xlu0 %3666
      %v3668 = vsel %vm792, %v3661, %v3665
      %v3669 = vsel %vm792, %v3663, %v3667
      %v3670 = vsel %vm792, %v3665, %v3661
      %v3671 = vsel %vm792, %v3667, %v3663
      %v3672 = vmul.f32 %v3670, %v797
      %v3673 = vmul.f32 %v3668, %v798
      %v3674 = vmul.f32 %v3671, %v797
      %v3675 = vmul.f32 %v3669, %v798
      %v3676 = vpack.c.bf16 %v3642, %v3640
      %v3677 = vpack.c.bf16 %v3643, %v3641
      %v3678 = vpack.c.bf16 %v3658, %v3656
      %v3679 = vpack.c.bf16 %v3659, %v3657
      %v3680 = vpack.c.bf16 %v3674, %v3672
      %v3681 = vpack.c.bf16 %v3675, %v3673
      %v3682 = vld [vmem:[%s16] sm:$0xff]
      %v3683 = vld [vmem:[%s16 + $0x8] sm:$0xff]
      %v3684 = vpack.c.bf16 %v3683, %v3682
      %3685 = vrot.lane.b32.xlu0 %v3372, 1
      %v3686 = vpop.permute.xlu0 %3685
      %3687 = vrot.lane.b32.xlu0 %v3374, 1
      %v3688 = vpop.permute.xlu0 %3687
      %3689 = vrot.lane.b32.xlu0 %v3373, 1
      %v3690 = vpop.permute.xlu0 %3689
      %3691 = vrot.lane.b32.xlu0 %v3375, 1
      %v3692 = vpop.permute.xlu0 %3691
      %v3693 = vsel %vm820, %v3686, %v3690
      %v3694 = vsel %vm820, %v3688, %v3692
      %v3695 = vsel %vm820, %v3690, %v3686
      %v3696 = vsel %vm820, %v3692, %v3688
      %v3697 = vmul.f32 %v3695, %v825
      %v3698 = vmul.f32 %v3693, %v826
      %v3699 = vmul.f32 %v3696, %v825
      %v3700 = vmul.f32 %v3694, %v826
      %3701 = vrot.lane.b32.xlu0 %v3372, 127
      %v3702 = vpop.permute.xlu0 %3701
      %3703 = vrot.lane.b32.xlu0 %v3374, 127
      %v3704 = vpop.permute.xlu0 %3703
      %3705 = vrot.lane.b32.xlu0 %v3373, 127
      %v3706 = vpop.permute.xlu0 %3705
      %3707 = vrot.lane.b32.xlu0 %v3375, 127
      %v3708 = vpop.permute.xlu0 %3707
      %v3709 = vsel %vm839, %v3702, %v3706
      %v3710 = vsel %vm839, %v3704, %v3708
      %v3711 = vsel %vm839, %v3706, %v3702
      %v3712 = vsel %vm839, %v3708, %v3704
      %v3713 = vmul.f32 %v3709, %v844
      %v3714 = vmul.f32 %v3711, %v845
      %v3715 = vmul.f32 %v3710, %v844
      %v3716 = vmul.f32 %v3712, %v845
      %v3717 = vpack.c.bf16 %v3699, %v3697
      %v3718 = vpack.c.bf16 %v3700, %v3698
      %v3719 = vpack.c.bf16 %v3374, %v3372
      %v3720 = vpack.c.bf16 %v3375, %v3373
      %v3721 = vpack.c.bf16 %v3715, %v3713
      %v3722 = vpack.c.bf16 %v3716, %v3714
      %s3723 = scalar_lea.vmem %s16, 16
      %v3724 = vld [vmem:[%s3723] sm:$0xff]
      %v3725 = vld [vmem:[%s3723 + $0x8] sm:$0xff]
      %v3726 = vpack.c.bf16 %v3725, %v3724
      %v3728 = vsel %vm860, %v3726, 0
      %3730 = vmatpush.bf16.msra.mxu0 0
      %3731 = vmatpush.bf16.msra.mxu0 0
      %3732 = vmatpush.bf16.msra.mxu0 0
      %3733 = vmatpush.bf16.msra.mxu0 0
      %3734 = vmatpush.bf16.msra.mxu0 0
      %3735 = vmatpush.bf16.msra.mxu0 %v3721
      %3736 = vmatpush.bf16.msra.mxu0 %v3719
      %3737 = vmatpush.bf16.msra.mxu0 %v3717
      %3738 = vmatmul.bf16.gmra.mxu0 %v3728
      %v3739 = vpop.f32.mrf.mxu0
      %v3740 = vadd.f32 0.0, %v3739
      %v3741 = vpop.f32.mrf.mxu0
      %v3742 = vadd.f32 0.0, %v3741
      %3743 = vdwg.mxu0
      %3744 = vmatpush.bf16.msra.mxu0 0
      %3745 = vmatpush.bf16.msra.mxu0 0
      %3746 = vmatpush.bf16.msra.mxu0 0
      %3747 = vmatpush.bf16.msra.mxu0 0
      %3748 = vmatpush.bf16.msra.mxu0 0
      %3749 = vmatpush.bf16.msra.mxu0 %v3722
      %3750 = vmatpush.bf16.msra.mxu0 %v3720
      %3751 = vmatpush.bf16.msra.mxu0 %v3718
      %3752 = vmatmul.bf16.gmra.mxu0 %v3728
      %v3753 = vpop.f32.mrf.mxu0
      %v3754 = vadd.f32 0.0, %v3753
      %v3755 = vpop.f32.mrf.mxu0
      %v3756 = vadd.f32 0.0, %v3755
      %3757 = vdwg.mxu0
      %v3759 = vsel %vm860, %v3684, 0
      %3761 = vmatpush.bf16.msra.mxu0 0
      %3762 = vmatpush.bf16.msra.mxu0 0
      %3763 = vmatpush.bf16.msra.mxu0 0
      %3764 = vmatpush.bf16.msra.mxu0 0
      %3765 = vmatpush.bf16.msra.mxu0 0
      %3766 = vmatpush.bf16.msra.mxu0 %v3680
      %3767 = vmatpush.bf16.msra.mxu0 %v3678
      %3768 = vmatpush.bf16.msra.mxu0 %v3676
      %3769 = vmatmul.bf16.gmra.mxu0 %v3759
      %v3770 = vpop.f32.mrf.mxu0
      %v3771 = vadd.f32 %v3740, %v3770
      %v3772 = vpop.f32.mrf.mxu0
      %v3773 = vadd.f32 %v3742, %v3772
      %3774 = vdwg.mxu0
      %3775 = vmatpush.bf16.msra.mxu0 0
      %3776 = vmatpush.bf16.msra.mxu0 0
      %3777 = vmatpush.bf16.msra.mxu0 0
      %3778 = vmatpush.bf16.msra.mxu0 0
      %3779 = vmatpush.bf16.msra.mxu0 0
      %3780 = vmatpush.bf16.msra.mxu0 %v3681
      %3781 = vmatpush.bf16.msra.mxu0 %v3679
      %3782 = vmatpush.bf16.msra.mxu0 %v3677
      %3783 = vmatmul.bf16.gmra.mxu0 %v3759
      %v3784 = vpop.f32.mrf.mxu0
      %v3785 = vadd.f32 %v3754, %v3784
      %v3786 = vpop.f32.mrf.mxu0
      %v3787 = vadd.f32 %v3756, %v3786
      %3788 = vdwg.mxu0
      %3789 = vrot.lane.b32.xlu0 %v3372, 113
      %v3790 = vpop.permute.xlu0 %3789
      %3791 = vrot.lane.b32.xlu0 %v3374, 113
      %v3792 = vpop.permute.xlu0 %3791
      %3793 = vrot.lane.b32.xlu0 %v3373, 113
      %v3794 = vpop.permute.xlu0 %3793
      %3795 = vrot.lane.b32.xlu0 %v3375, 113
      %v3796 = vpop.permute.xlu0 %3795
      %v3797 = vsel %vm931, %v3790, %v3794
      %v3798 = vsel %vm931, %v3792, %v3796
      %v3799 = vsel %vm931, %v3794, %v3790
      %v3800 = vsel %vm931, %v3796, %v3792
      %v3801 = vmul.f32 %v3797, %v936
      %v3802 = vmul.f32 %v3799, %v937
      %v3803 = vmul.f32 %v3798, %v936
      %v3804 = vmul.f32 %v3800, %v937
      %3805 = vrot.lane.b32.xlu0 %v3372, 112
      %v3806 = vpop.permute.xlu0 %3805
      %3807 = vrot.lane.b32.xlu0 %v3374, 112
      %v3808 = vpop.permute.xlu0 %3807
      %3809 = vrot.lane.b32.xlu0 %v3373, 112
      %v3810 = vpop.permute.xlu0 %3809
      %3811 = vrot.lane.b32.xlu0 %v3375, 112
      %v3812 = vpop.permute.xlu0 %3811
      %v3813 = vsel %vm950, %v3806, %v3810
      %v3814 = vsel %vm950, %v3808, %v3812
      %v3815 = vsel %vm950, %v3810, %v3806
      %v3816 = vsel %vm950, %v3812, %v3808
      %v3817 = vmul.f32 %v3813, %v955
      %v3818 = vmul.f32 %v3815, %v956
      %v3819 = vmul.f32 %v3814, %v955
      %v3820 = vmul.f32 %v3816, %v956
      %3821 = vrot.lane.b32.xlu0 %v3372, 111
      %v3822 = vpop.permute.xlu0 %3821
      %3823 = vrot.lane.b32.xlu0 %v3374, 111
      %v3824 = vpop.permute.xlu0 %3823
      %3825 = vrot.lane.b32.xlu0 %v3373, 111
      %v3826 = vpop.permute.xlu0 %3825
      %3827 = vrot.lane.b32.xlu0 %v3375, 111
      %v3828 = vpop.permute.xlu0 %3827
      %v3829 = vsel %vm969, %v3822, %v3826
      %v3830 = vsel %vm969, %v3824, %v3828
      %v3831 = vsel %vm969, %v3826, %v3822
      %v3832 = vsel %vm969, %v3828, %v3824
      %v3833 = vmul.f32 %v3829, %v974
      %v3834 = vmul.f32 %v3831, %v975
      %v3835 = vmul.f32 %v3830, %v974
      %v3836 = vmul.f32 %v3832, %v975
      %v3837 = vpack.c.bf16 %v3803, %v3801
      %v3838 = vpack.c.bf16 %v3804, %v3802
      %v3839 = vpack.c.bf16 %v3819, %v3817
      %v3840 = vpack.c.bf16 %v3820, %v3818
      %v3841 = vpack.c.bf16 %v3835, %v3833
      %v3842 = vpack.c.bf16 %v3836, %v3834
      %s3843 = scalar_lea.vmem %s16, 32
      %v3844 = vld [vmem:[%s3843] sm:$0xff]
      %v3845 = vld [vmem:[%s3843 + $0x8] sm:$0xff]
      %v3846 = vpack.c.bf16 %v3845, %v3844
      %v3848 = vsel %vm860, %v3846, 0
      %3850 = vmatpush.bf16.msra.mxu0 0
      %3851 = vmatpush.bf16.msra.mxu0 0
      %3852 = vmatpush.bf16.msra.mxu0 0
      %3853 = vmatpush.bf16.msra.mxu0 0
      %3854 = vmatpush.bf16.msra.mxu0 0
      %3855 = vmatpush.bf16.msra.mxu0 %v3841
      %3856 = vmatpush.bf16.msra.mxu0 %v3839
      %3857 = vmatpush.bf16.msra.mxu0 %v3837
      %3858 = vmatmul.bf16.gmra.mxu0 %v3848
      %v3859 = vpop.f32.mrf.mxu0
      %v3860 = vadd.f32 0.0, %v3859
      %v3861 = vpop.f32.mrf.mxu0
      %v3862 = vadd.f32 0.0, %v3861
      %3863 = vdwg.mxu0
      %3864 = vmatpush.bf16.msra.mxu0 0
      %3865 = vmatpush.bf16.msra.mxu0 0
      %3866 = vmatpush.bf16.msra.mxu0 0
      %3867 = vmatpush.bf16.msra.mxu0 0
      %3868 = vmatpush.bf16.msra.mxu0 0
      %3869 = vmatpush.bf16.msra.mxu0 %v3842
      %3870 = vmatpush.bf16.msra.mxu0 %v3840
      %3871 = vmatpush.bf16.msra.mxu0 %v3838
      %3872 = vmatmul.bf16.gmra.mxu0 %v3848
      %v3873 = vpop.f32.mrf.mxu0
      %v3874 = vadd.f32 0.0, %v3873
      %v3875 = vpop.f32.mrf.mxu0
      %v3876 = vadd.f32 0.0, %v3875
      %3877 = vdwg.mxu0
      %v3878 = vadd.f32 %v3771, %v3860
      %v3879 = vadd.f32 %v3785, %v3874
      %v3880 = vadd.f32 %v3773, %v3862
      %v3881 = vadd.f32 %v3787, %v3876
      %v3882 = vadd.f32 %v3624, %v3878
      %v3883 = vadd.f32 %v3625, %v3879
      %v3884 = vadd.f32 %v3626, %v3880
      %v3885 = vadd.f32 %v3627, %v3881
      %v3886 = vld [vmem:[%s17] sm:$0xff]
      %v3887 = vld [vmem:[%s17 + $0x8] sm:$0xff]
      %3889 = vset.pattern.permute.xlu0 0
      %3890 = vperm.xlu0 %3889, %v3886
      %v3891 = vpop.permute.xlu0 %3890
      %3894 = vset.pattern.permute.xlu0 0
      %3895 = vperm.xlu0 %3894, %v3887
      %v3896 = vpop.permute.xlu0 %3895
      %v3898 = vadd.f32 %v3882, %v3891
      %v3899 = vadd.f32 %v3883, %v3891
      %v3900 = vadd.f32 %v3884, %v3896
      %v3901 = vadd.f32 %v3885, %v3896
      %3902 = vrot.lane.b32.xlu0 %v3898, 17
      %v3903 = vpop.permute.xlu0 %3902
      %3904 = vrot.lane.b32.xlu0 %v3900, 17
      %v3905 = vpop.permute.xlu0 %3904
      %3906 = vrot.lane.b32.xlu0 %v3899, 17
      %v3907 = vpop.permute.xlu0 %3906
      %3908 = vrot.lane.b32.xlu0 %v3901, 17
      %v3909 = vpop.permute.xlu0 %3908
      %v3910 = vsel %vm754, %v3903, %v3907
      %v3911 = vsel %vm754, %v3905, %v3909
      %v3912 = vsel %vm754, %v3907, %v3903
      %v3913 = vsel %vm754, %v3909, %v3905
      %v3914 = vmul.f32 %v3912, %v759
      %v3915 = vmul.f32 %v3910, %v760
      %v3916 = vmul.f32 %v3913, %v759
      %v3917 = vmul.f32 %v3911, %v760
      %3918 = vrot.lane.b32.xlu0 %v3898, 16
      %v3919 = vpop.permute.xlu0 %3918
      %3920 = vrot.lane.b32.xlu0 %v3900, 16
      %v3921 = vpop.permute.xlu0 %3920
      %3922 = vrot.lane.b32.xlu0 %v3899, 16
      %v3923 = vpop.permute.xlu0 %3922
      %3924 = vrot.lane.b32.xlu0 %v3901, 16
      %v3925 = vpop.permute.xlu0 %3924
      %v3926 = vsel %vm773, %v3919, %v3923
      %v3927 = vsel %vm773, %v3921, %v3925
      %v3928 = vsel %vm773, %v3923, %v3919
      %v3929 = vsel %vm773, %v3925, %v3921
      %v3930 = vmul.f32 %v3928, %v778
      %v3931 = vmul.f32 %v3926, %v779
      %v3932 = vmul.f32 %v3929, %v778
      %v3933 = vmul.f32 %v3927, %v779
      %3934 = vrot.lane.b32.xlu0 %v3898, 15
      %v3935 = vpop.permute.xlu0 %3934
      %3936 = vrot.lane.b32.xlu0 %v3900, 15
      %v3937 = vpop.permute.xlu0 %3936
      %3938 = vrot.lane.b32.xlu0 %v3899, 15
      %v3939 = vpop.permute.xlu0 %3938
      %3940 = vrot.lane.b32.xlu0 %v3901, 15
      %v3941 = vpop.permute.xlu0 %3940
      %v3942 = vsel %vm792, %v3935, %v3939
      %v3943 = vsel %vm792, %v3937, %v3941
      %v3944 = vsel %vm792, %v3939, %v3935
      %v3945 = vsel %vm792, %v3941, %v3937
      %v3946 = vmul.f32 %v3944, %v797
      %v3947 = vmul.f32 %v3942, %v798
      %v3948 = vmul.f32 %v3945, %v797
      %v3949 = vmul.f32 %v3943, %v798
      %v3950 = vpack.c.bf16 %v3916, %v3914
      %v3951 = vpack.c.bf16 %v3917, %v3915
      %v3952 = vpack.c.bf16 %v3932, %v3930
      %v3953 = vpack.c.bf16 %v3933, %v3931
      %v3954 = vpack.c.bf16 %v3948, %v3946
      %v3955 = vpack.c.bf16 %v3949, %v3947
      %v3956 = vld [vmem:[%s18] sm:$0xff]
      %v3957 = vld [vmem:[%s18 + $0x8] sm:$0xff]
      %v3958 = vpack.c.bf16 %v3957, %v3956
      %3959 = vrot.lane.b32.xlu0 %v3898, 1
      %v3960 = vpop.permute.xlu0 %3959
      %3961 = vrot.lane.b32.xlu0 %v3900, 1
      %v3962 = vpop.permute.xlu0 %3961
      %3963 = vrot.lane.b32.xlu0 %v3899, 1
      %v3964 = vpop.permute.xlu0 %3963
      %3965 = vrot.lane.b32.xlu0 %v3901, 1
      %v3966 = vpop.permute.xlu0 %3965
      %v3967 = vsel %vm820, %v3960, %v3964
      %v3968 = vsel %vm820, %v3962, %v3966
      %v3969 = vsel %vm820, %v3964, %v3960
      %v3970 = vsel %vm820, %v3966, %v3962
      %v3971 = vmul.f32 %v3969, %v825
      %v3972 = vmul.f32 %v3967, %v826
      %v3973 = vmul.f32 %v3970, %v825
      %v3974 = vmul.f32 %v3968, %v826
      %3975 = vrot.lane.b32.xlu0 %v3898, 127
      %v3976 = vpop.permute.xlu0 %3975
      %3977 = vrot.lane.b32.xlu0 %v3900, 127
      %v3978 = vpop.permute.xlu0 %3977
      %3979 = vrot.lane.b32.xlu0 %v3899, 127
      %v3980 = vpop.permute.xlu0 %3979
      %3981 = vrot.lane.b32.xlu0 %v3901, 127
      %v3982 = vpop.permute.xlu0 %3981
      %v3983 = vsel %vm839, %v3976, %v3980
      %v3984 = vsel %vm839, %v3978, %v3982
      %v3985 = vsel %vm839, %v3980, %v3976
      %v3986 = vsel %vm839, %v3982, %v3978
      %v3987 = vmul.f32 %v3983, %v844
      %v3988 = vmul.f32 %v3985, %v845
      %v3989 = vmul.f32 %v3984, %v844
      %v3990 = vmul.f32 %v3986, %v845
      %v3991 = vpack.c.bf16 %v3973, %v3971
      %v3992 = vpack.c.bf16 %v3974, %v3972
      %v3993 = vpack.c.bf16 %v3900, %v3898
      %v3994 = vpack.c.bf16 %v3901, %v3899
      %v3995 = vpack.c.bf16 %v3989, %v3987
      %v3996 = vpack.c.bf16 %v3990, %v3988
      %s3997 = scalar_lea.vmem %s18, 16
      %v3998 = vld [vmem:[%s3997] sm:$0xff]
      %v3999 = vld [vmem:[%s3997 + $0x8] sm:$0xff]
      %v4000 = vpack.c.bf16 %v3999, %v3998
      %v4002 = vsel %vm860, %v4000, 0
      %4004 = vmatpush.bf16.msra.mxu0 0
      %4005 = vmatpush.bf16.msra.mxu0 0
      %4006 = vmatpush.bf16.msra.mxu0 0
      %4007 = vmatpush.bf16.msra.mxu0 0
      %4008 = vmatpush.bf16.msra.mxu0 0
      %4009 = vmatpush.bf16.msra.mxu0 %v3995
      %4010 = vmatpush.bf16.msra.mxu0 %v3993
      %4011 = vmatpush.bf16.msra.mxu0 %v3991
      %4012 = vmatmul.bf16.gmra.mxu0 %v4002
      %v4013 = vpop.f32.mrf.mxu0
      %v4014 = vadd.f32 0.0, %v4013
      %v4015 = vpop.f32.mrf.mxu0
      %v4016 = vadd.f32 0.0, %v4015
      %4017 = vdwg.mxu0
      %4018 = vmatpush.bf16.msra.mxu0 0
      %4019 = vmatpush.bf16.msra.mxu0 0
      %4020 = vmatpush.bf16.msra.mxu0 0
      %4021 = vmatpush.bf16.msra.mxu0 0
      %4022 = vmatpush.bf16.msra.mxu0 0
      %4023 = vmatpush.bf16.msra.mxu0 %v3996
      %4024 = vmatpush.bf16.msra.mxu0 %v3994
      %4025 = vmatpush.bf16.msra.mxu0 %v3992
      %4026 = vmatmul.bf16.gmra.mxu0 %v4002
      %v4027 = vpop.f32.mrf.mxu0
      %v4028 = vadd.f32 0.0, %v4027
      %v4029 = vpop.f32.mrf.mxu0
      %v4030 = vadd.f32 0.0, %v4029
      %4031 = vdwg.mxu0
      %v4033 = vsel %vm860, %v3958, 0
      %4035 = vmatpush.bf16.msra.mxu0 0
      %4036 = vmatpush.bf16.msra.mxu0 0
      %4037 = vmatpush.bf16.msra.mxu0 0
      %4038 = vmatpush.bf16.msra.mxu0 0
      %4039 = vmatpush.bf16.msra.mxu0 0
      %4040 = vmatpush.bf16.msra.mxu0 %v3954
      %4041 = vmatpush.bf16.msra.mxu0 %v3952
      %4042 = vmatpush.bf16.msra.mxu0 %v3950
      %4043 = vmatmul.bf16.gmra.mxu0 %v4033
      %v4044 = vpop.f32.mrf.mxu0
      %v4045 = vadd.f32 %v4014, %v4044
      %v4046 = vpop.f32.mrf.mxu0
      %v4047 = vadd.f32 %v4016, %v4046
      %4048 = vdwg.mxu0
      %4049 = vmatpush.bf16.msra.mxu0 0
      %4050 = vmatpush.bf16.msra.mxu0 0
      %4051 = vmatpush.bf16.msra.mxu0 0
      %4052 = vmatpush.bf16.msra.mxu0 0
      %4053 = vmatpush.bf16.msra.mxu0 0
      %4054 = vmatpush.bf16.msra.mxu0 %v3955
      %4055 = vmatpush.bf16.msra.mxu0 %v3953
      %4056 = vmatpush.bf16.msra.mxu0 %v3951
      %4057 = vmatmul.bf16.gmra.mxu0 %v4033
      %v4058 = vpop.f32.mrf.mxu0
      %v4059 = vadd.f32 %v4028, %v4058
      %v4060 = vpop.f32.mrf.mxu0
      %v4061 = vadd.f32 %v4030, %v4060
      %4062 = vdwg.mxu0
      %4063 = vrot.lane.b32.xlu0 %v3898, 113
      %v4064 = vpop.permute.xlu0 %4063
      %4065 = vrot.lane.b32.xlu0 %v3900, 113
      %v4066 = vpop.permute.xlu0 %4065
      %4067 = vrot.lane.b32.xlu0 %v3899, 113
      %v4068 = vpop.permute.xlu0 %4067
      %4069 = vrot.lane.b32.xlu0 %v3901, 113
      %v4070 = vpop.permute.xlu0 %4069
      %v4071 = vsel %vm931, %v4064, %v4068
      %v4072 = vsel %vm931, %v4066, %v4070
      %v4073 = vsel %vm931, %v4068, %v4064
      %v4074 = vsel %vm931, %v4070, %v4066
      %v4075 = vmul.f32 %v4071, %v936
      %v4076 = vmul.f32 %v4073, %v937
      %v4077 = vmul.f32 %v4072, %v936
      %v4078 = vmul.f32 %v4074, %v937
      %4079 = vrot.lane.b32.xlu0 %v3898, 112
      %v4080 = vpop.permute.xlu0 %4079
      %4081 = vrot.lane.b32.xlu0 %v3900, 112
      %v4082 = vpop.permute.xlu0 %4081
      %4083 = vrot.lane.b32.xlu0 %v3899, 112
      %v4084 = vpop.permute.xlu0 %4083
      %4085 = vrot.lane.b32.xlu0 %v3901, 112
      %v4086 = vpop.permute.xlu0 %4085
      %v4087 = vsel %vm950, %v4080, %v4084
      %v4088 = vsel %vm950, %v4082, %v4086
      %v4089 = vsel %vm950, %v4084, %v4080
      %v4090 = vsel %vm950, %v4086, %v4082
      %v4091 = vmul.f32 %v4087, %v955
      %v4092 = vmul.f32 %v4089, %v956
      %v4093 = vmul.f32 %v4088, %v955
      %v4094 = vmul.f32 %v4090, %v956
      %4095 = vrot.lane.b32.xlu0 %v3898, 111
      %v4096 = vpop.permute.xlu0 %4095
      %4097 = vrot.lane.b32.xlu0 %v3900, 111
      %v4098 = vpop.permute.xlu0 %4097
      %4099 = vrot.lane.b32.xlu0 %v3899, 111
      %v4100 = vpop.permute.xlu0 %4099
      %4101 = vrot.lane.b32.xlu0 %v3901, 111
      %v4102 = vpop.permute.xlu0 %4101
      %v4103 = vsel %vm969, %v4096, %v4100
      %v4104 = vsel %vm969, %v4098, %v4102
      %v4105 = vsel %vm969, %v4100, %v4096
      %v4106 = vsel %vm969, %v4102, %v4098
      %v4107 = vmul.f32 %v4103, %v974
      %v4108 = vmul.f32 %v4105, %v975
      %v4109 = vmul.f32 %v4104, %v974
      %v4110 = vmul.f32 %v4106, %v975
      %v4111 = vpack.c.bf16 %v4077, %v4075
      %v4112 = vpack.c.bf16 %v4078, %v4076
      %v4113 = vpack.c.bf16 %v4093, %v4091
      %v4114 = vpack.c.bf16 %v4094, %v4092
      %v4115 = vpack.c.bf16 %v4109, %v4107
      %v4116 = vpack.c.bf16 %v4110, %v4108
      %s4117 = scalar_lea.vmem %s18, 32
      %v4118 = vld [vmem:[%s4117] sm:$0xff]
      %v4119 = vld [vmem:[%s4117 + $0x8] sm:$0xff]
      %v4120 = vpack.c.bf16 %v4119, %v4118
      %v4122 = vsel %vm860, %v4120, 0
      %4124 = vmatpush.bf16.msra.mxu0 0
      %4125 = vmatpush.bf16.msra.mxu0 0
      %4126 = vmatpush.bf16.msra.mxu0 0
      %4127 = vmatpush.bf16.msra.mxu0 0
      %4128 = vmatpush.bf16.msra.mxu0 0
      %4129 = vmatpush.bf16.msra.mxu0 %v4115
      %4130 = vmatpush.bf16.msra.mxu0 %v4113
      %4131 = vmatpush.bf16.msra.mxu0 %v4111
      %4132 = vmatmul.bf16.gmra.mxu0 %v4122
      %v4133 = vpop.f32.mrf.mxu0
      %v4134 = vadd.f32 0.0, %v4133
      %v4135 = vpop.f32.mrf.mxu0
      %v4136 = vadd.f32 0.0, %v4135
      %4137 = vdwg.mxu0
      %4138 = vmatpush.bf16.msra.mxu0 0
      %4139 = vmatpush.bf16.msra.mxu0 0
      %4140 = vmatpush.bf16.msra.mxu0 0
      %4141 = vmatpush.bf16.msra.mxu0 0
      %4142 = vmatpush.bf16.msra.mxu0 0
      %4143 = vmatpush.bf16.msra.mxu0 %v4116
      %4144 = vmatpush.bf16.msra.mxu0 %v4114
      %4145 = vmatpush.bf16.msra.mxu0 %v4112
      %4146 = vmatmul.bf16.gmra.mxu0 %v4122
      %v4147 = vpop.f32.mrf.mxu0
      %v4148 = vadd.f32 0.0, %v4147
      %v4149 = vpop.f32.mrf.mxu0
      %v4150 = vadd.f32 0.0, %v4149
      %4151 = vdwg.mxu0
      %v4152 = vadd.f32 %v4045, %v4134
      %v4153 = vadd.f32 %v4059, %v4148
      %v4154 = vadd.f32 %v4047, %v4136
      %v4155 = vadd.f32 %v4061, %v4150
      %v4156 = vld [vmem:[%s19] sm:$0xff]
      %v4157 = vld [vmem:[%s19 + $0x8] sm:$0xff]
      %4159 = vset.pattern.permute.xlu0 0
      %4160 = vperm.xlu0 %4159, %v4156
      %v4161 = vpop.permute.xlu0 %4160
      %4164 = vset.pattern.permute.xlu0 0
      %4165 = vperm.xlu0 %4164, %v4157
      %v4166 = vpop.permute.xlu0 %4165
      %v4168 = vadd.f32 %v4152, %v4161
      %v4169 = vadd.f32 %v4153, %v4161
      %v4170 = vadd.f32 %v4154, %v4166
      %v4171 = vadd.f32 %v4155, %v4166
      %v4172 = vxor.u32 %v4168, 2147483648
      %v4173 = vxor.u32 %v4169, 2147483648
      %v4174 = vxor.u32 %v4170, 2147483648
      %v4175 = vxor.u32 %v4171, 2147483648
      %v4176 = vmul.f32 %v4172, 1.442695
      %v4177 = vpow.pop %v4176
      %v4178 = vmul.f32 %v4173, 1.442695
      %v4179 = vpow.pop %v4178
      %v4180 = vmul.f32 %v4174, 1.442695
      %v4181 = vpow.pop %v4180
      %v4182 = vmul.f32 %v4175, 1.442695
      %v4183 = vpow.pop %v4182
      %v4184 = vadd.f32 %v4177, 1.0
      %v4185 = vadd.f32 %v4179, 1.0
      %v4186 = vadd.f32 %v4181, 1.0
      %v4187 = vadd.f32 %v4183, 1.0
      %v4188 = vrcp.pop %v4184
      %v4189 = vmul.f32 %v4184, %v4188
      %v4190 = vsub.f32 1.0, %v4189
      %v4191 = vmul.f32 %v4188, %v4190
      %v4192 = vadd.f32 %v4188, %v4191
      %vm4193 = vweird.f32 %v4184
      %vm4194 = vweird.f32 %v4188
      %vm4195 = vmor %vm4193, %vm4194
      %v4196 = vsel %vm4195, %v4188, %v4192
      %v4197 = vand.u32 2147483647, %v4184
      %vm4198 = vcmp.eq.f32.partialorder %v4197, 8.507059e+37
      %v4199 = vand.u32 %v4184, 2147483648
      %v4200 = vor.u32 1.1754944e-38, %v4199
      %v4201 = vsel %vm4198, %v4200, %v4196
      %v4202 = vmul.f32 1.0, %v4201
      %v4203 = vrcp.pop %v4185
      %v4204 = vmul.f32 %v4185, %v4203
      %v4205 = vsub.f32 1.0, %v4204
      %v4206 = vmul.f32 %v4203, %v4205
      %v4207 = vadd.f32 %v4203, %v4206
      %vm4208 = vweird.f32 %v4185
      %vm4209 = vweird.f32 %v4203
      %vm4210 = vmor %vm4208, %vm4209
      %v4211 = vsel %vm4210, %v4203, %v4207
      %v4212 = vand.u32 2147483647, %v4185
      %vm4213 = vcmp.eq.f32.partialorder %v4212, 8.507059e+37
      %v4214 = vand.u32 %v4185, 2147483648
      %v4215 = vor.u32 1.1754944e-38, %v4214
      %v4216 = vsel %vm4213, %v4215, %v4211
      %v4217 = vmul.f32 1.0, %v4216
      %v4218 = vrcp.pop %v4186
      %v4219 = vmul.f32 %v4186, %v4218
      %v4220 = vsub.f32 1.0, %v4219
      %v4221 = vmul.f32 %v4218, %v4220
      %v4222 = vadd.f32 %v4218, %v4221
      %vm4223 = vweird.f32 %v4186
      %vm4224 = vweird.f32 %v4218
      %vm4225 = vmor %vm4223, %vm4224
      %v4226 = vsel %vm4225, %v4218, %v4222
      %v4227 = vand.u32 2147483647, %v4186
      %vm4228 = vcmp.eq.f32.partialorder %v4227, 8.507059e+37
      %v4229 = vand.u32 %v4186, 2147483648
      %v4230 = vor.u32 1.1754944e-38, %v4229
      %v4231 = vsel %vm4228, %v4230, %v4226
      %v4232 = vmul.f32 1.0, %v4231
      %v4233 = vrcp.pop %v4187
      %v4234 = vmul.f32 %v4187, %v4233
      %v4235 = vsub.f32 1.0, %v4234
      %v4236 = vmul.f32 %v4233, %v4235
      %v4237 = vadd.f32 %v4233, %v4236
      %vm4238 = vweird.f32 %v4187
      %vm4239 = vweird.f32 %v4233
      %vm4240 = vmor %vm4238, %vm4239
      %v4241 = vsel %vm4240, %v4233, %v4237
      %v4242 = vand.u32 2147483647, %v4187
      %vm4243 = vcmp.eq.f32.partialorder %v4242, 8.507059e+37
      %v4244 = vand.u32 %v4187, 2147483648
      %v4245 = vor.u32 1.1754944e-38, %v4244
      %v4246 = vsel %vm4243, %v4245, %v4241
      %v4247 = vmul.f32 1.0, %v4246
      %v4248 = vld [vmem:[%s20] sm:$0xff]
      %v4249 = vld [vmem:[%s20 + $0x8] sm:$0xff]
      %v4250 = vpack.c.bf16 %v4249, %v4248
      %s4251 = scalar_lea.vmem %s20, 16
      %v4252 = vld [vmem:[%s4251] sm:$0xff]
      %v4253 = vld [vmem:[%s4251 + $0x8] sm:$0xff]
      %v4254 = vpack.c.bf16 %v4253, %v4252
      %v4256 = vsel %vm860, %v4254, 0
      %4258 = vmatpush.bf16.msra.mxu0 0
      %4259 = vmatpush.bf16.msra.mxu0 0
      %4260 = vmatpush.bf16.msra.mxu0 0
      %4261 = vmatpush.bf16.msra.mxu0 0
      %4262 = vmatpush.bf16.msra.mxu0 0
      %4263 = vmatpush.bf16.msra.mxu0 %v3995
      %4264 = vmatpush.bf16.msra.mxu0 %v3993
      %4265 = vmatpush.bf16.msra.mxu0 %v3991
      %4266 = vmatmul.bf16.gmra.mxu0 %v4256
      %v4267 = vpop.f32.mrf.mxu0
      %v4268 = vadd.f32 0.0, %v4267
      %v4269 = vpop.f32.mrf.mxu0
      %v4270 = vadd.f32 0.0, %v4269
      %4271 = vdwg.mxu0
      %4272 = vmatpush.bf16.msra.mxu0 0
      %4273 = vmatpush.bf16.msra.mxu0 0
      %4274 = vmatpush.bf16.msra.mxu0 0
      %4275 = vmatpush.bf16.msra.mxu0 0
      %4276 = vmatpush.bf16.msra.mxu0 0
      %4277 = vmatpush.bf16.msra.mxu0 %v3996
      %4278 = vmatpush.bf16.msra.mxu0 %v3994
      %4279 = vmatpush.bf16.msra.mxu0 %v3992
      %4280 = vmatmul.bf16.gmra.mxu0 %v4256
      %v4281 = vpop.f32.mrf.mxu0
      %v4282 = vadd.f32 0.0, %v4281
      %v4283 = vpop.f32.mrf.mxu0
      %v4284 = vadd.f32 0.0, %v4283
      %4285 = vdwg.mxu0
      %v4287 = vsel %vm860, %v4250, 0
      %4289 = vmatpush.bf16.msra.mxu0 0
      %4290 = vmatpush.bf16.msra.mxu0 0
      %4291 = vmatpush.bf16.msra.mxu0 0
      %4292 = vmatpush.bf16.msra.mxu0 0
      %4293 = vmatpush.bf16.msra.mxu0 0
      %4294 = vmatpush.bf16.msra.mxu0 %v3954
      %4295 = vmatpush.bf16.msra.mxu0 %v3952
      %4296 = vmatpush.bf16.msra.mxu0 %v3950
      %4297 = vmatmul.bf16.gmra.mxu0 %v4287
      %v4298 = vpop.f32.mrf.mxu0
      %v4299 = vadd.f32 %v4268, %v4298
      %v4300 = vpop.f32.mrf.mxu0
      %v4301 = vadd.f32 %v4270, %v4300
      %4302 = vdwg.mxu0
      %4303 = vmatpush.bf16.msra.mxu0 0
      %4304 = vmatpush.bf16.msra.mxu0 0
      %4305 = vmatpush.bf16.msra.mxu0 0
      %4306 = vmatpush.bf16.msra.mxu0 0
      %4307 = vmatpush.bf16.msra.mxu0 0
      %4308 = vmatpush.bf16.msra.mxu0 %v3955
      %4309 = vmatpush.bf16.msra.mxu0 %v3953
      %4310 = vmatpush.bf16.msra.mxu0 %v3951
      %4311 = vmatmul.bf16.gmra.mxu0 %v4287
      %v4312 = vpop.f32.mrf.mxu0
      %v4313 = vadd.f32 %v4282, %v4312
      %v4314 = vpop.f32.mrf.mxu0
      %v4315 = vadd.f32 %v4284, %v4314
      %4316 = vdwg.mxu0
      %s4317 = scalar_lea.vmem %s20, 32
      %v4318 = vld [vmem:[%s4317] sm:$0xff]
      %v4319 = vld [vmem:[%s4317 + $0x8] sm:$0xff]
      %v4320 = vpack.c.bf16 %v4319, %v4318
      %v4322 = vsel %vm860, %v4320, 0
      %4324 = vmatpush.bf16.msra.mxu0 0
      %4325 = vmatpush.bf16.msra.mxu0 0
      %4326 = vmatpush.bf16.msra.mxu0 0
      %4327 = vmatpush.bf16.msra.mxu0 0
      %4328 = vmatpush.bf16.msra.mxu0 0
      %4329 = vmatpush.bf16.msra.mxu0 %v4115
      %4330 = vmatpush.bf16.msra.mxu0 %v4113
      %4331 = vmatpush.bf16.msra.mxu0 %v4111
      %4332 = vmatmul.bf16.gmra.mxu0 %v4322
      %v4333 = vpop.f32.mrf.mxu0
      %v4334 = vadd.f32 0.0, %v4333
      %v4335 = vpop.f32.mrf.mxu0
      %v4336 = vadd.f32 0.0, %v4335
      %4337 = vdwg.mxu0
      %4338 = vmatpush.bf16.msra.mxu0 0
      %4339 = vmatpush.bf16.msra.mxu0 0
      %4340 = vmatpush.bf16.msra.mxu0 0
      %4341 = vmatpush.bf16.msra.mxu0 0
      %4342 = vmatpush.bf16.msra.mxu0 0
      %4343 = vmatpush.bf16.msra.mxu0 %v4116
      %4344 = vmatpush.bf16.msra.mxu0 %v4114
      %4345 = vmatpush.bf16.msra.mxu0 %v4112
      %4346 = vmatmul.bf16.gmra.mxu0 %v4322
      %v4347 = vpop.f32.mrf.mxu0
      %v4348 = vadd.f32 0.0, %v4347
      %v4349 = vpop.f32.mrf.mxu0
      %v4350 = vadd.f32 0.0, %v4349
      %4351 = vdwg.mxu0
      %v4352 = vadd.f32 %v4299, %v4334
      %v4353 = vadd.f32 %v4313, %v4348
      %v4354 = vadd.f32 %v4301, %v4336
      %v4355 = vadd.f32 %v4315, %v4350
      %v4356 = vld [vmem:[%s21] sm:$0xff]
      %v4357 = vld [vmem:[%s21 + $0x8] sm:$0xff]
      %4359 = vset.pattern.permute.xlu0 0
      %4360 = vperm.xlu0 %4359, %v4356
      %v4361 = vpop.permute.xlu0 %4360
      %4364 = vset.pattern.permute.xlu0 0
      %4365 = vperm.xlu0 %4364, %v4357
      %v4366 = vpop.permute.xlu0 %4365
      %v4368 = vadd.f32 %v4352, %v4361
      %v4369 = vadd.f32 %v4353, %v4361
      %v4370 = vadd.f32 %v4354, %v4366
      %v4371 = vadd.f32 %v4355, %v4366
      %v4372 = vxor.u32 %v4368, 2147483648
      %v4373 = vxor.u32 %v4369, 2147483648
      %v4374 = vxor.u32 %v4370, 2147483648
      %v4375 = vxor.u32 %v4371, 2147483648
      %v4376 = vmul.f32 %v4372, 1.442695
      %v4377 = vpow.pop %v4376
      %v4378 = vmul.f32 %v4373, 1.442695
      %v4379 = vpow.pop %v4378
      %v4380 = vmul.f32 %v4374, 1.442695
      %v4381 = vpow.pop %v4380
      %v4382 = vmul.f32 %v4375, 1.442695
      %v4383 = vpow.pop %v4382
      %v4384 = vadd.f32 %v4377, 1.0
      %v4385 = vadd.f32 %v4379, 1.0
      %v4386 = vadd.f32 %v4381, 1.0
      %v4387 = vadd.f32 %v4383, 1.0
      %v4388 = vrcp.pop %v4384
      %v4389 = vmul.f32 %v4384, %v4388
      %v4390 = vsub.f32 1.0, %v4389
      %v4391 = vmul.f32 %v4388, %v4390
      %v4392 = vadd.f32 %v4388, %v4391
      %vm4393 = vweird.f32 %v4384
      %vm4394 = vweird.f32 %v4388
      %vm4395 = vmor %vm4393, %vm4394
      %v4396 = vsel %vm4395, %v4388, %v4392
      %v4397 = vand.u32 2147483647, %v4384
      %vm4398 = vcmp.eq.f32.partialorder %v4397, 8.507059e+37
      %v4399 = vand.u32 %v4384, 2147483648
      %v4400 = vor.u32 1.1754944e-38, %v4399
      %v4401 = vsel %vm4398, %v4400, %v4396
      %v4402 = vmul.f32 1.0, %v4401
      %v4403 = vrcp.pop %v4385
      %v4404 = vmul.f32 %v4385, %v4403
      %v4405 = vsub.f32 1.0, %v4404
      %v4406 = vmul.f32 %v4403, %v4405
      %v4407 = vadd.f32 %v4403, %v4406
      %vm4408 = vweird.f32 %v4385
      %vm4409 = vweird.f32 %v4403
      %vm4410 = vmor %vm4408, %vm4409
      %v4411 = vsel %vm4410, %v4403, %v4407
      %v4412 = vand.u32 2147483647, %v4385
      %vm4413 = vcmp.eq.f32.partialorder %v4412, 8.507059e+37
      %v4414 = vand.u32 %v4385, 2147483648
      %v4415 = vor.u32 1.1754944e-38, %v4414
      %v4416 = vsel %vm4413, %v4415, %v4411
      %v4417 = vmul.f32 1.0, %v4416
      %v4418 = vrcp.pop %v4386
      %v4419 = vmul.f32 %v4386, %v4418
      %v4420 = vsub.f32 1.0, %v4419
      %v4421 = vmul.f32 %v4418, %v4420
      %v4422 = vadd.f32 %v4418, %v4421
      %vm4423 = vweird.f32 %v4386
      %vm4424 = vweird.f32 %v4418
      %vm4425 = vmor %vm4423, %vm4424
      %v4426 = vsel %vm4425, %v4418, %v4422
      %v4427 = vand.u32 2147483647, %v4386
      %vm4428 = vcmp.eq.f32.partialorder %v4427, 8.507059e+37
      %v4429 = vand.u32 %v4386, 2147483648
      %v4430 = vor.u32 1.1754944e-38, %v4429
      %v4431 = vsel %vm4428, %v4430, %v4426
      %v4432 = vmul.f32 1.0, %v4431
      %v4433 = vrcp.pop %v4387
      %v4434 = vmul.f32 %v4387, %v4433
      %v4435 = vsub.f32 1.0, %v4434
      %v4436 = vmul.f32 %v4433, %v4435
      %v4437 = vadd.f32 %v4433, %v4436
      %vm4438 = vweird.f32 %v4387
      %vm4439 = vweird.f32 %v4433
      %vm4440 = vmor %vm4438, %vm4439
      %v4441 = vsel %vm4440, %v4433, %v4437
      %v4442 = vand.u32 2147483647, %v4387
      %vm4443 = vcmp.eq.f32.partialorder %v4442, 8.507059e+37
      %v4444 = vand.u32 %v4387, 2147483648
      %v4445 = vor.u32 1.1754944e-38, %v4444
      %v4446 = vsel %vm4443, %v4445, %v4441
      %v4447 = vmul.f32 1.0, %v4446
      %v4448 = vmul.f32 %v2474, %v4202
      %v4449 = vmul.f32 %v2475, %v4217
      %v4450 = vmul.f32 %v2476, %v4232
      %v4451 = vmul.f32 %v2477, %v4247
      %v4452 = vmul.f32 %v3372, %v4402
      %v4453 = vmul.f32 %v3373, %v4417
      %v4454 = vmul.f32 %v3374, %v4432
      %v4455 = vmul.f32 %v3375, %v4447
      %v4456 = vadd.f32 %v4448, %v4452
      %v4457 = vadd.f32 %v4449, %v4453
      %v4458 = vadd.f32 %v4450, %v4454
      %v4459 = vadd.f32 %v4451, %v4455
      %vm4460 = vcmp.ne.f32.partialorder %v4456, %v4456
      %vm4461 = vcmp.ne.f32.partialorder %v4457, %v4457
      %vm4462 = vcmp.ne.f32.partialorder %v4458, %v4458
      %vm4463 = vcmp.ne.f32.partialorder %v4459, %v4459
      %v4464 = vand.u32 2147483647, %v4456
      %v4465 = vand.u32 2147483647, %v4457
      %v4466 = vand.u32 2147483647, %v4458
      %v4467 = vand.u32 2147483647, %v4459
      %vm4468 = vcmp.eq.f32.partialorder %v4464, inf
      %vm4469 = vcmp.eq.f32.partialorder %v4465, inf
      %vm4470 = vcmp.eq.f32.partialorder %v4466, inf
      %vm4471 = vcmp.eq.f32.partialorder %v4467, inf
      %vm4472 = vmor %vm4460, %vm4468
      %vm4473 = vmor %vm4461, %vm4469
      %vm4474 = vmor %vm4462, %vm4470
      %vm4475 = vmor %vm4463, %vm4471
      %v4476 = vsel %vm4472, 1e-05, %v4456
      %v4477 = vsel %vm4473, 1e-05, %v4457
      %v4478 = vsel %vm4474, 1e-05, %v4458
      %v4479 = vsel %vm4475, 1e-05, %v4459
      %4480 = vst [vmem:[%s730] sm:$0xff] %v4476
      %4481 = vst [vmem:[%s730 + $0x8] sm:$0xff] %v4477
      %4482 = vst [vmem:[%s730 + $0x10] sm:$0xff] %v4478
      %4483 = vst [vmem:[%s730 + $0x18] sm:$0xff] %v4479
      %p4484 = scmp.lt.s32.totalorder %s34, 1
      %s4485 = scalar_select %p4484, %s34, 1
      %s4486 = smul.addr %s4485, 4
      %s4487 = smul.addr %s4486, 8
      %s4488 = scalar_lea.vmem %s23, %s4487
      // Predicated region
      $region113: #{fuse_block7.1} parent=111 // pred_check
        %p4489 = pneg %p545
      $region114: #{fuse_block7.1} parent=111 // pred_check_branch
        %4491 = sbr.rel (%p4489) target = $region116
      $region115: #{fuse_block7.1} parent=111 // pred_region
        _
      $region116: #{fuse_block7.1} parent=111 // pred_fallthru
        _
    $region112: #{fuse_block7.1} parent=5 // pred_fallthru
      _
    %p4492 = scmp.le.s32.totalorder 2, %s29
    // Predicated region
    $region117: #{fuse_block7.1} parent=5 // pred_check
      %p4493 = pneg %p4492
    $region118: #{fuse_block7.1} parent=5 // pred_check_branch
      %4495 = sbr.rel (%p4493) target = $region120
    $region119: #{fuse_block7.1} parent=5 // pred_region
      %s4496 = ssub.s32 %s29, 2
      // Predicated region
      $region121: #{fuse_block7.1} parent=119 // pred_check
        %p4497 = pneg %p551
      $region122: #{fuse_block7.1} parent=119 // pred_check_branch
        %4499 = sbr.rel (%p4497) target = $region124
      $region123: #{fuse_block7.1} parent=119 // pred_region
        %p4500 = scmp.lt.s32.totalorder %s35, 1
        %s4501 = scalar_select %p4500, %s35, 1
        %s4502 = smul.addr %s4501, 4
        %s4503 = smul.addr %s4502, 8
        %s4504 = scalar_lea.vmem %s23, %s4503
      $region124: #{fuse_block7.1} parent=119 // pred_fallthru
        _
    $region120: #{fuse_block7.1} parent=5 // pred_fallthru
      _
  $region6: #{fuse_block7.1} parent=0 // loop_footer
    %s33 = sadd.s32 1, %s29
  $region7: #{fuse_block7.1} parent=0 // loop_footer_branch
    %28 = sbr.rel target = $region3
  $region8: #{fuse_block7.1} parent=0 // loop_exit
    _

</llo_original>
